<compile_context>
chip_gen: v7x
topology: tpu7x:2x2x1
jax: 0.10.0
libtpu: 0.0.40
codegen_flags: <defaults>
</compile_context>

<pallas_src>
import numpy as np
import jax
import jax.numpy as jnp
from jax.experimental import pallas as pl
from jax.experimental.pallas import tpu as pltpu

EPS = 1e-5


def _round_up(x, m):
    return (x + m - 1) // m * m


def make_conv_stats_kernel(HW, W, PAD, C, apply_bn_relu):
    """3x3 conv (stride 1, pad 1) over one image as 9 accumulated MXU matmuls.

    Optionally applies a precomputed per-channel (scale, shift) + relu to the
    input first (BN folded from the previous pass's global stats). Also emits
    per-image partial BN statistics (mean, sum of squared deviations) of the
    conv output for the *next* BN.
    """

    def kernel(*args):
        if apply_bn_relu:
            x_ref, sb_ref, w_ref, y_ref, stats_ref, pad_ref, acc_ref = args
        else:
            x_ref, w_ref, y_ref, stats_ref, pad_ref, acc_ref = args

        x = x_ref[...]                                   # (HW, C)
        if apply_bn_relu:
            scale = sb_ref[0:1, :]
            shift = sb_ref[1:2, :]
            x = jnp.maximum(x.astype(jnp.float32) * scale + shift, 0.0)
        a = x.astype(jnp.bfloat16)                       # MXU input dtype

        # Zero only the halo rows (2*PAD*C bf16 stores); out-of-image dy taps
        # then read zeros. Re-zeroed every step on purpose: the grid axis is
        # "parallel", so on v7x each TensorCore has its own scratch and a
        # pl.when(program_id == 0) one-shot init would miss the second core.
        pad_ref[0:PAD, :] = jnp.zeros((PAD, C), jnp.bfloat16)
        pad_ref[PAD + HW:PAD + HW + PAD, :] = jnp.zeros((PAD, C), jnp.bfloat16)
        pad_ref[PAD:PAD + HW, :] = a

        # Column-wrap masks: built once per tile, pre-broadcast to (HW, C) as
        # multiplicative bf16 masks (JAX does not CSE broadcast_in_dim, so
        # keeping them out of the unrolled tap loop avoids 6 re-broadcasts).
        col = jax.lax.broadcasted_iota(jnp.int32, (HW, C), 0) % W
        left_m = (col > 0).astype(jnp.bfloat16)          # kills dx=-1 wrap at col 0
        right_m = (col < (W - 1)).astype(jnp.bfloat16)   # kills dx=+1 wrap at col W-1

        # 9 shifted taps -> 9 accumulated (HW, C) @ (C, C) MXU matmuls into an
        # f32 VMEM accumulator (no im2col buffer).
        for t in range(9):                               # static unroll
            dy, dx = t // 3 - 1, t % 3 - 1
            start = PAD + dy * W + dx                    # static slice start
            xt = pad_ref[start:start + HW, :]            # (HW, C) bf16
            if dx == -1:
                xt = xt * left_m
            elif dx == 1:
                xt = xt * right_m
            d = jnp.dot(xt, w_ref[t * C:(t + 1) * C, :],
                        preferred_element_type=jnp.float32)
            if t == 0:
                acc_ref[...] = d
            else:
                acc_ref[...] += d

        y = acc_ref[...]                                 # (HW, C) f32
        y_ref[...] = y.astype(y_ref.dtype)               # bf16 inter-pass store

        # Per-image partial BN stats: mean + sum of squared deviations
        # (Welford/Chan-style partials; avoids E[x^2]-E[x]^2 cancellation).
        m = jnp.mean(y, axis=0, keepdims=True)
        ssd = jnp.sum((y - m) * (y - m), axis=0, keepdims=True)
        stats_ref[...] = jnp.concatenate([m, ssd], axis=0)

    return kernel


def bn_add_relu_kernel(y_ref, sb_ref, x_ref, o_ref):
    """out = relu(y * scale + shift + identity)   (bn2 folded into scale/shift)."""
    scale = sb_ref[0:1, :]
    shift = sb_ref[1:2, :]
    o_ref[...] = jnp.maximum(
        y_ref[...].astype(jnp.float32) * scale + shift + x_ref[...], 0.0)


def basicblock_forward(x_nchw, params):
    """Pallas forward. params = (w1, g1, b1, w2, g2, b2) in torch layouts."""
    w1_t, g1, b1, w2_t, g2, b2 = params
    N, Cin, H, W = x_nchw.shape
    planes = w1_t.shape[0]
    assert w1_t.shape == (planes, Cin, 3, 3) and w2_t.shape == (planes, planes, 3, 3)
    assert Cin == planes, "identity residual requires inplanes == planes (stride=1, no downsample)"

    HW = H * W
    P = N * HW
    C = _round_up(max(Cin, planes), 128)      # lane-padded channel count
    PAD = _round_up(W + 1, 16)                # halo rows, bf16 sublane-aligned

    # NCHW -> NHWC -> (P, C) with zero-padded channels (channels on lanes).
    x2d = jnp.transpose(x_nchw, (0, 2, 3, 1)).reshape(P, Cin)
    x2d = jnp.pad(x2d, ((0, 0), (0, C - Cin)))

    def prep_w(w_t, ci, co):
        # (O, I, 3, 3) -> (ky, kx, I, O) -> pad channels -> (9*C, C), bf16
        w = jnp.transpose(w_t, (2, 3, 1, 0)).reshape(9, ci, co)
        w = jnp.pad(w, ((0, 0), (0, C - ci), (0, C - co)))
        return w.reshape(9 * C, C).astype(jnp.bfloat16)

    w1c = prep_w(w1_t, Cin, planes)
    w2c = prep_w(w2_t, planes, planes)

    def prep_cb(v):
        return jnp.pad(v.astype(jnp.float32), (0, C - planes)).reshape(1, C)

    g1p, b1p, g2p, b2p = (prep_cb(v) for v in (g1, b1, g2, b2))

    def fold_bn(partials, g_p, b_p):
        """Combine per-image (mean, ssd) partials (Chan) -> (scale, shift)."""
        m_i = partials[:, 0, :]                           # (N, C) per-image means
        ssd_i = partials[:, 1, :]                         # (N, C) per-image SSDs
        mu = jnp.mean(m_i, axis=0, keepdims=True)         # (1, C)
        var = (jnp.sum(ssd_i, axis=0, keepdims=True)
               + HW * jnp.sum((m_i - mu) ** 2, axis=0, keepdims=True)) / P
        scale = g_p * jax.lax.rsqrt(var + EPS)
        shift = b_p - mu * scale
        return jnp.concatenate([scale, shift], axis=0)    # (2, C) f32

    row_spec = pl.BlockSpec((HW, C), lambda n: (n, 0))
    stats_spec = pl.BlockSpec((None, 2, C), lambda n: (n, 0, 0))   # per-image partials

    def const_spec(shape):
        # Constant-index-map operand (weights / folded BN scale+shift).
        # NOTE: could add pipeline_mode=pl.Buffered(1) to drop the redundant
        # second buffer (~0.3 MiB per conv pass); left at the default here.
        return pl.BlockSpec(shape, lambda n: (0,) * len(shape))

    scratch = [pltpu.VMEM((HW + 2 * PAD, C), jnp.bfloat16),   # halo-padded activation
               pltpu.VMEM((HW, C), jnp.float32)]              # conv f32 accumulator

    # Independent per-image work -> "parallel": v7x megacore shards every pass
    # (including the heavy conv passes) across both TensorCores.
    cp = pltpu.CompilerParams(dimension_semantics=("parallel",),
                              vmem_limit_bytes=32 * 1024 * 1024)

    # ---- pass 1: conv1 + per-image partial stats for bn1 -------------------
    y1, part1 = pl.pallas_call(
        make_conv_stats_kernel(HW, W, PAD, C, apply_bn_relu=False),
        grid=(N,),
        in_specs=[row_spec, const_spec(w1c.shape)],
        out_specs=[row_spec, stats_spec],
        out_shape=[jax.ShapeDtypeStruct((P, C), jnp.bfloat16),
                   jax.ShapeDtypeStruct((N, 2, C), jnp.float32)],
        scratch_shapes=scratch,
        compiler_params=cp,
    )(x2d, w1c)
    sb1 = fold_bn(part1, g1p, b1p)            # tiny (2, C) XLA combine

    # ---- pass 2: bn1+relu (folded scale/shift) -> conv2 + bn2 partials -----
    y2, part2 = pl.pallas_call(
        make_conv_stats_kernel(HW, W, PAD, C, apply_bn_relu=True),
        grid=(N,),
        in_specs=[row_spec, const_spec((2, C)), const_spec(w2c.shape)],
        out_specs=[row_spec, stats_spec],
        out_shape=[jax.ShapeDtypeStruct((P, C), jnp.bfloat16),
                   jax.ShapeDtypeStruct((N, 2, C), jnp.float32)],
        scratch_shapes=scratch,
        compiler_params=cp,
    )(y1, sb1, w2c)
    sb2 = fold_bn(part2, g2p, b2p)

    # ---- pass 3: bn2 (folded) + residual add + relu -------------------------
    out2d = pl.pallas_call(
        bn_add_relu_kernel,
        grid=(N,),
        in_specs=[row_spec, const_spec((2, C)), row_spec],
        out_specs=row_spec,
        out_shape=jax.ShapeDtypeStruct((P, C), jnp.float32),
        compiler_params=cp,
    )(y2, sb2, x2d)

    out = out2d.reshape(N, H, W, C)[:, :, :, :planes]
    return jnp.transpose(out, (0, 3, 1, 2))


def basicblock_ref(x, params, matmul_dtype=jnp.bfloat16, inter_dtype=jnp.bfloat16):
    """Pure-JAX NCHW reference mirroring the PyTorch BasicBlock forward
    (training-mode BN) at the kernel's precision: conv inputs in bf16 with f32
    accumulation (MXU), conv outputs rounded to `inter_dtype` between passes
    (the kernel's HBM inter-pass storage), BN stats computed in f32 from the
    pre-rounding conv output (as the kernel does)."""
    w1, g1, b1, w2, g2, b2 = params
    dn = ('NCHW', 'OIHW', 'NCHW')

    def conv(x_, w_):
        return jax.lax.conv_general_dilated(
            x_.astype(matmul_dtype), w_.astype(matmul_dtype), (1, 1),
            ((1, 1), (1, 1)), dimension_numbers=dn,
            preferred_element_type=jnp.float32)

    def bn(y_stats, y_apply, g, b):
        mu = y_stats.mean(axis=(0, 2, 3), keepdims=True)
        var = ((y_stats - mu) ** 2).mean(axis=(0, 2, 3), keepdims=True)
        return ((y_apply - mu) * jax.lax.rsqrt(var + EPS)
                * g.reshape(1, -1, 1, 1) + b.reshape(1, -1, 1, 1))

    y1 = conv(x, w1)
    y1r = y1.astype(inter_dtype).astype(jnp.float32)
    out = jax.nn.relu(bn(y1, y1r, g1, b1))
    y2 = conv(out, w2)
    y2r = y2.astype(inter_dtype).astype(jnp.float32)
    out = bn(y2, y2r, g2, b2)
    return jax.nn.relu(out + x)


if __name__ == "__main__":
    # BasicBlock(inplanes=64, planes=64), stride=1, downsample=None — a real
    # ResNet-18/34 layer1 block at a small spatial size.
    N, H, W = 2, 16, 16
    inplanes = planes = 64

    key = jax.random.PRNGKey(0)
    ks = jax.random.split(key, 8)
    x = jax.random.normal(ks[0], (N, inplanes, H, W), jnp.float32)
    w1 = 0.1 * jax.random.normal(ks[1], (planes, inplanes, 3, 3), jnp.float32)
    w2 = 0.1 * jax.random.normal(ks[2], (planes, planes, 3, 3), jnp.float32)
    g1 = 1.0 + 0.1 * jax.random.normal(ks[3], (planes,), jnp.float32)
    b1 = 0.1 * jax.random.normal(ks[4], (planes,), jnp.float32)
    g2 = 1.0 + 0.1 * jax.random.normal(ks[5], (planes,), jnp.float32)
    b2 = 0.1 * jax.random.normal(ks[6], (planes,), jnp.float32)
    params = (w1, g1, b1, w2, g2, b2)

    fwd = jax.jit(basicblock_forward)
    out = jax.block_until_ready(fwd(x, params))
    ref = jax.block_until_ready(basicblock_ref(x, params))
    # Both pipelines use bf16 MXU inputs, f32 accumulation, and bf16 inter-pass
    # storage. Tiny accumulation-order differences (~1e-6) can land on opposite
    # sides of a bf16 rounding boundary for isolated elements, giving one-ulp
    # (~1e-2 absolute after BN scaling) outliers — hence the tolerance below;
    # typical element-wise error is ~1e-3.
    np.testing.assert_allclose(np.asarray(out), np.asarray(ref),
                               rtol=1e-2, atol=2e-2)
    print("KERNEL_OK")
</pallas_src>

<mosaic_0001>
module attributes {stable_mosaic.version = 11 : i64} {
  func.func @kernel(%arg0: i32, %arg1: memref<256x128xf32, #tpu.memory_space<vmem>>, %arg2: memref<1152x128xbf16, #tpu.memory_space<vmem>>, %arg3: memref<256x128xbf16, #tpu.memory_space<vmem>>, %arg4: memref<1x2x128xf32, #tpu.memory_space<vmem>>, %arg5: memref<320x128xbf16, #tpu.memory_space<vmem>>, %arg6: memref<256x128xf32, #tpu.memory_space<vmem>>) attributes {dimension_semantics = [#tpu.dimension_semantics<parallel>], iteration_bounds = array<i64: 2>, scalar_prefetch = 0 : i64, scratch_operands = 2 : i64, tpu.core_type = #tpu.core_type<tc>, window_params = [{transform_indices = @transform_0, window_bounds = array<i64: 256, 128>}, {pipeline_mode = #tpu.pipeline_mode<synchronous>, transform_indices = @transform_1, window_bounds = array<i64: 1152, 128>}, {transform_indices = @transform_2, window_bounds = array<i64: 256, 128>}, {transform_indices = @transform_3, window_bounds = array<i64: 1, 2, 128>}]} {
    %c0 = arith.constant 0 : index
    %c0_0 = arith.constant 0 : index
    %0 = vector.load %arg1[%c0, %c0_0] : memref<256x128xf32, #tpu.memory_space<vmem>>, vector<256x128xf32>
    %1 = arith.truncf %0 : vector<256x128xf32> to vector<256x128xbf16>
    %cst = arith.constant 0.000000e+00 : bf16
    %2 = vector.broadcast %cst : bf16 to vector<32x128xbf16>
    %c0_1 = arith.constant 0 : index
    %c0_2 = arith.constant 0 : index
    %3 = vector.load %arg5[%c0_1, %c0_2] : memref<320x128xbf16, #tpu.memory_space<vmem>>, vector<32x128xbf16>
    tpu.vector_store %arg5[%c0_1, %c0_2], %2 {strides = array<i32>} : memref<320x128xbf16, #tpu.memory_space<vmem>>, vector<32x128xbf16>,
    %cst_3 = arith.constant 0.000000e+00 : bf16
    %4 = vector.broadcast %cst_3 : bf16 to vector<32x128xbf16>
    %c288 = arith.constant 288 : index
    %c0_4 = arith.constant 0 : index
    %5 = vector.load %arg5[%c288, %c0_4] : memref<320x128xbf16, #tpu.memory_space<vmem>>, vector<32x128xbf16>
    tpu.vector_store %arg5[%c288, %c0_4], %4 {strides = array<i32>} : memref<320x128xbf16, #tpu.memory_space<vmem>>, vector<32x128xbf16>,
    %c32 = arith.constant 32 : index
    %c0_5 = arith.constant 0 : index
    %6 = vector.load %arg5[%c32, %c0_5] : memref<320x128xbf16, #tpu.memory_space<vmem>>, vector<256x128xbf16>
    tpu.vector_store %arg5[%c32, %c0_5], %1 {strides = array<i32>} : memref<320x128xbf16, #tpu.memory_space<vmem>>, vector<256x128xbf16>,
    %7 = tpu.iota {dimensions = array<i32: 0>} : vector<256x128xi32>
    %c16_i32 = arith.constant 16 : i32
    %c0_i32 = arith.constant 0 : i32
    %8 = arith.cmpi eq, %c16_i32, %c0_i32 : i32
    %c1_i32 = arith.constant 1 : i32
    %9 = arith.select %8, %c1_i32, %c16_i32 : i32
    %10 = vector.broadcast %9 : i32 to vector<256x128xi32>
    %11 = arith.remsi %7, %10 : vector<256x128xi32>
    %c0_i32_6 = arith.constant 0 : i32
    %12 = vector.broadcast %c0_i32_6 : i32 to vector<256x128xi32>
    %13 = arith.cmpi ne, %11, %12 : vector<256x128xi32>
    %c0_i32_7 = arith.constant 0 : i32
    %14 = vector.broadcast %c0_i32_7 : i32 to vector<256x128xi32>
    %15 = arith.cmpi slt, %11, %14 : vector<256x128xi32>
    %c0_i32_8 = arith.constant 0 : i32
    %16 = arith.cmpi slt, %9, %c0_i32_8 : i32
    %17 = vector.broadcast %16 : i1 to vector<256x128xi1>
    %18 = vector.broadcast %17 : vector<256x128xi1> to vector<256x128xi1>
    %19 = arith.xori %15, %18 : vector<256x128xi1>
    %20 = arith.andi %19, %13 : vector<256x128xi1>
    %21 = vector.broadcast %9 : i32 to vector<256x128xi32>
    %22 = arith.addi %11, %21 : vector<256x128xi32>
    %23 = arith.select %20, %22, %11 : vector<256x128xi1>, vector<256x128xi32>
    %c0_i32_9 = arith.constant 0 : i32
    %24 = vector.broadcast %c0_i32_9 : i32 to vector<256x128xi32>
    %25 = arith.cmpi sgt, %23, %24 : vector<256x128xi32>
    %26 = arith.extui %25 : vector<256x128xi1> to vector<256x128xi32>
    %27 = arith.sitofp %26 : vector<256x128xi32> to vector<256x128xf32>
    %28 = arith.truncf %27 : vector<256x128xf32> to vector<256x128xbf16>
    %c15_i32 = arith.constant 15 : i32
    %29 = vector.broadcast %c15_i32 : i32 to vector<256x128xi32>
    %30 = arith.cmpi slt, %23, %29 : vector<256x128xi32>
    %31 = arith.extui %30 : vector<256x128xi1> to vector<256x128xi32>
    %32 = arith.sitofp %31 : vector<256x128xi32> to vector<256x128xf32>
    %33 = arith.truncf %32 : vector<256x128xf32> to vector<256x128xbf16>
    %c15 = arith.constant 15 : index
    %c0_10 = arith.constant 0 : index
    %34 = vector.load %arg5[%c15, %c0_10] : memref<320x128xbf16, #tpu.memory_space<vmem>>, vector<256x128xbf16>
    %35 = arith.mulf %34, %28 : vector<256x128xbf16>
    %c0_11 = arith.constant 0 : index
    %c0_12 = arith.constant 0 : index
    %36 = vector.load %arg2[%c0_11, %c0_12] : memref<1152x128xbf16, #tpu.memory_space<vmem>>, vector<128x128xbf16>
    %cst_13 = arith.constant dense<0.000000e+00> : vector<256x128xf32>
    %37 = tpu.matmul %35, %36, %cst_13 {dimension_numbers = #tpu.dot_dimension_numbers<[1], [0], [0], [1], [0, 0, 1, 1], [], []>} : vector<256x128xbf16>, vector<128x128xbf16>, vector<256x128xf32> -> vector<256x128xf32>
    %c0_14 = arith.constant 0 : index
    %c0_15 = arith.constant 0 : index
    %38 = vector.load %arg6[%c0_14, %c0_15] : memref<256x128xf32, #tpu.memory_space<vmem>>, vector<256x128xf32>
    tpu.vector_store %arg6[%c0_14, %c0_15], %37 {strides = array<i32>} : memref<256x128xf32, #tpu.memory_space<vmem>>, vector<256x128xf32>,
    %c16 = arith.constant 16 : index
    %c0_16 = arith.constant 0 : index
    %39 = vector.load %arg5[%c16, %c0_16] : memref<320x128xbf16, #tpu.memory_space<vmem>>, vector<256x128xbf16>
    %c128 = arith.constant 128 : index
    %c0_17 = arith.constant 0 : index
    %40 = vector.load %arg2[%c128, %c0_17] : memref<1152x128xbf16, #tpu.memory_space<vmem>>, vector<128x128xbf16>
    %cst_18 = arith.constant dense<0.000000e+00> : vector<256x128xf32>
    %41 = tpu.matmul %39, %40, %cst_18 {dimension_numbers = #tpu.dot_dimension_numbers<[1], [0], [0], [1], [0, 0, 1, 1], [], []>} : vector<256x128xbf16>, vector<128x128xbf16>, vector<256x128xf32> -> vector<256x128xf32>
    %c0_19 = arith.constant 0 : index
    %c0_20 = arith.constant 0 : index
    %42 = vector.load %arg6[%c0_19, %c0_20] : memref<256x128xf32, #tpu.memory_space<vmem>>, vector<256x128xf32>
    %43 = arith.addf %42, %41 : vector<256x128xf32>
    %c0_21 = arith.constant 0 : index
    %c0_22 = arith.constant 0 : index
    %44 = vector.load %arg6[%c0_21, %c0_22] : memref<256x128xf32, #tpu.memory_space<vmem>>, vector<256x128xf32>
    tpu.vector_store %arg6[%c0_21, %c0_22], %43 {strides = array<i32>} : memref<256x128xf32, #tpu.memory_space<vmem>>, vector<256x128xf32>,
    %c17 = arith.constant 17 : index
    %c0_23 = arith.constant 0 : index
    %45 = vector.load %arg5[%c17, %c0_23] : memref<320x128xbf16, #tpu.memory_space<vmem>>, vector<256x128xbf16>
    %46 = arith.mulf %45, %33 : vector<256x128xbf16>
    %c256 = arith.constant 256 : index
    %c0_24 = arith.constant 0 : index
    %47 = vector.load %arg2[%c256, %c0_24] : memref<1152x128xbf16, #tpu.memory_space<vmem>>, vector<128x128xbf16>
    %cst_25 = arith.constant dense<0.000000e+00> : vector<256x128xf32>
    %48 = tpu.matmul %46, %47, %cst_25 {dimension_numbers = #tpu.dot_dimension_numbers<[1], [0], [0], [1], [0, 0, 1, 1], [], []>} : vector<256x128xbf16>, vector<128x128xbf16>, vector<256x128xf32> -> vector<256x128xf32>
    %c0_26 = arith.constant 0 : index
    %c0_27 = arith.constant 0 : index
    %49 = vector.load %arg6[%c0_26, %c0_27] : memref<256x128xf32, #tpu.memory_space<vmem>>, vector<256x128xf32>
    %50 = arith.addf %49, %48 : vector<256x128xf32>
    %c0_28 = arith.constant 0 : index
    %c0_29 = arith.constant 0 : index
    %51 = vector.load %arg6[%c0_28, %c0_29] : memref<256x128xf32, #tpu.memory_space<vmem>>, vector<256x128xf32>
    tpu.vector_store %arg6[%c0_28, %c0_29], %50 {strides = array<i32>} : memref<256x128xf32, #tpu.memory_space<vmem>>, vector<256x128xf32>,
    %c31 = arith.constant 31 : index
    %c0_30 = arith.constant 0 : index
    %52 = vector.load %arg5[%c31, %c0_30] : memref<320x128xbf16, #tpu.memory_space<vmem>>, vector<256x128xbf16>
    %53 = arith.mulf %52, %28 : vector<256x128xbf16>
    %c384 = arith.constant 384 : index
    %c0_31 = arith.constant 0 : index
    %54 = vector.load %arg2[%c384, %c0_31] : memref<1152x128xbf16, #tpu.memory_space<vmem>>, vector<128x128xbf16>
    %cst_32 = arith.constant dense<0.000000e+00> : vector<256x128xf32>
    %55 = tpu.matmul %53, %54, %cst_32 {dimension_numbers = #tpu.dot_dimension_numbers<[1], [0], [0], [1], [0, 0, 1, 1], [], []>} : vector<256x128xbf16>, vector<128x128xbf16>, vector<256x128xf32> -> vector<256x128xf32>
    %c0_33 = arith.constant 0 : index
    %c0_34 = arith.constant 0 : index
    %56 = vector.load %arg6[%c0_33, %c0_34] : memref<256x128xf32, #tpu.memory_space<vmem>>, vector<256x128xf32>
    %57 = arith.addf %56, %55 : vector<256x128xf32>
    %c0_35 = arith.constant 0 : index
    %c0_36 = arith.constant 0 : index
    %58 = vector.load %arg6[%c0_35, %c0_36] : memref<256x128xf32, #tpu.memory_space<vmem>>, vector<256x128xf32>
    tpu.vector_store %arg6[%c0_35, %c0_36], %57 {strides = array<i32>} : memref<256x128xf32, #tpu.memory_space<vmem>>, vector<256x128xf32>,
    %c32_37 = arith.constant 32 : index
    %c0_38 = arith.constant 0 : index
    %59 = vector.load %arg5[%c32_37, %c0_38] : memref<320x128xbf16, #tpu.memory_space<vmem>>, vector<256x128xbf16>
    %c512 = arith.constant 512 : index
    %c0_39 = arith.constant 0 : index
    %60 = vector.load %arg2[%c512, %c0_39] : memref<1152x128xbf16, #tpu.memory_space<vmem>>, vector<128x128xbf16>
    %cst_40 = arith.constant dense<0.000000e+00> : vector<256x128xf32>
    %61 = tpu.matmul %59, %60, %cst_40 {dimension_numbers = #tpu.dot_dimension_numbers<[1], [0], [0], [1], [0, 0, 1, 1], [], []>} : vector<256x128xbf16>, vector<128x128xbf16>, vector<256x128xf32> -> vector<256x128xf32>
    %c0_41 = arith.constant 0 : index
    %c0_42 = arith.constant 0 : index
    %62 = vector.load %arg6[%c0_41, %c0_42] : memref<256x128xf32, #tpu.memory_space<vmem>>, vector<256x128xf32>
    %63 = arith.addf %62, %61 : vector<256x128xf32>
    %c0_43 = arith.constant 0 : index
    %c0_44 = arith.constant 0 : index
    %64 = vector.load %arg6[%c0_43, %c0_44] : memref<256x128xf32, #tpu.memory_space<vmem>>, vector<256x128xf32>
    tpu.vector_store %arg6[%c0_43, %c0_44], %63 {strides = array<i32>} : memref<256x128xf32, #tpu.memory_space<vmem>>, vector<256x128xf32>,
    %c33 = arith.constant 33 : index
    %c0_45 = arith.constant 0 : index
    %65 = vector.load %arg5[%c33, %c0_45] : memref<320x128xbf16, #tpu.memory_space<vmem>>, vector<256x128xbf16>
    %66 = arith.mulf %65, %33 : vector<256x128xbf16>
    %c640 = arith.constant 640 : index
    %c0_46 = arith.constant 0 : index
    %67 = vector.load %arg2[%c640, %c0_46] : memref<1152x128xbf16, #tpu.memory_space<vmem>>, vector<128x128xbf16>
    %cst_47 = arith.constant dense<0.000000e+00> : vector<256x128xf32>
    %68 = tpu.matmul %66, %67, %cst_47 {dimension_numbers = #tpu.dot_dimension_numbers<[1], [0], [0], [1], [0, 0, 1, 1], [], []>} : vector<256x128xbf16>, vector<128x128xbf16>, vector<256x128xf32> -> vector<256x128xf32>
    %c0_48 = arith.constant 0 : index
    %c0_49 = arith.constant 0 : index
    %69 = vector.load %arg6[%c0_48, %c0_49] : memref<256x128xf32, #tpu.memory_space<vmem>>, vector<256x128xf32>
    %70 = arith.addf %69, %68 : vector<256x128xf32>
    %c0_50 = arith.constant 0 : index
    %c0_51 = arith.constant 0 : index
    %71 = vector.load %arg6[%c0_50, %c0_51] : memref<256x128xf32, #tpu.memory_space<vmem>>, vector<256x128xf32>
    tpu.vector_store %arg6[%c0_50, %c0_51], %70 {strides = array<i32>} : memref<256x128xf32, #tpu.memory_space<vmem>>, vector<256x128xf32>,
    %c47 = arith.constant 47 : index
    %c0_52 = arith.constant 0 : index
    %72 = vector.load %arg5[%c47, %c0_52] : memref<320x128xbf16, #tpu.memory_space<vmem>>, vector<256x128xbf16>
    %73 = arith.mulf %72, %28 : vector<256x128xbf16>
    %c768 = arith.constant 768 : index
    %c0_53 = arith.constant 0 : index
    %74 = vector.load %arg2[%c768, %c0_53] : memref<1152x128xbf16, #tpu.memory_space<vmem>>, vector<128x128xbf16>
    %cst_54 = arith.constant dense<0.000000e+00> : vector<256x128xf32>
    %75 = tpu.matmul %73, %74, %cst_54 {dimension_numbers = #tpu.dot_dimension_numbers<[1], [0], [0], [1], [0, 0, 1, 1], [], []>} : vector<256x128xbf16>, vector<128x128xbf16>, vector<256x128xf32> -> vector<256x128xf32>
    %c0_55 = arith.constant 0 : index
    %c0_56 = arith.constant 0 : index
    %76 = vector.load %arg6[%c0_55, %c0_56] : memref<256x128xf32, #tpu.memory_space<vmem>>, vector<256x128xf32>
    %77 = arith.addf %76, %75 : vector<256x128xf32>
    %c0_57 = arith.constant 0 : index
    %c0_58 = arith.constant 0 : index
    %78 = vector.load %arg6[%c0_57, %c0_58] : memref<256x128xf32, #tpu.memory_space<vmem>>, vector<256x128xf32>
    tpu.vector_store %arg6[%c0_57, %c0_58], %77 {strides = array<i32>} : memref<256x128xf32, #tpu.memory_space<vmem>>, vector<256x128xf32>,
    %c48 = arith.constant 48 : index
    %c0_59 = arith.constant 0 : index
    %79 = vector.load %arg5[%c48, %c0_59] : memref<320x128xbf16, #tpu.memory_space<vmem>>, vector<256x128xbf16>
    %c896 = arith.constant 896 : index
    %c0_60 = arith.constant 0 : index
    %80 = vector.load %arg2[%c896, %c0_60] : memref<1152x128xbf16, #tpu.memory_space<vmem>>, vector<128x128xbf16>
    %cst_61 = arith.constant dense<0.000000e+00> : vector<256x128xf32>
    %81 = tpu.matmul %79, %80, %cst_61 {dimension_numbers = #tpu.dot_dimension_numbers<[1], [0], [0], [1], [0, 0, 1, 1], [], []>} : vector<256x128xbf16>, vector<128x128xbf16>, vector<256x128xf32> -> vector<256x128xf32>
    %c0_62 = arith.constant 0 : index
    %c0_63 = arith.constant 0 : index
    %82 = vector.load %arg6[%c0_62, %c0_63] : memref<256x128xf32, #tpu.memory_space<vmem>>, vector<256x128xf32>
    %83 = arith.addf %82, %81 : vector<256x128xf32>
    %c0_64 = arith.constant 0 : index
    %c0_65 = arith.constant 0 : index
    %84 = vector.load %arg6[%c0_64, %c0_65] : memref<256x128xf32, #tpu.memory_space<vmem>>, vector<256x128xf32>
    tpu.vector_store %arg6[%c0_64, %c0_65], %83 {strides = array<i32>} : memref<256x128xf32, #tpu.memory_space<vmem>>, vector<256x128xf32>,
    %c49 = arith.constant 49 : index
    %c0_66 = arith.constant 0 : index
    %85 = vector.load %arg5[%c49, %c0_66] : memref<320x128xbf16, #tpu.memory_space<vmem>>, vector<256x128xbf16>
    %86 = arith.mulf %85, %33 : vector<256x128xbf16>
    %c1024 = arith.constant 1024 : index
    %c0_67 = arith.constant 0 : index
    %87 = vector.load %arg2[%c1024, %c0_67] : memref<1152x128xbf16, #tpu.memory_space<vmem>>, vector<128x128xbf16>
    %cst_68 = arith.constant dense<0.000000e+00> : vector<256x128xf32>
    %88 = tpu.matmul %86, %87, %cst_68 {dimension_numbers = #tpu.dot_dimension_numbers<[1], [0], [0], [1], [0, 0, 1, 1], [], []>} : vector<256x128xbf16>, vector<128x128xbf16>, vector<256x128xf32> -> vector<256x128xf32>
    %c0_69 = arith.constant 0 : index
    %c0_70 = arith.constant 0 : index
    %89 = vector.load %arg6[%c0_69, %c0_70] : memref<256x128xf32, #tpu.memory_space<vmem>>, vector<256x128xf32>
    %90 = arith.addf %89, %88 : vector<256x128xf32>
    %c0_71 = arith.constant 0 : index
    %c0_72 = arith.constant 0 : index
    %91 = vector.load %arg6[%c0_71, %c0_72] : memref<256x128xf32, #tpu.memory_space<vmem>>, vector<256x128xf32>
    tpu.vector_store %arg6[%c0_71, %c0_72], %90 {strides = array<i32>} : memref<256x128xf32, #tpu.memory_space<vmem>>, vector<256x128xf32>,
    %c0_73 = arith.constant 0 : index
    %c0_74 = arith.constant 0 : index
    %92 = vector.load %arg6[%c0_73, %c0_74] : memref<256x128xf32, #tpu.memory_space<vmem>>, vector<256x128xf32>
    %93 = arith.truncf %92 : vector<256x128xf32> to vector<256x128xbf16>
    %c0_75 = arith.constant 0 : index
    %c0_76 = arith.constant 0 : index
    %94 = vector.load %arg3[%c0_75, %c0_76] : memref<256x128xbf16, #tpu.memory_space<vmem>>, vector<256x128xbf16>
    tpu.vector_store %arg3[%c0_75, %c0_76], %93 {strides = array<i32>} : memref<256x128xbf16, #tpu.memory_space<vmem>>, vector<256x128xbf16>,
    %cst_77 = arith.constant dense<0.000000e+00> : vector<128xf32>
    %95 = vector.multi_reduction <add>, %92, %cst_77 [0] : vector<256x128xf32> to vector<128xf32>
    %96 = vector.shape_cast %95 : vector<128xf32> to vector<1x128xf32>
    %cst_78 = arith.constant 2.560000e+02 : f32
    %97 = vector.broadcast %cst_78 : f32 to vector<1x128xf32>
    %98 = arith.divf %96, %97 : vector<1x128xf32>
    %99 = vector.broadcast %98 : vector<1x128xf32> to vector<256x128xf32>
    %100 = arith.subf %92, %99 : vector<256x128xf32>
    %101 = vector.broadcast %98 : vector<1x128xf32> to vector<256x128xf32>
    %102 = arith.subf %92, %101 : vector<256x128xf32>
    %103 = arith.mulf %100, %102 : vector<256x128xf32>
    %cst_79 = arith.constant dense<0.000000e+00> : vector<128xf32>
    %104 = vector.multi_reduction <add>, %103, %cst_79 [0] : vector<256x128xf32> to vector<128xf32>
    %105 = vector.shape_cast %104 : vector<128xf32> to vector<1x128xf32>
    %106 = tpu.concatenate %98, %105 in 0 : vector<1x128xf32>, vector<1x128xf32> -> vector<2x128xf32>
    %c0_80 = arith.constant 0 : index
    %c0_81 = arith.constant 0 : index
    %c0_82 = arith.constant 0 : index
    %107 = vector.load %arg4[%c0_80, %c0_81, %c0_82] : memref<1x2x128xf32, #tpu.memory_space<vmem>>, vector<1x2x128xf32>
    %108 = vector.shape_cast %107 : vector<1x2x128xf32> to vector<2x128xf32>
    %109 = vector.shape_cast %106 : vector<2x128xf32> to vector<1x2x128xf32>
    tpu.vector_store %arg4[%c0_80, %c0_81, %c0_82], %109 {strides = array<i32>} : memref<1x2x128xf32, #tpu.memory_space<vmem>>, vector<1x2x128xf32>,
    return
  }
  func.func @transform_0(%arg0: i32) -> (i32, i32) {
    %c0_i32 = arith.constant 0 : i32
    %c0_i32_0 = arith.constant 0 : i32
    return %arg0, %c0_i32 : i32, i32
  }
  func.func @transform_1(%arg0: i32) -> (i32, i32) {
    %c0_i32 = arith.constant 0 : i32
    %c0_i32_0 = arith.constant 0 : i32
    %c0_i32_1 = arith.constant 0 : i32
    return %c0_i32, %c0_i32_0 : i32, i32
  }
  func.func @transform_2(%arg0: i32) -> (i32, i32) {
    %c0_i32 = arith.constant 0 : i32
    %c0_i32_0 = arith.constant 0 : i32
    return %arg0, %c0_i32 : i32, i32
  }
  func.func @transform_3(%arg0: i32) -> (i32, i32, i32) {
    %c0_i32 = arith.constant 0 : i32
    %c0_i32_0 = arith.constant 0 : i32
    %c0_i32_1 = arith.constant 0 : i32
    return %arg0, %c0_i32, %c0_i32_0 : i32, i32, i32
  }
}

module attributes {stable_mosaic.version = 11 : i64} {
  func.func @bn_add_relu_kernel(%arg0: i32, %arg1: memref<256x128xbf16, #tpu.memory_space<vmem>>, %arg2: memref<2x128xf32, #tpu.memory_space<vmem>>, %arg3: memref<256x128xf32, #tpu.memory_space<vmem>>, %arg4: memref<256x128xf32, #tpu.memory_space<vmem>>) attributes {dimension_semantics = [#tpu.dimension_semantics<parallel>], iteration_bounds = array<i64: 2>, scalar_prefetch = 0 : i64, scratch_operands = 0 : i64, tpu.core_type = #tpu.core_type<tc>, window_params = [{transform_indices = @transform_0, window_bounds = array<i64: 256, 128>}, {pipeline_mode = #tpu.pipeline_mode<synchronous>, transform_indices = @transform_1, window_bounds = array<i64: 2, 128>}, {transform_indices = @transform_2, window_bounds = array<i64: 256, 128>}, {transform_indices = @transform_3, window_bounds = array<i64: 256, 128>}]} {
    %c0 = arith.constant 0 : index
    %c0_0 = arith.constant 0 : index
    %0 = vector.load %arg2[%c0, %c0_0] : memref<2x128xf32, #tpu.memory_space<vmem>>, vector<1x128xf32>
    %c1 = arith.constant 1 : index
    %c0_1 = arith.constant 0 : index
    %1 = vector.load %arg2[%c1, %c0_1] : memref<2x128xf32, #tpu.memory_space<vmem>>, vector<1x128xf32>
    %c0_2 = arith.constant 0 : index
    %c0_3 = arith.constant 0 : index
    %2 = vector.load %arg1[%c0_2, %c0_3] : memref<256x128xbf16, #tpu.memory_space<vmem>>, vector<256x128xbf16>
    %3 = arith.extf %2 : vector<256x128xbf16> to vector<256x128xf32>
    %4 = vector.broadcast %0 : vector<1x128xf32> to vector<256x128xf32>
    %5 = arith.mulf %3, %4 : vector<256x128xf32>
    %6 = vector.broadcast %1 : vector<1x128xf32> to vector<256x128xf32>
    %7 = arith.addf %5, %6 : vector<256x128xf32>
    %c0_4 = arith.constant 0 : index
    %c0_5 = arith.constant 0 : index
    %8 = vector.load %arg3[%c0_4, %c0_5] : memref<256x128xf32, #tpu.memory_space<vmem>>, vector<256x128xf32>
    %9 = arith.addf %7, %8 : vector<256x128xf32>
    %cst = arith.constant 0.000000e+00 : f32
    %10 = vector.broadcast %cst : f32 to vector<256x128xf32>
    %11 = arith.maximumf %9, %10 : vector<256x128xf32>
    %c0_6 = arith.constant 0 : index
    %c0_7 = arith.constant 0 : index
    %12 = vector.load %arg4[%c0_6, %c0_7] : memref<256x128xf32, #tpu.memory_space<vmem>>, vector<256x128xf32>
    tpu.vector_store %arg4[%c0_6, %c0_7], %11 {strides = array<i32>} : memref<256x128xf32, #tpu.memory_space<vmem>>, vector<256x128xf32>,
    return
  }
  func.func @transform_0(%arg0: i32) -> (i32, i32) {
    %c0_i32 = arith.constant 0 : i32
    %c0_i32_0 = arith.constant 0 : i32
    return %arg0, %c0_i32 : i32, i32
  }
  func.func @transform_1(%arg0: i32) -> (i32, i32) {
    %c0_i32 = arith.constant 0 : i32
    %c0_i32_0 = arith.constant 0 : i32
    %c0_i32_1 = arith.constant 0 : i32
    return %c0_i32, %c0_i32_0 : i32, i32
  }
  func.func @transform_2(%arg0: i32) -> (i32, i32) {
    %c0_i32 = arith.constant 0 : i32
    %c0_i32_0 = arith.constant 0 : i32
    return %arg0, %c0_i32 : i32, i32
  }
  func.func @transform_3(%arg0: i32) -> (i32, i32) {
    %c0_i32 = arith.constant 0 : i32
    %c0_i32_0 = arith.constant 0 : i32
    return %arg0, %c0_i32 : i32, i32
  }
}

module attributes {stable_mosaic.version = 11 : i64} {
  func.func @kernel(%arg0: i32, %arg1: memref<256x128xbf16, #tpu.memory_space<vmem>>, %arg2: memref<2x128xf32, #tpu.memory_space<vmem>>, %arg3: memref<1152x128xbf16, #tpu.memory_space<vmem>>, %arg4: memref<256x128xbf16, #tpu.memory_space<vmem>>, %arg5: memref<1x2x128xf32, #tpu.memory_space<vmem>>, %arg6: memref<320x128xbf16, #tpu.memory_space<vmem>>, %arg7: memref<256x128xf32, #tpu.memory_space<vmem>>) attributes {dimension_semantics = [#tpu.dimension_semantics<parallel>], iteration_bounds = array<i64: 2>, scalar_prefetch = 0 : i64, scratch_operands = 2 : i64, tpu.core_type = #tpu.core_type<tc>, window_params = [{transform_indices = @transform_0, window_bounds = array<i64: 256, 128>}, {pipeline_mode = #tpu.pipeline_mode<synchronous>, transform_indices = @transform_1, window_bounds = array<i64: 2, 128>}, {pipeline_mode = #tpu.pipeline_mode<synchronous>, transform_indices = @transform_2, window_bounds = array<i64: 1152, 128>}, {transform_indices = @transform_3, window_bounds = array<i64: 256, 128>}, {transform_indices = @transform_4, window_bounds = array<i64: 1, 2, 128>}]} {
    %c0 = arith.constant 0 : index
    %c0_0 = arith.constant 0 : index
    %0 = vector.load %arg1[%c0, %c0_0] : memref<256x128xbf16, #tpu.memory_space<vmem>>, vector<256x128xbf16>
    %c0_1 = arith.constant 0 : index
    %c0_2 = arith.constant 0 : index
    %1 = vector.load %arg2[%c0_1, %c0_2] : memref<2x128xf32, #tpu.memory_space<vmem>>, vector<1x128xf32>
    %c1 = arith.constant 1 : index
    %c0_3 = arith.constant 0 : index
    %2 = vector.load %arg2[%c1, %c0_3] : memref<2x128xf32, #tpu.memory_space<vmem>>, vector<1x128xf32>
    %3 = arith.extf %0 : vector<256x128xbf16> to vector<256x128xf32>
    %4 = vector.broadcast %1 : vector<1x128xf32> to vector<256x128xf32>
    %5 = arith.mulf %3, %4 : vector<256x128xf32>
    %6 = vector.broadcast %2 : vector<1x128xf32> to vector<256x128xf32>
    %7 = arith.addf %5, %6 : vector<256x128xf32>
    %cst = arith.constant 0.000000e+00 : f32
    %8 = vector.broadcast %cst : f32 to vector<256x128xf32>
    %9 = arith.maximumf %7, %8 : vector<256x128xf32>
    %10 = arith.truncf %9 : vector<256x128xf32> to vector<256x128xbf16>
    %cst_4 = arith.constant 0.000000e+00 : bf16
    %11 = vector.broadcast %cst_4 : bf16 to vector<32x128xbf16>
    %c0_5 = arith.constant 0 : index
    %c0_6 = arith.constant 0 : index
    %12 = vector.load %arg6[%c0_5, %c0_6] : memref<320x128xbf16, #tpu.memory_space<vmem>>, vector<32x128xbf16>
    tpu.vector_store %arg6[%c0_5, %c0_6], %11 {strides = array<i32>} : memref<320x128xbf16, #tpu.memory_space<vmem>>, vector<32x128xbf16>,
    %cst_7 = arith.constant 0.000000e+00 : bf16
    %13 = vector.broadcast %cst_7 : bf16 to vector<32x128xbf16>
    %c288 = arith.constant 288 : index
    %c0_8 = arith.constant 0 : index
    %14 = vector.load %arg6[%c288, %c0_8] : memref<320x128xbf16, #tpu.memory_space<vmem>>, vector<32x128xbf16>
    tpu.vector_store %arg6[%c288, %c0_8], %13 {strides = array<i32>} : memref<320x128xbf16, #tpu.memory_space<vmem>>, vector<32x128xbf16>,
    %c32 = arith.constant 32 : index
    %c0_9 = arith.constant 0 : index
    %15 = vector.load %arg6[%c32, %c0_9] : memref<320x128xbf16, #tpu.memory_space<vmem>>, vector<256x128xbf16>
    tpu.vector_store %arg6[%c32, %c0_9], %10 {strides = array<i32>} : memref<320x128xbf16, #tpu.memory_space<vmem>>, vector<256x128xbf16>,
    %16 = tpu.iota {dimensions = array<i32: 0>} : vector<256x128xi32>
    %c16_i32 = arith.constant 16 : i32
    %c0_i32 = arith.constant 0 : i32
    %17 = arith.cmpi eq, %c16_i32, %c0_i32 : i32
    %c1_i32 = arith.constant 1 : i32
    %18 = arith.select %17, %c1_i32, %c16_i32 : i32
    %19 = vector.broadcast %18 : i32 to vector<256x128xi32>
    %20 = arith.remsi %16, %19 : vector<256x128xi32>
    %c0_i32_10 = arith.constant 0 : i32
    %21 = vector.broadcast %c0_i32_10 : i32 to vector<256x128xi32>
    %22 = arith.cmpi ne, %20, %21 : vector<256x128xi32>
    %c0_i32_11 = arith.constant 0 : i32
    %23 = vector.broadcast %c0_i32_11 : i32 to vector<256x128xi32>
    %24 = arith.cmpi slt, %20, %23 : vector<256x128xi32>
    %c0_i32_12 = arith.constant 0 : i32
    %25 = arith.cmpi slt, %18, %c0_i32_12 : i32
    %26 = vector.broadcast %25 : i1 to vector<256x128xi1>
    %27 = vector.broadcast %26 : vector<256x128xi1> to vector<256x128xi1>
    %28 = arith.xori %24, %27 : vector<256x128xi1>
    %29 = arith.andi %28, %22 : vector<256x128xi1>
    %30 = vector.broadcast %18 : i32 to vector<256x128xi32>
    %31 = arith.addi %20, %30 : vector<256x128xi32>
    %32 = arith.select %29, %31, %20 : vector<256x128xi1>, vector<256x128xi32>
    %c0_i32_13 = arith.constant 0 : i32
    %33 = vector.broadcast %c0_i32_13 : i32 to vector<256x128xi32>
    %34 = arith.cmpi sgt, %32, %33 : vector<256x128xi32>
    %35 = arith.extui %34 : vector<256x128xi1> to vector<256x128xi32>
    %36 = arith.sitofp %35 : vector<256x128xi32> to vector<256x128xf32>
    %37 = arith.truncf %36 : vector<256x128xf32> to vector<256x128xbf16>
    %c15_i32 = arith.constant 15 : i32
    %38 = vector.broadcast %c15_i32 : i32 to vector<256x128xi32>
    %39 = arith.cmpi slt, %32, %38 : vector<256x128xi32>
    %40 = arith.extui %39 : vector<256x128xi1> to vector<256x128xi32>
    %41 = arith.sitofp %40 : vector<256x128xi32> to vector<256x128xf32>
    %42 = arith.truncf %41 : vector<256x128xf32> to vector<256x128xbf16>
    %c15 = arith.constant 15 : index
    %c0_14 = arith.constant 0 : index
    %43 = vector.load %arg6[%c15, %c0_14] : memref<320x128xbf16, #tpu.memory_space<vmem>>, vector<256x128xbf16>
    %44 = arith.mulf %43, %37 : vector<256x128xbf16>
    %c0_15 = arith.constant 0 : index
    %c0_16 = arith.constant 0 : index
    %45 = vector.load %arg3[%c0_15, %c0_16] : memref<1152x128xbf16, #tpu.memory_space<vmem>>, vector<128x128xbf16>
    %cst_17 = arith.constant dense<0.000000e+00> : vector<256x128xf32>
    %46 = tpu.matmul %44, %45, %cst_17 {dimension_numbers = #tpu.dot_dimension_numbers<[1], [0], [0], [1], [0, 0, 1, 1], [], []>} : vector<256x128xbf16>, vector<128x128xbf16>, vector<256x128xf32> -> vector<256x128xf32>
    %c0_18 = arith.constant 0 : index
    %c0_19 = arith.constant 0 : index
    %47 = vector.load %arg7[%c0_18, %c0_19] : memref<256x128xf32, #tpu.memory_space<vmem>>, vector<256x128xf32>
    tpu.vector_store %arg7[%c0_18, %c0_19], %46 {strides = array<i32>} : memref<256x128xf32, #tpu.memory_space<vmem>>, vector<256x128xf32>,
    %c16 = arith.constant 16 : index
    %c0_20 = arith.constant 0 : index
    %48 = vector.load %arg6[%c16, %c0_20] : memref<320x128xbf16, #tpu.memory_space<vmem>>, vector<256x128xbf16>
    %c128 = arith.constant 128 : index
    %c0_21 = arith.constant 0 : index
    %49 = vector.load %arg3[%c128, %c0_21] : memref<1152x128xbf16, #tpu.memory_space<vmem>>, vector<128x128xbf16>
    %cst_22 = arith.constant dense<0.000000e+00> : vector<256x128xf32>
    %50 = tpu.matmul %48, %49, %cst_22 {dimension_numbers = #tpu.dot_dimension_numbers<[1], [0], [0], [1], [0, 0, 1, 1], [], []>} : vector<256x128xbf16>, vector<128x128xbf16>, vector<256x128xf32> -> vector<256x128xf32>
    %c0_23 = arith.constant 0 : index
    %c0_24 = arith.constant 0 : index
    %51 = vector.load %arg7[%c0_23, %c0_24] : memref<256x128xf32, #tpu.memory_space<vmem>>, vector<256x128xf32>
    %52 = arith.addf %51, %50 : vector<256x128xf32>
    %c0_25 = arith.constant 0 : index
    %c0_26 = arith.constant 0 : index
    %53 = vector.load %arg7[%c0_25, %c0_26] : memref<256x128xf32, #tpu.memory_space<vmem>>, vector<256x128xf32>
    tpu.vector_store %arg7[%c0_25, %c0_26], %52 {strides = array<i32>} : memref<256x128xf32, #tpu.memory_space<vmem>>, vector<256x128xf32>,
    %c17 = arith.constant 17 : index
    %c0_27 = arith.constant 0 : index
    %54 = vector.load %arg6[%c17, %c0_27] : memref<320x128xbf16, #tpu.memory_space<vmem>>, vector<256x128xbf16>
    %55 = arith.mulf %54, %42 : vector<256x128xbf16>
    %c256 = arith.constant 256 : index
    %c0_28 = arith.constant 0 : index
    %56 = vector.load %arg3[%c256, %c0_28] : memref<1152x128xbf16, #tpu.memory_space<vmem>>, vector<128x128xbf16>
    %cst_29 = arith.constant dense<0.000000e+00> : vector<256x128xf32>
    %57 = tpu.matmul %55, %56, %cst_29 {dimension_numbers = #tpu.dot_dimension_numbers<[1], [0], [0], [1], [0, 0, 1, 1], [], []>} : vector<256x128xbf16>, vector<128x128xbf16>, vector<256x128xf32> -> vector<256x128xf32>
    %c0_30 = arith.constant 0 : index
    %c0_31 = arith.constant 0 : index
    %58 = vector.load %arg7[%c0_30, %c0_31] : memref<256x128xf32, #tpu.memory_space<vmem>>, vector<256x128xf32>
    %59 = arith.addf %58, %57 : vector<256x128xf32>
    %c0_32 = arith.constant 0 : index
    %c0_33 = arith.constant 0 : index
    %60 = vector.load %arg7[%c0_32, %c0_33] : memref<256x128xf32, #tpu.memory_space<vmem>>, vector<256x128xf32>
    tpu.vector_store %arg7[%c0_32, %c0_33], %59 {strides = array<i32>} : memref<256x128xf32, #tpu.memory_space<vmem>>, vector<256x128xf32>,
    %c31 = arith.constant 31 : index
    %c0_34 = arith.constant 0 : index
    %61 = vector.load %arg6[%c31, %c0_34] : memref<320x128xbf16, #tpu.memory_space<vmem>>, vector<256x128xbf16>
    %62 = arith.mulf %61, %37 : vector<256x128xbf16>
    %c384 = arith.constant 384 : index
    %c0_35 = arith.constant 0 : index
    %63 = vector.load %arg3[%c384, %c0_35] : memref<1152x128xbf16, #tpu.memory_space<vmem>>, vector<128x128xbf16>
    %cst_36 = arith.constant dense<0.000000e+00> : vector<256x128xf32>
    %64 = tpu.matmul %62, %63, %cst_36 {dimension_numbers = #tpu.dot_dimension_numbers<[1], [0], [0], [1], [0, 0, 1, 1], [], []>} : vector<256x128xbf16>, vector<128x128xbf16>, vector<256x128xf32> -> vector<256x128xf32>
    %c0_37 = arith.constant 0 : index
    %c0_38 = arith.constant 0 : index
    %65 = vector.load %arg7[%c0_37, %c0_38] : memref<256x128xf32, #tpu.memory_space<vmem>>, vector<256x128xf32>
    %66 = arith.addf %65, %64 : vector<256x128xf32>
    %c0_39 = arith.constant 0 : index
    %c0_40 = arith.constant 0 : index
    %67 = vector.load %arg7[%c0_39, %c0_40] : memref<256x128xf32, #tpu.memory_space<vmem>>, vector<256x128xf32>
    tpu.vector_store %arg7[%c0_39, %c0_40], %66 {strides = array<i32>} : memref<256x128xf32, #tpu.memory_space<vmem>>, vector<256x128xf32>,
    %c32_41 = arith.constant 32 : index
    %c0_42 = arith.constant 0 : index
    %68 = vector.load %arg6[%c32_41, %c0_42] : memref<320x128xbf16, #tpu.memory_space<vmem>>, vector<256x128xbf16>
    %c512 = arith.constant 512 : index
    %c0_43 = arith.constant 0 : index
    %69 = vector.load %arg3[%c512, %c0_43] : memref<1152x128xbf16, #tpu.memory_space<vmem>>, vector<128x128xbf16>
    %cst_44 = arith.constant dense<0.000000e+00> : vector<256x128xf32>
    %70 = tpu.matmul %68, %69, %cst_44 {dimension_numbers = #tpu.dot_dimension_numbers<[1], [0], [0], [1], [0, 0, 1, 1], [], []>} : vector<256x128xbf16>, vector<128x128xbf16>, vector<256x128xf32> -> vector<256x128xf32>
    %c0_45 = arith.constant 0 : index
    %c0_46 = arith.constant 0 : index
    %71 = vector.load %arg7[%c0_45, %c0_46] : memref<256x128xf32, #tpu.memory_space<vmem>>, vector<256x128xf32>
    %72 = arith.addf %71, %70 : vector<256x128xf32>
    %c0_47 = arith.constant 0 : index
    %c0_48 = arith.constant 0 : index
    %73 = vector.load %arg7[%c0_47, %c0_48] : memref<256x128xf32, #tpu.memory_space<vmem>>, vector<256x128xf32>
    tpu.vector_store %arg7[%c0_47, %c0_48], %72 {strides = array<i32>} : memref<256x128xf32, #tpu.memory_space<vmem>>, vector<256x128xf32>,
    %c33 = arith.constant 33 : index
    %c0_49 = arith.constant 0 : index
    %74 = vector.load %arg6[%c33, %c0_49] : memref<320x128xbf16, #tpu.memory_space<vmem>>, vector<256x128xbf16>
    %75 = arith.mulf %74, %42 : vector<256x128xbf16>
    %c640 = arith.constant 640 : index
    %c0_50 = arith.constant 0 : index
    %76 = vector.load %arg3[%c640, %c0_50] : memref<1152x128xbf16, #tpu.memory_space<vmem>>, vector<128x128xbf16>
    %cst_51 = arith.constant dense<0.000000e+00> : vector<256x128xf32>
    %77 = tpu.matmul %75, %76, %cst_51 {dimension_numbers = #tpu.dot_dimension_numbers<[1], [0], [0], [1], [0, 0, 1, 1], [], []>} : vector<256x128xbf16>, vector<128x128xbf16>, vector<256x128xf32> -> vector<256x128xf32>
    %c0_52 = arith.constant 0 : index
    %c0_53 = arith.constant 0 : index
    %78 = vector.load %arg7[%c0_52, %c0_53] : memref<256x128xf32, #tpu.memory_space<vmem>>, vector<256x128xf32>
    %79 = arith.addf %78, %77 : vector<256x128xf32>
    %c0_54 = arith.constant 0 : index
    %c0_55 = arith.constant 0 : index
    %80 = vector.load %arg7[%c0_54, %c0_55] : memref<256x128xf32, #tpu.memory_space<vmem>>, vector<256x128xf32>
    tpu.vector_store %arg7[%c0_54, %c0_55], %79 {strides = array<i32>} : memref<256x128xf32, #tpu.memory_space<vmem>>, vector<256x128xf32>,
    %c47 = arith.constant 47 : index
    %c0_56 = arith.constant 0 : index
    %81 = vector.load %arg6[%c47, %c0_56] : memref<320x128xbf16, #tpu.memory_space<vmem>>, vector<256x128xbf16>
    %82 = arith.mulf %81, %37 : vector<256x128xbf16>
    %c768 = arith.constant 768 : index
    %c0_57 = arith.constant 0 : index
    %83 = vector.load %arg3[%c768, %c0_57] : memref<1152x128xbf16, #tpu.memory_space<vmem>>, vector<128x128xbf16>
    %cst_58 = arith.constant dense<0.000000e+00> : vector<256x128xf32>
    %84 = tpu.matmul %82, %83, %cst_58 {dimension_numbers = #tpu.dot_dimension_numbers<[1], [0], [0], [1], [0, 0, 1, 1], [], []>} : vector<256x128xbf16>, vector<128x128xbf16>, vector<256x128xf32> -> vector<256x128xf32>
    %c0_59 = arith.constant 0 : index
    %c0_60 = arith.constant 0 : index
    %85 = vector.load %arg7[%c0_59, %c0_60] : memref<256x128xf32, #tpu.memory_space<vmem>>, vector<256x128xf32>
    %86 = arith.addf %85, %84 : vector<256x128xf32>
    %c0_61 = arith.constant 0 : index
    %c0_62 = arith.constant 0 : index
    %87 = vector.load %arg7[%c0_61, %c0_62] : memref<256x128xf32, #tpu.memory_space<vmem>>, vector<256x128xf32>
    tpu.vector_store %arg7[%c0_61, %c0_62], %86 {strides = array<i32>} : memref<256x128xf32, #tpu.memory_space<vmem>>, vector<256x128xf32>,
    %c48 = arith.constant 48 : index
    %c0_63 = arith.constant 0 : index
    %88 = vector.load %arg6[%c48, %c0_63] : memref<320x128xbf16, #tpu.memory_space<vmem>>, vector<256x128xbf16>
    %c896 = arith.constant 896 : index
    %c0_64 = arith.constant 0 : index
    %89 = vector.load %arg3[%c896, %c0_64] : memref<1152x128xbf16, #tpu.memory_space<vmem>>, vector<128x128xbf16>
    %cst_65 = arith.constant dense<0.000000e+00> : vector<256x128xf32>
    %90 = tpu.matmul %88, %89, %cst_65 {dimension_numbers = #tpu.dot_dimension_numbers<[1], [0], [0], [1], [0, 0, 1, 1], [], []>} : vector<256x128xbf16>, vector<128x128xbf16>, vector<256x128xf32> -> vector<256x128xf32>
    %c0_66 = arith.constant 0 : index
    %c0_67 = arith.constant 0 : index
    %91 = vector.load %arg7[%c0_66, %c0_67] : memref<256x128xf32, #tpu.memory_space<vmem>>, vector<256x128xf32>
    %92 = arith.addf %91, %90 : vector<256x128xf32>
    %c0_68 = arith.constant 0 : index
    %c0_69 = arith.constant 0 : index
    %93 = vector.load %arg7[%c0_68, %c0_69] : memref<256x128xf32, #tpu.memory_space<vmem>>, vector<256x128xf32>
    tpu.vector_store %arg7[%c0_68, %c0_69], %92 {strides = array<i32>} : memref<256x128xf32, #tpu.memory_space<vmem>>, vector<256x128xf32>,
    %c49 = arith.constant 49 : index
    %c0_70 = arith.constant 0 : index
    %94 = vector.load %arg6[%c49, %c0_70] : memref<320x128xbf16, #tpu.memory_space<vmem>>, vector<256x128xbf16>
    %95 = arith.mulf %94, %42 : vector<256x128xbf16>
    %c1024 = arith.constant 1024 : index
    %c0_71 = arith.constant 0 : index
    %96 = vector.load %arg3[%c1024, %c0_71] : memref<1152x128xbf16, #tpu.memory_space<vmem>>, vector<128x128xbf16>
    %cst_72 = arith.constant dense<0.000000e+00> : vector<256x128xf32>
    %97 = tpu.matmul %95, %96, %cst_72 {dimension_numbers = #tpu.dot_dimension_numbers<[1], [0], [0], [1], [0, 0, 1, 1], [], []>} : vector<256x128xbf16>, vector<128x128xbf16>, vector<256x128xf32> -> vector<256x128xf32>
    %c0_73 = arith.constant 0 : index
    %c0_74 = arith.constant 0 : index
    %98 = vector.load %arg7[%c0_73, %c0_74] : memref<256x128xf32, #tpu.memory_space<vmem>>, vector<256x128xf32>
    %99 = arith.addf %98, %97 : vector<256x128xf32>
    %c0_75 = arith.constant 0 : index
    %c0_76 = arith.constant 0 : index
    %100 = vector.load %arg7[%c0_75, %c0_76] : memref<256x128xf32, #tpu.memory_space<vmem>>, vector<256x128xf32>
    tpu.vector_store %arg7[%c0_75, %c0_76], %99 {strides = array<i32>} : memref<256x128xf32, #tpu.memory_space<vmem>>, vector<256x128xf32>,
    %c0_77 = arith.constant 0 : index
    %c0_78 = arith.constant 0 : index
    %101 = vector.load %arg7[%c0_77, %c0_78] : memref<256x128xf32, #tpu.memory_space<vmem>>, vector<256x128xf32>
    %102 = arith.truncf %101 : vector<256x128xf32> to vector<256x128xbf16>
    %c0_79 = arith.constant 0 : index
    %c0_80 = arith.constant 0 : index
    %103 = vector.load %arg4[%c0_79, %c0_80] : memref<256x128xbf16, #tpu.memory_space<vmem>>, vector<256x128xbf16>
    tpu.vector_store %arg4[%c0_79, %c0_80], %102 {strides = array<i32>} : memref<256x128xbf16, #tpu.memory_space<vmem>>, vector<256x128xbf16>,
    %cst_81 = arith.constant dense<0.000000e+00> : vector<128xf32>
    %104 = vector.multi_reduction <add>, %101, %cst_81 [0] : vector<256x128xf32> to vector<128xf32>
    %105 = vector.shape_cast %104 : vector<128xf32> to vector<1x128xf32>
    %cst_82 = arith.constant 2.560000e+02 : f32
    %106 = vector.broadcast %cst_82 : f32 to vector<1x128xf32>
    %107 = arith.divf %105, %106 : vector<1x128xf32>
    %108 = vector.broadcast %107 : vector<1x128xf32> to vector<256x128xf32>
    %109 = arith.subf %101, %108 : vector<256x128xf32>
    %110 = vector.broadcast %107 : vector<1x128xf32> to vector<256x128xf32>
    %111 = arith.subf %101, %110 : vector<256x128xf32>
    %112 = arith.mulf %109, %111 : vector<256x128xf32>
    %cst_83 = arith.constant dense<0.000000e+00> : vector<128xf32>
    %113 = vector.multi_reduction <add>, %112, %cst_83 [0] : vector<256x128xf32> to vector<128xf32>
    %114 = vector.shape_cast %113 : vector<128xf32> to vector<1x128xf32>
    %115 = tpu.concatenate %107, %114 in 0 : vector<1x128xf32>, vector<1x128xf32> -> vector<2x128xf32>
    %c0_84 = arith.constant 0 : index
    %c0_85 = arith.constant 0 : index
    %c0_86 = arith.constant 0 : index
    %116 = vector.load %arg5[%c0_84, %c0_85, %c0_86] : memref<1x2x128xf32, #tpu.memory_space<vmem>>, vector<1x2x128xf32>
    %117 = vector.shape_cast %116 : vector<1x2x128xf32> to vector<2x128xf32>
    %118 = vector.shape_cast %115 : vector<2x128xf32> to vector<1x2x128xf32>
    tpu.vector_store %arg5[%c0_84, %c0_85, %c0_86], %118 {strides = array<i32>} : memref<1x2x128xf32, #tpu.memory_space<vmem>>, vector<1x2x128xf32>,
    return
  }
  func.func @transform_0(%arg0: i32) -> (i32, i32) {
    %c0_i32 = arith.constant 0 : i32
    %c0_i32_0 = arith.constant 0 : i32
    return %arg0, %c0_i32 : i32, i32
  }
  func.func @transform_1(%arg0: i32) -> (i32, i32) {
    %c0_i32 = arith.constant 0 : i32
    %c0_i32_0 = arith.constant 0 : i32
    %c0_i32_1 = arith.constant 0 : i32
    return %c0_i32, %c0_i32_0 : i32, i32
  }
  func.func @transform_2(%arg0: i32) -> (i32, i32) {
    %c0_i32 = arith.constant 0 : i32
    %c0_i32_0 = arith.constant 0 : i32
    %c0_i32_1 = arith.constant 0 : i32
    return %c0_i32, %c0_i32_0 : i32, i32
  }
  func.func @transform_3(%arg0: i32) -> (i32, i32) {
    %c0_i32 = arith.constant 0 : i32
    %c0_i32_0 = arith.constant 0 : i32
    return %arg0, %c0_i32 : i32, i32
  }
  func.func @transform_4(%arg0: i32) -> (i32, i32, i32) {
    %c0_i32 = arith.constant 0 : i32
    %c0_i32_0 = arith.constant 0 : i32
    %c0_i32_1 = arith.constant 0 : i32
    return %arg0, %c0_i32, %c0_i32_0 : i32, i32, i32
  }
}

</mosaic_0001>

<llo_original>
// kernel: basicblock_forward.5
$region0: #{basicblock_forward.5}
  #allocation0 [shape = 'u32[]', space=smem, size = 0x4, offset = 0x4, fixed_abs, tag = 'smem constant byte address 0x4 - core index']
  #allocation1 [shape = 'u32[144,128]{1,0:T(1,128)}', space=vmem, size = 0x12000, scoped, tag = 'internal scratch']
  %s0 = inlined_call_operand.vmem [shape: bf16[512,128], index: 0, kind: input, shape index: {}]
  %s1 = inlined_call_operand.vmem [shape: f32[2,128], index: 1, kind: input, shape index: {}]
  %s2 = inlined_call_operand.vmem [shape: f32[512,128], index: 2, kind: input, shape index: {}]
  %s3 = inlined_call_operand.vmem [shape: f32[512,128], index: 3, kind: output, shape index: {}]
  %s4 = sld [smem:[#allocation0]]
  $region45: #{basicblock_forward.5} parent=0
    _
  %s6 = ssub.s32 1, %s4
  %s7 = scalar_select 0, %s6, %s4
  loop: start=0, step=1, limit=4
  $region2: #{basicblock_forward.5} parent=0 // loop_pre_header
    _
  $region3: #{basicblock_forward.5} parent=0 // loop_header
    %s9 = sphi 0, %s13
    %p10 = scmp.ge.s32.totalorder %s9, 4
    %s19 = sphi 0, %s21
    %s22 = sphi 0, %s19
    %s23 = sphi 0, %s22
    %s39 = sphi 0, %s23
    %s43 = sphi 0, %s43
    %s45 = sphi 0, %s43
    %s46 = sphi 0, %s45
    %s60 = sphi 0, %s46
    %s66 = sphi 0, %s68
    %s69 = sphi 0, %s66
    %s70 = sphi 0, %s69
    %s86 = sphi 0, %s70
    %s92 = sphi 0, %s94
    %s95 = sphi 0, %s92
    %s96 = sphi 0, %s95
    %s112 = sphi 0, %s96
  $region4: #{basicblock_forward.5} parent=0 // loop_header_branch
    %12 = sbr.rel (%p10) target = $region8
  $region5: #{basicblock_forward.5} parent=0 // loop_body
    %s14 = ssub.s32 %s9, 1
    %s15 = ssub.s32 %s9, 2
    %s16 = sadd.s32 %s9, 1
    %s17 = ssub.s32 %s9, %s16
    %p18 = scmp.eq.s32.totalorder %s17, 0
    %s20 = sadd.s32 %s19, 1
    %s21 = scalar_select %p18, %s19, %s20
    %p24 = pneg %p18
    %p25 = scmp.eq.s32.totalorder %s9, 1
    %p26 = por %p24, %p25
    %p27 = scmp.ne.s32.totalorder %s19, %s22
    %p28 = scmp.eq.s32.totalorder %s9, 0
    %p29 = por %p27, %p28
    %p30 = scmp.ne.s32.totalorder %s19, %s22
    %p31 = scmp.eq.s32.totalorder %s14, 1
    %p32 = por %p30, %p31
    %p33 = scmp.ne.s32.totalorder %s22, %s23
    %p34 = scmp.eq.s32.totalorder %s14, 0
    %p35 = por %p33, %p34
    %p36 = scmp.ne.s32.totalorder %s22, %s23
    %p37 = scmp.eq.s32.totalorder %s15, 1
    %p38 = por %p36, %p37
    %p40 = scmp.ne.s32.totalorder %s23, %s39
    %p41 = scmp.eq.s32.totalorder %s15, 0
    %p42 = por %p40, %p41
    %s44 = sadd.s32 %s43, 1
    %p47 = scmp.eq.s32.totalorder %s9, 1
    %p48 = scmp.ne.s32.totalorder %s43, %s45
    %p49 = scmp.eq.s32.totalorder %s9, 0
    %p50 = por %p48, %p49
    %p51 = scmp.ne.s32.totalorder %s43, %s45
    %p52 = scmp.eq.s32.totalorder %s14, 1
    %p53 = por %p51, %p52
    %p54 = scmp.ne.s32.totalorder %s45, %s46
    %p55 = scmp.eq.s32.totalorder %s14, 0
    %p56 = por %p54, %p55
    %p57 = scmp.ne.s32.totalorder %s45, %s46
    %p58 = scmp.eq.s32.totalorder %s15, 1
    %p59 = por %p57, %p58
    %p61 = scmp.ne.s32.totalorder %s46, %s60
    %p62 = scmp.eq.s32.totalorder %s15, 0
    %p63 = por %p61, %p62
    %s64 = ssub.s32 %s9, %s16
    %p65 = scmp.eq.s32.totalorder %s64, 0
    %s67 = sadd.s32 %s66, 1
    %s68 = scalar_select %p65, %s66, %s67
    %p71 = pneg %p65
    %p72 = scmp.eq.s32.totalorder %s9, 1
    %p73 = por %p71, %p72
    %p74 = scmp.ne.s32.totalorder %s66, %s69
    %p75 = scmp.eq.s32.totalorder %s9, 0
    %p76 = por %p74, %p75
    %p77 = scmp.ne.s32.totalorder %s66, %s69
    %p78 = scmp.eq.s32.totalorder %s14, 1
    %p79 = por %p77, %p78
    %p80 = scmp.ne.s32.totalorder %s69, %s70
    %p81 = scmp.eq.s32.totalorder %s14, 0
    %p82 = por %p80, %p81
    %p83 = scmp.ne.s32.totalorder %s69, %s70
    %p84 = scmp.eq.s32.totalorder %s15, 1
    %p85 = por %p83, %p84
    %p87 = scmp.ne.s32.totalorder %s70, %s86
    %p88 = scmp.eq.s32.totalorder %s15, 0
    %p89 = por %p87, %p88
    %s90 = ssub.s32 %s9, %s16
    %p91 = scmp.eq.s32.totalorder %s90, 0
    %s93 = sadd.s32 %s92, 1
    %s94 = scalar_select %p91, %s92, %s93
    %p97 = pneg %p91
    %p98 = scmp.eq.s32.totalorder %s9, 1
    %p99 = por %p97, %p98
    %p100 = scmp.ne.s32.totalorder %s92, %s95
    %p101 = scmp.eq.s32.totalorder %s9, 0
    %p102 = por %p100, %p101
    %p103 = scmp.ne.s32.totalorder %s92, %s95
    %p104 = scmp.eq.s32.totalorder %s14, 1
    %p105 = por %p103, %p104
    %p106 = scmp.ne.s32.totalorder %s95, %s96
    %p107 = scmp.eq.s32.totalorder %s14, 0
    %p108 = por %p106, %p107
    %p109 = scmp.ne.s32.totalorder %s95, %s96
    %p110 = scmp.eq.s32.totalorder %s15, 1
    %p111 = por %p109, %p110
    %p113 = scmp.ne.s32.totalorder %s96, %s112
    %p114 = scmp.eq.s32.totalorder %s15, 0
    %p115 = por %p113, %p114
    %p116 = scmp.le.s32.totalorder 1, %s9
    %p117 = scmp.lt.s32.totalorder %s9, 3
    %p118 = pnand %p116, %p117
    %p119 = pneg %p118
    // Predicated region
    $region9: #{basicblock_forward.5} parent=5 // pred_check
      _
    $region10: #{basicblock_forward.5} parent=5 // pred_check_branch
      %121 = sbr.rel (%p118) target = $region12
    $region11: #{basicblock_forward.5} parent=5 // pred_region
      %s122 = ssub.s32 %s9, 1
      // Predicated region
      $region13: #{basicblock_forward.5} parent=11 // pred_check
        %p123 = pneg %p56
      $region14: #{basicblock_forward.5} parent=11 // pred_check_branch
        %125 = sbr.rel (%p123) target = $region16
      $region15: #{basicblock_forward.5} parent=11 // pred_region
        _
      $region16: #{basicblock_forward.5} parent=11 // pred_fallthru
        _
    $region12: #{basicblock_forward.5} parent=5 // pred_fallthru
      _
    %p126 = scmp.lt.s32.totalorder %s9, 2
    // Predicated region
    $region17: #{basicblock_forward.5} parent=5 // pred_check
      %p127 = pneg %p126
    $region18: #{basicblock_forward.5} parent=5 // pred_check_branch
      %129 = sbr.rel (%p127) target = $region20
    $region19: #{basicblock_forward.5} parent=5 // pred_region
      // Predicated region
      $region21: #{basicblock_forward.5} parent=19 // pred_check
        %p130 = pneg %p29
      $region22: #{basicblock_forward.5} parent=19 // pred_check_branch
        %132 = sbr.rel (%p130) target = $region24
      $region23: #{basicblock_forward.5} parent=19 // pred_region
        %s133 = smul.u32 32, %s9
        %p134 = scmp.lt.s32.totalorder %s133, 63
        %s135 = scalar_select %p134, %s133, 63
        %s136 = smul.addr %s135, 4
        %s137 = scalar_lea.vmem %s0, %s136
        %s138 = smul.u32 32, %s9
      $region24: #{basicblock_forward.5} parent=19 // pred_fallthru
        _
      // Predicated region
      $region25: #{basicblock_forward.5} parent=19 // pred_check
        %p139 = pneg %p76
      $region26: #{basicblock_forward.5} parent=19 // pred_check_branch
        %141 = sbr.rel (%p139) target = $region28
      $region27: #{basicblock_forward.5} parent=19 // pred_region
        %s142 = smul.u32 32, %s9
        %p143 = scmp.lt.s32.totalorder %s142, 63
        %s144 = scalar_select %p143, %s142, 63
        %s145 = smul.addr %s144, 8
        %s146 = scalar_lea.vmem %s2, %s145
        %s147 = smul.u32 32, %s9
      $region28: #{basicblock_forward.5} parent=19 // pred_fallthru
        _
    $region20: #{basicblock_forward.5} parent=5 // pred_fallthru
      _
    %p148 = scmp.le.s32.totalorder 1, %s9
    %p149 = scmp.lt.s32.totalorder %s9, 3
    %p150 = pnand %p148, %p149
    %p151 = pneg %p150
    // Predicated region
    $region29: #{basicblock_forward.5} parent=5 // pred_check
      _
    $region30: #{basicblock_forward.5} parent=5 // pred_check_branch
      %153 = sbr.rel (%p150) target = $region32
    $region31: #{basicblock_forward.5} parent=5 // pred_region
      %s154 = ssub.s32 %s9, 1
      %s155 = smul.u32 32, %s14
      %p156 = scmp.lt.s32.totalorder %s155, 63
      %s157 = scalar_select %p156, %s155, 63
      %s158 = smul.addr %s157, 4
      %s159 = scalar_lea.vmem %s0, %s158
      %p160 = pneg %p35
      %p161 = pneg %p32
      %p162 = pneg %p56
      %p163 = pneg %p53
      %s164 = smul.u32 32, %s14
      %p165 = scmp.lt.s32.totalorder %s164, 63
      %s166 = scalar_select %p165, %s164, 63
      %s167 = smul.addr %s166, 8
      %s168 = scalar_lea.vmem %s2, %s167
      %p169 = pneg %p82
      %p170 = pneg %p79
      %p171 = pneg %p108
      %p172 = pneg %p105
      %s173 = smul.u32 32, %s14
      %p174 = scmp.lt.s32.totalorder %s173, 63
      %s175 = scalar_select %p174, %s173, 63
      %s176 = smul.addr %s175, 8
      %s177 = scalar_lea.vmem %s3, %s176
      %s178 = smul.u32 32, %s14
      %p179 = scmp.lt.s32.totalorder %s178, 63
      %s180 = scalar_select %p179, %s178, 63
      %s181 = smul.addr %s180, 4
      %s182 = scalar_lea.vmem %s0, %s181
      %s183 = smul.u32 32, %s14
      %s184 = smul.u32 32, %s14
      %p185 = scmp.lt.s32.totalorder %s184, 63
      %s186 = scalar_select %p185, %s184, 63
      %s187 = smul.addr %s186, 8
      %s188 = scalar_lea.vmem %s2, %s187
      %s189 = smul.u32 32, %s14
      %s190 = smul.u32 32, %s14
      %p191 = scmp.lt.s32.totalorder %s190, 63
      %s192 = scalar_select %p191, %s190, 63
      %s193 = smul.addr %s192, 8
      %s194 = scalar_lea.vmem %s3, %s193
      %s195 = smul.u32 32, %s14
      %v196 = vld [vmem:[%s1] sm:$0x1]
      %v197 = vld [vmem:[%s1 + $0x1] sm:$0x1]
      %v198 = vld [vmem:[%s182] sm:$0xf]
      %v199 = vld [vmem:[%s182 + $0x4] sm:$0xf]
      %v200 = vld [vmem:[%s182 + $0x8] sm:$0xf]
      %v201 = vld [vmem:[%s182 + $0xc] sm:$0xf]
      %v202 = vld [vmem:[%s182 + $0x10] sm:$0xf]
      %v203 = vld [vmem:[%s182 + $0x14] sm:$0xf]
      %v204 = vld [vmem:[%s182 + $0x18] sm:$0xf]
      %v205 = vld [vmem:[%s182 + $0x1c] sm:$0xf]
      %v206 = vld [vmem:[%s182 + $0x20] sm:$0xf]
      %v207 = vld [vmem:[%s182 + $0x24] sm:$0xf]
      %v208 = vld [vmem:[%s182 + $0x28] sm:$0xf]
      %v209 = vld [vmem:[%s182 + $0x2c] sm:$0xf]
      %v210 = vld [vmem:[%s182 + $0x30] sm:$0xf]
      %v211 = vld [vmem:[%s182 + $0x34] sm:$0xf]
      %v212 = vld [vmem:[%s182 + $0x38] sm:$0xf]
      %v213 = vld [vmem:[%s182 + $0x3c] sm:$0xf]
      %v214 = vld [vmem:[%s182 + $0x40] sm:$0xf]
      %v215 = vld [vmem:[%s182 + $0x44] sm:$0xf]
      %v216 = vld [vmem:[%s182 + $0x48] sm:$0xf]
      %v217 = vld [vmem:[%s182 + $0x4c] sm:$0xf]
      %v218 = vld [vmem:[%s182 + $0x50] sm:$0xf]
      %v219 = vld [vmem:[%s182 + $0x54] sm:$0xf]
      %v220 = vld [vmem:[%s182 + $0x58] sm:$0xf]
      %v221 = vld [vmem:[%s182 + $0x5c] sm:$0xf]
      %v222 = vld [vmem:[%s182 + $0x60] sm:$0xf]
      %v223 = vld [vmem:[%s182 + $0x64] sm:$0xf]
      %v224 = vld [vmem:[%s182 + $0x68] sm:$0xf]
      %v225 = vld [vmem:[%s182 + $0x6c] sm:$0xf]
      %v226 = vld [vmem:[%s182 + $0x70] sm:$0xf]
      %v227 = vld [vmem:[%s182 + $0x74] sm:$0xf]
      %v228 = vld [vmem:[%s182 + $0x78] sm:$0xf]
      %v229 = vld [vmem:[%s182 + $0x7c] sm:$0xf]
      %v230 = vunpack.c.l.bf16 %v198
      %v231 = vunpack.c.l.bf16 %v199
      %v232 = vunpack.c.l.bf16 %v200
      %v233 = vunpack.c.l.bf16 %v201
      %v234 = vunpack.c.l.bf16 %v202
      %v235 = vunpack.c.l.bf16 %v203
      %v236 = vunpack.c.l.bf16 %v204
      %v237 = vunpack.c.l.bf16 %v205
      %v238 = vunpack.c.l.bf16 %v206
      %v239 = vunpack.c.l.bf16 %v207
      %v240 = vunpack.c.l.bf16 %v208
      %v241 = vunpack.c.l.bf16 %v209
      %v242 = vunpack.c.l.bf16 %v210
      %v243 = vunpack.c.l.bf16 %v211
      %v244 = vunpack.c.l.bf16 %v212
      %v245 = vunpack.c.l.bf16 %v213
      %v246 = vunpack.c.l.bf16 %v214
      %v247 = vunpack.c.l.bf16 %v215
      %v248 = vunpack.c.l.bf16 %v216
      %v249 = vunpack.c.l.bf16 %v217
      %v250 = vunpack.c.l.bf16 %v218
      %v251 = vunpack.c.l.bf16 %v219
      %v252 = vunpack.c.l.bf16 %v220
      %v253 = vunpack.c.l.bf16 %v221
      %v254 = vunpack.c.l.bf16 %v222
      %v255 = vunpack.c.l.bf16 %v223
      %v256 = vunpack.c.l.bf16 %v224
      %v257 = vunpack.c.l.bf16 %v225
      %v258 = vunpack.c.l.bf16 %v226
      %v259 = vunpack.c.l.bf16 %v227
      %v260 = vunpack.c.l.bf16 %v228
      %v261 = vunpack.c.l.bf16 %v229
      %v262 = vlaneseq
      %v263 = vshrl.u32 %v262, 7
      %v264 = vsub.s32 0, %v263
      %v265 = vrot.slane %v196, %v264
      %v266 = vmul.f32 %v230, %v265
      %v267 = vmul.f32 %v231, %v265
      %v268 = vmul.f32 %v232, %v265
      %v269 = vmul.f32 %v233, %v265
      %v270 = vmul.f32 %v234, %v265
      %v271 = vmul.f32 %v235, %v265
      %v272 = vmul.f32 %v236, %v265
      %v273 = vmul.f32 %v237, %v265
      %v274 = vmul.f32 %v238, %v265
      %v275 = vmul.f32 %v239, %v265
      %v276 = vmul.f32 %v240, %v265
      %v277 = vmul.f32 %v241, %v265
      %v278 = vmul.f32 %v242, %v265
      %v279 = vmul.f32 %v243, %v265
      %v280 = vmul.f32 %v244, %v265
      %v281 = vmul.f32 %v245, %v265
      %v282 = vmul.f32 %v246, %v265
      %v283 = vmul.f32 %v247, %v265
      %v284 = vmul.f32 %v248, %v265
      %v285 = vmul.f32 %v249, %v265
      %v286 = vmul.f32 %v250, %v265
      %v287 = vmul.f32 %v251, %v265
      %v288 = vmul.f32 %v252, %v265
      %v289 = vmul.f32 %v253, %v265
      %v290 = vmul.f32 %v254, %v265
      %v291 = vmul.f32 %v255, %v265
      %v292 = vmul.f32 %v256, %v265
      %v293 = vmul.f32 %v257, %v265
      %v294 = vmul.f32 %v258, %v265
      %v295 = vmul.f32 %v259, %v265
      %v296 = vmul.f32 %v260, %v265
      %v297 = vmul.f32 %v261, %v265
      %v298 = vlaneseq
      %v299 = vshrl.u32 %v298, 7
      %v300 = vsub.s32 0, %v299
      %v301 = vrot.slane %v197, %v300
      %v302 = vadd.f32 %v266, %v301
      %v303 = vadd.f32 %v267, %v301
      %v304 = vadd.f32 %v268, %v301
      %v305 = vadd.f32 %v269, %v301
      %v306 = vadd.f32 %v270, %v301
      %v307 = vadd.f32 %v271, %v301
      %v308 = vadd.f32 %v272, %v301
      %v309 = vadd.f32 %v273, %v301
      %v310 = vadd.f32 %v274, %v301
      %v311 = vadd.f32 %v275, %v301
      %v312 = vadd.f32 %v276, %v301
      %v313 = vadd.f32 %v277, %v301
      %v314 = vadd.f32 %v278, %v301
      %v315 = vadd.f32 %v279, %v301
      %v316 = vadd.f32 %v280, %v301
      %v317 = vadd.f32 %v281, %v301
      %v318 = vadd.f32 %v282, %v301
      %v319 = vadd.f32 %v283, %v301
      %v320 = vadd.f32 %v284, %v301
      %v321 = vadd.f32 %v285, %v301
      %v322 = vadd.f32 %v286, %v301
      %v323 = vadd.f32 %v287, %v301
      %v324 = vadd.f32 %v288, %v301
      %v325 = vadd.f32 %v289, %v301
      %v326 = vadd.f32 %v290, %v301
      %v327 = vadd.f32 %v291, %v301
      %v328 = vadd.f32 %v292, %v301
      %v329 = vadd.f32 %v293, %v301
      %v330 = vadd.f32 %v294, %v301
      %v331 = vadd.f32 %v295, %v301
      %v332 = vadd.f32 %v296, %v301
      %v333 = vadd.f32 %v297, %v301
      %v334 = vld [vmem:[%s188] sm:$0xff]
      %v335 = vld [vmem:[%s188 + $0x8] sm:$0xff]
      %v336 = vld [vmem:[%s188 + $0x10] sm:$0xff]
      %v337 = vld [vmem:[%s188 + $0x18] sm:$0xff]
      %v338 = vld [vmem:[%s188 + $0x20] sm:$0xff]
      %v339 = vld [vmem:[%s188 + $0x28] sm:$0xff]
      %v340 = vld [vmem:[%s188 + $0x30] sm:$0xff]
      %v341 = vld [vmem:[%s188 + $0x38] sm:$0xff]
      %v342 = vld [vmem:[%s188 + $0x40] sm:$0xff]
      %v343 = vld [vmem:[%s188 + $0x48] sm:$0xff]
      %v344 = vld [vmem:[%s188 + $0x50] sm:$0xff]
      %v345 = vld [vmem:[%s188 + $0x58] sm:$0xff]
      %v346 = vld [vmem:[%s188 + $0x60] sm:$0xff]
      %v347 = vld [vmem:[%s188 + $0x68] sm:$0xff]
      %v348 = vld [vmem:[%s188 + $0x70] sm:$0xff]
      %v349 = vld [vmem:[%s188 + $0x78] sm:$0xff]
      %v350 = vld [vmem:[%s188 + $0x80] sm:$0xff]
      %v351 = vld [vmem:[%s188 + $0x88] sm:$0xff]
      %v352 = vld [vmem:[%s188 + $0x90] sm:$0xff]
      %v353 = vld [vmem:[%s188 + $0x98] sm:$0xff]
      %v354 = vld [vmem:[%s188 + $0xa0] sm:$0xff]
      %v355 = vld [vmem:[%s188 + $0xa8] sm:$0xff]
      %v356 = vld [vmem:[%s188 + $0xb0] sm:$0xff]
      %v357 = vld [vmem:[%s188 + $0xb8] sm:$0xff]
      %v358 = vld [vmem:[%s188 + $0xc0] sm:$0xff]
      %v359 = vld [vmem:[%s188 + $0xc8] sm:$0xff]
      %v360 = vld [vmem:[%s188 + $0xd0] sm:$0xff]
      %v361 = vld [vmem:[%s188 + $0xd8] sm:$0xff]
      %v362 = vld [vmem:[%s188 + $0xe0] sm:$0xff]
      %v363 = vld [vmem:[%s188 + $0xe8] sm:$0xff]
      %v364 = vld [vmem:[%s188 + $0xf0] sm:$0xff]
      %v365 = vld [vmem:[%s188 + $0xf8] sm:$0xff]
      %v366 = vadd.f32 %v302, %v334
      %v367 = vadd.f32 %v303, %v335
      %v368 = vadd.f32 %v304, %v336
      %v369 = vadd.f32 %v305, %v337
      %v370 = vadd.f32 %v306, %v338
      %v371 = vadd.f32 %v307, %v339
      %v372 = vadd.f32 %v308, %v340
      %v373 = vadd.f32 %v309, %v341
      %v374 = vadd.f32 %v310, %v342
      %v375 = vadd.f32 %v311, %v343
      %v376 = vadd.f32 %v312, %v344
      %v377 = vadd.f32 %v313, %v345
      %v378 = vadd.f32 %v314, %v346
      %v379 = vadd.f32 %v315, %v347
      %v380 = vadd.f32 %v316, %v348
      %v381 = vadd.f32 %v317, %v349
      %v382 = vadd.f32 %v318, %v350
      %v383 = vadd.f32 %v319, %v351
      %v384 = vadd.f32 %v320, %v352
      %v385 = vadd.f32 %v321, %v353
      %v386 = vadd.f32 %v322, %v354
      %v387 = vadd.f32 %v323, %v355
      %v388 = vadd.f32 %v324, %v356
      %v389 = vadd.f32 %v325, %v357
      %v390 = vadd.f32 %v326, %v358
      %v391 = vadd.f32 %v327, %v359
      %v392 = vadd.f32 %v328, %v360
      %v393 = vadd.f32 %v329, %v361
      %v394 = vadd.f32 %v330, %v362
      %v395 = vadd.f32 %v331, %v363
      %v396 = vadd.f32 %v332, %v364
      %v397 = vadd.f32 %v333, %v365
      %v398 = vmax.f32 %v366, 0.0
      %v399 = vmax.f32 %v367, 0.0
      %v400 = vmax.f32 %v368, 0.0
      %v401 = vmax.f32 %v369, 0.0
      %v402 = vmax.f32 %v370, 0.0
      %v403 = vmax.f32 %v371, 0.0
      %v404 = vmax.f32 %v372, 0.0
      %v405 = vmax.f32 %v373, 0.0
      %v406 = vmax.f32 %v374, 0.0
      %v407 = vmax.f32 %v375, 0.0
      %v408 = vmax.f32 %v376, 0.0
      %v409 = vmax.f32 %v377, 0.0
      %v410 = vmax.f32 %v378, 0.0
      %v411 = vmax.f32 %v379, 0.0
      %v412 = vmax.f32 %v380, 0.0
      %v413 = vmax.f32 %v381, 0.0
      %v414 = vmax.f32 %v382, 0.0
      %v415 = vmax.f32 %v383, 0.0
      %v416 = vmax.f32 %v384, 0.0
      %v417 = vmax.f32 %v385, 0.0
      %v418 = vmax.f32 %v386, 0.0
      %v419 = vmax.f32 %v387, 0.0
      %v420 = vmax.f32 %v388, 0.0
      %v421 = vmax.f32 %v389, 0.0
      %v422 = vmax.f32 %v390, 0.0
      %v423 = vmax.f32 %v391, 0.0
      %v424 = vmax.f32 %v392, 0.0
      %v425 = vmax.f32 %v393, 0.0
      %v426 = vmax.f32 %v394, 0.0
      %v427 = vmax.f32 %v395, 0.0
      %v428 = vmax.f32 %v396, 0.0
      %v429 = vmax.f32 %v397, 0.0
      %430 = vst [vmem:[%s194] sm:$0xff] %v398
      %431 = vst [vmem:[%s194 + $0x8] sm:$0xff] %v399
      %432 = vst [vmem:[%s194 + $0x10] sm:$0xff] %v400
      %433 = vst [vmem:[%s194 + $0x18] sm:$0xff] %v401
      %434 = vst [vmem:[%s194 + $0x20] sm:$0xff] %v402
      %435 = vst [vmem:[%s194 + $0x28] sm:$0xff] %v403
      %436 = vst [vmem:[%s194 + $0x30] sm:$0xff] %v404
      %437 = vst [vmem:[%s194 + $0x38] sm:$0xff] %v405
      %438 = vst [vmem:[%s194 + $0x40] sm:$0xff] %v406
      %439 = vst [vmem:[%s194 + $0x48] sm:$0xff] %v407
      %440 = vst [vmem:[%s194 + $0x50] sm:$0xff] %v408
      %441 = vst [vmem:[%s194 + $0x58] sm:$0xff] %v409
      %442 = vst [vmem:[%s194 + $0x60] sm:$0xff] %v410
      %443 = vst [vmem:[%s194 + $0x68] sm:$0xff] %v411
      %444 = vst [vmem:[%s194 + $0x70] sm:$0xff] %v412
      %445 = vst [vmem:[%s194 + $0x78] sm:$0xff] %v413
      %446 = vst [vmem:[%s194 + $0x80] sm:$0xff] %v414
      %447 = vst [vmem:[%s194 + $0x88] sm:$0xff] %v415
      %448 = vst [vmem:[%s194 + $0x90] sm:$0xff] %v416
      %449 = vst [vmem:[%s194 + $0x98] sm:$0xff] %v417
      %450 = vst [vmem:[%s194 + $0xa0] sm:$0xff] %v418
      %451 = vst [vmem:[%s194 + $0xa8] sm:$0xff] %v419
      %452 = vst [vmem:[%s194 + $0xb0] sm:$0xff] %v420
      %453 = vst [vmem:[%s194 + $0xb8] sm:$0xff] %v421
      %454 = vst [vmem:[%s194 + $0xc0] sm:$0xff] %v422
      %455 = vst [vmem:[%s194 + $0xc8] sm:$0xff] %v423
      %456 = vst [vmem:[%s194 + $0xd0] sm:$0xff] %v424
      %457 = vst [vmem:[%s194 + $0xd8] sm:$0xff] %v425
      %458 = vst [vmem:[%s194 + $0xe0] sm:$0xff] %v426
      %459 = vst [vmem:[%s194 + $0xe8] sm:$0xff] %v427
      %460 = vst [vmem:[%s194 + $0xf0] sm:$0xff] %v428
      %461 = vst [vmem:[%s194 + $0xf8] sm:$0xff] %v429
      %s462 = smul.u32 32, %s14
      %p463 = scmp.lt.s32.totalorder %s462, 63
      %s464 = scalar_select %p463, %s462, 63
      %s465 = smul.addr %s464, 8
      %s466 = scalar_lea.vmem %s3, %s465
      // Predicated region
      $region33: #{basicblock_forward.5} parent=31 // pred_check
        %p467 = pneg %p105
      $region34: #{basicblock_forward.5} parent=31 // pred_check_branch
        %469 = sbr.rel (%p467) target = $region36
      $region35: #{basicblock_forward.5} parent=31 // pred_region
        %s470 = smul.u32 32, %s14
      $region36: #{basicblock_forward.5} parent=31 // pred_fallthru
        _
    $region32: #{basicblock_forward.5} parent=5 // pred_fallthru
      _
    %p471 = scmp.le.s32.totalorder 2, %s9
    // Predicated region
    $region37: #{basicblock_forward.5} parent=5 // pred_check
      %p472 = pneg %p471
    $region38: #{basicblock_forward.5} parent=5 // pred_check_branch
      %474 = sbr.rel (%p472) target = $region40
    $region39: #{basicblock_forward.5} parent=5 // pred_region
      %s475 = ssub.s32 %s9, 2
      // Predicated region
      $region41: #{basicblock_forward.5} parent=39 // pred_check
        %p476 = pneg %p111
      $region42: #{basicblock_forward.5} parent=39 // pred_check_branch
        %478 = sbr.rel (%p476) target = $region44
      $region43: #{basicblock_forward.5} parent=39 // pred_region
        %s479 = smul.u32 32, %s15
        %p480 = scmp.lt.s32.totalorder %s479, 63
        %s481 = scalar_select %p480, %s479, 63
        %s482 = smul.addr %s481, 8
        %s483 = scalar_lea.vmem %s3, %s482
      $region44: #{basicblock_forward.5} parent=39 // pred_fallthru
        _
    $region40: #{basicblock_forward.5} parent=5 // pred_fallthru
      _
  $region6: #{basicblock_forward.5} parent=0 // loop_footer
    %s13 = sadd.s32 1, %s9
  $region7: #{basicblock_forward.5} parent=0 // loop_footer_branch
    %8 = sbr.rel target = $region3
  $region8: #{basicblock_forward.5} parent=0 // loop_exit
    _

// kernel: basicblock_forward.3
$region0: #{basicblock_forward.3}
  #allocation0 [shape = 'u32[]', space=smem, size = 0x4, offset = 0x4, fixed_abs, tag = 'smem constant byte address 0x4 - core index']
  #allocation1 [shape = 'u32[144,128]{1,0:T(1,128)}', space=vmem, size = 0x12000, scoped, tag = 'internal scratch']
  #allocation2 [shape = 'bf16[320,128]{1,0:T(16,128)(2,1)}', space=vmem, size = 0x14000, scoped, tag = 'scratch operand']
  #allocation3 [shape = 'f32[256,128]{1,0:T(8,128)}', space=vmem, size = 0x20000, scoped, tag = 'scratch operand']
  %s0 = inlined_call_operand.vmem [shape: f32[512,128], index: 0, kind: input, shape index: {}]
  %s1 = inlined_call_operand.vmem [shape: bf16[1152,128], index: 1, kind: input, shape index: {}]
  %s2 = inlined_call_operand.vmem [shape: bf16[512,128], index: 2, kind: output, shape index: {0}]
  %s3 = inlined_call_operand.vmem [shape: f32[2,2,128], index: 3, kind: output, shape index: {1}]
  %4 = xla_tuple %s2, %s3
  %s5 = sld [smem:[#allocation0]]
  $region49: #{basicblock_forward.3} parent=0
    _
  %s7 = ssub.s32 1, %s5
  %s8 = scalar_select 0, %s7, %s5
  loop: start=0, step=1, limit=4
  $region2: #{basicblock_forward.3} parent=0 // loop_pre_header
    _
  $region3: #{basicblock_forward.3} parent=0 // loop_header
    %s10 = sphi 0, %s14
    %p11 = scmp.ge.s32.totalorder %s10, 4
    %s20 = sphi 0, %s22
    %s23 = sphi 0, %s20
    %s24 = sphi 0, %s23
    %s40 = sphi 0, %s24
    %s44 = sphi 0, %s44
    %s46 = sphi 0, %s44
    %s47 = sphi 0, %s46
    %s61 = sphi 0, %s47
    %s67 = sphi 0, %s69
    %s70 = sphi 0, %s67
    %s71 = sphi 0, %s70
    %s87 = sphi 0, %s71
    %s93 = sphi 0, %s95
    %s96 = sphi 0, %s93
    %s97 = sphi 0, %s96
    %s113 = sphi 0, %s97
  $region4: #{basicblock_forward.3} parent=0 // loop_header_branch
    %13 = sbr.rel (%p11) target = $region8
  $region5: #{basicblock_forward.3} parent=0 // loop_body
    %s15 = ssub.s32 %s10, 1
    %s16 = ssub.s32 %s10, 2
    %s17 = sadd.s32 %s10, 1
    %s18 = ssub.s32 %s10, %s17
    %p19 = scmp.eq.s32.totalorder %s18, 0
    %s21 = sadd.s32 %s20, 1
    %s22 = scalar_select %p19, %s20, %s21
    %p25 = pneg %p19
    %p26 = scmp.eq.s32.totalorder %s10, 1
    %p27 = por %p25, %p26
    %p28 = scmp.ne.s32.totalorder %s20, %s23
    %p29 = scmp.eq.s32.totalorder %s10, 0
    %p30 = por %p28, %p29
    %p31 = scmp.ne.s32.totalorder %s20, %s23
    %p32 = scmp.eq.s32.totalorder %s15, 1
    %p33 = por %p31, %p32
    %p34 = scmp.ne.s32.totalorder %s23, %s24
    %p35 = scmp.eq.s32.totalorder %s15, 0
    %p36 = por %p34, %p35
    %p37 = scmp.ne.s32.totalorder %s23, %s24
    %p38 = scmp.eq.s32.totalorder %s16, 1
    %p39 = por %p37, %p38
    %p41 = scmp.ne.s32.totalorder %s24, %s40
    %p42 = scmp.eq.s32.totalorder %s16, 0
    %p43 = por %p41, %p42
    %s45 = sadd.s32 %s44, 1
    %p48 = scmp.eq.s32.totalorder %s10, 1
    %p49 = scmp.ne.s32.totalorder %s44, %s46
    %p50 = scmp.eq.s32.totalorder %s10, 0
    %p51 = por %p49, %p50
    %p52 = scmp.ne.s32.totalorder %s44, %s46
    %p53 = scmp.eq.s32.totalorder %s15, 1
    %p54 = por %p52, %p53
    %p55 = scmp.ne.s32.totalorder %s46, %s47
    %p56 = scmp.eq.s32.totalorder %s15, 0
    %p57 = por %p55, %p56
    %p58 = scmp.ne.s32.totalorder %s46, %s47
    %p59 = scmp.eq.s32.totalorder %s16, 1
    %p60 = por %p58, %p59
    %p62 = scmp.ne.s32.totalorder %s47, %s61
    %p63 = scmp.eq.s32.totalorder %s16, 0
    %p64 = por %p62, %p63
    %s65 = ssub.s32 %s10, %s17
    %p66 = scmp.eq.s32.totalorder %s65, 0
    %s68 = sadd.s32 %s67, 1
    %s69 = scalar_select %p66, %s67, %s68
    %p72 = pneg %p66
    %p73 = scmp.eq.s32.totalorder %s10, 1
    %p74 = por %p72, %p73
    %p75 = scmp.ne.s32.totalorder %s67, %s70
    %p76 = scmp.eq.s32.totalorder %s10, 0
    %p77 = por %p75, %p76
    %p78 = scmp.ne.s32.totalorder %s67, %s70
    %p79 = scmp.eq.s32.totalorder %s15, 1
    %p80 = por %p78, %p79
    %p81 = scmp.ne.s32.totalorder %s70, %s71
    %p82 = scmp.eq.s32.totalorder %s15, 0
    %p83 = por %p81, %p82
    %p84 = scmp.ne.s32.totalorder %s70, %s71
    %p85 = scmp.eq.s32.totalorder %s16, 1
    %p86 = por %p84, %p85
    %p88 = scmp.ne.s32.totalorder %s71, %s87
    %p89 = scmp.eq.s32.totalorder %s16, 0
    %p90 = por %p88, %p89
    %s91 = ssub.s32 %s10, %s17
    %p92 = scmp.eq.s32.totalorder %s91, 0
    %s94 = sadd.s32 %s93, 1
    %s95 = scalar_select %p92, %s93, %s94
    %p98 = pneg %p92
    %p99 = scmp.eq.s32.totalorder %s10, 1
    %p100 = por %p98, %p99
    %p101 = scmp.ne.s32.totalorder %s93, %s96
    %p102 = scmp.eq.s32.totalorder %s10, 0
    %p103 = por %p101, %p102
    %p104 = scmp.ne.s32.totalorder %s93, %s96
    %p105 = scmp.eq.s32.totalorder %s15, 1
    %p106 = por %p104, %p105
    %p107 = scmp.ne.s32.totalorder %s96, %s97
    %p108 = scmp.eq.s32.totalorder %s15, 0
    %p109 = por %p107, %p108
    %p110 = scmp.ne.s32.totalorder %s96, %s97
    %p111 = scmp.eq.s32.totalorder %s16, 1
    %p112 = por %p110, %p111
    %p114 = scmp.ne.s32.totalorder %s97, %s113
    %p115 = scmp.eq.s32.totalorder %s16, 0
    %p116 = por %p114, %p115
    %p117 = scmp.le.s32.totalorder 1, %s10
    %p118 = scmp.lt.s32.totalorder %s10, 3
    %p119 = pnand %p117, %p118
    %p120 = pneg %p119
    // Predicated region
    $region9: #{basicblock_forward.3} parent=5 // pred_check
      _
    $region10: #{basicblock_forward.3} parent=5 // pred_check_branch
      %122 = sbr.rel (%p119) target = $region12
    $region11: #{basicblock_forward.3} parent=5 // pred_region
      %s123 = ssub.s32 %s10, 1
      // Predicated region
      $region13: #{basicblock_forward.3} parent=11 // pred_check
        %p124 = pneg %p57
      $region14: #{basicblock_forward.3} parent=11 // pred_check_branch
        %126 = sbr.rel (%p124) target = $region16
      $region15: #{basicblock_forward.3} parent=11 // pred_region
        _
      $region16: #{basicblock_forward.3} parent=11 // pred_fallthru
        _
    $region12: #{basicblock_forward.3} parent=5 // pred_fallthru
      _
    %p127 = scmp.lt.s32.totalorder %s10, 2
    // Predicated region
    $region17: #{basicblock_forward.3} parent=5 // pred_check
      %p128 = pneg %p127
    $region18: #{basicblock_forward.3} parent=5 // pred_check_branch
      %130 = sbr.rel (%p128) target = $region20
    $region19: #{basicblock_forward.3} parent=5 // pred_region
      // Predicated region
      $region21: #{basicblock_forward.3} parent=19 // pred_check
        %p131 = pneg %p30
      $region22: #{basicblock_forward.3} parent=19 // pred_check_branch
        %133 = sbr.rel (%p131) target = $region24
      $region23: #{basicblock_forward.3} parent=19 // pred_region
        %s134 = smul.u32 32, %s10
        %p135 = scmp.lt.s32.totalorder %s134, 63
        %s136 = scalar_select %p135, %s134, 63
        %s137 = smul.addr %s136, 8
        %s138 = scalar_lea.vmem %s0, %s137
        %s139 = smul.u32 32, %s10
      $region24: #{basicblock_forward.3} parent=19 // pred_fallthru
        _
    $region20: #{basicblock_forward.3} parent=5 // pred_fallthru
      _
    %p140 = scmp.le.s32.totalorder 1, %s10
    %p141 = scmp.lt.s32.totalorder %s10, 3
    %p142 = pnand %p140, %p141
    %p143 = pneg %p142
    // Predicated region
    $region25: #{basicblock_forward.3} parent=5 // pred_check
      _
    $region26: #{basicblock_forward.3} parent=5 // pred_check_branch
      %145 = sbr.rel (%p142) target = $region28
    $region27: #{basicblock_forward.3} parent=5 // pred_region
      %s146 = ssub.s32 %s10, 1
      %s147 = smul.u32 32, %s15
      %p148 = scmp.lt.s32.totalorder %s147, 63
      %s149 = scalar_select %p148, %s147, 63
      %s150 = smul.addr %s149, 8
      %s151 = scalar_lea.vmem %s0, %s150
      %p152 = pneg %p36
      %p153 = pneg %p33
      %p154 = pneg %p57
      %p155 = pneg %p54
      %p156 = pneg %p83
      %p157 = pneg %p80
      %s158 = smul.u32 32, %s15
      %p159 = scmp.lt.s32.totalorder %s158, 63
      %s160 = scalar_select %p159, %s158, 63
      %s161 = smul.addr %s160, 4
      %s162 = scalar_lea.vmem %s2, %s161
      %p163 = pneg %p109
      %p164 = pneg %p106
      %p165 = scmp.lt.s32.totalorder %s15, 1
      %s166 = scalar_select %p165, %s15, 1
      %s167 = smul.addr %s166, 2
      %s168 = scalar_lea.vmem %s3, %s167
      %s169 = smul.u32 32, %s15
      %p170 = scmp.lt.s32.totalorder %s169, 63
      %s171 = scalar_select %p170, %s169, 63
      %s172 = smul.addr %s171, 8
      %s173 = scalar_lea.vmem %s0, %s172
      %s174 = smul.u32 32, %s15
      %s175 = smul.u32 32, %s15
      %p176 = scmp.lt.s32.totalorder %s175, 63
      %s177 = scalar_select %p176, %s175, 63
      %s178 = smul.addr %s177, 4
      %s179 = scalar_lea.vmem %s2, %s178
      %s180 = smul.u32 32, %s15
      %p181 = scmp.lt.s32.totalorder %s15, 1
      %s182 = scalar_select %p181, %s15, 1
      %s183 = smul.addr %s182, 2
      %s184 = scalar_lea.vmem %s3, %s183
      %v186 = vld [vmem:[%s173] sm:$0xff]
      %v187 = vld [vmem:[%s173 + $0x8] sm:$0xff]
      %v188 = vld [vmem:[%s173 + $0x10] sm:$0xff]
      %v189 = vld [vmem:[%s173 + $0x18] sm:$0xff]
      %v190 = vld [vmem:[%s173 + $0x20] sm:$0xff]
      %v191 = vld [vmem:[%s173 + $0x28] sm:$0xff]
      %v192 = vld [vmem:[%s173 + $0x30] sm:$0xff]
      %v193 = vld [vmem:[%s173 + $0x38] sm:$0xff]
      %v194 = vld [vmem:[%s173 + $0x40] sm:$0xff]
      %v195 = vld [vmem:[%s173 + $0x48] sm:$0xff]
      %v196 = vld [vmem:[%s173 + $0x50] sm:$0xff]
      %v197 = vld [vmem:[%s173 + $0x58] sm:$0xff]
      %v198 = vld [vmem:[%s173 + $0x60] sm:$0xff]
      %v199 = vld [vmem:[%s173 + $0x68] sm:$0xff]
      %v200 = vld [vmem:[%s173 + $0x70] sm:$0xff]
      %v201 = vld [vmem:[%s173 + $0x78] sm:$0xff]
      %v202 = vld [vmem:[%s173 + $0x80] sm:$0xff]
      %v203 = vld [vmem:[%s173 + $0x88] sm:$0xff]
      %v204 = vld [vmem:[%s173 + $0x90] sm:$0xff]
      %v205 = vld [vmem:[%s173 + $0x98] sm:$0xff]
      %v206 = vld [vmem:[%s173 + $0xa0] sm:$0xff]
      %v207 = vld [vmem:[%s173 + $0xa8] sm:$0xff]
      %v208 = vld [vmem:[%s173 + $0xb0] sm:$0xff]
      %v209 = vld [vmem:[%s173 + $0xb8] sm:$0xff]
      %v210 = vld [vmem:[%s173 + $0xc0] sm:$0xff]
      %v211 = vld [vmem:[%s173 + $0xc8] sm:$0xff]
      %v212 = vld [vmem:[%s173 + $0xd0] sm:$0xff]
      %v213 = vld [vmem:[%s173 + $0xd8] sm:$0xff]
      %v214 = vld [vmem:[%s173 + $0xe0] sm:$0xff]
      %v215 = vld [vmem:[%s173 + $0xe8] sm:$0xff]
      %v216 = vld [vmem:[%s173 + $0xf0] sm:$0xff]
      %v217 = vld [vmem:[%s173 + $0xf8] sm:$0xff]
      %v218 = vpack.c.bf16 %v187, %v186
      %v219 = vpack.c.bf16 %v189, %v188
      %v220 = vpack.c.bf16 %v191, %v190
      %v221 = vpack.c.bf16 %v193, %v192
      %v222 = vpack.c.bf16 %v195, %v194
      %v223 = vpack.c.bf16 %v197, %v196
      %v224 = vpack.c.bf16 %v199, %v198
      %v225 = vpack.c.bf16 %v201, %v200
      %v226 = vpack.c.bf16 %v203, %v202
      %v227 = vpack.c.bf16 %v205, %v204
      %v228 = vpack.c.bf16 %v207, %v206
      %v229 = vpack.c.bf16 %v209, %v208
      %v230 = vpack.c.bf16 %v211, %v210
      %v231 = vpack.c.bf16 %v213, %v212
      %v232 = vpack.c.bf16 %v215, %v214
      %v233 = vpack.c.bf16 %v217, %v216
      %234 = vst [vmem:[#allocation2] sm:$0xff] 0
      %235 = vst [vmem:[#allocation2 + $0x8] sm:$0xff] 0
      %236 = vst [vmem:[#allocation2 + $0x90] sm:$0xff] 0
      %237 = vst [vmem:[#allocation2 + $0x98] sm:$0xff] 0
      %238 = vst [vmem:[#allocation2 + $0x10] sm:$0xff] %v218
      %239 = vst [vmem:[#allocation2 + $0x18] sm:$0xff] %v219
      %240 = vst [vmem:[#allocation2 + $0x20] sm:$0xff] %v220
      %241 = vst [vmem:[#allocation2 + $0x28] sm:$0xff] %v221
      %242 = vst [vmem:[#allocation2 + $0x30] sm:$0xff] %v222
      %243 = vst [vmem:[#allocation2 + $0x38] sm:$0xff] %v223
      %244 = vst [vmem:[#allocation2 + $0x40] sm:$0xff] %v224
      %245 = vst [vmem:[#allocation2 + $0x48] sm:$0xff] %v225
      %246 = vst [vmem:[#allocation2 + $0x50] sm:$0xff] %v226
      %247 = vst [vmem:[#allocation2 + $0x58] sm:$0xff] %v227
      %248 = vst [vmem:[#allocation2 + $0x60] sm:$0xff] %v228
      %249 = vst [vmem:[#allocation2 + $0x68] sm:$0xff] %v229
      %250 = vst [vmem:[#allocation2 + $0x70] sm:$0xff] %v230
      %251 = vst [vmem:[#allocation2 + $0x78] sm:$0xff] %v231
      %252 = vst [vmem:[#allocation2 + $0x80] sm:$0xff] %v232
      %253 = vst [vmem:[#allocation2 + $0x88] sm:$0xff] %v233
      %v254 = vlaneseq
      %v255 = vshrl.u32 %v254, 7
      %v256 = vadd.s32 %v255, 8
      %v257 = vadd.s32 %v255, 16
      %v258 = vadd.s32 %v255, 24
      %v259 = vadd.s32 %v255, 32
      %v260 = vadd.s32 %v255, 40
      %v261 = vadd.s32 %v255, 48
      %v262 = vadd.s32 %v255, 56
      %v263 = vadd.s32 %v255, 64
      %v264 = vadd.s32 %v255, 72
      %v265 = vadd.s32 %v255, 80
      %v266 = vadd.s32 %v255, 88
      %v267 = vadd.s32 %v255, 96
      %v268 = vadd.s32 %v255, 104
      %v269 = vadd.s32 %v255, 112
      %v270 = vadd.s32 %v255, 120
      %v271 = vadd.s32 %v255, 128
      %v272 = vadd.s32 %v255, 136
      %v273 = vadd.s32 %v255, 144
      %v274 = vadd.s32 %v255, 152
      %v275 = vadd.s32 %v255, 160
      %v276 = vadd.s32 %v255, 168
      %v277 = vadd.s32 %v255, 176
      %v278 = vadd.s32 %v255, 184
      %v279 = vadd.s32 %v255, 192
      %v280 = vadd.s32 %v255, 200
      %v281 = vadd.s32 %v255, 208
      %v282 = vadd.s32 %v255, 216
      %v283 = vadd.s32 %v255, 224
      %v284 = vadd.s32 %v255, 232
      %v285 = vadd.s32 %v255, 240
      %v286 = vadd.s32 %v255, 248
      %vm287 = vcmp.lt.s32.totalorder %v255, 0
      %v288 = vsub.s32 0, %v255
      %v289 = vsel %vm287, %v288, %v255
      %v290 = vshrl.u32 %v289, 4
      %v291 = vand.u32 %v289, 15
      %v292 = vsub.s32 0, %v291
      %v293 = vsel %vm287, %v292, %v291
      %vm294 = vcmp.lt.s32.totalorder %v256, 0
      %v295 = vsub.s32 0, %v256
      %v296 = vsel %vm294, %v295, %v256
      %v297 = vshrl.u32 %v296, 4
      %v298 = vand.u32 %v296, 15
      %v299 = vsub.s32 0, %v298
      %v300 = vsel %vm294, %v299, %v298
      %vm301 = vcmp.lt.s32.totalorder %v257, 0
      %v302 = vsub.s32 0, %v257
      %v303 = vsel %vm301, %v302, %v257
      %v304 = vshrl.u32 %v303, 4
      %v305 = vand.u32 %v303, 15
      %v306 = vsub.s32 0, %v305
      %v307 = vsel %vm301, %v306, %v305
      %vm308 = vcmp.lt.s32.totalorder %v258, 0
      %v309 = vsub.s32 0, %v258
      %v310 = vsel %vm308, %v309, %v258
      %v311 = vshrl.u32 %v310, 4
      %v312 = vand.u32 %v310, 15
      %v313 = vsub.s32 0, %v312
      %v314 = vsel %vm308, %v313, %v312
      %vm315 = vcmp.lt.s32.totalorder %v259, 0
      %v316 = vsub.s32 0, %v259
      %v317 = vsel %vm315, %v316, %v259
      %v318 = vshrl.u32 %v317, 4
      %v319 = vand.u32 %v317, 15
      %v320 = vsub.s32 0, %v319
      %v321 = vsel %vm315, %v320, %v319
      %vm322 = vcmp.lt.s32.totalorder %v260, 0
      %v323 = vsub.s32 0, %v260
      %v324 = vsel %vm322, %v323, %v260
      %v325 = vshrl.u32 %v324, 4
      %v326 = vand.u32 %v324, 15
      %v327 = vsub.s32 0, %v326
      %v328 = vsel %vm322, %v327, %v326
      %vm329 = vcmp.lt.s32.totalorder %v261, 0
      %v330 = vsub.s32 0, %v261
      %v331 = vsel %vm329, %v330, %v261
      %v332 = vshrl.u32 %v331, 4
      %v333 = vand.u32 %v331, 15
      %v334 = vsub.s32 0, %v333
      %v335 = vsel %vm329, %v334, %v333
      %vm336 = vcmp.lt.s32.totalorder %v262, 0
      %v337 = vsub.s32 0, %v262
      %v338 = vsel %vm336, %v337, %v262
      %v339 = vshrl.u32 %v338, 4
      %v340 = vand.u32 %v338, 15
      %v341 = vsub.s32 0, %v340
      %v342 = vsel %vm336, %v341, %v340
      %vm343 = vcmp.lt.s32.totalorder %v263, 0
      %v344 = vsub.s32 0, %v263
      %v345 = vsel %vm343, %v344, %v263
      %v346 = vshrl.u32 %v345, 4
      %v347 = vand.u32 %v345, 15
      %v348 = vsub.s32 0, %v347
      %v349 = vsel %vm343, %v348, %v347
      %vm350 = vcmp.lt.s32.totalorder %v264, 0
      %v351 = vsub.s32 0, %v264
      %v352 = vsel %vm350, %v351, %v264
      %v353 = vshrl.u32 %v352, 4
      %v354 = vand.u32 %v352, 15
      %v355 = vsub.s32 0, %v354
      %v356 = vsel %vm350, %v355, %v354
      %vm357 = vcmp.lt.s32.totalorder %v265, 0
      %v358 = vsub.s32 0, %v265
      %v359 = vsel %vm357, %v358, %v265
      %v360 = vshrl.u32 %v359, 4
      %v361 = vand.u32 %v359, 15
      %v362 = vsub.s32 0, %v361
      %v363 = vsel %vm357, %v362, %v361
      %vm364 = vcmp.lt.s32.totalorder %v266, 0
      %v365 = vsub.s32 0, %v266
      %v366 = vsel %vm364, %v365, %v266
      %v367 = vshrl.u32 %v366, 4
      %v368 = vand.u32 %v366, 15
      %v369 = vsub.s32 0, %v368
      %v370 = vsel %vm364, %v369, %v368
      %vm371 = vcmp.lt.s32.totalorder %v267, 0
      %v372 = vsub.s32 0, %v267
      %v373 = vsel %vm371, %v372, %v267
      %v374 = vshrl.u32 %v373, 4
      %v375 = vand.u32 %v373, 15
      %v376 = vsub.s32 0, %v375
      %v377 = vsel %vm371, %v376, %v375
      %vm378 = vcmp.lt.s32.totalorder %v268, 0
      %v379 = vsub.s32 0, %v268
      %v380 = vsel %vm378, %v379, %v268
      %v381 = vshrl.u32 %v380, 4
      %v382 = vand.u32 %v380, 15
      %v383 = vsub.s32 0, %v382
      %v384 = vsel %vm378, %v383, %v382
      %vm385 = vcmp.lt.s32.totalorder %v269, 0
      %v386 = vsub.s32 0, %v269
      %v387 = vsel %vm385, %v386, %v269
      %v388 = vshrl.u32 %v387, 4
      %v389 = vand.u32 %v387, 15
      %v390 = vsub.s32 0, %v389
      %v391 = vsel %vm385, %v390, %v389
      %vm392 = vcmp.lt.s32.totalorder %v270, 0
      %v393 = vsub.s32 0, %v270
      %v394 = vsel %vm392, %v393, %v270
      %v395 = vshrl.u32 %v394, 4
      %v396 = vand.u32 %v394, 15
      %v397 = vsub.s32 0, %v396
      %v398 = vsel %vm392, %v397, %v396
      %vm399 = vcmp.lt.s32.totalorder %v271, 0
      %v400 = vsub.s32 0, %v271
      %v401 = vsel %vm399, %v400, %v271
      %v402 = vshrl.u32 %v401, 4
      %v403 = vand.u32 %v401, 15
      %v404 = vsub.s32 0, %v403
      %v405 = vsel %vm399, %v404, %v403
      %vm406 = vcmp.lt.s32.totalorder %v272, 0
      %v407 = vsub.s32 0, %v272
      %v408 = vsel %vm406, %v407, %v272
      %v409 = vshrl.u32 %v408, 4
      %v410 = vand.u32 %v408, 15
      %v411 = vsub.s32 0, %v410
      %v412 = vsel %vm406, %v411, %v410
      %vm413 = vcmp.lt.s32.totalorder %v273, 0
      %v414 = vsub.s32 0, %v273
      %v415 = vsel %vm413, %v414, %v273
      %v416 = vshrl.u32 %v415, 4
      %v417 = vand.u32 %v415, 15
      %v418 = vsub.s32 0, %v417
      %v419 = vsel %vm413, %v418, %v417
      %vm420 = vcmp.lt.s32.totalorder %v274, 0
      %v421 = vsub.s32 0, %v274
      %v422 = vsel %vm420, %v421, %v274
      %v423 = vshrl.u32 %v422, 4
      %v424 = vand.u32 %v422, 15
      %v425 = vsub.s32 0, %v424
      %v426 = vsel %vm420, %v425, %v424
      %vm427 = vcmp.lt.s32.totalorder %v275, 0
      %v428 = vsub.s32 0, %v275
      %v429 = vsel %vm427, %v428, %v275
      %v430 = vshrl.u32 %v429, 4
      %v431 = vand.u32 %v429, 15
      %v432 = vsub.s32 0, %v431
      %v433 = vsel %vm427, %v432, %v431
      %vm434 = vcmp.lt.s32.totalorder %v276, 0
      %v435 = vsub.s32 0, %v276
      %v436 = vsel %vm434, %v435, %v276
      %v437 = vshrl.u32 %v436, 4
      %v438 = vand.u32 %v436, 15
      %v439 = vsub.s32 0, %v438
      %v440 = vsel %vm434, %v439, %v438
      %vm441 = vcmp.lt.s32.totalorder %v277, 0
      %v442 = vsub.s32 0, %v277
      %v443 = vsel %vm441, %v442, %v277
      %v444 = vshrl.u32 %v443, 4
      %v445 = vand.u32 %v443, 15
      %v446 = vsub.s32 0, %v445
      %v447 = vsel %vm441, %v446, %v445
      %vm448 = vcmp.lt.s32.totalorder %v278, 0
      %v449 = vsub.s32 0, %v278
      %v450 = vsel %vm448, %v449, %v278
      %v451 = vshrl.u32 %v450, 4
      %v452 = vand.u32 %v450, 15
      %v453 = vsub.s32 0, %v452
      %v454 = vsel %vm448, %v453, %v452
      %vm455 = vcmp.lt.s32.totalorder %v279, 0
      %v456 = vsub.s32 0, %v279
      %v457 = vsel %vm455, %v456, %v279
      %v458 = vshrl.u32 %v457, 4
      %v459 = vand.u32 %v457, 15
      %v460 = vsub.s32 0, %v459
      %v461 = vsel %vm455, %v460, %v459
      %vm462 = vcmp.lt.s32.totalorder %v280, 0
      %v463 = vsub.s32 0, %v280
      %v464 = vsel %vm462, %v463, %v280
      %v465 = vshrl.u32 %v464, 4
      %v466 = vand.u32 %v464, 15
      %v467 = vsub.s32 0, %v466
      %v468 = vsel %vm462, %v467, %v466
      %vm469 = vcmp.lt.s32.totalorder %v281, 0
      %v470 = vsub.s32 0, %v281
      %v471 = vsel %vm469, %v470, %v281
      %v472 = vshrl.u32 %v471, 4
      %v473 = vand.u32 %v471, 15
      %v474 = vsub.s32 0, %v473
      %v475 = vsel %vm469, %v474, %v473
      %vm476 = vcmp.lt.s32.totalorder %v282, 0
      %v477 = vsub.s32 0, %v282
      %v478 = vsel %vm476, %v477, %v282
      %v479 = vshrl.u32 %v478, 4
      %v480 = vand.u32 %v478, 15
      %v481 = vsub.s32 0, %v480
      %v482 = vsel %vm476, %v481, %v480
      %vm483 = vcmp.lt.s32.totalorder %v283, 0
      %v484 = vsub.s32 0, %v283
      %v485 = vsel %vm483, %v484, %v283
      %v486 = vshrl.u32 %v485, 4
      %v487 = vand.u32 %v485, 15
      %v488 = vsub.s32 0, %v487
      %v489 = vsel %vm483, %v488, %v487
      %vm490 = vcmp.lt.s32.totalorder %v284, 0
      %v491 = vsub.s32 0, %v284
      %v492 = vsel %vm490, %v491, %v284
      %v493 = vshrl.u32 %v492, 4
      %v494 = vand.u32 %v492, 15
      %v495 = vsub.s32 0, %v494
      %v496 = vsel %vm490, %v495, %v494
      %vm497 = vcmp.lt.s32.totalorder %v285, 0
      %v498 = vsub.s32 0, %v285
      %v499 = vsel %vm497, %v498, %v285
      %v500 = vshrl.u32 %v499, 4
      %v501 = vand.u32 %v499, 15
      %v502 = vsub.s32 0, %v501
      %v503 = vsel %vm497, %v502, %v501
      %vm504 = vcmp.lt.s32.totalorder %v286, 0
      %v505 = vsub.s32 0, %v286
      %v506 = vsel %vm504, %v505, %v286
      %v507 = vshrl.u32 %v506, 4
      %v508 = vand.u32 %v506, 15
      %v509 = vsub.s32 0, %v508
      %v510 = vsel %vm504, %v509, %v508
      %vm511 = vcmp.ne.s32.totalorder %v293, 0
      %vm512 = vcmp.ne.s32.totalorder %v300, 0
      %vm513 = vcmp.ne.s32.totalorder %v307, 0
      %vm514 = vcmp.ne.s32.totalorder %v314, 0
      %vm515 = vcmp.ne.s32.totalorder %v321, 0
      %vm516 = vcmp.ne.s32.totalorder %v328, 0
      %vm517 = vcmp.ne.s32.totalorder %v335, 0
      %vm518 = vcmp.ne.s32.totalorder %v342, 0
      %vm519 = vcmp.ne.s32.totalorder %v349, 0
      %vm520 = vcmp.ne.s32.totalorder %v356, 0
      %vm521 = vcmp.ne.s32.totalorder %v363, 0
      %vm522 = vcmp.ne.s32.totalorder %v370, 0
      %vm523 = vcmp.ne.s32.totalorder %v377, 0
      %vm524 = vcmp.ne.s32.totalorder %v384, 0
      %vm525 = vcmp.ne.s32.totalorder %v391, 0
      %vm526 = vcmp.ne.s32.totalorder %v398, 0
      %vm527 = vcmp.ne.s32.totalorder %v405, 0
      %vm528 = vcmp.ne.s32.totalorder %v412, 0
      %vm529 = vcmp.ne.s32.totalorder %v419, 0
      %vm530 = vcmp.ne.s32.totalorder %v426, 0
      %vm531 = vcmp.ne.s32.totalorder %v433, 0
      %vm532 = vcmp.ne.s32.totalorder %v440, 0
      %vm533 = vcmp.ne.s32.totalorder %v447, 0
      %vm534 = vcmp.ne.s32.totalorder %v454, 0
      %vm535 = vcmp.ne.s32.totalorder %v461, 0
      %vm536 = vcmp.ne.s32.totalorder %v468, 0
      %vm537 = vcmp.ne.s32.totalorder %v475, 0
      %vm538 = vcmp.ne.s32.totalorder %v482, 0
      %vm539 = vcmp.ne.s32.totalorder %v489, 0
      %vm540 = vcmp.ne.s32.totalorder %v496, 0
      %vm541 = vcmp.ne.s32.totalorder %v503, 0
      %vm542 = vcmp.ne.s32.totalorder %v510, 0
      %vm543 = vcmp.lt.s32.totalorder %v293, 0
      %vm544 = vcmp.lt.s32.totalorder %v300, 0
      %vm545 = vcmp.lt.s32.totalorder %v307, 0
      %vm546 = vcmp.lt.s32.totalorder %v314, 0
      %vm547 = vcmp.lt.s32.totalorder %v321, 0
      %vm548 = vcmp.lt.s32.totalorder %v328, 0
      %vm549 = vcmp.lt.s32.totalorder %v335, 0
      %vm550 = vcmp.lt.s32.totalorder %v342, 0
      %vm551 = vcmp.lt.s32.totalorder %v349, 0
      %vm552 = vcmp.lt.s32.totalorder %v356, 0
      %vm553 = vcmp.lt.s32.totalorder %v363, 0
      %vm554 = vcmp.lt.s32.totalorder %v370, 0
      %vm555 = vcmp.lt.s32.totalorder %v377, 0
      %vm556 = vcmp.lt.s32.totalorder %v384, 0
      %vm557 = vcmp.lt.s32.totalorder %v391, 0
      %vm558 = vcmp.lt.s32.totalorder %v398, 0
      %vm559 = vcmp.lt.s32.totalorder %v405, 0
      %vm560 = vcmp.lt.s32.totalorder %v412, 0
      %vm561 = vcmp.lt.s32.totalorder %v419, 0
      %vm562 = vcmp.lt.s32.totalorder %v426, 0
      %vm563 = vcmp.lt.s32.totalorder %v433, 0
      %vm564 = vcmp.lt.s32.totalorder %v440, 0
      %vm565 = vcmp.lt.s32.totalorder %v447, 0
      %vm566 = vcmp.lt.s32.totalorder %v454, 0
      %vm567 = vcmp.lt.s32.totalorder %v461, 0
      %vm568 = vcmp.lt.s32.totalorder %v468, 0
      %vm569 = vcmp.lt.s32.totalorder %v475, 0
      %vm570 = vcmp.lt.s32.totalorder %v482, 0
      %vm571 = vcmp.lt.s32.totalorder %v489, 0
      %vm572 = vcmp.lt.s32.totalorder %v496, 0
      %vm573 = vcmp.lt.s32.totalorder %v503, 0
      %vm574 = vcmp.lt.s32.totalorder %v510, 0
      %vm575 = vmand %vm543, %vm511
      %vm576 = vmand %vm544, %vm512
      %vm577 = vmand %vm545, %vm513
      %vm578 = vmand %vm546, %vm514
      %vm579 = vmand %vm547, %vm515
      %vm580 = vmand %vm548, %vm516
      %vm581 = vmand %vm549, %vm517
      %vm582 = vmand %vm550, %vm518
      %vm583 = vmand %vm551, %vm519
      %vm584 = vmand %vm552, %vm520
      %vm585 = vmand %vm553, %vm521
      %vm586 = vmand %vm554, %vm522
      %vm587 = vmand %vm555, %vm523
      %vm588 = vmand %vm556, %vm524
      %vm589 = vmand %vm557, %vm525
      %vm590 = vmand %vm558, %vm526
      %vm591 = vmand %vm559, %vm527
      %vm592 = vmand %vm560, %vm528
      %vm593 = vmand %vm561, %vm529
      %vm594 = vmand %vm562, %vm530
      %vm595 = vmand %vm563, %vm531
      %vm596 = vmand %vm564, %vm532
      %vm597 = vmand %vm565, %vm533
      %vm598 = vmand %vm566, %vm534
      %vm599 = vmand %vm567, %vm535
      %vm600 = vmand %vm568, %vm536
      %vm601 = vmand %vm569, %vm537
      %vm602 = vmand %vm570, %vm538
      %vm603 = vmand %vm571, %vm539
      %vm604 = vmand %vm572, %vm540
      %vm605 = vmand %vm573, %vm541
      %vm606 = vmand %vm574, %vm542
      %v607 = vadd.s32 %v293, 16
      %v608 = vadd.s32 %v300, 16
      %v609 = vadd.s32 %v307, 16
      %v610 = vadd.s32 %v314, 16
      %v611 = vadd.s32 %v321, 16
      %v612 = vadd.s32 %v328, 16
      %v613 = vadd.s32 %v335, 16
      %v614 = vadd.s32 %v342, 16
      %v615 = vadd.s32 %v349, 16
      %v616 = vadd.s32 %v356, 16
      %v617 = vadd.s32 %v363, 16
      %v618 = vadd.s32 %v370, 16
      %v619 = vadd.s32 %v377, 16
      %v620 = vadd.s32 %v384, 16
      %v621 = vadd.s32 %v391, 16
      %v622 = vadd.s32 %v398, 16
      %v623 = vadd.s32 %v405, 16
      %v624 = vadd.s32 %v412, 16
      %v625 = vadd.s32 %v419, 16
      %v626 = vadd.s32 %v426, 16
      %v627 = vadd.s32 %v433, 16
      %v628 = vadd.s32 %v440, 16
      %v629 = vadd.s32 %v447, 16
      %v630 = vadd.s32 %v454, 16
      %v631 = vadd.s32 %v461, 16
      %v632 = vadd.s32 %v468, 16
      %v633 = vadd.s32 %v475, 16
      %v634 = vadd.s32 %v482, 16
      %v635 = vadd.s32 %v489, 16
      %v636 = vadd.s32 %v496, 16
      %v637 = vadd.s32 %v503, 16
      %v638 = vadd.s32 %v510, 16
      %v639 = vsel %vm575, %v607, %v293
      %v640 = vsel %vm576, %v608, %v300
      %v641 = vsel %vm577, %v609, %v307
      %v642 = vsel %vm578, %v610, %v314
      %v643 = vsel %vm579, %v611, %v321
      %v644 = vsel %vm580, %v612, %v328
      %v645 = vsel %vm581, %v613, %v335
      %v646 = vsel %vm582, %v614, %v342
      %v647 = vsel %vm583, %v615, %v349
      %v648 = vsel %vm584, %v616, %v356
      %v649 = vsel %vm585, %v617, %v363
      %v650 = vsel %vm586, %v618, %v370
      %v651 = vsel %vm587, %v619, %v377
      %v652 = vsel %vm588, %v620, %v384
      %v653 = vsel %vm589, %v621, %v391
      %v654 = vsel %vm590, %v622, %v398
      %v655 = vsel %vm591, %v623, %v405
      %v656 = vsel %vm592, %v624, %v412
      %v657 = vsel %vm593, %v625, %v419
      %v658 = vsel %vm594, %v626, %v426
      %v659 = vsel %vm595, %v627, %v433
      %v660 = vsel %vm596, %v628, %v440
      %v661 = vsel %vm597, %v629, %v447
      %v662 = vsel %vm598, %v630, %v454
      %v663 = vsel %vm599, %v631, %v461
      %v664 = vsel %vm600, %v632, %v468
      %v665 = vsel %vm601, %v633, %v475
      %v666 = vsel %vm602, %v634, %v482
      %v667 = vsel %vm603, %v635, %v489
      %v668 = vsel %vm604, %v636, %v496
      %v669 = vsel %vm605, %v637, %v503
      %v670 = vsel %vm606, %v638, %v510
      %vm671 = vcmp.gt.s32.totalorder %v639, 0
      %vm672 = vcmp.gt.s32.totalorder %v640, 0
      %vm673 = vcmp.gt.s32.totalorder %v641, 0
      %vm674 = vcmp.gt.s32.totalorder %v642, 0
      %vm675 = vcmp.gt.s32.totalorder %v643, 0
      %vm676 = vcmp.gt.s32.totalorder %v644, 0
      %vm677 = vcmp.gt.s32.totalorder %v645, 0
      %vm678 = vcmp.gt.s32.totalorder %v646, 0
      %vm679 = vcmp.gt.s32.totalorder %v647, 0
      %vm680 = vcmp.gt.s32.totalorder %v648, 0
      %vm681 = vcmp.gt.s32.totalorder %v649, 0
      %vm682 = vcmp.gt.s32.totalorder %v650, 0
      %vm683 = vcmp.gt.s32.totalorder %v651, 0
      %vm684 = vcmp.gt.s32.totalorder %v652, 0
      %vm685 = vcmp.gt.s32.totalorder %v653, 0
      %vm686 = vcmp.gt.s32.totalorder %v654, 0
      %vm687 = vcmp.gt.s32.totalorder %v655, 0
      %vm688 = vcmp.gt.s32.totalorder %v656, 0
      %vm689 = vcmp.gt.s32.totalorder %v657, 0
      %vm690 = vcmp.gt.s32.totalorder %v658, 0
      %vm691 = vcmp.gt.s32.totalorder %v659, 0
      %vm692 = vcmp.gt.s32.totalorder %v660, 0
      %vm693 = vcmp.gt.s32.totalorder %v661, 0
      %vm694 = vcmp.gt.s32.totalorder %v662, 0
      %vm695 = vcmp.gt.s32.totalorder %v663, 0
      %vm696 = vcmp.gt.s32.totalorder %v664, 0
      %vm697 = vcmp.gt.s32.totalorder %v665, 0
      %vm698 = vcmp.gt.s32.totalorder %v666, 0
      %vm699 = vcmp.gt.s32.totalorder %v667, 0
      %vm700 = vcmp.gt.s32.totalorder %v668, 0
      %vm701 = vcmp.gt.s32.totalorder %v669, 0
      %vm702 = vcmp.gt.s32.totalorder %v670, 0
      %v703 = vsel %vm671, 1, 0
      %v704 = vsel %vm672, 1, 0
      %v705 = vsel %vm673, 1, 0
      %v706 = vsel %vm674, 1, 0
      %v707 = vsel %vm675, 1, 0
      %v708 = vsel %vm676, 1, 0
      %v709 = vsel %vm677, 1, 0
      %v710 = vsel %vm678, 1, 0
      %v711 = vsel %vm679, 1, 0
      %v712 = vsel %vm680, 1, 0
      %v713 = vsel %vm681, 1, 0
      %v714 = vsel %vm682, 1, 0
      %v715 = vsel %vm683, 1, 0
      %v716 = vsel %vm684, 1, 0
      %v717 = vsel %vm685, 1, 0
      %v718 = vsel %vm686, 1, 0
      %v719 = vsel %vm687, 1, 0
      %v720 = vsel %vm688, 1, 0
      %v721 = vsel %vm689, 1, 0
      %v722 = vsel %vm690, 1, 0
      %v723 = vsel %vm691, 1, 0
      %v724 = vsel %vm692, 1, 0
      %v725 = vsel %vm693, 1, 0
      %v726 = vsel %vm694, 1, 0
      %v727 = vsel %vm695, 1, 0
      %v728 = vsel %vm696, 1, 0
      %v729 = vsel %vm697, 1, 0
      %v730 = vsel %vm698, 1, 0
      %v731 = vsel %vm699, 1, 0
      %v732 = vsel %vm700, 1, 0
      %v733 = vsel %vm701, 1, 0
      %v734 = vsel %vm702, 1, 0
      %v735 = vcvt.s32.f32 %v703
      %v736 = vcvt.s32.f32 %v704
      %v737 = vcvt.s32.f32 %v705
      %v738 = vcvt.s32.f32 %v706
      %v739 = vcvt.s32.f32 %v707
      %v740 = vcvt.s32.f32 %v708
      %v741 = vcvt.s32.f32 %v709
      %v742 = vcvt.s32.f32 %v710
      %v743 = vcvt.s32.f32 %v711
      %v744 = vcvt.s32.f32 %v712
      %v745 = vcvt.s32.f32 %v713
      %v746 = vcvt.s32.f32 %v714
      %v747 = vcvt.s32.f32 %v715
      %v748 = vcvt.s32.f32 %v716
      %v749 = vcvt.s32.f32 %v717
      %v750 = vcvt.s32.f32 %v718
      %v751 = vcvt.s32.f32 %v719
      %v752 = vcvt.s32.f32 %v720
      %v753 = vcvt.s32.f32 %v721
      %v754 = vcvt.s32.f32 %v722
      %v755 = vcvt.s32.f32 %v723
      %v756 = vcvt.s32.f32 %v724
      %v757 = vcvt.s32.f32 %v725
      %v758 = vcvt.s32.f32 %v726
      %v759 = vcvt.s32.f32 %v727
      %v760 = vcvt.s32.f32 %v728
      %v761 = vcvt.s32.f32 %v729
      %v762 = vcvt.s32.f32 %v730
      %v763 = vcvt.s32.f32 %v731
      %v764 = vcvt.s32.f32 %v732
      %v765 = vcvt.s32.f32 %v733
      %v766 = vcvt.s32.f32 %v734
      %v767 = vpack.c.bf16 %v736, %v735
      %v768 = vpack.c.bf16 %v738, %v737
      %v769 = vpack.c.bf16 %v740, %v739
      %v770 = vpack.c.bf16 %v742, %v741
      %v771 = vpack.c.bf16 %v744, %v743
      %v772 = vpack.c.bf16 %v746, %v745
      %v773 = vpack.c.bf16 %v748, %v747
      %v774 = vpack.c.bf16 %v750, %v749
      %v775 = vpack.c.bf16 %v752, %v751
      %v776 = vpack.c.bf16 %v754, %v753
      %v777 = vpack.c.bf16 %v756, %v755
      %v778 = vpack.c.bf16 %v758, %v757
      %v779 = vpack.c.bf16 %v760, %v759
      %v780 = vpack.c.bf16 %v762, %v761
      %v781 = vpack.c.bf16 %v764, %v763
      %v782 = vpack.c.bf16 %v766, %v765
      %vm783 = vcmp.lt.s32.totalorder %v639, 15
      %vm784 = vcmp.lt.s32.totalorder %v640, 15
      %vm785 = vcmp.lt.s32.totalorder %v641, 15
      %vm786 = vcmp.lt.s32.totalorder %v642, 15
      %vm787 = vcmp.lt.s32.totalorder %v643, 15
      %vm788 = vcmp.lt.s32.totalorder %v644, 15
      %vm789 = vcmp.lt.s32.totalorder %v645, 15
      %vm790 = vcmp.lt.s32.totalorder %v646, 15
      %vm791 = vcmp.lt.s32.totalorder %v647, 15
      %vm792 = vcmp.lt.s32.totalorder %v648, 15
      %vm793 = vcmp.lt.s32.totalorder %v649, 15
      %vm794 = vcmp.lt.s32.totalorder %v650, 15
      %vm795 = vcmp.lt.s32.totalorder %v651, 15
      %vm796 = vcmp.lt.s32.totalorder %v652, 15
      %vm797 = vcmp.lt.s32.totalorder %v653, 15
      %vm798 = vcmp.lt.s32.totalorder %v654, 15
      %vm799 = vcmp.lt.s32.totalorder %v655, 15
      %vm800 = vcmp.lt.s32.totalorder %v656, 15
      %vm801 = vcmp.lt.s32.totalorder %v657, 15
      %vm802 = vcmp.lt.s32.totalorder %v658, 15
      %vm803 = vcmp.lt.s32.totalorder %v659, 15
      %vm804 = vcmp.lt.s32.totalorder %v660, 15
      %vm805 = vcmp.lt.s32.totalorder %v661, 15
      %vm806 = vcmp.lt.s32.totalorder %v662, 15
      %vm807 = vcmp.lt.s32.totalorder %v663, 15
      %vm808 = vcmp.lt.s32.totalorder %v664, 15
      %vm809 = vcmp.lt.s32.totalorder %v665, 15
      %vm810 = vcmp.lt.s32.totalorder %v666, 15
      %vm811 = vcmp.lt.s32.totalorder %v667, 15
      %vm812 = vcmp.lt.s32.totalorder %v668, 15
      %vm813 = vcmp.lt.s32.totalorder %v669, 15
      %vm814 = vcmp.lt.s32.totalorder %v670, 15
      %v815 = vsel %vm783, 1, 0
      %v816 = vsel %vm784, 1, 0
      %v817 = vsel %vm785, 1, 0
      %v818 = vsel %vm786, 1, 0
      %v819 = vsel %vm787, 1, 0
      %v820 = vsel %vm788, 1, 0
      %v821 = vsel %vm789, 1, 0
      %v822 = vsel %vm790, 1, 0
      %v823 = vsel %vm791, 1, 0
      %v824 = vsel %vm792, 1, 0
      %v825 = vsel %vm793, 1, 0
      %v826 = vsel %vm794, 1, 0
      %v827 = vsel %vm795, 1, 0
      %v828 = vsel %vm796, 1, 0
      %v829 = vsel %vm797, 1, 0
      %v830 = vsel %vm798, 1, 0
      %v831 = vsel %vm799, 1, 0
      %v832 = vsel %vm800, 1, 0
      %v833 = vsel %vm801, 1, 0
      %v834 = vsel %vm802, 1, 0
      %v835 = vsel %vm803, 1, 0
      %v836 = vsel %vm804, 1, 0
      %v837 = vsel %vm805, 1, 0
      %v838 = vsel %vm806, 1, 0
      %v839 = vsel %vm807, 1, 0
      %v840 = vsel %vm808, 1, 0
      %v841 = vsel %vm809, 1, 0
      %v842 = vsel %vm810, 1, 0
      %v843 = vsel %vm811, 1, 0
      %v844 = vsel %vm812, 1, 0
      %v845 = vsel %vm813, 1, 0
      %v846 = vsel %vm814, 1, 0
      %v847 = vcvt.s32.f32 %v815
      %v848 = vcvt.s32.f32 %v816
      %v849 = vcvt.s32.f32 %v817
      %v850 = vcvt.s32.f32 %v818
      %v851 = vcvt.s32.f32 %v819
      %v852 = vcvt.s32.f32 %v820
      %v853 = vcvt.s32.f32 %v821
      %v854 = vcvt.s32.f32 %v822
      %v855 = vcvt.s32.f32 %v823
      %v856 = vcvt.s32.f32 %v824
      %v857 = vcvt.s32.f32 %v825
      %v858 = vcvt.s32.f32 %v826
      %v859 = vcvt.s32.f32 %v827
      %v860 = vcvt.s32.f32 %v828
      %v861 = vcvt.s32.f32 %v829
      %v862 = vcvt.s32.f32 %v830
      %v863 = vcvt.s32.f32 %v831
      %v864 = vcvt.s32.f32 %v832
      %v865 = vcvt.s32.f32 %v833
      %v866 = vcvt.s32.f32 %v834
      %v867 = vcvt.s32.f32 %v835
      %v868 = vcvt.s32.f32 %v836
      %v869 = vcvt.s32.f32 %v837
      %v870 = vcvt.s32.f32 %v838
      %v871 = vcvt.s32.f32 %v839
      %v872 = vcvt.s32.f32 %v840
      %v873 = vcvt.s32.f32 %v841
      %v874 = vcvt.s32.f32 %v842
      %v875 = vcvt.s32.f32 %v843
      %v876 = vcvt.s32.f32 %v844
      %v877 = vcvt.s32.f32 %v845
      %v878 = vcvt.s32.f32 %v846
      %v879 = vpack.c.bf16 %v848, %v847
      %v880 = vpack.c.bf16 %v850, %v849
      %v881 = vpack.c.bf16 %v852, %v851
      %v882 = vpack.c.bf16 %v854, %v853
      %v883 = vpack.c.bf16 %v856, %v855
      %v884 = vpack.c.bf16 %v858, %v857
      %v885 = vpack.c.bf16 %v860, %v859
      %v886 = vpack.c.bf16 %v862, %v861
      %v887 = vpack.c.bf16 %v864, %v863
      %v888 = vpack.c.bf16 %v866, %v865
      %v889 = vpack.c.bf16 %v868, %v867
      %v890 = vpack.c.bf16 %v870, %v869
      %v891 = vpack.c.bf16 %v872, %v871
      %v892 = vpack.c.bf16 %v874, %v873
      %v893 = vpack.c.bf16 %v876, %v875
      %v894 = vpack.c.bf16 %v878, %v877
      %v895 = vld [vmem:[#allocation2] sm:$0x80]
      %v896 = vld [vmem:[#allocation2 + $0x8] sm:$0xff]
      %v897 = vld [vmem:[#allocation2 + $0x10] sm:$0xff]
      %v898 = vld [vmem:[#allocation2 + $0x18] sm:$0xff]
      %v899 = vld [vmem:[#allocation2 + $0x20] sm:$0xff]
      %v900 = vld [vmem:[#allocation2 + $0x28] sm:$0xff]
      %v901 = vld [vmem:[#allocation2 + $0x30] sm:$0xff]
      %v902 = vld [vmem:[#allocation2 + $0x38] sm:$0xff]
      %v903 = vld [vmem:[#allocation2 + $0x40] sm:$0xff]
      %v904 = vld [vmem:[#allocation2 + $0x48] sm:$0xff]
      %v905 = vld [vmem:[#allocation2 + $0x50] sm:$0xff]
      %v906 = vld [vmem:[#allocation2 + $0x58] sm:$0xff]
      %v907 = vld [vmem:[#allocation2 + $0x60] sm:$0xff]
      %v908 = vld [vmem:[#allocation2 + $0x68] sm:$0xff]
      %v909 = vld [vmem:[#allocation2 + $0x70] sm:$0xff]
      %v910 = vld [vmem:[#allocation2 + $0x78] sm:$0xff]
      %v911 = vld [vmem:[#allocation2 + $0x80] sm:$0xff]
      %vm912 = vsmask.f32 7424
      %v914 = vshll.u32 %v767, 16
      %v916 = vrot.slane %v914, 1
      %v917 = vshrl.u32 %v767, 16
      %v919 = vor.u32 %v917, %v916
      %v921 = vshll.u32 %v768, 16
      %v923 = vrot.slane %v921, 1
      %v924 = vsel %vm912, %v919, %v923
      %v925 = vshrl.u32 %v768, 16
      %v927 = vor.u32 %v925, %v923
      %v929 = vshll.u32 %v769, 16
      %v931 = vrot.slane %v929, 1
      %v932 = vsel %vm912, %v927, %v931
      %v933 = vshrl.u32 %v769, 16
      %v935 = vor.u32 %v933, %v931
      %v937 = vshll.u32 %v770, 16
      %v939 = vrot.slane %v937, 1
      %v940 = vsel %vm912, %v935, %v939
      %v941 = vshrl.u32 %v770, 16
      %v943 = vor.u32 %v941, %v939
      %v945 = vshll.u32 %v771, 16
      %v947 = vrot.slane %v945, 1
      %v948 = vsel %vm912, %v943, %v947
      %v949 = vshrl.u32 %v771, 16
      %v951 = vor.u32 %v949, %v947
      %v953 = vshll.u32 %v772, 16
      %v955 = vrot.slane %v953, 1
      %v956 = vsel %vm912, %v951, %v955
      %v957 = vshrl.u32 %v772, 16
      %v959 = vor.u32 %v957, %v955
      %v961 = vshll.u32 %v773, 16
      %v963 = vrot.slane %v961, 1
      %v964 = vsel %vm912, %v959, %v963
      %v965 = vshrl.u32 %v773, 16
      %v967 = vor.u32 %v965, %v963
      %v969 = vshll.u32 %v774, 16
      %v971 = vrot.slane %v969, 1
      %v972 = vsel %vm912, %v967, %v971
      %v973 = vshrl.u32 %v774, 16
      %v975 = vor.u32 %v973, %v971
      %v977 = vshll.u32 %v775, 16
      %v979 = vrot.slane %v977, 1
      %v980 = vsel %vm912, %v975, %v979
      %v981 = vshrl.u32 %v775, 16
      %v983 = vor.u32 %v981, %v979
      %v985 = vshll.u32 %v776, 16
      %v987 = vrot.slane %v985, 1
      %v988 = vsel %vm912, %v983, %v987
      %v989 = vshrl.u32 %v776, 16
      %v991 = vor.u32 %v989, %v987
      %v993 = vshll.u32 %v777, 16
      %v995 = vrot.slane %v993, 1
      %v996 = vsel %vm912, %v991, %v995
      %v997 = vshrl.u32 %v777, 16
      %v999 = vor.u32 %v997, %v995
      %v1001 = vshll.u32 %v778, 16
      %v1003 = vrot.slane %v1001, 1
      %v1004 = vsel %vm912, %v999, %v1003
      %v1005 = vshrl.u32 %v778, 16
      %v1007 = vor.u32 %v1005, %v1003
      %v1009 = vshll.u32 %v779, 16
      %v1011 = vrot.slane %v1009, 1
      %v1012 = vsel %vm912, %v1007, %v1011
      %v1013 = vshrl.u32 %v779, 16
      %v1015 = vor.u32 %v1013, %v1011
      %v1017 = vshll.u32 %v780, 16
      %v1019 = vrot.slane %v1017, 1
      %v1020 = vsel %vm912, %v1015, %v1019
      %v1021 = vshrl.u32 %v780, 16
      %v1023 = vor.u32 %v1021, %v1019
      %v1025 = vshll.u32 %v781, 16
      %v1027 = vrot.slane %v1025, 1
      %v1028 = vsel %vm912, %v1023, %v1027
      %v1029 = vshrl.u32 %v781, 16
      %v1031 = vor.u32 %v1029, %v1027
      %v1033 = vshll.u32 %v782, 16
      %v1035 = vrot.slane %v1033, 1
      %v1036 = vsel %vm912, %v1031, %v1035
      %v1037 = vshrl.u32 %v782, 16
      %v1039 = vor.u32 %v1037, %v1035
      %v1057 = vmul.bf16 %v895, %v916
      %v1058 = vmul.bf16 %v896, %v924
      %v1059 = vmul.bf16 %v897, %v932
      %v1060 = vmul.bf16 %v898, %v940
      %v1061 = vmul.bf16 %v899, %v948
      %v1062 = vmul.bf16 %v900, %v956
      %v1063 = vmul.bf16 %v901, %v964
      %v1064 = vmul.bf16 %v902, %v972
      %v1065 = vmul.bf16 %v903, %v980
      %v1066 = vmul.bf16 %v904, %v988
      %v1067 = vmul.bf16 %v905, %v996
      %v1068 = vmul.bf16 %v906, %v1004
      %v1069 = vmul.bf16 %v907, %v1012
      %v1070 = vmul.bf16 %v908, %v1020
      %v1071 = vmul.bf16 %v909, %v1028
      %v1072 = vmul.bf16 %v910, %v1036
      %v1073 = vmul.bf16 %v911, %v1039
      %v1074 = vld [vmem:[%s1] sm:$0xf]
      %v1075 = vld [vmem:[%s1 + $0x4] sm:$0xf]
      %v1076 = vld [vmem:[%s1 + $0x8] sm:$0xf]
      %v1077 = vld [vmem:[%s1 + $0xc] sm:$0xf]
      %v1078 = vld [vmem:[%s1 + $0x10] sm:$0xf]
      %v1079 = vld [vmem:[%s1 + $0x14] sm:$0xf]
      %v1080 = vld [vmem:[%s1 + $0x18] sm:$0xf]
      %v1081 = vld [vmem:[%s1 + $0x1c] sm:$0xf]
      %v1082 = vld [vmem:[%s1 + $0x20] sm:$0xf]
      %v1083 = vld [vmem:[%s1 + $0x24] sm:$0xf]
      %v1084 = vld [vmem:[%s1 + $0x28] sm:$0xf]
      %v1085 = vld [vmem:[%s1 + $0x2c] sm:$0xf]
      %v1086 = vld [vmem:[%s1 + $0x30] sm:$0xf]
      %v1087 = vld [vmem:[%s1 + $0x34] sm:$0xf]
      %v1088 = vld [vmem:[%s1 + $0x38] sm:$0xf]
      %v1089 = vld [vmem:[%s1 + $0x3c] sm:$0xf]
      %vm1090 = vsmask.f32 256
      %v1092 = vshrl.u32 %v1057, 16
      %v1094 = vrot.slane %v1092, 7
      %v1096 = vshrl.u32 %v1058, 16
      %v1098 = vrot.slane %v1096, 7
      %v1099 = vshll.u32 %v1058, 16
      %v1101 = vor.u32 %v1098, %v1099
      %v1102 = vsel %vm1090, %v1094, %v1101
      %v1104 = vshrl.u32 %v1059, 16
      %v1106 = vrot.slane %v1104, 7
      %v1107 = vshll.u32 %v1059, 16
      %v1109 = vor.u32 %v1106, %v1107
      %v1110 = vsel %vm1090, %v1098, %v1109
      %v1112 = vshrl.u32 %v1060, 16
      %v1114 = vrot.slane %v1112, 7
      %v1115 = vshll.u32 %v1060, 16
      %v1117 = vor.u32 %v1114, %v1115
      %v1118 = vsel %vm1090, %v1106, %v1117
      %v1120 = vshrl.u32 %v1061, 16
      %v1122 = vrot.slane %v1120, 7
      %v1123 = vshll.u32 %v1061, 16
      %v1125 = vor.u32 %v1122, %v1123
      %v1126 = vsel %vm1090, %v1114, %v1125
      %v1128 = vshrl.u32 %v1062, 16
      %v1130 = vrot.slane %v1128, 7
      %v1131 = vshll.u32 %v1062, 16
      %v1133 = vor.u32 %v1130, %v1131
      %v1134 = vsel %vm1090, %v1122, %v1133
      %v1136 = vshrl.u32 %v1063, 16
      %v1138 = vrot.slane %v1136, 7
      %v1139 = vshll.u32 %v1063, 16
      %v1141 = vor.u32 %v1138, %v1139
      %v1142 = vsel %vm1090, %v1130, %v1141
      %v1144 = vshrl.u32 %v1064, 16
      %v1146 = vrot.slane %v1144, 7
      %v1147 = vshll.u32 %v1064, 16
      %v1149 = vor.u32 %v1146, %v1147
      %v1150 = vsel %vm1090, %v1138, %v1149
      %v1152 = vshrl.u32 %v1065, 16
      %v1154 = vrot.slane %v1152, 7
      %v1155 = vshll.u32 %v1065, 16
      %v1157 = vor.u32 %v1154, %v1155
      %v1158 = vsel %vm1090, %v1146, %v1157
      %v1160 = vshrl.u32 %v1066, 16
      %v1162 = vrot.slane %v1160, 7
      %v1163 = vshll.u32 %v1066, 16
      %v1165 = vor.u32 %v1162, %v1163
      %v1166 = vsel %vm1090, %v1154, %v1165
      %v1168 = vshrl.u32 %v1067, 16
      %v1170 = vrot.slane %v1168, 7
      %v1171 = vshll.u32 %v1067, 16
      %v1173 = vor.u32 %v1170, %v1171
      %v1174 = vsel %vm1090, %v1162, %v1173
      %v1176 = vshrl.u32 %v1068, 16
      %v1178 = vrot.slane %v1176, 7
      %v1179 = vshll.u32 %v1068, 16
      %v1181 = vor.u32 %v1178, %v1179
      %v1182 = vsel %vm1090, %v1170, %v1181
      %v1184 = vshrl.u32 %v1069, 16
      %v1186 = vrot.slane %v1184, 7
      %v1187 = vshll.u32 %v1069, 16
      %v1189 = vor.u32 %v1186, %v1187
      %v1190 = vsel %vm1090, %v1178, %v1189
      %v1192 = vshrl.u32 %v1070, 16
      %v1194 = vrot.slane %v1192, 7
      %v1195 = vshll.u32 %v1070, 16
      %v1197 = vor.u32 %v1194, %v1195
      %v1198 = vsel %vm1090, %v1186, %v1197
      %v1200 = vshrl.u32 %v1071, 16
      %v1202 = vrot.slane %v1200, 7
      %v1203 = vshll.u32 %v1071, 16
      %v1205 = vor.u32 %v1202, %v1203
      %v1206 = vsel %vm1090, %v1194, %v1205
      %v1208 = vshrl.u32 %v1072, 16
      %v1210 = vrot.slane %v1208, 7
      %v1211 = vshll.u32 %v1072, 16
      %v1213 = vor.u32 %v1210, %v1211
      %v1214 = vsel %vm1090, %v1202, %v1213
      %v1216 = vshrl.u32 %v1073, 16
      %v1218 = vrot.slane %v1216, 7
      %v1219 = vshll.u32 %v1073, 16
      %v1221 = vor.u32 %v1218, %v1219
      %v1222 = vsel %vm1090, %v1210, %v1221
      %v1255 = vunpack.c.l.b16 %v1074
      %v1256 = vunpack.c.l.b16 %v1075
      %v1257 = vunpack.c.l.b16 %v1076
      %v1258 = vunpack.c.l.b16 %v1077
      %v1259 = vunpack.c.l.b16 %v1078
      %v1260 = vunpack.c.l.b16 %v1079
      %v1261 = vunpack.c.l.b16 %v1080
      %v1262 = vunpack.c.l.b16 %v1081
      %v1263 = vunpack.c.l.b16 %v1082
      %v1264 = vunpack.c.l.b16 %v1083
      %v1265 = vunpack.c.l.b16 %v1084
      %v1266 = vunpack.c.l.b16 %v1085
      %v1267 = vunpack.c.l.b16 %v1086
      %v1268 = vunpack.c.l.b16 %v1087
      %v1269 = vunpack.c.l.b16 %v1088
      %v1270 = vunpack.c.l.b16 %v1089
      %v1271 = vpack.c.b16 %v1256, %v1255
      %v1272 = vpack.c.b16 %v1258, %v1257
      %v1273 = vpack.c.b16 %v1260, %v1259
      %v1274 = vpack.c.b16 %v1262, %v1261
      %v1275 = vpack.c.b16 %v1264, %v1263
      %v1276 = vpack.c.b16 %v1266, %v1265
      %v1277 = vpack.c.b16 %v1268, %v1267
      %v1278 = vpack.c.b16 %v1270, %v1269
      %1287 = vmatprep.subr.bf16.mxu0 0
      %1288 = vmatpush1.bf16.msra.mxu0 %v1271
      %1289 = vmatprep.subr.bf16.mxu0 0
      %1290 = vmatpush1.bf16.msra.mxu0 %v1272
      %1291 = vmatprep.subr.bf16.mxu0 0
      %1292 = vmatpush1.bf16.msra.mxu0 %v1273
      %1293 = vmatprep.subr.bf16.mxu0 0
      %1294 = vmatpush1.bf16.msra.mxu0 %v1274
      %1295 = vmatprep.subr.bf16.mxu0 0
      %1296 = vmatpush1.bf16.msra.mxu0 %v1275
      %1297 = vmatprep.subr.bf16.mxu0 0
      %1298 = vmatpush1.bf16.msra.mxu0 %v1276
      %1299 = vmatprep.subr.bf16.mxu0 0
      %1300 = vmatpush1.bf16.msra.mxu0 %v1277
      %1301 = vmatprep.subr.bf16.mxu0 0
      %1302 = vmatpush1.bf16.msra.mxu0 %v1278
      %1303 = vmatprep.subr.bf16.mxu0 0
      %1304 = vmatpush1.bf16.msra.mxu0 0
      %1305 = vmatprep.subr.bf16.mxu0 0
      %1306 = vmatpush1.bf16.msra.mxu0 0
      %1307 = vmatprep.subr.bf16.mxu0 0
      %1308 = vmatpush1.bf16.msra.mxu0 0
      %1309 = vmatprep.subr.bf16.mxu0 0
      %1310 = vmatpush1.bf16.msra.mxu0 0
      %1311 = vmatprep.subr.bf16.mxu0 0
      %1312 = vmatpush1.bf16.msra.mxu0 0
      %1313 = vmatprep.subr.bf16.mxu0 0
      %1314 = vmatpush1.bf16.msra.mxu0 0
      %1315 = vmatprep.subr.bf16.mxu0 0
      %1316 = vmatpush1.bf16.msra.mxu0 0
      %1317 = vmatprep.subr.bf16.mxu0 0
      %1318 = vmatpush1.bf16.msra.mxu0 0
      %1319 = vmatprep.mubr.bf16.mxu0 0
      %1320 = vmatmul.mubr.bf16.gmra.mrb[0].mxu0 %v1102
      %v1321 = vpop.f32.mrb[0].mxu0
      %v1322 = vadd.f32 0.0, %v1321
      %v1323 = vpop.f32.mrb[0].mxu0
      %v1324 = vpop.f32.mrb[0].mxu0
      %v1325 = vadd.f32 0.0, %v1324
      %v1326 = vpop.f32.mrb[0].mxu0
      %1327 = vmatprep.mubr.bf16.mxu0 0
      %1328 = vmatmul.mubr.bf16.gmra.mrb[0].mxu0 %v1110
      %v1329 = vpop.f32.mrb[0].mxu0
      %v1330 = vadd.f32 0.0, %v1329
      %v1331 = vpop.f32.mrb[0].mxu0
      %v1332 = vpop.f32.mrb[0].mxu0
      %v1333 = vadd.f32 0.0, %v1332
      %v1334 = vpop.f32.mrb[0].mxu0
      %1335 = vmatprep.mubr.bf16.mxu0 0
      %1336 = vmatmul.mubr.bf16.gmra.mrb[0].mxu0 %v1118
      %v1337 = vpop.f32.mrb[0].mxu0
      %v1338 = vadd.f32 0.0, %v1337
      %v1339 = vpop.f32.mrb[0].mxu0
      %v1340 = vpop.f32.mrb[0].mxu0
      %v1341 = vadd.f32 0.0, %v1340
      %v1342 = vpop.f32.mrb[0].mxu0
      %1343 = vmatprep.mubr.bf16.mxu0 0
      %1344 = vmatmul.mubr.bf16.gmra.mrb[0].mxu0 %v1126
      %v1345 = vpop.f32.mrb[0].mxu0
      %v1346 = vadd.f32 0.0, %v1345
      %v1347 = vpop.f32.mrb[0].mxu0
      %v1348 = vpop.f32.mrb[0].mxu0
      %v1349 = vadd.f32 0.0, %v1348
      %v1350 = vpop.f32.mrb[0].mxu0
      %1351 = vmatprep.mubr.bf16.mxu0 0
      %1352 = vmatmul.mubr.bf16.gmra.mrb[0].mxu0 %v1134
      %v1353 = vpop.f32.mrb[0].mxu0
      %v1354 = vadd.f32 0.0, %v1353
      %v1355 = vpop.f32.mrb[0].mxu0
      %v1356 = vpop.f32.mrb[0].mxu0
      %v1357 = vadd.f32 0.0, %v1356
      %v1358 = vpop.f32.mrb[0].mxu0
      %1359 = vmatprep.mubr.bf16.mxu0 0
      %1360 = vmatmul.mubr.bf16.gmra.mrb[0].mxu0 %v1142
      %v1361 = vpop.f32.mrb[0].mxu0
      %v1362 = vadd.f32 0.0, %v1361
      %v1363 = vpop.f32.mrb[0].mxu0
      %v1364 = vpop.f32.mrb[0].mxu0
      %v1365 = vadd.f32 0.0, %v1364
      %v1366 = vpop.f32.mrb[0].mxu0
      %1367 = vmatprep.mubr.bf16.mxu0 0
      %1368 = vmatmul.mubr.bf16.gmra.mrb[0].mxu0 %v1150
      %v1369 = vpop.f32.mrb[0].mxu0
      %v1370 = vadd.f32 0.0, %v1369
      %v1371 = vpop.f32.mrb[0].mxu0
      %v1372 = vpop.f32.mrb[0].mxu0
      %v1373 = vadd.f32 0.0, %v1372
      %v1374 = vpop.f32.mrb[0].mxu0
      %1375 = vmatprep.mubr.bf16.mxu0 0
      %1376 = vmatmul.mubr.bf16.gmra.mrb[0].mxu0 %v1158
      %v1377 = vpop.f32.mrb[0].mxu0
      %v1378 = vadd.f32 0.0, %v1377
      %v1379 = vpop.f32.mrb[0].mxu0
      %v1380 = vpop.f32.mrb[0].mxu0
      %v1381 = vadd.f32 0.0, %v1380
      %v1382 = vpop.f32.mrb[0].mxu0
      %1383 = vmatprep.mubr.bf16.mxu0 0
      %1384 = vmatmul.mubr.bf16.gmra.mrb[0].mxu0 %v1166
      %v1385 = vpop.f32.mrb[0].mxu0
      %v1386 = vadd.f32 0.0, %v1385
      %v1387 = vpop.f32.mrb[0].mxu0
      %v1388 = vpop.f32.mrb[0].mxu0
      %v1389 = vadd.f32 0.0, %v1388
      %v1390 = vpop.f32.mrb[0].mxu0
      %1391 = vmatprep.mubr.bf16.mxu0 0
      %1392 = vmatmul.mubr.bf16.gmra.mrb[0].mxu0 %v1174
      %v1393 = vpop.f32.mrb[0].mxu0
      %v1394 = vadd.f32 0.0, %v1393
      %v1395 = vpop.f32.mrb[0].mxu0
      %v1396 = vpop.f32.mrb[0].mxu0
      %v1397 = vadd.f32 0.0, %v1396
      %v1398 = vpop.f32.mrb[0].mxu0
      %1399 = vmatprep.mubr.bf16.mxu0 0
      %1400 = vmatmul.mubr.bf16.gmra.mrb[0].mxu0 %v1182
      %v1401 = vpop.f32.mrb[0].mxu0
      %v1402 = vadd.f32 0.0, %v1401
      %v1403 = vpop.f32.mrb[0].mxu0
      %v1404 = vpop.f32.mrb[0].mxu0
      %v1405 = vadd.f32 0.0, %v1404
      %v1406 = vpop.f32.mrb[0].mxu0
      %1407 = vmatprep.mubr.bf16.mxu0 0
      %1408 = vmatmul.mubr.bf16.gmra.mrb[0].mxu0 %v1190
      %v1409 = vpop.f32.mrb[0].mxu0
      %v1410 = vadd.f32 0.0, %v1409
      %v1411 = vpop.f32.mrb[0].mxu0
      %v1412 = vpop.f32.mrb[0].mxu0
      %v1413 = vadd.f32 0.0, %v1412
      %v1414 = vpop.f32.mrb[0].mxu0
      %1415 = vmatprep.mubr.bf16.mxu0 0
      %1416 = vmatmul.mubr.bf16.gmra.mrb[0].mxu0 %v1198
      %v1417 = vpop.f32.mrb[0].mxu0
      %v1418 = vadd.f32 0.0, %v1417
      %v1419 = vpop.f32.mrb[0].mxu0
      %v1420 = vpop.f32.mrb[0].mxu0
      %v1421 = vadd.f32 0.0, %v1420
      %v1422 = vpop.f32.mrb[0].mxu0
      %1423 = vmatprep.mubr.bf16.mxu0 0
      %1424 = vmatmul.mubr.bf16.gmra.mrb[0].mxu0 %v1206
      %v1425 = vpop.f32.mrb[0].mxu0
      %v1426 = vadd.f32 0.0, %v1425
      %v1427 = vpop.f32.mrb[0].mxu0
      %v1428 = vpop.f32.mrb[0].mxu0
      %v1429 = vadd.f32 0.0, %v1428
      %v1430 = vpop.f32.mrb[0].mxu0
      %1431 = vmatprep.mubr.bf16.mxu0 0
      %1432 = vmatmul.mubr.bf16.gmra.mrb[0].mxu0 %v1214
      %v1433 = vpop.f32.mrb[0].mxu0
      %v1434 = vadd.f32 0.0, %v1433
      %v1435 = vpop.f32.mrb[0].mxu0
      %v1436 = vpop.f32.mrb[0].mxu0
      %v1437 = vadd.f32 0.0, %v1436
      %v1438 = vpop.f32.mrb[0].mxu0
      %1439 = vmatprep.mubr.bf16.mxu0 0
      %1440 = vmatmul.mubr.bf16.gmra.mrb[0].mxu0 %v1222
      %v1441 = vpop.f32.mrb[0].mxu0
      %v1442 = vadd.f32 0.0, %v1441
      %v1443 = vpop.f32.mrb[0].mxu0
      %v1444 = vpop.f32.mrb[0].mxu0
      %v1445 = vadd.f32 0.0, %v1444
      %v1446 = vpop.f32.mrb[0].mxu0
      %1447 = vdwg.mxu0
      %1448 = vst [vmem:[#allocation3] sm:$0xff] %v1322
      %1449 = vst [vmem:[#allocation3 + $0x8] sm:$0xff] %v1325
      %1450 = vst [vmem:[#allocation3 + $0x10] sm:$0xff] %v1330
      %1451 = vst [vmem:[#allocation3 + $0x18] sm:$0xff] %v1333
      %1452 = vst [vmem:[#allocation3 + $0x20] sm:$0xff] %v1338
      %1453 = vst [vmem:[#allocation3 + $0x28] sm:$0xff] %v1341
      %1454 = vst [vmem:[#allocation3 + $0x30] sm:$0xff] %v1346
      %1455 = vst [vmem:[#allocation3 + $0x38] sm:$0xff] %v1349
      %1456 = vst [vmem:[#allocation3 + $0x40] sm:$0xff] %v1354
      %1457 = vst [vmem:[#allocation3 + $0x48] sm:$0xff] %v1357
      %1458 = vst [vmem:[#allocation3 + $0x50] sm:$0xff] %v1362
      %1459 = vst [vmem:[#allocation3 + $0x58] sm:$0xff] %v1365
      %1460 = vst [vmem:[#allocation3 + $0x60] sm:$0xff] %v1370
      %1461 = vst [vmem:[#allocation3 + $0x68] sm:$0xff] %v1373
      %1462 = vst [vmem:[#allocation3 + $0x70] sm:$0xff] %v1378
      %1463 = vst [vmem:[#allocation3 + $0x78] sm:$0xff] %v1381
      %1464 = vst [vmem:[#allocation3 + $0x80] sm:$0xff] %v1386
      %1465 = vst [vmem:[#allocation3 + $0x88] sm:$0xff] %v1389
      %1466 = vst [vmem:[#allocation3 + $0x90] sm:$0xff] %v1394
      %1467 = vst [vmem:[#allocation3 + $0x98] sm:$0xff] %v1397
      %1468 = vst [vmem:[#allocation3 + $0xa0] sm:$0xff] %v1402
      %1469 = vst [vmem:[#allocation3 + $0xa8] sm:$0xff] %v1405
      %1470 = vst [vmem:[#allocation3 + $0xb0] sm:$0xff] %v1410
      %1471 = vst [vmem:[#allocation3 + $0xb8] sm:$0xff] %v1413
      %1472 = vst [vmem:[#allocation3 + $0xc0] sm:$0xff] %v1418
      %1473 = vst [vmem:[#allocation3 + $0xc8] sm:$0xff] %v1421
      %1474 = vst [vmem:[#allocation3 + $0xd0] sm:$0xff] %v1426
      %1475 = vst [vmem:[#allocation3 + $0xd8] sm:$0xff] %v1429
      %1476 = vst [vmem:[#allocation3 + $0xe0] sm:$0xff] %v1434
      %1477 = vst [vmem:[#allocation3 + $0xe8] sm:$0xff] %v1437
      %1478 = vst [vmem:[#allocation3 + $0xf0] sm:$0xff] %v1442
      %1479 = vst [vmem:[#allocation3 + $0xf8] sm:$0xff] %v1445
      %v1480 = vld [vmem:[#allocation2 + $0x8] sm:$0xff]
      %v1481 = vld [vmem:[#allocation2 + $0x10] sm:$0xff]
      %v1482 = vld [vmem:[#allocation2 + $0x18] sm:$0xff]
      %v1483 = vld [vmem:[#allocation2 + $0x20] sm:$0xff]
      %v1484 = vld [vmem:[#allocation2 + $0x28] sm:$0xff]
      %v1485 = vld [vmem:[#allocation2 + $0x30] sm:$0xff]
      %v1486 = vld [vmem:[#allocation2 + $0x38] sm:$0xff]
      %v1487 = vld [vmem:[#allocation2 + $0x40] sm:$0xff]
      %v1488 = vld [vmem:[#allocation2 + $0x48] sm:$0xff]
      %v1489 = vld [vmem:[#allocation2 + $0x50] sm:$0xff]
      %v1490 = vld [vmem:[#allocation2 + $0x58] sm:$0xff]
      %v1491 = vld [vmem:[#allocation2 + $0x60] sm:$0xff]
      %v1492 = vld [vmem:[#allocation2 + $0x68] sm:$0xff]
      %v1493 = vld [vmem:[#allocation2 + $0x70] sm:$0xff]
      %v1494 = vld [vmem:[#allocation2 + $0x78] sm:$0xff]
      %v1495 = vld [vmem:[#allocation2 + $0x80] sm:$0xff]
      %v1496 = vld [vmem:[%s1 + $0x40] sm:$0xf]
      %v1497 = vld [vmem:[%s1 + $0x44] sm:$0xf]
      %v1498 = vld [vmem:[%s1 + $0x48] sm:$0xf]
      %v1499 = vld [vmem:[%s1 + $0x4c] sm:$0xf]
      %v1500 = vld [vmem:[%s1 + $0x50] sm:$0xf]
      %v1501 = vld [vmem:[%s1 + $0x54] sm:$0xf]
      %v1502 = vld [vmem:[%s1 + $0x58] sm:$0xf]
      %v1503 = vld [vmem:[%s1 + $0x5c] sm:$0xf]
      %v1504 = vld [vmem:[%s1 + $0x60] sm:$0xf]
      %v1505 = vld [vmem:[%s1 + $0x64] sm:$0xf]
      %v1506 = vld [vmem:[%s1 + $0x68] sm:$0xf]
      %v1507 = vld [vmem:[%s1 + $0x6c] sm:$0xf]
      %v1508 = vld [vmem:[%s1 + $0x70] sm:$0xf]
      %v1509 = vld [vmem:[%s1 + $0x74] sm:$0xf]
      %v1510 = vld [vmem:[%s1 + $0x78] sm:$0xf]
      %v1511 = vld [vmem:[%s1 + $0x7c] sm:$0xf]
      %v1528 = vunpack.c.l.b16 %v1496
      %v1529 = vunpack.c.l.b16 %v1497
      %v1530 = vunpack.c.l.b16 %v1498
      %v1531 = vunpack.c.l.b16 %v1499
      %v1532 = vunpack.c.l.b16 %v1500
      %v1533 = vunpack.c.l.b16 %v1501
      %v1534 = vunpack.c.l.b16 %v1502
      %v1535 = vunpack.c.l.b16 %v1503
      %v1536 = vunpack.c.l.b16 %v1504
      %v1537 = vunpack.c.l.b16 %v1505
      %v1538 = vunpack.c.l.b16 %v1506
      %v1539 = vunpack.c.l.b16 %v1507
      %v1540 = vunpack.c.l.b16 %v1508
      %v1541 = vunpack.c.l.b16 %v1509
      %v1542 = vunpack.c.l.b16 %v1510
      %v1543 = vunpack.c.l.b16 %v1511
      %v1544 = vpack.c.b16 %v1529, %v1528
      %v1545 = vpack.c.b16 %v1531, %v1530
      %v1546 = vpack.c.b16 %v1533, %v1532
      %v1547 = vpack.c.b16 %v1535, %v1534
      %v1548 = vpack.c.b16 %v1537, %v1536
      %v1549 = vpack.c.b16 %v1539, %v1538
      %v1550 = vpack.c.b16 %v1541, %v1540
      %v1551 = vpack.c.b16 %v1543, %v1542
      %1560 = vmatprep.subr.bf16.mxu0 0
      %1561 = vmatpush1.bf16.msra.mxu0 %v1544
      %1562 = vmatprep.subr.bf16.mxu0 0
      %1563 = vmatpush1.bf16.msra.mxu0 %v1545
      %1564 = vmatprep.subr.bf16.mxu0 0
      %1565 = vmatpush1.bf16.msra.mxu0 %v1546
      %1566 = vmatprep.subr.bf16.mxu0 0
      %1567 = vmatpush1.bf16.msra.mxu0 %v1547
      %1568 = vmatprep.subr.bf16.mxu0 0
      %1569 = vmatpush1.bf16.msra.mxu0 %v1548
      %1570 = vmatprep.subr.bf16.mxu0 0
      %1571 = vmatpush1.bf16.msra.mxu0 %v1549
      %1572 = vmatprep.subr.bf16.mxu0 0
      %1573 = vmatpush1.bf16.msra.mxu0 %v1550
      %1574 = vmatprep.subr.bf16.mxu0 0
      %1575 = vmatpush1.bf16.msra.mxu0 %v1551
      %1576 = vmatprep.subr.bf16.mxu0 0
      %1577 = vmatpush1.bf16.msra.mxu0 0
      %1578 = vmatprep.subr.bf16.mxu0 0
      %1579 = vmatpush1.bf16.msra.mxu0 0
      %1580 = vmatprep.subr.bf16.mxu0 0
      %1581 = vmatpush1.bf16.msra.mxu0 0
      %1582 = vmatprep.subr.bf16.mxu0 0
      %1583 = vmatpush1.bf16.msra.mxu0 0
      %1584 = vmatprep.subr.bf16.mxu0 0
      %1585 = vmatpush1.bf16.msra.mxu0 0
      %1586 = vmatprep.subr.bf16.mxu0 0
      %1587 = vmatpush1.bf16.msra.mxu0 0
      %1588 = vmatprep.subr.bf16.mxu0 0
      %1589 = vmatpush1.bf16.msra.mxu0 0
      %1590 = vmatprep.subr.bf16.mxu0 0
      %1591 = vmatpush1.bf16.msra.mxu0 0
      %1592 = vmatprep.mubr.bf16.mxu0 0
      %1593 = vmatmul.mubr.bf16.gmra.mrb[0].mxu0 %v1480
      %v1594 = vpop.f32.mrb[0].mxu0
      %v1595 = vadd.f32 0.0, %v1594
      %v1596 = vpop.f32.mrb[0].mxu0
      %v1597 = vpop.f32.mrb[0].mxu0
      %v1598 = vadd.f32 0.0, %v1597
      %v1599 = vpop.f32.mrb[0].mxu0
      %1600 = vmatprep.mubr.bf16.mxu0 0
      %1601 = vmatmul.mubr.bf16.gmra.mrb[0].mxu0 %v1481
      %v1602 = vpop.f32.mrb[0].mxu0
      %v1603 = vadd.f32 0.0, %v1602
      %v1604 = vpop.f32.mrb[0].mxu0
      %v1605 = vpop.f32.mrb[0].mxu0
      %v1606 = vadd.f32 0.0, %v1605
      %v1607 = vpop.f32.mrb[0].mxu0
      %1608 = vmatprep.mubr.bf16.mxu0 0
      %1609 = vmatmul.mubr.bf16.gmra.mrb[0].mxu0 %v1482
      %v1610 = vpop.f32.mrb[0].mxu0
      %v1611 = vadd.f32 0.0, %v1610
      %v1612 = vpop.f32.mrb[0].mxu0
      %v1613 = vpop.f32.mrb[0].mxu0
      %v1614 = vadd.f32 0.0, %v1613
      %v1615 = vpop.f32.mrb[0].mxu0
      %1616 = vmatprep.mubr.bf16.mxu0 0
      %1617 = vmatmul.mubr.bf16.gmra.mrb[0].mxu0 %v1483
      %v1618 = vpop.f32.mrb[0].mxu0
      %v1619 = vadd.f32 0.0, %v1618
      %v1620 = vpop.f32.mrb[0].mxu0
      %v1621 = vpop.f32.mrb[0].mxu0
      %v1622 = vadd.f32 0.0, %v1621
      %v1623 = vpop.f32.mrb[0].mxu0
      %1624 = vmatprep.mubr.bf16.mxu0 0
      %1625 = vmatmul.mubr.bf16.gmra.mrb[0].mxu0 %v1484
      %v1626 = vpop.f32.mrb[0].mxu0
      %v1627 = vadd.f32 0.0, %v1626
      %v1628 = vpop.f32.mrb[0].mxu0
      %v1629 = vpop.f32.mrb[0].mxu0
      %v1630 = vadd.f32 0.0, %v1629
      %v1631 = vpop.f32.mrb[0].mxu0
      %1632 = vmatprep.mubr.bf16.mxu0 0
      %1633 = vmatmul.mubr.bf16.gmra.mrb[0].mxu0 %v1485
      %v1634 = vpop.f32.mrb[0].mxu0
      %v1635 = vadd.f32 0.0, %v1634
      %v1636 = vpop.f32.mrb[0].mxu0
      %v1637 = vpop.f32.mrb[0].mxu0
      %v1638 = vadd.f32 0.0, %v1637
      %v1639 = vpop.f32.mrb[0].mxu0
      %1640 = vmatprep.mubr.bf16.mxu0 0
      %1641 = vmatmul.mubr.bf16.gmra.mrb[0].mxu0 %v1486
      %v1642 = vpop.f32.mrb[0].mxu0
      %v1643 = vadd.f32 0.0, %v1642
      %v1644 = vpop.f32.mrb[0].mxu0
      %v1645 = vpop.f32.mrb[0].mxu0
      %v1646 = vadd.f32 0.0, %v1645
      %v1647 = vpop.f32.mrb[0].mxu0
      %1648 = vmatprep.mubr.bf16.mxu0 0
      %1649 = vmatmul.mubr.bf16.gmra.mrb[0].mxu0 %v1487
      %v1650 = vpop.f32.mrb[0].mxu0
      %v1651 = vadd.f32 0.0, %v1650
      %v1652 = vpop.f32.mrb[0].mxu0
      %v1653 = vpop.f32.mrb[0].mxu0
      %v1654 = vadd.f32 0.0, %v1653
      %v1655 = vpop.f32.mrb[0].mxu0
      %1656 = vmatprep.mubr.bf16.mxu0 0
      %1657 = vmatmul.mubr.bf16.gmra.mrb[0].mxu0 %v1488
      %v1658 = vpop.f32.mrb[0].mxu0
      %v1659 = vadd.f32 0.0, %v1658
      %v1660 = vpop.f32.mrb[0].mxu0
      %v1661 = vpop.f32.mrb[0].mxu0
      %v1662 = vadd.f32 0.0, %v1661
      %v1663 = vpop.f32.mrb[0].mxu0
      %1664 = vmatprep.mubr.bf16.mxu0 0
      %1665 = vmatmul.mubr.bf16.gmra.mrb[0].mxu0 %v1489
      %v1666 = vpop.f32.mrb[0].mxu0
      %v1667 = vadd.f32 0.0, %v1666
      %v1668 = vpop.f32.mrb[0].mxu0
      %v1669 = vpop.f32.mrb[0].mxu0
      %v1670 = vadd.f32 0.0, %v1669
      %v1671 = vpop.f32.mrb[0].mxu0
      %1672 = vmatprep.mubr.bf16.mxu0 0
      %1673 = vmatmul.mubr.bf16.gmra.mrb[0].mxu0 %v1490
      %v1674 = vpop.f32.mrb[0].mxu0
      %v1675 = vadd.f32 0.0, %v1674
      %v1676 = vpop.f32.mrb[0].mxu0
      %v1677 = vpop.f32.mrb[0].mxu0
      %v1678 = vadd.f32 0.0, %v1677
      %v1679 = vpop.f32.mrb[0].mxu0
      %1680 = vmatprep.mubr.bf16.mxu0 0
      %1681 = vmatmul.mubr.bf16.gmra.mrb[0].mxu0 %v1491
      %v1682 = vpop.f32.mrb[0].mxu0
      %v1683 = vadd.f32 0.0, %v1682
      %v1684 = vpop.f32.mrb[0].mxu0
      %v1685 = vpop.f32.mrb[0].mxu0
      %v1686 = vadd.f32 0.0, %v1685
      %v1687 = vpop.f32.mrb[0].mxu0
      %1688 = vmatprep.mubr.bf16.mxu0 0
      %1689 = vmatmul.mubr.bf16.gmra.mrb[0].mxu0 %v1492
      %v1690 = vpop.f32.mrb[0].mxu0
      %v1691 = vadd.f32 0.0, %v1690
      %v1692 = vpop.f32.mrb[0].mxu0
      %v1693 = vpop.f32.mrb[0].mxu0
      %v1694 = vadd.f32 0.0, %v1693
      %v1695 = vpop.f32.mrb[0].mxu0
      %1696 = vmatprep.mubr.bf16.mxu0 0
      %1697 = vmatmul.mubr.bf16.gmra.mrb[0].mxu0 %v1493
      %v1698 = vpop.f32.mrb[0].mxu0
      %v1699 = vadd.f32 0.0, %v1698
      %v1700 = vpop.f32.mrb[0].mxu0
      %v1701 = vpop.f32.mrb[0].mxu0
      %v1702 = vadd.f32 0.0, %v1701
      %v1703 = vpop.f32.mrb[0].mxu0
      %1704 = vmatprep.mubr.bf16.mxu0 0
      %1705 = vmatmul.mubr.bf16.gmra.mrb[0].mxu0 %v1494
      %v1706 = vpop.f32.mrb[0].mxu0
      %v1707 = vadd.f32 0.0, %v1706
      %v1708 = vpop.f32.mrb[0].mxu0
      %v1709 = vpop.f32.mrb[0].mxu0
      %v1710 = vadd.f32 0.0, %v1709
      %v1711 = vpop.f32.mrb[0].mxu0
      %1712 = vmatprep.mubr.bf16.mxu0 0
      %1713 = vmatmul.mubr.bf16.gmra.mrb[0].mxu0 %v1495
      %v1714 = vpop.f32.mrb[0].mxu0
      %v1715 = vadd.f32 0.0, %v1714
      %v1716 = vpop.f32.mrb[0].mxu0
      %v1717 = vpop.f32.mrb[0].mxu0
      %v1718 = vadd.f32 0.0, %v1717
      %v1719 = vpop.f32.mrb[0].mxu0
      %1720 = vdwg.mxu0
      %v1721 = vld [vmem:[#allocation3] sm:$0xff]
      %v1722 = vld [vmem:[#allocation3 + $0x8] sm:$0xff]
      %v1723 = vld [vmem:[#allocation3 + $0x10] sm:$0xff]
      %v1724 = vld [vmem:[#allocation3 + $0x18] sm:$0xff]
      %v1725 = vld [vmem:[#allocation3 + $0x20] sm:$0xff]
      %v1726 = vld [vmem:[#allocation3 + $0x28] sm:$0xff]
      %v1727 = vld [vmem:[#allocation3 + $0x30] sm:$0xff]
      %v1728 = vld [vmem:[#allocation3 + $0x38] sm:$0xff]
      %v1729 = vld [vmem:[#allocation3 + $0x40] sm:$0xff]
      %v1730 = vld [vmem:[#allocation3 + $0x48] sm:$0xff]
      %v1731 = vld [vmem:[#allocation3 + $0x50] sm:$0xff]
      %v1732 = vld [vmem:[#allocation3 + $0x58] sm:$0xff]
      %v1733 = vld [vmem:[#allocation3 + $0x60] sm:$0xff]
      %v1734 = vld [vmem:[#allocation3 + $0x68] sm:$0xff]
      %v1735 = vld [vmem:[#allocation3 + $0x70] sm:$0xff]
      %v1736 = vld [vmem:[#allocation3 + $0x78] sm:$0xff]
      %v1737 = vld [vmem:[#allocation3 + $0x80] sm:$0xff]
      %v1738 = vld [vmem:[#allocation3 + $0x88] sm:$0xff]
      %v1739 = vld [vmem:[#allocation3 + $0x90] sm:$0xff]
      %v1740 = vld [vmem:[#allocation3 + $0x98] sm:$0xff]
      %v1741 = vld [vmem:[#allocation3 + $0xa0] sm:$0xff]
      %v1742 = vld [vmem:[#allocation3 + $0xa8] sm:$0xff]
      %v1743 = vld [vmem:[#allocation3 + $0xb0] sm:$0xff]
      %v1744 = vld [vmem:[#allocation3 + $0xb8] sm:$0xff]
      %v1745 = vld [vmem:[#allocation3 + $0xc0] sm:$0xff]
      %v1746 = vld [vmem:[#allocation3 + $0xc8] sm:$0xff]
      %v1747 = vld [vmem:[#allocation3 + $0xd0] sm:$0xff]
      %v1748 = vld [vmem:[#allocation3 + $0xd8] sm:$0xff]
      %v1749 = vld [vmem:[#allocation3 + $0xe0] sm:$0xff]
      %v1750 = vld [vmem:[#allocation3 + $0xe8] sm:$0xff]
      %v1751 = vld [vmem:[#allocation3 + $0xf0] sm:$0xff]
      %v1752 = vld [vmem:[#allocation3 + $0xf8] sm:$0xff]
      %v1753 = vadd.f32 %v1721, %v1595
      %v1754 = vadd.f32 %v1722, %v1598
      %v1755 = vadd.f32 %v1723, %v1603
      %v1756 = vadd.f32 %v1724, %v1606
      %v1757 = vadd.f32 %v1725, %v1611
      %v1758 = vadd.f32 %v1726, %v1614
      %v1759 = vadd.f32 %v1727, %v1619
      %v1760 = vadd.f32 %v1728, %v1622
      %v1761 = vadd.f32 %v1729, %v1627
      %v1762 = vadd.f32 %v1730, %v1630
      %v1763 = vadd.f32 %v1731, %v1635
      %v1764 = vadd.f32 %v1732, %v1638
      %v1765 = vadd.f32 %v1733, %v1643
      %v1766 = vadd.f32 %v1734, %v1646
      %v1767 = vadd.f32 %v1735, %v1651
      %v1768 = vadd.f32 %v1736, %v1654
      %v1769 = vadd.f32 %v1737, %v1659
      %v1770 = vadd.f32 %v1738, %v1662
      %v1771 = vadd.f32 %v1739, %v1667
      %v1772 = vadd.f32 %v1740, %v1670
      %v1773 = vadd.f32 %v1741, %v1675
      %v1774 = vadd.f32 %v1742, %v1678
      %v1775 = vadd.f32 %v1743, %v1683
      %v1776 = vadd.f32 %v1744, %v1686
      %v1777 = vadd.f32 %v1745, %v1691
      %v1778 = vadd.f32 %v1746, %v1694
      %v1779 = vadd.f32 %v1747, %v1699
      %v1780 = vadd.f32 %v1748, %v1702
      %v1781 = vadd.f32 %v1749, %v1707
      %v1782 = vadd.f32 %v1750, %v1710
      %v1783 = vadd.f32 %v1751, %v1715
      %v1784 = vadd.f32 %v1752, %v1718
      %1785 = vst [vmem:[#allocation3] sm:$0xff] %v1753
      %1786 = vst [vmem:[#allocation3 + $0x8] sm:$0xff] %v1754
      %1787 = vst [vmem:[#allocation3 + $0x10] sm:$0xff] %v1755
      %1788 = vst [vmem:[#allocation3 + $0x18] sm:$0xff] %v1756
      %1789 = vst [vmem:[#allocation3 + $0x20] sm:$0xff] %v1757
      %1790 = vst [vmem:[#allocation3 + $0x28] sm:$0xff] %v1758
      %1791 = vst [vmem:[#allocation3 + $0x30] sm:$0xff] %v1759
      %1792 = vst [vmem:[#allocation3 + $0x38] sm:$0xff] %v1760
      %1793 = vst [vmem:[#allocation3 + $0x40] sm:$0xff] %v1761
      %1794 = vst [vmem:[#allocation3 + $0x48] sm:$0xff] %v1762
      %1795 = vst [vmem:[#allocation3 + $0x50] sm:$0xff] %v1763
      %1796 = vst [vmem:[#allocation3 + $0x58] sm:$0xff] %v1764
      %1797 = vst [vmem:[#allocation3 + $0x60] sm:$0xff] %v1765
      %1798 = vst [vmem:[#allocation3 + $0x68] sm:$0xff] %v1766
      %1799 = vst [vmem:[#allocation3 + $0x70] sm:$0xff] %v1767
      %1800 = vst [vmem:[#allocation3 + $0x78] sm:$0xff] %v1768
      %1801 = vst [vmem:[#allocation3 + $0x80] sm:$0xff] %v1769
      %1802 = vst [vmem:[#allocation3 + $0x88] sm:$0xff] %v1770
      %1803 = vst [vmem:[#allocation3 + $0x90] sm:$0xff] %v1771
      %1804 = vst [vmem:[#allocation3 + $0x98] sm:$0xff] %v1772
      %1805 = vst [vmem:[#allocation3 + $0xa0] sm:$0xff] %v1773
      %1806 = vst [vmem:[#allocation3 + $0xa8] sm:$0xff] %v1774
      %1807 = vst [vmem:[#allocation3 + $0xb0] sm:$0xff] %v1775
      %1808 = vst [vmem:[#allocation3 + $0xb8] sm:$0xff] %v1776
      %1809 = vst [vmem:[#allocation3 + $0xc0] sm:$0xff] %v1777
      %1810 = vst [vmem:[#allocation3 + $0xc8] sm:$0xff] %v1778
      %1811 = vst [vmem:[#allocation3 + $0xd0] sm:$0xff] %v1779
      %1812 = vst [vmem:[#allocation3 + $0xd8] sm:$0xff] %v1780
      %1813 = vst [vmem:[#allocation3 + $0xe0] sm:$0xff] %v1781
      %1814 = vst [vmem:[#allocation3 + $0xe8] sm:$0xff] %v1782
      %1815 = vst [vmem:[#allocation3 + $0xf0] sm:$0xff] %v1783
      %1816 = vst [vmem:[#allocation3 + $0xf8] sm:$0xff] %v1784
      %v1817 = vld [vmem:[#allocation2 + $0x8] sm:$0xff]
      %v1818 = vld [vmem:[#allocation2 + $0x10] sm:$0xff]
      %v1819 = vld [vmem:[#allocation2 + $0x18] sm:$0xff]
      %v1820 = vld [vmem:[#allocation2 + $0x20] sm:$0xff]
      %v1821 = vld [vmem:[#allocation2 + $0x28] sm:$0xff]
      %v1822 = vld [vmem:[#allocation2 + $0x30] sm:$0xff]
      %v1823 = vld [vmem:[#allocation2 + $0x38] sm:$0xff]
      %v1824 = vld [vmem:[#allocation2 + $0x40] sm:$0xff]
      %v1825 = vld [vmem:[#allocation2 + $0x48] sm:$0xff]
      %v1826 = vld [vmem:[#allocation2 + $0x50] sm:$0xff]
      %v1827 = vld [vmem:[#allocation2 + $0x58] sm:$0xff]
      %v1828 = vld [vmem:[#allocation2 + $0x60] sm:$0xff]
      %v1829 = vld [vmem:[#allocation2 + $0x68] sm:$0xff]
      %v1830 = vld [vmem:[#allocation2 + $0x70] sm:$0xff]
      %v1831 = vld [vmem:[#allocation2 + $0x78] sm:$0xff]
      %v1832 = vld [vmem:[#allocation2 + $0x80] sm:$0xff]
      %v1833 = vld [vmem:[#allocation2 + $0x88] sm:$0x1]
      %v1835 = vshrl.u32 %v879, 16
      %v1837 = vrot.slane %v1835, 7
      %v1838 = vshll.u32 %v879, 16
      %v1840 = vor.u32 %v1837, %v1838
      %v1842 = vshrl.u32 %v880, 16
      %v1844 = vrot.slane %v1842, 7
      %v1845 = vshll.u32 %v880, 16
      %v1847 = vor.u32 %v1844, %v1845
      %v1848 = vsel %vm1090, %v1837, %v1847
      %v1850 = vshrl.u32 %v881, 16
      %v1852 = vrot.slane %v1850, 7
      %v1853 = vshll.u32 %v881, 16
      %v1855 = vor.u32 %v1852, %v1853
      %v1856 = vsel %vm1090, %v1844, %v1855
      %v1858 = vshrl.u32 %v882, 16
      %v1860 = vrot.slane %v1858, 7
      %v1861 = vshll.u32 %v882, 16
      %v1863 = vor.u32 %v1860, %v1861
      %v1864 = vsel %vm1090, %v1852, %v1863
      %v1866 = vshrl.u32 %v883, 16
      %v1868 = vrot.slane %v1866, 7
      %v1869 = vshll.u32 %v883, 16
      %v1871 = vor.u32 %v1868, %v1869
      %v1872 = vsel %vm1090, %v1860, %v1871
      %v1874 = vshrl.u32 %v884, 16
      %v1876 = vrot.slane %v1874, 7
      %v1877 = vshll.u32 %v884, 16
      %v1879 = vor.u32 %v1876, %v1877
      %v1880 = vsel %vm1090, %v1868, %v1879
      %v1882 = vshrl.u32 %v885, 16
      %v1884 = vrot.slane %v1882, 7
      %v1885 = vshll.u32 %v885, 16
      %v1887 = vor.u32 %v1884, %v1885
      %v1888 = vsel %vm1090, %v1876, %v1887
      %v1890 = vshrl.u32 %v886, 16
      %v1892 = vrot.slane %v1890, 7
      %v1893 = vshll.u32 %v886, 16
      %v1895 = vor.u32 %v1892, %v1893
      %v1896 = vsel %vm1090, %v1884, %v1895
      %v1898 = vshrl.u32 %v887, 16
      %v1900 = vrot.slane %v1898, 7
      %v1901 = vshll.u32 %v887, 16
      %v1903 = vor.u32 %v1900, %v1901
      %v1904 = vsel %vm1090, %v1892, %v1903
      %v1906 = vshrl.u32 %v888, 16
      %v1908 = vrot.slane %v1906, 7
      %v1909 = vshll.u32 %v888, 16
      %v1911 = vor.u32 %v1908, %v1909
      %v1912 = vsel %vm1090, %v1900, %v1911
      %v1914 = vshrl.u32 %v889, 16
      %v1916 = vrot.slane %v1914, 7
      %v1917 = vshll.u32 %v889, 16
      %v1919 = vor.u32 %v1916, %v1917
      %v1920 = vsel %vm1090, %v1908, %v1919
      %v1922 = vshrl.u32 %v890, 16
      %v1924 = vrot.slane %v1922, 7
      %v1925 = vshll.u32 %v890, 16
      %v1927 = vor.u32 %v1924, %v1925
      %v1928 = vsel %vm1090, %v1916, %v1927
      %v1930 = vshrl.u32 %v891, 16
      %v1932 = vrot.slane %v1930, 7
      %v1933 = vshll.u32 %v891, 16
      %v1935 = vor.u32 %v1932, %v1933
      %v1936 = vsel %vm1090, %v1924, %v1935
      %v1938 = vshrl.u32 %v892, 16
      %v1940 = vrot.slane %v1938, 7
      %v1941 = vshll.u32 %v892, 16
      %v1943 = vor.u32 %v1940, %v1941
      %v1944 = vsel %vm1090, %v1932, %v1943
      %v1946 = vshrl.u32 %v893, 16
      %v1948 = vrot.slane %v1946, 7
      %v1949 = vshll.u32 %v893, 16
      %v1951 = vor.u32 %v1948, %v1949
      %v1952 = vsel %vm1090, %v1940, %v1951
      %v1954 = vshrl.u32 %v894, 16
      %v1956 = vrot.slane %v1954, 7
      %v1957 = vshll.u32 %v894, 16
      %v1959 = vor.u32 %v1956, %v1957
      %v1960 = vsel %vm1090, %v1948, %v1959
      %v1978 = vmul.bf16 %v1817, %v1840
      %v1979 = vmul.bf16 %v1818, %v1848
      %v1980 = vmul.bf16 %v1819, %v1856
      %v1981 = vmul.bf16 %v1820, %v1864
      %v1982 = vmul.bf16 %v1821, %v1872
      %v1983 = vmul.bf16 %v1822, %v1880
      %v1984 = vmul.bf16 %v1823, %v1888
      %v1985 = vmul.bf16 %v1824, %v1896
      %v1986 = vmul.bf16 %v1825, %v1904
      %v1987 = vmul.bf16 %v1826, %v1912
      %v1988 = vmul.bf16 %v1827, %v1920
      %v1989 = vmul.bf16 %v1828, %v1928
      %v1990 = vmul.bf16 %v1829, %v1936
      %v1991 = vmul.bf16 %v1830, %v1944
      %v1992 = vmul.bf16 %v1831, %v1952
      %v1993 = vmul.bf16 %v1832, %v1960
      %v1994 = vmul.bf16 %v1833, %v1956
      %v1995 = vld [vmem:[%s1 + $0x80] sm:$0xf]
      %v1996 = vld [vmem:[%s1 + $0x84] sm:$0xf]
      %v1997 = vld [vmem:[%s1 + $0x88] sm:$0xf]
      %v1998 = vld [vmem:[%s1 + $0x8c] sm:$0xf]
      %v1999 = vld [vmem:[%s1 + $0x90] sm:$0xf]
      %v2000 = vld [vmem:[%s1 + $0x94] sm:$0xf]
      %v2001 = vld [vmem:[%s1 + $0x98] sm:$0xf]
      %v2002 = vld [vmem:[%s1 + $0x9c] sm:$0xf]
      %v2003 = vld [vmem:[%s1 + $0xa0] sm:$0xf]
      %v2004 = vld [vmem:[%s1 + $0xa4] sm:$0xf]
      %v2005 = vld [vmem:[%s1 + $0xa8] sm:$0xf]
      %v2006 = vld [vmem:[%s1 + $0xac] sm:$0xf]
      %v2007 = vld [vmem:[%s1 + $0xb0] sm:$0xf]
      %v2008 = vld [vmem:[%s1 + $0xb4] sm:$0xf]
      %v2009 = vld [vmem:[%s1 + $0xb8] sm:$0xf]
      %v2010 = vld [vmem:[%s1 + $0xbc] sm:$0xf]
      %v2012 = vshrl.u32 %v1978, 16
      %v2014 = vshll.u32 %v1978, 16
      %v2016 = vrot.slane %v2014, 1
      %v2017 = vor.u32 %v2012, %v2016
      %v2019 = vshll.u32 %v1979, 16
      %v2021 = vrot.slane %v2019, 1
      %v2022 = vsel %vm912, %v2017, %v2021
      %v2023 = vshrl.u32 %v1979, 16
      %v2025 = vor.u32 %v2023, %v2021
      %v2027 = vshll.u32 %v1980, 16
      %v2029 = vrot.slane %v2027, 1
      %v2030 = vsel %vm912, %v2025, %v2029
      %v2031 = vshrl.u32 %v1980, 16
      %v2033 = vor.u32 %v2031, %v2029
      %v2035 = vshll.u32 %v1981, 16
      %v2037 = vrot.slane %v2035, 1
      %v2038 = vsel %vm912, %v2033, %v2037
      %v2039 = vshrl.u32 %v1981, 16
      %v2041 = vor.u32 %v2039, %v2037
      %v2043 = vshll.u32 %v1982, 16
      %v2045 = vrot.slane %v2043, 1
      %v2046 = vsel %vm912, %v2041, %v2045
      %v2047 = vshrl.u32 %v1982, 16
      %v2049 = vor.u32 %v2047, %v2045
      %v2051 = vshll.u32 %v1983, 16
      %v2053 = vrot.slane %v2051, 1
      %v2054 = vsel %vm912, %v2049, %v2053
      %v2055 = vshrl.u32 %v1983, 16
      %v2057 = vor.u32 %v2055, %v2053
      %v2059 = vshll.u32 %v1984, 16
      %v2061 = vrot.slane %v2059, 1
      %v2062 = vsel %vm912, %v2057, %v2061
      %v2063 = vshrl.u32 %v1984, 16
      %v2065 = vor.u32 %v2063, %v2061
      %v2067 = vshll.u32 %v1985, 16
      %v2069 = vrot.slane %v2067, 1
      %v2070 = vsel %vm912, %v2065, %v2069
      %v2071 = vshrl.u32 %v1985, 16
      %v2073 = vor.u32 %v2071, %v2069
      %v2075 = vshll.u32 %v1986, 16
      %v2077 = vrot.slane %v2075, 1
      %v2078 = vsel %vm912, %v2073, %v2077
      %v2079 = vshrl.u32 %v1986, 16
      %v2081 = vor.u32 %v2079, %v2077
      %v2083 = vshll.u32 %v1987, 16
      %v2085 = vrot.slane %v2083, 1
      %v2086 = vsel %vm912, %v2081, %v2085
      %v2087 = vshrl.u32 %v1987, 16
      %v2089 = vor.u32 %v2087, %v2085
      %v2091 = vshll.u32 %v1988, 16
      %v2093 = vrot.slane %v2091, 1
      %v2094 = vsel %vm912, %v2089, %v2093
      %v2095 = vshrl.u32 %v1988, 16
      %v2097 = vor.u32 %v2095, %v2093
      %v2099 = vshll.u32 %v1989, 16
      %v2101 = vrot.slane %v2099, 1
      %v2102 = vsel %vm912, %v2097, %v2101
      %v2103 = vshrl.u32 %v1989, 16
      %v2105 = vor.u32 %v2103, %v2101
      %v2107 = vshll.u32 %v1990, 16
      %v2109 = vrot.slane %v2107, 1
      %v2110 = vsel %vm912, %v2105, %v2109
      %v2111 = vshrl.u32 %v1990, 16
      %v2113 = vor.u32 %v2111, %v2109
      %v2115 = vshll.u32 %v1991, 16
      %v2117 = vrot.slane %v2115, 1
      %v2118 = vsel %vm912, %v2113, %v2117
      %v2119 = vshrl.u32 %v1991, 16
      %v2121 = vor.u32 %v2119, %v2117
      %v2123 = vshll.u32 %v1992, 16
      %v2125 = vrot.slane %v2123, 1
      %v2126 = vsel %vm912, %v2121, %v2125
      %v2127 = vshrl.u32 %v1992, 16
      %v2129 = vor.u32 %v2127, %v2125
      %v2131 = vshll.u32 %v1993, 16
      %v2133 = vrot.slane %v2131, 1
      %v2134 = vsel %vm912, %v2129, %v2133
      %v2135 = vshrl.u32 %v1993, 16
      %v2137 = vor.u32 %v2135, %v2133
      %v2139 = vshll.u32 %v1994, 16
      %v2141 = vrot.slane %v2139, 1
      %v2142 = vsel %vm912, %v2137, %v2141
      %v2175 = vunpack.c.l.b16 %v1995
      %v2176 = vunpack.c.l.b16 %v1996
      %v2177 = vunpack.c.l.b16 %v1997
      %v2178 = vunpack.c.l.b16 %v1998
      %v2179 = vunpack.c.l.b16 %v1999
      %v2180 = vunpack.c.l.b16 %v2000
      %v2181 = vunpack.c.l.b16 %v2001
      %v2182 = vunpack.c.l.b16 %v2002
      %v2183 = vunpack.c.l.b16 %v2003
      %v2184 = vunpack.c.l.b16 %v2004
      %v2185 = vunpack.c.l.b16 %v2005
      %v2186 = vunpack.c.l.b16 %v2006
      %v2187 = vunpack.c.l.b16 %v2007
      %v2188 = vunpack.c.l.b16 %v2008
      %v2189 = vunpack.c.l.b16 %v2009
      %v2190 = vunpack.c.l.b16 %v2010
      %v2191 = vpack.c.b16 %v2176, %v2175
      %v2192 = vpack.c.b16 %v2178, %v2177
      %v2193 = vpack.c.b16 %v2180, %v2179
      %v2194 = vpack.c.b16 %v2182, %v2181
      %v2195 = vpack.c.b16 %v2184, %v2183
      %v2196 = vpack.c.b16 %v2186, %v2185
      %v2197 = vpack.c.b16 %v2188, %v2187
      %v2198 = vpack.c.b16 %v2190, %v2189
      %2207 = vmatprep.subr.bf16.mxu0 0
      %2208 = vmatpush1.bf16.msra.mxu0 %v2191
      %2209 = vmatprep.subr.bf16.mxu0 0
      %2210 = vmatpush1.bf16.msra.mxu0 %v2192
      %2211 = vmatprep.subr.bf16.mxu0 0
      %2212 = vmatpush1.bf16.msra.mxu0 %v2193
      %2213 = vmatprep.subr.bf16.mxu0 0
      %2214 = vmatpush1.bf16.msra.mxu0 %v2194
      %2215 = vmatprep.subr.bf16.mxu0 0
      %2216 = vmatpush1.bf16.msra.mxu0 %v2195
      %2217 = vmatprep.subr.bf16.mxu0 0
      %2218 = vmatpush1.bf16.msra.mxu0 %v2196
      %2219 = vmatprep.subr.bf16.mxu0 0
      %2220 = vmatpush1.bf16.msra.mxu0 %v2197
      %2221 = vmatprep.subr.bf16.mxu0 0
      %2222 = vmatpush1.bf16.msra.mxu0 %v2198
      %2223 = vmatprep.subr.bf16.mxu0 0
      %2224 = vmatpush1.bf16.msra.mxu0 0
      %2225 = vmatprep.subr.bf16.mxu0 0
      %2226 = vmatpush1.bf16.msra.mxu0 0
      %2227 = vmatprep.subr.bf16.mxu0 0
      %2228 = vmatpush1.bf16.msra.mxu0 0
      %2229 = vmatprep.subr.bf16.mxu0 0
      %2230 = vmatpush1.bf16.msra.mxu0 0
      %2231 = vmatprep.subr.bf16.mxu0 0
      %2232 = vmatpush1.bf16.msra.mxu0 0
      %2233 = vmatprep.subr.bf16.mxu0 0
      %2234 = vmatpush1.bf16.msra.mxu0 0
      %2235 = vmatprep.subr.bf16.mxu0 0
      %2236 = vmatpush1.bf16.msra.mxu0 0
      %2237 = vmatprep.subr.bf16.mxu0 0
      %2238 = vmatpush1.bf16.msra.mxu0 0
      %2239 = vmatprep.mubr.bf16.mxu0 0
      %2240 = vmatmul.mubr.bf16.gmra.mrb[0].mxu0 %v2022
      %v2241 = vpop.f32.mrb[0].mxu0
      %v2242 = vadd.f32 0.0, %v2241
      %v2243 = vpop.f32.mrb[0].mxu0
      %v2244 = vpop.f32.mrb[0].mxu0
      %v2245 = vadd.f32 0.0, %v2244
      %v2246 = vpop.f32.mrb[0].mxu0
      %2247 = vmatprep.mubr.bf16.mxu0 0
      %2248 = vmatmul.mubr.bf16.gmra.mrb[0].mxu0 %v2030
      %v2249 = vpop.f32.mrb[0].mxu0
      %v2250 = vadd.f32 0.0, %v2249
      %v2251 = vpop.f32.mrb[0].mxu0
      %v2252 = vpop.f32.mrb[0].mxu0
      %v2253 = vadd.f32 0.0, %v2252
      %v2254 = vpop.f32.mrb[0].mxu0
      %2255 = vmatprep.mubr.bf16.mxu0 0
      %2256 = vmatmul.mubr.bf16.gmra.mrb[0].mxu0 %v2038
      %v2257 = vpop.f32.mrb[0].mxu0
      %v2258 = vadd.f32 0.0, %v2257
      %v2259 = vpop.f32.mrb[0].mxu0
      %v2260 = vpop.f32.mrb[0].mxu0
      %v2261 = vadd.f32 0.0, %v2260
      %v2262 = vpop.f32.mrb[0].mxu0
      %2263 = vmatprep.mubr.bf16.mxu0 0
      %2264 = vmatmul.mubr.bf16.gmra.mrb[0].mxu0 %v2046
      %v2265 = vpop.f32.mrb[0].mxu0
      %v2266 = vadd.f32 0.0, %v2265
      %v2267 = vpop.f32.mrb[0].mxu0
      %v2268 = vpop.f32.mrb[0].mxu0
      %v2269 = vadd.f32 0.0, %v2268
      %v2270 = vpop.f32.mrb[0].mxu0
      %2271 = vmatprep.mubr.bf16.mxu0 0
      %2272 = vmatmul.mubr.bf16.gmra.mrb[0].mxu0 %v2054
      %v2273 = vpop.f32.mrb[0].mxu0
      %v2274 = vadd.f32 0.0, %v2273
      %v2275 = vpop.f32.mrb[0].mxu0
      %v2276 = vpop.f32.mrb[0].mxu0
      %v2277 = vadd.f32 0.0, %v2276
      %v2278 = vpop.f32.mrb[0].mxu0
      %2279 = vmatprep.mubr.bf16.mxu0 0
      %2280 = vmatmul.mubr.bf16.gmra.mrb[0].mxu0 %v2062
      %v2281 = vpop.f32.mrb[0].mxu0
      %v2282 = vadd.f32 0.0, %v2281
      %v2283 = vpop.f32.mrb[0].mxu0
      %v2284 = vpop.f32.mrb[0].mxu0
      %v2285 = vadd.f32 0.0, %v2284
      %v2286 = vpop.f32.mrb[0].mxu0
      %2287 = vmatprep.mubr.bf16.mxu0 0
      %2288 = vmatmul.mubr.bf16.gmra.mrb[0].mxu0 %v2070
      %v2289 = vpop.f32.mrb[0].mxu0
      %v2290 = vadd.f32 0.0, %v2289
      %v2291 = vpop.f32.mrb[0].mxu0
      %v2292 = vpop.f32.mrb[0].mxu0
      %v2293 = vadd.f32 0.0, %v2292
      %v2294 = vpop.f32.mrb[0].mxu0
      %2295 = vmatprep.mubr.bf16.mxu0 0
      %2296 = vmatmul.mubr.bf16.gmra.mrb[0].mxu0 %v2078
      %v2297 = vpop.f32.mrb[0].mxu0
      %v2298 = vadd.f32 0.0, %v2297
      %v2299 = vpop.f32.mrb[0].mxu0
      %v2300 = vpop.f32.mrb[0].mxu0
      %v2301 = vadd.f32 0.0, %v2300
      %v2302 = vpop.f32.mrb[0].mxu0
      %2303 = vmatprep.mubr.bf16.mxu0 0
      %2304 = vmatmul.mubr.bf16.gmra.mrb[0].mxu0 %v2086
      %v2305 = vpop.f32.mrb[0].mxu0
      %v2306 = vadd.f32 0.0, %v2305
      %v2307 = vpop.f32.mrb[0].mxu0
      %v2308 = vpop.f32.mrb[0].mxu0
      %v2309 = vadd.f32 0.0, %v2308
      %v2310 = vpop.f32.mrb[0].mxu0
      %2311 = vmatprep.mubr.bf16.mxu0 0
      %2312 = vmatmul.mubr.bf16.gmra.mrb[0].mxu0 %v2094
      %v2313 = vpop.f32.mrb[0].mxu0
      %v2314 = vadd.f32 0.0, %v2313
      %v2315 = vpop.f32.mrb[0].mxu0
      %v2316 = vpop.f32.mrb[0].mxu0
      %v2317 = vadd.f32 0.0, %v2316
      %v2318 = vpop.f32.mrb[0].mxu0
      %2319 = vmatprep.mubr.bf16.mxu0 0
      %2320 = vmatmul.mubr.bf16.gmra.mrb[0].mxu0 %v2102
      %v2321 = vpop.f32.mrb[0].mxu0
      %v2322 = vadd.f32 0.0, %v2321
      %v2323 = vpop.f32.mrb[0].mxu0
      %v2324 = vpop.f32.mrb[0].mxu0
      %v2325 = vadd.f32 0.0, %v2324
      %v2326 = vpop.f32.mrb[0].mxu0
      %2327 = vmatprep.mubr.bf16.mxu0 0
      %2328 = vmatmul.mubr.bf16.gmra.mrb[0].mxu0 %v2110
      %v2329 = vpop.f32.mrb[0].mxu0
      %v2330 = vadd.f32 0.0, %v2329
      %v2331 = vpop.f32.mrb[0].mxu0
      %v2332 = vpop.f32.mrb[0].mxu0
      %v2333 = vadd.f32 0.0, %v2332
      %v2334 = vpop.f32.mrb[0].mxu0
      %2335 = vmatprep.mubr.bf16.mxu0 0
      %2336 = vmatmul.mubr.bf16.gmra.mrb[0].mxu0 %v2118
      %v2337 = vpop.f32.mrb[0].mxu0
      %v2338 = vadd.f32 0.0, %v2337
      %v2339 = vpop.f32.mrb[0].mxu0
      %v2340 = vpop.f32.mrb[0].mxu0
      %v2341 = vadd.f32 0.0, %v2340
      %v2342 = vpop.f32.mrb[0].mxu0
      %2343 = vmatprep.mubr.bf16.mxu0 0
      %2344 = vmatmul.mubr.bf16.gmra.mrb[0].mxu0 %v2126
      %v2345 = vpop.f32.mrb[0].mxu0
      %v2346 = vadd.f32 0.0, %v2345
      %v2347 = vpop.f32.mrb[0].mxu0
      %v2348 = vpop.f32.mrb[0].mxu0
      %v2349 = vadd.f32 0.0, %v2348
      %v2350 = vpop.f32.mrb[0].mxu0
      %2351 = vmatprep.mubr.bf16.mxu0 0
      %2352 = vmatmul.mubr.bf16.gmra.mrb[0].mxu0 %v2134
      %v2353 = vpop.f32.mrb[0].mxu0
      %v2354 = vadd.f32 0.0, %v2353
      %v2355 = vpop.f32.mrb[0].mxu0
      %v2356 = vpop.f32.mrb[0].mxu0
      %v2357 = vadd.f32 0.0, %v2356
      %v2358 = vpop.f32.mrb[0].mxu0
      %2359 = vmatprep.mubr.bf16.mxu0 0
      %2360 = vmatmul.mubr.bf16.gmra.mrb[0].mxu0 %v2142
      %v2361 = vpop.f32.mrb[0].mxu0
      %v2362 = vadd.f32 0.0, %v2361
      %v2363 = vpop.f32.mrb[0].mxu0
      %v2364 = vpop.f32.mrb[0].mxu0
      %v2365 = vadd.f32 0.0, %v2364
      %v2366 = vpop.f32.mrb[0].mxu0
      %2367 = vdwg.mxu0
      %v2368 = vld [vmem:[#allocation3] sm:$0xff]
      %v2369 = vld [vmem:[#allocation3 + $0x8] sm:$0xff]
      %v2370 = vld [vmem:[#allocation3 + $0x10] sm:$0xff]
      %v2371 = vld [vmem:[#allocation3 + $0x18] sm:$0xff]
      %v2372 = vld [vmem:[#allocation3 + $0x20] sm:$0xff]
      %v2373 = vld [vmem:[#allocation3 + $0x28] sm:$0xff]
      %v2374 = vld [vmem:[#allocation3 + $0x30] sm:$0xff]
      %v2375 = vld [vmem:[#allocation3 + $0x38] sm:$0xff]
      %v2376 = vld [vmem:[#allocation3 + $0x40] sm:$0xff]
      %v2377 = vld [vmem:[#allocation3 + $0x48] sm:$0xff]
      %v2378 = vld [vmem:[#allocation3 + $0x50] sm:$0xff]
      %v2379 = vld [vmem:[#allocation3 + $0x58] sm:$0xff]
      %v2380 = vld [vmem:[#allocation3 + $0x60] sm:$0xff]
      %v2381 = vld [vmem:[#allocation3 + $0x68] sm:$0xff]
      %v2382 = vld [vmem:[#allocation3 + $0x70] sm:$0xff]
      %v2383 = vld [vmem:[#allocation3 + $0x78] sm:$0xff]
      %v2384 = vld [vmem:[#allocation3 + $0x80] sm:$0xff]
      %v2385 = vld [vmem:[#allocation3 + $0x88] sm:$0xff]
      %v2386 = vld [vmem:[#allocation3 + $0x90] sm:$0xff]
      %v2387 = vld [vmem:[#allocation3 + $0x98] sm:$0xff]
      %v2388 = vld [vmem:[#allocation3 + $0xa0] sm:$0xff]
      %v2389 = vld [vmem:[#allocation3 + $0xa8] sm:$0xff]
      %v2390 = vld [vmem:[#allocation3 + $0xb0] sm:$0xff]
      %v2391 = vld [vmem:[#allocation3 + $0xb8] sm:$0xff]
      %v2392 = vld [vmem:[#allocation3 + $0xc0] sm:$0xff]
      %v2393 = vld [vmem:[#allocation3 + $0xc8] sm:$0xff]
      %v2394 = vld [vmem:[#allocation3 + $0xd0] sm:$0xff]
      %v2395 = vld [vmem:[#allocation3 + $0xd8] sm:$0xff]
      %v2396 = vld [vmem:[#allocation3 + $0xe0] sm:$0xff]
      %v2397 = vld [vmem:[#allocation3 + $0xe8] sm:$0xff]
      %v2398 = vld [vmem:[#allocation3 + $0xf0] sm:$0xff]
      %v2399 = vld [vmem:[#allocation3 + $0xf8] sm:$0xff]
      %v2400 = vadd.f32 %v2368, %v2242
      %v2401 = vadd.f32 %v2369, %v2245
      %v2402 = vadd.f32 %v2370, %v2250
      %v2403 = vadd.f32 %v2371, %v2253
      %v2404 = vadd.f32 %v2372, %v2258
      %v2405 = vadd.f32 %v2373, %v2261
      %v2406 = vadd.f32 %v2374, %v2266
      %v2407 = vadd.f32 %v2375, %v2269
      %v2408 = vadd.f32 %v2376, %v2274
      %v2409 = vadd.f32 %v2377, %v2277
      %v2410 = vadd.f32 %v2378, %v2282
      %v2411 = vadd.f32 %v2379, %v2285
      %v2412 = vadd.f32 %v2380, %v2290
      %v2413 = vadd.f32 %v2381, %v2293
      %v2414 = vadd.f32 %v2382, %v2298
      %v2415 = vadd.f32 %v2383, %v2301
      %v2416 = vadd.f32 %v2384, %v2306
      %v2417 = vadd.f32 %v2385, %v2309
      %v2418 = vadd.f32 %v2386, %v2314
      %v2419 = vadd.f32 %v2387, %v2317
      %v2420 = vadd.f32 %v2388, %v2322
      %v2421 = vadd.f32 %v2389, %v2325
      %v2422 = vadd.f32 %v2390, %v2330
      %v2423 = vadd.f32 %v2391, %v2333
      %v2424 = vadd.f32 %v2392, %v2338
      %v2425 = vadd.f32 %v2393, %v2341
      %v2426 = vadd.f32 %v2394, %v2346
      %v2427 = vadd.f32 %v2395, %v2349
      %v2428 = vadd.f32 %v2396, %v2354
      %v2429 = vadd.f32 %v2397, %v2357
      %v2430 = vadd.f32 %v2398, %v2362
      %v2431 = vadd.f32 %v2399, %v2365
      %2432 = vst [vmem:[#allocation3] sm:$0xff] %v2400
      %2433 = vst [vmem:[#allocation3 + $0x8] sm:$0xff] %v2401
      %2434 = vst [vmem:[#allocation3 + $0x10] sm:$0xff] %v2402
      %2435 = vst [vmem:[#allocation3 + $0x18] sm:$0xff] %v2403
      %2436 = vst [vmem:[#allocation3 + $0x20] sm:$0xff] %v2404
      %2437 = vst [vmem:[#allocation3 + $0x28] sm:$0xff] %v2405
      %2438 = vst [vmem:[#allocation3 + $0x30] sm:$0xff] %v2406
      %2439 = vst [vmem:[#allocation3 + $0x38] sm:$0xff] %v2407
      %2440 = vst [vmem:[#allocation3 + $0x40] sm:$0xff] %v2408
      %2441 = vst [vmem:[#allocation3 + $0x48] sm:$0xff] %v2409
      %2442 = vst [vmem:[#allocation3 + $0x50] sm:$0xff] %v2410
      %2443 = vst [vmem:[#allocation3 + $0x58] sm:$0xff] %v2411
      %2444 = vst [vmem:[#allocation3 + $0x60] sm:$0xff] %v2412
      %2445 = vst [vmem:[#allocation3 + $0x68] sm:$0xff] %v2413
      %2446 = vst [vmem:[#allocation3 + $0x70] sm:$0xff] %v2414
      %2447 = vst [vmem:[#allocation3 + $0x78] sm:$0xff] %v2415
      %2448 = vst [vmem:[#allocation3 + $0x80] sm:$0xff] %v2416
      %2449 = vst [vmem:[#allocation3 + $0x88] sm:$0xff] %v2417
      %2450 = vst [vmem:[#allocation3 + $0x90] sm:$0xff] %v2418
      %2451 = vst [vmem:[#allocation3 + $0x98] sm:$0xff] %v2419
      %2452 = vst [vmem:[#allocation3 + $0xa0] sm:$0xff] %v2420
      %2453 = vst [vmem:[#allocation3 + $0xa8] sm:$0xff] %v2421
      %2454 = vst [vmem:[#allocation3 + $0xb0] sm:$0xff] %v2422
      %2455 = vst [vmem:[#allocation3 + $0xb8] sm:$0xff] %v2423
      %2456 = vst [vmem:[#allocation3 + $0xc0] sm:$0xff] %v2424
      %2457 = vst [vmem:[#allocation3 + $0xc8] sm:$0xff] %v2425
      %2458 = vst [vmem:[#allocation3 + $0xd0] sm:$0xff] %v2426
      %2459 = vst [vmem:[#allocation3 + $0xd8] sm:$0xff] %v2427
      %2460 = vst [vmem:[#allocation3 + $0xe0] sm:$0xff] %v2428
      %2461 = vst [vmem:[#allocation3 + $0xe8] sm:$0xff] %v2429
      %2462 = vst [vmem:[#allocation3 + $0xf0] sm:$0xff] %v2430
      %2463 = vst [vmem:[#allocation3 + $0xf8] sm:$0xff] %v2431
      %v2464 = vld [vmem:[#allocation2 + $0x8] sm:$0x80]
      %v2465 = vld [vmem:[#allocation2 + $0x10] sm:$0xff]
      %v2466 = vld [vmem:[#allocation2 + $0x18] sm:$0xff]
      %v2467 = vld [vmem:[#allocation2 + $0x20] sm:$0xff]
      %v2468 = vld [vmem:[#allocation2 + $0x28] sm:$0xff]
      %v2469 = vld [vmem:[#allocation2 + $0x30] sm:$0xff]
      %v2470 = vld [vmem:[#allocation2 + $0x38] sm:$0xff]
      %v2471 = vld [vmem:[#allocation2 + $0x40] sm:$0xff]
      %v2472 = vld [vmem:[#allocation2 + $0x48] sm:$0xff]
      %v2473 = vld [vmem:[#allocation2 + $0x50] sm:$0xff]
      %v2474 = vld [vmem:[#allocation2 + $0x58] sm:$0xff]
      %v2475 = vld [vmem:[#allocation2 + $0x60] sm:$0xff]
      %v2476 = vld [vmem:[#allocation2 + $0x68] sm:$0xff]
      %v2477 = vld [vmem:[#allocation2 + $0x70] sm:$0xff]
      %v2478 = vld [vmem:[#allocation2 + $0x78] sm:$0xff]
      %v2479 = vld [vmem:[#allocation2 + $0x80] sm:$0xff]
      %v2480 = vld [vmem:[#allocation2 + $0x88] sm:$0xff]
      %v2481 = vmul.bf16 %v2464, %v916
      %v2482 = vmul.bf16 %v2465, %v924
      %v2483 = vmul.bf16 %v2466, %v932
      %v2484 = vmul.bf16 %v2467, %v940
      %v2485 = vmul.bf16 %v2468, %v948
      %v2486 = vmul.bf16 %v2469, %v956
      %v2487 = vmul.bf16 %v2470, %v964
      %v2488 = vmul.bf16 %v2471, %v972
      %v2489 = vmul.bf16 %v2472, %v980
      %v2490 = vmul.bf16 %v2473, %v988
      %v2491 = vmul.bf16 %v2474, %v996
      %v2492 = vmul.bf16 %v2475, %v1004
      %v2493 = vmul.bf16 %v2476, %v1012
      %v2494 = vmul.bf16 %v2477, %v1020
      %v2495 = vmul.bf16 %v2478, %v1028
      %v2496 = vmul.bf16 %v2479, %v1036
      %v2497 = vmul.bf16 %v2480, %v1039
      %v2498 = vld [vmem:[%s1 + $0xc0] sm:$0xf]
      %v2499 = vld [vmem:[%s1 + $0xc4] sm:$0xf]
      %v2500 = vld [vmem:[%s1 + $0xc8] sm:$0xf]
      %v2501 = vld [vmem:[%s1 + $0xcc] sm:$0xf]
      %v2502 = vld [vmem:[%s1 + $0xd0] sm:$0xf]
      %v2503 = vld [vmem:[%s1 + $0xd4] sm:$0xf]
      %v2504 = vld [vmem:[%s1 + $0xd8] sm:$0xf]
      %v2505 = vld [vmem:[%s1 + $0xdc] sm:$0xf]
      %v2506 = vld [vmem:[%s1 + $0xe0] sm:$0xf]
      %v2507 = vld [vmem:[%s1 + $0xe4] sm:$0xf]
      %v2508 = vld [vmem:[%s1 + $0xe8] sm:$0xf]
      %v2509 = vld [vmem:[%s1 + $0xec] sm:$0xf]
      %v2510 = vld [vmem:[%s1 + $0xf0] sm:$0xf]
      %v2511 = vld [vmem:[%s1 + $0xf4] sm:$0xf]
      %v2512 = vld [vmem:[%s1 + $0xf8] sm:$0xf]
      %v2513 = vld [vmem:[%s1 + $0xfc] sm:$0xf]
      %v2515 = vshrl.u32 %v2481, 16
      %v2517 = vrot.slane %v2515, 7
      %v2519 = vshrl.u32 %v2482, 16
      %v2521 = vrot.slane %v2519, 7
      %v2522 = vshll.u32 %v2482, 16
      %v2524 = vor.u32 %v2521, %v2522
      %v2525 = vsel %vm1090, %v2517, %v2524
      %v2527 = vshrl.u32 %v2483, 16
      %v2529 = vrot.slane %v2527, 7
      %v2530 = vshll.u32 %v2483, 16
      %v2532 = vor.u32 %v2529, %v2530
      %v2533 = vsel %vm1090, %v2521, %v2532
      %v2535 = vshrl.u32 %v2484, 16
      %v2537 = vrot.slane %v2535, 7
      %v2538 = vshll.u32 %v2484, 16
      %v2540 = vor.u32 %v2537, %v2538
      %v2541 = vsel %vm1090, %v2529, %v2540
      %v2543 = vshrl.u32 %v2485, 16
      %v2545 = vrot.slane %v2543, 7
      %v2546 = vshll.u32 %v2485, 16
      %v2548 = vor.u32 %v2545, %v2546
      %v2549 = vsel %vm1090, %v2537, %v2548
      %v2551 = vshrl.u32 %v2486, 16
      %v2553 = vrot.slane %v2551, 7
      %v2554 = vshll.u32 %v2486, 16
      %v2556 = vor.u32 %v2553, %v2554
      %v2557 = vsel %vm1090, %v2545, %v2556
      %v2559 = vshrl.u32 %v2487, 16
      %v2561 = vrot.slane %v2559, 7
      %v2562 = vshll.u32 %v2487, 16
      %v2564 = vor.u32 %v2561, %v2562
      %v2565 = vsel %vm1090, %v2553, %v2564
      %v2567 = vshrl.u32 %v2488, 16
      %v2569 = vrot.slane %v2567, 7
      %v2570 = vshll.u32 %v2488, 16
      %v2572 = vor.u32 %v2569, %v2570
      %v2573 = vsel %vm1090, %v2561, %v2572
      %v2575 = vshrl.u32 %v2489, 16
      %v2577 = vrot.slane %v2575, 7
      %v2578 = vshll.u32 %v2489, 16
      %v2580 = vor.u32 %v2577, %v2578
      %v2581 = vsel %vm1090, %v2569, %v2580
      %v2583 = vshrl.u32 %v2490, 16
      %v2585 = vrot.slane %v2583, 7
      %v2586 = vshll.u32 %v2490, 16
      %v2588 = vor.u32 %v2585, %v2586
      %v2589 = vsel %vm1090, %v2577, %v2588
      %v2591 = vshrl.u32 %v2491, 16
      %v2593 = vrot.slane %v2591, 7
      %v2594 = vshll.u32 %v2491, 16
      %v2596 = vor.u32 %v2593, %v2594
      %v2597 = vsel %vm1090, %v2585, %v2596
      %v2599 = vshrl.u32 %v2492, 16
      %v2601 = vrot.slane %v2599, 7
      %v2602 = vshll.u32 %v2492, 16
      %v2604 = vor.u32 %v2601, %v2602
      %v2605 = vsel %vm1090, %v2593, %v2604
      %v2607 = vshrl.u32 %v2493, 16
      %v2609 = vrot.slane %v2607, 7
      %v2610 = vshll.u32 %v2493, 16
      %v2612 = vor.u32 %v2609, %v2610
      %v2613 = vsel %vm1090, %v2601, %v2612
      %v2615 = vshrl.u32 %v2494, 16
      %v2617 = vrot.slane %v2615, 7
      %v2618 = vshll.u32 %v2494, 16
      %v2620 = vor.u32 %v2617, %v2618
      %v2621 = vsel %vm1090, %v2609, %v2620
      %v2623 = vshrl.u32 %v2495, 16
      %v2625 = vrot.slane %v2623, 7
      %v2626 = vshll.u32 %v2495, 16
      %v2628 = vor.u32 %v2625, %v2626
      %v2629 = vsel %vm1090, %v2617, %v2628
      %v2631 = vshrl.u32 %v2496, 16
      %v2633 = vrot.slane %v2631, 7
      %v2634 = vshll.u32 %v2496, 16
      %v2636 = vor.u32 %v2633, %v2634
      %v2637 = vsel %vm1090, %v2625, %v2636
      %v2639 = vshrl.u32 %v2497, 16
      %v2641 = vrot.slane %v2639, 7
      %v2642 = vshll.u32 %v2497, 16
      %v2644 = vor.u32 %v2641, %v2642
      %v2645 = vsel %vm1090, %v2633, %v2644
      %v2678 = vunpack.c.l.b16 %v2498
      %v2679 = vunpack.c.l.b16 %v2499
      %v2680 = vunpack.c.l.b16 %v2500
      %v2681 = vunpack.c.l.b16 %v2501
      %v2682 = vunpack.c.l.b16 %v2502
      %v2683 = vunpack.c.l.b16 %v2503
      %v2684 = vunpack.c.l.b16 %v2504
      %v2685 = vunpack.c.l.b16 %v2505
      %v2686 = vunpack.c.l.b16 %v2506
      %v2687 = vunpack.c.l.b16 %v2507
      %v2688 = vunpack.c.l.b16 %v2508
      %v2689 = vunpack.c.l.b16 %v2509
      %v2690 = vunpack.c.l.b16 %v2510
      %v2691 = vunpack.c.l.b16 %v2511
      %v2692 = vunpack.c.l.b16 %v2512
      %v2693 = vunpack.c.l.b16 %v2513
      %v2694 = vpack.c.b16 %v2679, %v2678
      %v2695 = vpack.c.b16 %v2681, %v2680
      %v2696 = vpack.c.b16 %v2683, %v2682
      %v2697 = vpack.c.b16 %v2685, %v2684
      %v2698 = vpack.c.b16 %v2687, %v2686
      %v2699 = vpack.c.b16 %v2689, %v2688
      %v2700 = vpack.c.b16 %v2691, %v2690
      %v2701 = vpack.c.b16 %v2693, %v2692
      %2710 = vmatprep.subr.bf16.mxu0 0
      %2711 = vmatpush1.bf16.msra.mxu0 %v2694
      %2712 = vmatprep.subr.bf16.mxu0 0
      %2713 = vmatpush1.bf16.msra.mxu0 %v2695
      %2714 = vmatprep.subr.bf16.mxu0 0
      %2715 = vmatpush1.bf16.msra.mxu0 %v2696
      %2716 = vmatprep.subr.bf16.mxu0 0
      %2717 = vmatpush1.bf16.msra.mxu0 %v2697
      %2718 = vmatprep.subr.bf16.mxu0 0
      %2719 = vmatpush1.bf16.msra.mxu0 %v2698
      %2720 = vmatprep.subr.bf16.mxu0 0
      %2721 = vmatpush1.bf16.msra.mxu0 %v2699
      %2722 = vmatprep.subr.bf16.mxu0 0
      %2723 = vmatpush1.bf16.msra.mxu0 %v2700
      %2724 = vmatprep.subr.bf16.mxu0 0
      %2725 = vmatpush1.bf16.msra.mxu0 %v2701
      %2726 = vmatprep.subr.bf16.mxu0 0
      %2727 = vmatpush1.bf16.msra.mxu0 0
      %2728 = vmatprep.subr.bf16.mxu0 0
      %2729 = vmatpush1.bf16.msra.mxu0 0
      %2730 = vmatprep.subr.bf16.mxu0 0
      %2731 = vmatpush1.bf16.msra.mxu0 0
      %2732 = vmatprep.subr.bf16.mxu0 0
      %2733 = vmatpush1.bf16.msra.mxu0 0
      %2734 = vmatprep.subr.bf16.mxu0 0
      %2735 = vmatpush1.bf16.msra.mxu0 0
      %2736 = vmatprep.subr.bf16.mxu0 0
      %2737 = vmatpush1.bf16.msra.mxu0 0
      %2738 = vmatprep.subr.bf16.mxu0 0
      %2739 = vmatpush1.bf16.msra.mxu0 0
      %2740 = vmatprep.subr.bf16.mxu0 0
      %2741 = vmatpush1.bf16.msra.mxu0 0
      %2742 = vmatprep.mubr.bf16.mxu0 0
      %2743 = vmatmul.mubr.bf16.gmra.mrb[0].mxu0 %v2525
      %v2744 = vpop.f32.mrb[0].mxu0
      %v2745 = vadd.f32 0.0, %v2744
      %v2746 = vpop.f32.mrb[0].mxu0
      %v2747 = vpop.f32.mrb[0].mxu0
      %v2748 = vadd.f32 0.0, %v2747
      %v2749 = vpop.f32.mrb[0].mxu0
      %2750 = vmatprep.mubr.bf16.mxu0 0
      %2751 = vmatmul.mubr.bf16.gmra.mrb[0].mxu0 %v2533
      %v2752 = vpop.f32.mrb[0].mxu0
      %v2753 = vadd.f32 0.0, %v2752
      %v2754 = vpop.f32.mrb[0].mxu0
      %v2755 = vpop.f32.mrb[0].mxu0
      %v2756 = vadd.f32 0.0, %v2755
      %v2757 = vpop.f32.mrb[0].mxu0
      %2758 = vmatprep.mubr.bf16.mxu0 0
      %2759 = vmatmul.mubr.bf16.gmra.mrb[0].mxu0 %v2541
      %v2760 = vpop.f32.mrb[0].mxu0
      %v2761 = vadd.f32 0.0, %v2760
      %v2762 = vpop.f32.mrb[0].mxu0
      %v2763 = vpop.f32.mrb[0].mxu0
      %v2764 = vadd.f32 0.0, %v2763
      %v2765 = vpop.f32.mrb[0].mxu0
      %2766 = vmatprep.mubr.bf16.mxu0 0
      %2767 = vmatmul.mubr.bf16.gmra.mrb[0].mxu0 %v2549
      %v2768 = vpop.f32.mrb[0].mxu0
      %v2769 = vadd.f32 0.0, %v2768
      %v2770 = vpop.f32.mrb[0].mxu0
      %v2771 = vpop.f32.mrb[0].mxu0
      %v2772 = vadd.f32 0.0, %v2771
      %v2773 = vpop.f32.mrb[0].mxu0
      %2774 = vmatprep.mubr.bf16.mxu0 0
      %2775 = vmatmul.mubr.bf16.gmra.mrb[0].mxu0 %v2557
      %v2776 = vpop.f32.mrb[0].mxu0
      %v2777 = vadd.f32 0.0, %v2776
      %v2778 = vpop.f32.mrb[0].mxu0
      %v2779 = vpop.f32.mrb[0].mxu0
      %v2780 = vadd.f32 0.0, %v2779
      %v2781 = vpop.f32.mrb[0].mxu0
      %2782 = vmatprep.mubr.bf16.mxu0 0
      %2783 = vmatmul.mubr.bf16.gmra.mrb[0].mxu0 %v2565
      %v2784 = vpop.f32.mrb[0].mxu0
      %v2785 = vadd.f32 0.0, %v2784
      %v2786 = vpop.f32.mrb[0].mxu0
      %v2787 = vpop.f32.mrb[0].mxu0
      %v2788 = vadd.f32 0.0, %v2787
      %v2789 = vpop.f32.mrb[0].mxu0
      %2790 = vmatprep.mubr.bf16.mxu0 0
      %2791 = vmatmul.mubr.bf16.gmra.mrb[0].mxu0 %v2573
      %v2792 = vpop.f32.mrb[0].mxu0
      %v2793 = vadd.f32 0.0, %v2792
      %v2794 = vpop.f32.mrb[0].mxu0
      %v2795 = vpop.f32.mrb[0].mxu0
      %v2796 = vadd.f32 0.0, %v2795
      %v2797 = vpop.f32.mrb[0].mxu0
      %2798 = vmatprep.mubr.bf16.mxu0 0
      %2799 = vmatmul.mubr.bf16.gmra.mrb[0].mxu0 %v2581
      %v2800 = vpop.f32.mrb[0].mxu0
      %v2801 = vadd.f32 0.0, %v2800
      %v2802 = vpop.f32.mrb[0].mxu0
      %v2803 = vpop.f32.mrb[0].mxu0
      %v2804 = vadd.f32 0.0, %v2803
      %v2805 = vpop.f32.mrb[0].mxu0
      %2806 = vmatprep.mubr.bf16.mxu0 0
      %2807 = vmatmul.mubr.bf16.gmra.mrb[0].mxu0 %v2589
      %v2808 = vpop.f32.mrb[0].mxu0
      %v2809 = vadd.f32 0.0, %v2808
      %v2810 = vpop.f32.mrb[0].mxu0
      %v2811 = vpop.f32.mrb[0].mxu0
      %v2812 = vadd.f32 0.0, %v2811
      %v2813 = vpop.f32.mrb[0].mxu0
      %2814 = vmatprep.mubr.bf16.mxu0 0
      %2815 = vmatmul.mubr.bf16.gmra.mrb[0].mxu0 %v2597
      %v2816 = vpop.f32.mrb[0].mxu0
      %v2817 = vadd.f32 0.0, %v2816
      %v2818 = vpop.f32.mrb[0].mxu0
      %v2819 = vpop.f32.mrb[0].mxu0
      %v2820 = vadd.f32 0.0, %v2819
      %v2821 = vpop.f32.mrb[0].mxu0
      %2822 = vmatprep.mubr.bf16.mxu0 0
      %2823 = vmatmul.mubr.bf16.gmra.mrb[0].mxu0 %v2605
      %v2824 = vpop.f32.mrb[0].mxu0
      %v2825 = vadd.f32 0.0, %v2824
      %v2826 = vpop.f32.mrb[0].mxu0
      %v2827 = vpop.f32.mrb[0].mxu0
      %v2828 = vadd.f32 0.0, %v2827
      %v2829 = vpop.f32.mrb[0].mxu0
      %2830 = vmatprep.mubr.bf16.mxu0 0
      %2831 = vmatmul.mubr.bf16.gmra.mrb[0].mxu0 %v2613
      %v2832 = vpop.f32.mrb[0].mxu0
      %v2833 = vadd.f32 0.0, %v2832
      %v2834 = vpop.f32.mrb[0].mxu0
      %v2835 = vpop.f32.mrb[0].mxu0
      %v2836 = vadd.f32 0.0, %v2835
      %v2837 = vpop.f32.mrb[0].mxu0
      %2838 = vmatprep.mubr.bf16.mxu0 0
      %2839 = vmatmul.mubr.bf16.gmra.mrb[0].mxu0 %v2621
      %v2840 = vpop.f32.mrb[0].mxu0
      %v2841 = vadd.f32 0.0, %v2840
      %v2842 = vpop.f32.mrb[0].mxu0
      %v2843 = vpop.f32.mrb[0].mxu0
      %v2844 = vadd.f32 0.0, %v2843
      %v2845 = vpop.f32.mrb[0].mxu0
      %2846 = vmatprep.mubr.bf16.mxu0 0
      %2847 = vmatmul.mubr.bf16.gmra.mrb[0].mxu0 %v2629
      %v2848 = vpop.f32.mrb[0].mxu0
      %v2849 = vadd.f32 0.0, %v2848
      %v2850 = vpop.f32.mrb[0].mxu0
      %v2851 = vpop.f32.mrb[0].mxu0
      %v2852 = vadd.f32 0.0, %v2851
      %v2853 = vpop.f32.mrb[0].mxu0
      %2854 = vmatprep.mubr.bf16.mxu0 0
      %2855 = vmatmul.mubr.bf16.gmra.mrb[0].mxu0 %v2637
      %v2856 = vpop.f32.mrb[0].mxu0
      %v2857 = vadd.f32 0.0, %v2856
      %v2858 = vpop.f32.mrb[0].mxu0
      %v2859 = vpop.f32.mrb[0].mxu0
      %v2860 = vadd.f32 0.0, %v2859
      %v2861 = vpop.f32.mrb[0].mxu0
      %2862 = vmatprep.mubr.bf16.mxu0 0
      %2863 = vmatmul.mubr.bf16.gmra.mrb[0].mxu0 %v2645
      %v2864 = vpop.f32.mrb[0].mxu0
      %v2865 = vadd.f32 0.0, %v2864
      %v2866 = vpop.f32.mrb[0].mxu0
      %v2867 = vpop.f32.mrb[0].mxu0
      %v2868 = vadd.f32 0.0, %v2867
      %v2869 = vpop.f32.mrb[0].mxu0
      %2870 = vdwg.mxu0
      %v2871 = vld [vmem:[#allocation3] sm:$0xff]
      %v2872 = vld [vmem:[#allocation3 + $0x8] sm:$0xff]
      %v2873 = vld [vmem:[#allocation3 + $0x10] sm:$0xff]
      %v2874 = vld [vmem:[#allocation3 + $0x18] sm:$0xff]
      %v2875 = vld [vmem:[#allocation3 + $0x20] sm:$0xff]
      %v2876 = vld [vmem:[#allocation3 + $0x28] sm:$0xff]
      %v2877 = vld [vmem:[#allocation3 + $0x30] sm:$0xff]
      %v2878 = vld [vmem:[#allocation3 + $0x38] sm:$0xff]
      %v2879 = vld [vmem:[#allocation3 + $0x40] sm:$0xff]
      %v2880 = vld [vmem:[#allocation3 + $0x48] sm:$0xff]
      %v2881 = vld [vmem:[#allocation3 + $0x50] sm:$0xff]
      %v2882 = vld [vmem:[#allocation3 + $0x58] sm:$0xff]
      %v2883 = vld [vmem:[#allocation3 + $0x60] sm:$0xff]
      %v2884 = vld [vmem:[#allocation3 + $0x68] sm:$0xff]
      %v2885 = vld [vmem:[#allocation3 + $0x70] sm:$0xff]
      %v2886 = vld [vmem:[#allocation3 + $0x78] sm:$0xff]
      %v2887 = vld [vmem:[#allocation3 + $0x80] sm:$0xff]
      %v2888 = vld [vmem:[#allocation3 + $0x88] sm:$0xff]
      %v2889 = vld [vmem:[#allocation3 + $0x90] sm:$0xff]
      %v2890 = vld [vmem:[#allocation3 + $0x98] sm:$0xff]
      %v2891 = vld [vmem:[#allocation3 + $0xa0] sm:$0xff]
      %v2892 = vld [vmem:[#allocation3 + $0xa8] sm:$0xff]
      %v2893 = vld [vmem:[#allocation3 + $0xb0] sm:$0xff]
      %v2894 = vld [vmem:[#allocation3 + $0xb8] sm:$0xff]
      %v2895 = vld [vmem:[#allocation3 + $0xc0] sm:$0xff]
      %v2896 = vld [vmem:[#allocation3 + $0xc8] sm:$0xff]
      %v2897 = vld [vmem:[#allocation3 + $0xd0] sm:$0xff]
      %v2898 = vld [vmem:[#allocation3 + $0xd8] sm:$0xff]
      %v2899 = vld [vmem:[#allocation3 + $0xe0] sm:$0xff]
      %v2900 = vld [vmem:[#allocation3 + $0xe8] sm:$0xff]
      %v2901 = vld [vmem:[#allocation3 + $0xf0] sm:$0xff]
      %v2902 = vld [vmem:[#allocation3 + $0xf8] sm:$0xff]
      %v2903 = vadd.f32 %v2871, %v2745
      %v2904 = vadd.f32 %v2872, %v2748
      %v2905 = vadd.f32 %v2873, %v2753
      %v2906 = vadd.f32 %v2874, %v2756
      %v2907 = vadd.f32 %v2875, %v2761
      %v2908 = vadd.f32 %v2876, %v2764
      %v2909 = vadd.f32 %v2877, %v2769
      %v2910 = vadd.f32 %v2878, %v2772
      %v2911 = vadd.f32 %v2879, %v2777
      %v2912 = vadd.f32 %v2880, %v2780
      %v2913 = vadd.f32 %v2881, %v2785
      %v2914 = vadd.f32 %v2882, %v2788
      %v2915 = vadd.f32 %v2883, %v2793
      %v2916 = vadd.f32 %v2884, %v2796
      %v2917 = vadd.f32 %v2885, %v2801
      %v2918 = vadd.f32 %v2886, %v2804
      %v2919 = vadd.f32 %v2887, %v2809
      %v2920 = vadd.f32 %v2888, %v2812
      %v2921 = vadd.f32 %v2889, %v2817
      %v2922 = vadd.f32 %v2890, %v2820
      %v2923 = vadd.f32 %v2891, %v2825
      %v2924 = vadd.f32 %v2892, %v2828
      %v2925 = vadd.f32 %v2893, %v2833
      %v2926 = vadd.f32 %v2894, %v2836
      %v2927 = vadd.f32 %v2895, %v2841
      %v2928 = vadd.f32 %v2896, %v2844
      %v2929 = vadd.f32 %v2897, %v2849
      %v2930 = vadd.f32 %v2898, %v2852
      %v2931 = vadd.f32 %v2899, %v2857
      %v2932 = vadd.f32 %v2900, %v2860
      %v2933 = vadd.f32 %v2901, %v2865
      %v2934 = vadd.f32 %v2902, %v2868
      %2935 = vst [vmem:[#allocation3] sm:$0xff] %v2903
      %2936 = vst [vmem:[#allocation3 + $0x8] sm:$0xff] %v2904
      %2937 = vst [vmem:[#allocation3 + $0x10] sm:$0xff] %v2905
      %2938 = vst [vmem:[#allocation3 + $0x18] sm:$0xff] %v2906
      %2939 = vst [vmem:[#allocation3 + $0x20] sm:$0xff] %v2907
      %2940 = vst [vmem:[#allocation3 + $0x28] sm:$0xff] %v2908
      %2941 = vst [vmem:[#allocation3 + $0x30] sm:$0xff] %v2909
      %2942 = vst [vmem:[#allocation3 + $0x38] sm:$0xff] %v2910
      %2943 = vst [vmem:[#allocation3 + $0x40] sm:$0xff] %v2911
      %2944 = vst [vmem:[#allocation3 + $0x48] sm:$0xff] %v2912
      %2945 = vst [vmem:[#allocation3 + $0x50] sm:$0xff] %v2913
      %2946 = vst [vmem:[#allocation3 + $0x58] sm:$0xff] %v2914
      %2947 = vst [vmem:[#allocation3 + $0x60] sm:$0xff] %v2915
      %2948 = vst [vmem:[#allocation3 + $0x68] sm:$0xff] %v2916
      %2949 = vst [vmem:[#allocation3 + $0x70] sm:$0xff] %v2917
      %2950 = vst [vmem:[#allocation3 + $0x78] sm:$0xff] %v2918
      %2951 = vst [vmem:[#allocation3 + $0x80] sm:$0xff] %v2919
      %2952 = vst [vmem:[#allocation3 + $0x88] sm:$0xff] %v2920
      %2953 = vst [vmem:[#allocation3 + $0x90] sm:$0xff] %v2921
      %2954 = vst [vmem:[#allocation3 + $0x98] sm:$0xff] %v2922
      %2955 = vst [vmem:[#allocation3 + $0xa0] sm:$0xff] %v2923
      %2956 = vst [vmem:[#allocation3 + $0xa8] sm:$0xff] %v2924
      %2957 = vst [vmem:[#allocation3 + $0xb0] sm:$0xff] %v2925
      %2958 = vst [vmem:[#allocation3 + $0xb8] sm:$0xff] %v2926
      %2959 = vst [vmem:[#allocation3 + $0xc0] sm:$0xff] %v2927
      %2960 = vst [vmem:[#allocation3 + $0xc8] sm:$0xff] %v2928
      %2961 = vst [vmem:[#allocation3 + $0xd0] sm:$0xff] %v2929
      %2962 = vst [vmem:[#allocation3 + $0xd8] sm:$0xff] %v2930
      %2963 = vst [vmem:[#allocation3 + $0xe0] sm:$0xff] %v2931
      %2964 = vst [vmem:[#allocation3 + $0xe8] sm:$0xff] %v2932
      %2965 = vst [vmem:[#allocation3 + $0xf0] sm:$0xff] %v2933
      %2966 = vst [vmem:[#allocation3 + $0xf8] sm:$0xff] %v2934
      %v2967 = vld [vmem:[#allocation2 + $0x10] sm:$0xff]
      %v2968 = vld [vmem:[#allocation2 + $0x18] sm:$0xff]
      %v2969 = vld [vmem:[#allocation2 + $0x20] sm:$0xff]
      %v2970 = vld [vmem:[#allocation2 + $0x28] sm:$0xff]
      %v2971 = vld [vmem:[#allocation2 + $0x30] sm:$0xff]
      %v2972 = vld [vmem:[#allocation2 + $0x38] sm:$0xff]
      %v2973 = vld [vmem:[#allocation2 + $0x40] sm:$0xff]
      %v2974 = vld [vmem:[#allocation2 + $0x48] sm:$0xff]
      %v2975 = vld [vmem:[#allocation2 + $0x50] sm:$0xff]
      %v2976 = vld [vmem:[#allocation2 + $0x58] sm:$0xff]
      %v2977 = vld [vmem:[#allocation2 + $0x60] sm:$0xff]
      %v2978 = vld [vmem:[#allocation2 + $0x68] sm:$0xff]
      %v2979 = vld [vmem:[#allocation2 + $0x70] sm:$0xff]
      %v2980 = vld [vmem:[#allocation2 + $0x78] sm:$0xff]
      %v2981 = vld [vmem:[#allocation2 + $0x80] sm:$0xff]
      %v2982 = vld [vmem:[#allocation2 + $0x88] sm:$0xff]
      %v2983 = vld [vmem:[%s1 + $0x100] sm:$0xf]
      %v2984 = vld [vmem:[%s1 + $0x104] sm:$0xf]
      %v2985 = vld [vmem:[%s1 + $0x108] sm:$0xf]
      %v2986 = vld [vmem:[%s1 + $0x10c] sm:$0xf]
      %v2987 = vld [vmem:[%s1 + $0x110] sm:$0xf]
      %v2988 = vld [vmem:[%s1 + $0x114] sm:$0xf]
      %v2989 = vld [vmem:[%s1 + $0x118] sm:$0xf]
      %v2990 = vld [vmem:[%s1 + $0x11c] sm:$0xf]
      %v2991 = vld [vmem:[%s1 + $0x120] sm:$0xf]
      %v2992 = vld [vmem:[%s1 + $0x124] sm:$0xf]
      %v2993 = vld [vmem:[%s1 + $0x128] sm:$0xf]
      %v2994 = vld [vmem:[%s1 + $0x12c] sm:$0xf]
      %v2995 = vld [vmem:[%s1 + $0x130] sm:$0xf]
      %v2996 = vld [vmem:[%s1 + $0x134] sm:$0xf]
      %v2997 = vld [vmem:[%s1 + $0x138] sm:$0xf]
      %v2998 = vld [vmem:[%s1 + $0x13c] sm:$0xf]
      %v3015 = vunpack.c.l.b16 %v2983
      %v3016 = vunpack.c.l.b16 %v2984
      %v3017 = vunpack.c.l.b16 %v2985
      %v3018 = vunpack.c.l.b16 %v2986
      %v3019 = vunpack.c.l.b16 %v2987
      %v3020 = vunpack.c.l.b16 %v2988
      %v3021 = vunpack.c.l.b16 %v2989
      %v3022 = vunpack.c.l.b16 %v2990
      %v3023 = vunpack.c.l.b16 %v2991
      %v3024 = vunpack.c.l.b16 %v2992
      %v3025 = vunpack.c.l.b16 %v2993
      %v3026 = vunpack.c.l.b16 %v2994
      %v3027 = vunpack.c.l.b16 %v2995
      %v3028 = vunpack.c.l.b16 %v2996
      %v3029 = vunpack.c.l.b16 %v2997
      %v3030 = vunpack.c.l.b16 %v2998
      %v3031 = vpack.c.b16 %v3016, %v3015
      %v3032 = vpack.c.b16 %v3018, %v3017
      %v3033 = vpack.c.b16 %v3020, %v3019
      %v3034 = vpack.c.b16 %v3022, %v3021
      %v3035 = vpack.c.b16 %v3024, %v3023
      %v3036 = vpack.c.b16 %v3026, %v3025
      %v3037 = vpack.c.b16 %v3028, %v3027
      %v3038 = vpack.c.b16 %v3030, %v3029
      %3047 = vmatprep.subr.bf16.mxu0 0
      %3048 = vmatpush1.bf16.msra.mxu0 %v3031
      %3049 = vmatprep.subr.bf16.mxu0 0
      %3050 = vmatpush1.bf16.msra.mxu0 %v3032
      %3051 = vmatprep.subr.bf16.mxu0 0
      %3052 = vmatpush1.bf16.msra.mxu0 %v3033
      %3053 = vmatprep.subr.bf16.mxu0 0
      %3054 = vmatpush1.bf16.msra.mxu0 %v3034
      %3055 = vmatprep.subr.bf16.mxu0 0
      %3056 = vmatpush1.bf16.msra.mxu0 %v3035
      %3057 = vmatprep.subr.bf16.mxu0 0
      %3058 = vmatpush1.bf16.msra.mxu0 %v3036
      %3059 = vmatprep.subr.bf16.mxu0 0
      %3060 = vmatpush1.bf16.msra.mxu0 %v3037
      %3061 = vmatprep.subr.bf16.mxu0 0
      %3062 = vmatpush1.bf16.msra.mxu0 %v3038
      %3063 = vmatprep.subr.bf16.mxu0 0
      %3064 = vmatpush1.bf16.msra.mxu0 0
      %3065 = vmatprep.subr.bf16.mxu0 0
      %3066 = vmatpush1.bf16.msra.mxu0 0
      %3067 = vmatprep.subr.bf16.mxu0 0
      %3068 = vmatpush1.bf16.msra.mxu0 0
      %3069 = vmatprep.subr.bf16.mxu0 0
      %3070 = vmatpush1.bf16.msra.mxu0 0
      %3071 = vmatprep.subr.bf16.mxu0 0
      %3072 = vmatpush1.bf16.msra.mxu0 0
      %3073 = vmatprep.subr.bf16.mxu0 0
      %3074 = vmatpush1.bf16.msra.mxu0 0
      %3075 = vmatprep.subr.bf16.mxu0 0
      %3076 = vmatpush1.bf16.msra.mxu0 0
      %3077 = vmatprep.subr.bf16.mxu0 0
      %3078 = vmatpush1.bf16.msra.mxu0 0
      %3079 = vmatprep.mubr.bf16.mxu0 0
      %3080 = vmatmul.mubr.bf16.gmra.mrb[0].mxu0 %v2967
      %v3081 = vpop.f32.mrb[0].mxu0
      %v3082 = vadd.f32 0.0, %v3081
      %v3083 = vpop.f32.mrb[0].mxu0
      %v3084 = vpop.f32.mrb[0].mxu0
      %v3085 = vadd.f32 0.0, %v3084
      %v3086 = vpop.f32.mrb[0].mxu0
      %3087 = vmatprep.mubr.bf16.mxu0 0
      %3088 = vmatmul.mubr.bf16.gmra.mrb[0].mxu0 %v2968
      %v3089 = vpop.f32.mrb[0].mxu0
      %v3090 = vadd.f32 0.0, %v3089
      %v3091 = vpop.f32.mrb[0].mxu0
      %v3092 = vpop.f32.mrb[0].mxu0
      %v3093 = vadd.f32 0.0, %v3092
      %v3094 = vpop.f32.mrb[0].mxu0
      %3095 = vmatprep.mubr.bf16.mxu0 0
      %3096 = vmatmul.mubr.bf16.gmra.mrb[0].mxu0 %v2969
      %v3097 = vpop.f32.mrb[0].mxu0
      %v3098 = vadd.f32 0.0, %v3097
      %v3099 = vpop.f32.mrb[0].mxu0
      %v3100 = vpop.f32.mrb[0].mxu0
      %v3101 = vadd.f32 0.0, %v3100
      %v3102 = vpop.f32.mrb[0].mxu0
      %3103 = vmatprep.mubr.bf16.mxu0 0
      %3104 = vmatmul.mubr.bf16.gmra.mrb[0].mxu0 %v2970
      %v3105 = vpop.f32.mrb[0].mxu0
      %v3106 = vadd.f32 0.0, %v3105
      %v3107 = vpop.f32.mrb[0].mxu0
      %v3108 = vpop.f32.mrb[0].mxu0
      %v3109 = vadd.f32 0.0, %v3108
      %v3110 = vpop.f32.mrb[0].mxu0
      %3111 = vmatprep.mubr.bf16.mxu0 0
      %3112 = vmatmul.mubr.bf16.gmra.mrb[0].mxu0 %v2971
      %v3113 = vpop.f32.mrb[0].mxu0
      %v3114 = vadd.f32 0.0, %v3113
      %v3115 = vpop.f32.mrb[0].mxu0
      %v3116 = vpop.f32.mrb[0].mxu0
      %v3117 = vadd.f32 0.0, %v3116
      %v3118 = vpop.f32.mrb[0].mxu0
      %3119 = vmatprep.mubr.bf16.mxu0 0
      %3120 = vmatmul.mubr.bf16.gmra.mrb[0].mxu0 %v2972
      %v3121 = vpop.f32.mrb[0].mxu0
      %v3122 = vadd.f32 0.0, %v3121
      %v3123 = vpop.f32.mrb[0].mxu0
      %v3124 = vpop.f32.mrb[0].mxu0
      %v3125 = vadd.f32 0.0, %v3124
      %v3126 = vpop.f32.mrb[0].mxu0
      %3127 = vmatprep.mubr.bf16.mxu0 0
      %3128 = vmatmul.mubr.bf16.gmra.mrb[0].mxu0 %v2973
      %v3129 = vpop.f32.mrb[0].mxu0
      %v3130 = vadd.f32 0.0, %v3129
      %v3131 = vpop.f32.mrb[0].mxu0
      %v3132 = vpop.f32.mrb[0].mxu0
      %v3133 = vadd.f32 0.0, %v3132
      %v3134 = vpop.f32.mrb[0].mxu0
      %3135 = vmatprep.mubr.bf16.mxu0 0
      %3136 = vmatmul.mubr.bf16.gmra.mrb[0].mxu0 %v2974
      %v3137 = vpop.f32.mrb[0].mxu0
      %v3138 = vadd.f32 0.0, %v3137
      %v3139 = vpop.f32.mrb[0].mxu0
      %v3140 = vpop.f32.mrb[0].mxu0
      %v3141 = vadd.f32 0.0, %v3140
      %v3142 = vpop.f32.mrb[0].mxu0
      %3143 = vmatprep.mubr.bf16.mxu0 0
      %3144 = vmatmul.mubr.bf16.gmra.mrb[0].mxu0 %v2975
      %v3145 = vpop.f32.mrb[0].mxu0
      %v3146 = vadd.f32 0.0, %v3145
      %v3147 = vpop.f32.mrb[0].mxu0
      %v3148 = vpop.f32.mrb[0].mxu0
      %v3149 = vadd.f32 0.0, %v3148
      %v3150 = vpop.f32.mrb[0].mxu0
      %3151 = vmatprep.mubr.bf16.mxu0 0
      %3152 = vmatmul.mubr.bf16.gmra.mrb[0].mxu0 %v2976
      %v3153 = vpop.f32.mrb[0].mxu0
      %v3154 = vadd.f32 0.0, %v3153
      %v3155 = vpop.f32.mrb[0].mxu0
      %v3156 = vpop.f32.mrb[0].mxu0
      %v3157 = vadd.f32 0.0, %v3156
      %v3158 = vpop.f32.mrb[0].mxu0
      %3159 = vmatprep.mubr.bf16.mxu0 0
      %3160 = vmatmul.mubr.bf16.gmra.mrb[0].mxu0 %v2977
      %v3161 = vpop.f32.mrb[0].mxu0
      %v3162 = vadd.f32 0.0, %v3161
      %v3163 = vpop.f32.mrb[0].mxu0
      %v3164 = vpop.f32.mrb[0].mxu0
      %v3165 = vadd.f32 0.0, %v3164
      %v3166 = vpop.f32.mrb[0].mxu0
      %3167 = vmatprep.mubr.bf16.mxu0 0
      %3168 = vmatmul.mubr.bf16.gmra.mrb[0].mxu0 %v2978
      %v3169 = vpop.f32.mrb[0].mxu0
      %v3170 = vadd.f32 0.0, %v3169
      %v3171 = vpop.f32.mrb[0].mxu0
      %v3172 = vpop.f32.mrb[0].mxu0
      %v3173 = vadd.f32 0.0, %v3172
      %v3174 = vpop.f32.mrb[0].mxu0
      %3175 = vmatprep.mubr.bf16.mxu0 0
      %3176 = vmatmul.mubr.bf16.gmra.mrb[0].mxu0 %v2979
      %v3177 = vpop.f32.mrb[0].mxu0
      %v3178 = vadd.f32 0.0, %v3177
      %v3179 = vpop.f32.mrb[0].mxu0
      %v3180 = vpop.f32.mrb[0].mxu0
      %v3181 = vadd.f32 0.0, %v3180
      %v3182 = vpop.f32.mrb[0].mxu0
      %3183 = vmatprep.mubr.bf16.mxu0 0
      %3184 = vmatmul.mubr.bf16.gmra.mrb[0].mxu0 %v2980
      %v3185 = vpop.f32.mrb[0].mxu0
      %v3186 = vadd.f32 0.0, %v3185
      %v3187 = vpop.f32.mrb[0].mxu0
      %v3188 = vpop.f32.mrb[0].mxu0
      %v3189 = vadd.f32 0.0, %v3188
      %v3190 = vpop.f32.mrb[0].mxu0
      %3191 = vmatprep.mubr.bf16.mxu0 0
      %3192 = vmatmul.mubr.bf16.gmra.mrb[0].mxu0 %v2981
      %v3193 = vpop.f32.mrb[0].mxu0
      %v3194 = vadd.f32 0.0, %v3193
      %v3195 = vpop.f32.mrb[0].mxu0
      %v3196 = vpop.f32.mrb[0].mxu0
      %v3197 = vadd.f32 0.0, %v3196
      %v3198 = vpop.f32.mrb[0].mxu0
      %3199 = vmatprep.mubr.bf16.mxu0 0
      %3200 = vmatmul.mubr.bf16.gmra.mrb[0].mxu0 %v2982
      %v3201 = vpop.f32.mrb[0].mxu0
      %v3202 = vadd.f32 0.0, %v3201
      %v3203 = vpop.f32.mrb[0].mxu0
      %v3204 = vpop.f32.mrb[0].mxu0
      %v3205 = vadd.f32 0.0, %v3204
      %v3206 = vpop.f32.mrb[0].mxu0
      %3207 = vdwg.mxu0
      %v3208 = vld [vmem:[#allocation3] sm:$0xff]
      %v3209 = vld [vmem:[#allocation3 + $0x8] sm:$0xff]
      %v3210 = vld [vmem:[#allocation3 + $0x10] sm:$0xff]
      %v3211 = vld [vmem:[#allocation3 + $0x18] sm:$0xff]
      %v3212 = vld [vmem:[#allocation3 + $0x20] sm:$0xff]
      %v3213 = vld [vmem:[#allocation3 + $0x28] sm:$0xff]
      %v3214 = vld [vmem:[#allocation3 + $0x30] sm:$0xff]
      %v3215 = vld [vmem:[#allocation3 + $0x38] sm:$0xff]
      %v3216 = vld [vmem:[#allocation3 + $0x40] sm:$0xff]
      %v3217 = vld [vmem:[#allocation3 + $0x48] sm:$0xff]
      %v3218 = vld [vmem:[#allocation3 + $0x50] sm:$0xff]
      %v3219 = vld [vmem:[#allocation3 + $0x58] sm:$0xff]
      %v3220 = vld [vmem:[#allocation3 + $0x60] sm:$0xff]
      %v3221 = vld [vmem:[#allocation3 + $0x68] sm:$0xff]
      %v3222 = vld [vmem:[#allocation3 + $0x70] sm:$0xff]
      %v3223 = vld [vmem:[#allocation3 + $0x78] sm:$0xff]
      %v3224 = vld [vmem:[#allocation3 + $0x80] sm:$0xff]
      %v3225 = vld [vmem:[#allocation3 + $0x88] sm:$0xff]
      %v3226 = vld [vmem:[#allocation3 + $0x90] sm:$0xff]
      %v3227 = vld [vmem:[#allocation3 + $0x98] sm:$0xff]
      %v3228 = vld [vmem:[#allocation3 + $0xa0] sm:$0xff]
      %v3229 = vld [vmem:[#allocation3 + $0xa8] sm:$0xff]
      %v3230 = vld [vmem:[#allocation3 + $0xb0] sm:$0xff]
      %v3231 = vld [vmem:[#allocation3 + $0xb8] sm:$0xff]
      %v3232 = vld [vmem:[#allocation3 + $0xc0] sm:$0xff]
      %v3233 = vld [vmem:[#allocation3 + $0xc8] sm:$0xff]
      %v3234 = vld [vmem:[#allocation3 + $0xd0] sm:$0xff]
      %v3235 = vld [vmem:[#allocation3 + $0xd8] sm:$0xff]
      %v3236 = vld [vmem:[#allocation3 + $0xe0] sm:$0xff]
      %v3237 = vld [vmem:[#allocation3 + $0xe8] sm:$0xff]
      %v3238 = vld [vmem:[#allocation3 + $0xf0] sm:$0xff]
      %v3239 = vld [vmem:[#allocation3 + $0xf8] sm:$0xff]
      %v3240 = vadd.f32 %v3208, %v3082
      %v3241 = vadd.f32 %v3209, %v3085
      %v3242 = vadd.f32 %v3210, %v3090
      %v3243 = vadd.f32 %v3211, %v3093
      %v3244 = vadd.f32 %v3212, %v3098
      %v3245 = vadd.f32 %v3213, %v3101
      %v3246 = vadd.f32 %v3214, %v3106
      %v3247 = vadd.f32 %v3215, %v3109
      %v3248 = vadd.f32 %v3216, %v3114
      %v3249 = vadd.f32 %v3217, %v3117
      %v3250 = vadd.f32 %v3218, %v3122
      %v3251 = vadd.f32 %v3219, %v3125
      %v3252 = vadd.f32 %v3220, %v3130
      %v3253 = vadd.f32 %v3221, %v3133
      %v3254 = vadd.f32 %v3222, %v3138
      %v3255 = vadd.f32 %v3223, %v3141
      %v3256 = vadd.f32 %v3224, %v3146
      %v3257 = vadd.f32 %v3225, %v3149
      %v3258 = vadd.f32 %v3226, %v3154
      %v3259 = vadd.f32 %v3227, %v3157
      %v3260 = vadd.f32 %v3228, %v3162
      %v3261 = vadd.f32 %v3229, %v3165
      %v3262 = vadd.f32 %v3230, %v3170
      %v3263 = vadd.f32 %v3231, %v3173
      %v3264 = vadd.f32 %v3232, %v3178
      %v3265 = vadd.f32 %v3233, %v3181
      %v3266 = vadd.f32 %v3234, %v3186
      %v3267 = vadd.f32 %v3235, %v3189
      %v3268 = vadd.f32 %v3236, %v3194
      %v3269 = vadd.f32 %v3237, %v3197
      %v3270 = vadd.f32 %v3238, %v3202
      %v3271 = vadd.f32 %v3239, %v3205
      %3272 = vst [vmem:[#allocation3] sm:$0xff] %v3240
      %3273 = vst [vmem:[#allocation3 + $0x8] sm:$0xff] %v3241
      %3274 = vst [vmem:[#allocation3 + $0x10] sm:$0xff] %v3242
      %3275 = vst [vmem:[#allocation3 + $0x18] sm:$0xff] %v3243
      %3276 = vst [vmem:[#allocation3 + $0x20] sm:$0xff] %v3244
      %3277 = vst [vmem:[#allocation3 + $0x28] sm:$0xff] %v3245
      %3278 = vst [vmem:[#allocation3 + $0x30] sm:$0xff] %v3246
      %3279 = vst [vmem:[#allocation3 + $0x38] sm:$0xff] %v3247
      %3280 = vst [vmem:[#allocation3 + $0x40] sm:$0xff] %v3248
      %3281 = vst [vmem:[#allocation3 + $0x48] sm:$0xff] %v3249
      %3282 = vst [vmem:[#allocation3 + $0x50] sm:$0xff] %v3250
      %3283 = vst [vmem:[#allocation3 + $0x58] sm:$0xff] %v3251
      %3284 = vst [vmem:[#allocation3 + $0x60] sm:$0xff] %v3252
      %3285 = vst [vmem:[#allocation3 + $0x68] sm:$0xff] %v3253
      %3286 = vst [vmem:[#allocation3 + $0x70] sm:$0xff] %v3254
      %3287 = vst [vmem:[#allocation3 + $0x78] sm:$0xff] %v3255
      %3288 = vst [vmem:[#allocation3 + $0x80] sm:$0xff] %v3256
      %3289 = vst [vmem:[#allocation3 + $0x88] sm:$0xff] %v3257
      %3290 = vst [vmem:[#allocation3 + $0x90] sm:$0xff] %v3258
      %3291 = vst [vmem:[#allocation3 + $0x98] sm:$0xff] %v3259
      %3292 = vst [vmem:[#allocation3 + $0xa0] sm:$0xff] %v3260
      %3293 = vst [vmem:[#allocation3 + $0xa8] sm:$0xff] %v3261
      %3294 = vst [vmem:[#allocation3 + $0xb0] sm:$0xff] %v3262
      %3295 = vst [vmem:[#allocation3 + $0xb8] sm:$0xff] %v3263
      %3296 = vst [vmem:[#allocation3 + $0xc0] sm:$0xff] %v3264
      %3297 = vst [vmem:[#allocation3 + $0xc8] sm:$0xff] %v3265
      %3298 = vst [vmem:[#allocation3 + $0xd0] sm:$0xff] %v3266
      %3299 = vst [vmem:[#allocation3 + $0xd8] sm:$0xff] %v3267
      %3300 = vst [vmem:[#allocation3 + $0xe0] sm:$0xff] %v3268
      %3301 = vst [vmem:[#allocation3 + $0xe8] sm:$0xff] %v3269
      %3302 = vst [vmem:[#allocation3 + $0xf0] sm:$0xff] %v3270
      %3303 = vst [vmem:[#allocation3 + $0xf8] sm:$0xff] %v3271
      %v3304 = vld [vmem:[#allocation2 + $0x10] sm:$0xff]
      %v3305 = vld [vmem:[#allocation2 + $0x18] sm:$0xff]
      %v3306 = vld [vmem:[#allocation2 + $0x20] sm:$0xff]
      %v3307 = vld [vmem:[#allocation2 + $0x28] sm:$0xff]
      %v3308 = vld [vmem:[#allocation2 + $0x30] sm:$0xff]
      %v3309 = vld [vmem:[#allocation2 + $0x38] sm:$0xff]
      %v3310 = vld [vmem:[#allocation2 + $0x40] sm:$0xff]
      %v3311 = vld [vmem:[#allocation2 + $0x48] sm:$0xff]
      %v3312 = vld [vmem:[#allocation2 + $0x50] sm:$0xff]
      %v3313 = vld [vmem:[#allocation2 + $0x58] sm:$0xff]
      %v3314 = vld [vmem:[#allocation2 + $0x60] sm:$0xff]
      %v3315 = vld [vmem:[#allocation2 + $0x68] sm:$0xff]
      %v3316 = vld [vmem:[#allocation2 + $0x70] sm:$0xff]
      %v3317 = vld [vmem:[#allocation2 + $0x78] sm:$0xff]
      %v3318 = vld [vmem:[#allocation2 + $0x80] sm:$0xff]
      %v3319 = vld [vmem:[#allocation2 + $0x88] sm:$0xff]
      %v3320 = vld [vmem:[#allocation2 + $0x90] sm:$0x1]
      %v3321 = vmul.bf16 %v3304, %v1840
      %v3322 = vmul.bf16 %v3305, %v1848
      %v3323 = vmul.bf16 %v3306, %v1856
      %v3324 = vmul.bf16 %v3307, %v1864
      %v3325 = vmul.bf16 %v3308, %v1872
      %v3326 = vmul.bf16 %v3309, %v1880
      %v3327 = vmul.bf16 %v3310, %v1888
      %v3328 = vmul.bf16 %v3311, %v1896
      %v3329 = vmul.bf16 %v3312, %v1904
      %v3330 = vmul.bf16 %v3313, %v1912
      %v3331 = vmul.bf16 %v3314, %v1920
      %v3332 = vmul.bf16 %v3315, %v1928
      %v3333 = vmul.bf16 %v3316, %v1936
      %v3334 = vmul.bf16 %v3317, %v1944
      %v3335 = vmul.bf16 %v3318, %v1952
      %v3336 = vmul.bf16 %v3319, %v1960
      %v3337 = vmul.bf16 %v3320, %v1956
      %v3338 = vld [vmem:[%s1 + $0x140] sm:$0xf]
      %v3339 = vld [vmem:[%s1 + $0x144] sm:$0xf]
      %v3340 = vld [vmem:[%s1 + $0x148] sm:$0xf]
      %v3341 = vld [vmem:[%s1 + $0x14c] sm:$0xf]
      %v3342 = vld [vmem:[%s1 + $0x150] sm:$0xf]
      %v3343 = vld [vmem:[%s1 + $0x154] sm:$0xf]
      %v3344 = vld [vmem:[%s1 + $0x158] sm:$0xf]
      %v3345 = vld [vmem:[%s1 + $0x15c] sm:$0xf]
      %v3346 = vld [vmem:[%s1 + $0x160] sm:$0xf]
      %v3347 = vld [vmem:[%s1 + $0x164] sm:$0xf]
      %v3348 = vld [vmem:[%s1 + $0x168] sm:$0xf]
      %v3349 = vld [vmem:[%s1 + $0x16c] sm:$0xf]
      %v3350 = vld [vmem:[%s1 + $0x170] sm:$0xf]
      %v3351 = vld [vmem:[%s1 + $0x174] sm:$0xf]
      %v3352 = vld [vmem:[%s1 + $0x178] sm:$0xf]
      %v3353 = vld [vmem:[%s1 + $0x17c] sm:$0xf]
      %v3355 = vshrl.u32 %v3321, 16
      %v3357 = vshll.u32 %v3321, 16
      %v3359 = vrot.slane %v3357, 1
      %v3360 = vor.u32 %v3355, %v3359
      %v3362 = vshll.u32 %v3322, 16
      %v3364 = vrot.slane %v3362, 1
      %v3365 = vsel %vm912, %v3360, %v3364
      %v3366 = vshrl.u32 %v3322, 16
      %v3368 = vor.u32 %v3366, %v3364
      %v3370 = vshll.u32 %v3323, 16
      %v3372 = vrot.slane %v3370, 1
      %v3373 = vsel %vm912, %v3368, %v3372
      %v3374 = vshrl.u32 %v3323, 16
      %v3376 = vor.u32 %v3374, %v3372
      %v3378 = vshll.u32 %v3324, 16
      %v3380 = vrot.slane %v3378, 1
      %v3381 = vsel %vm912, %v3376, %v3380
      %v3382 = vshrl.u32 %v3324, 16
      %v3384 = vor.u32 %v3382, %v3380
      %v3386 = vshll.u32 %v3325, 16
      %v3388 = vrot.slane %v3386, 1
      %v3389 = vsel %vm912, %v3384, %v3388
      %v3390 = vshrl.u32 %v3325, 16
      %v3392 = vor.u32 %v3390, %v3388
      %v3394 = vshll.u32 %v3326, 16
      %v3396 = vrot.slane %v3394, 1
      %v3397 = vsel %vm912, %v3392, %v3396
      %v3398 = vshrl.u32 %v3326, 16
      %v3400 = vor.u32 %v3398, %v3396
      %v3402 = vshll.u32 %v3327, 16
      %v3404 = vrot.slane %v3402, 1
      %v3405 = vsel %vm912, %v3400, %v3404
      %v3406 = vshrl.u32 %v3327, 16
      %v3408 = vor.u32 %v3406, %v3404
      %v3410 = vshll.u32 %v3328, 16
      %v3412 = vrot.slane %v3410, 1
      %v3413 = vsel %vm912, %v3408, %v3412
      %v3414 = vshrl.u32 %v3328, 16
      %v3416 = vor.u32 %v3414, %v3412
      %v3418 = vshll.u32 %v3329, 16
      %v3420 = vrot.slane %v3418, 1
      %v3421 = vsel %vm912, %v3416, %v3420
      %v3422 = vshrl.u32 %v3329, 16
      %v3424 = vor.u32 %v3422, %v3420
      %v3426 = vshll.u32 %v3330, 16
      %v3428 = vrot.slane %v3426, 1
      %v3429 = vsel %vm912, %v3424, %v3428
      %v3430 = vshrl.u32 %v3330, 16
      %v3432 = vor.u32 %v3430, %v3428
      %v3434 = vshll.u32 %v3331, 16
      %v3436 = vrot.slane %v3434, 1
      %v3437 = vsel %vm912, %v3432, %v3436
      %v3438 = vshrl.u32 %v3331, 16
      %v3440 = vor.u32 %v3438, %v3436
      %v3442 = vshll.u32 %v3332, 16
      %v3444 = vrot.slane %v3442, 1
      %v3445 = vsel %vm912, %v3440, %v3444
      %v3446 = vshrl.u32 %v3332, 16
      %v3448 = vor.u32 %v3446, %v3444
      %v3450 = vshll.u32 %v3333, 16
      %v3452 = vrot.slane %v3450, 1
      %v3453 = vsel %vm912, %v3448, %v3452
      %v3454 = vshrl.u32 %v3333, 16
      %v3456 = vor.u32 %v3454, %v3452
      %v3458 = vshll.u32 %v3334, 16
      %v3460 = vrot.slane %v3458, 1
      %v3461 = vsel %vm912, %v3456, %v3460
      %v3462 = vshrl.u32 %v3334, 16
      %v3464 = vor.u32 %v3462, %v3460
      %v3466 = vshll.u32 %v3335, 16
      %v3468 = vrot.slane %v3466, 1
      %v3469 = vsel %vm912, %v3464, %v3468
      %v3470 = vshrl.u32 %v3335, 16
      %v3472 = vor.u32 %v3470, %v3468
      %v3474 = vshll.u32 %v3336, 16
      %v3476 = vrot.slane %v3474, 1
      %v3477 = vsel %vm912, %v3472, %v3476
      %v3478 = vshrl.u32 %v3336, 16
      %v3480 = vor.u32 %v3478, %v3476
      %v3482 = vshll.u32 %v3337, 16
      %v3484 = vrot.slane %v3482, 1
      %v3485 = vsel %vm912, %v3480, %v3484
      %v3518 = vunpack.c.l.b16 %v3338
      %v3519 = vunpack.c.l.b16 %v3339
      %v3520 = vunpack.c.l.b16 %v3340
      %v3521 = vunpack.c.l.b16 %v3341
      %v3522 = vunpack.c.l.b16 %v3342
      %v3523 = vunpack.c.l.b16 %v3343
      %v3524 = vunpack.c.l.b16 %v3344
      %v3525 = vunpack.c.l.b16 %v3345
      %v3526 = vunpack.c.l.b16 %v3346
      %v3527 = vunpack.c.l.b16 %v3347
      %v3528 = vunpack.c.l.b16 %v3348
      %v3529 = vunpack.c.l.b16 %v3349
      %v3530 = vunpack.c.l.b16 %v3350
      %v3531 = vunpack.c.l.b16 %v3351
      %v3532 = vunpack.c.l.b16 %v3352
      %v3533 = vunpack.c.l.b16 %v3353
      %v3534 = vpack.c.b16 %v3519, %v3518
      %v3535 = vpack.c.b16 %v3521, %v3520
      %v3536 = vpack.c.b16 %v3523, %v3522
      %v3537 = vpack.c.b16 %v3525, %v3524
      %v3538 = vpack.c.b16 %v3527, %v3526
      %v3539 = vpack.c.b16 %v3529, %v3528
      %v3540 = vpack.c.b16 %v3531, %v3530
      %v3541 = vpack.c.b16 %v3533, %v3532
      %3550 = vmatprep.subr.bf16.mxu0 0
      %3551 = vmatpush1.bf16.msra.mxu0 %v3534
      %3552 = vmatprep.subr.bf16.mxu0 0
      %3553 = vmatpush1.bf16.msra.mxu0 %v3535
      %3554 = vmatprep.subr.bf16.mxu0 0
      %3555 = vmatpush1.bf16.msra.mxu0 %v3536
      %3556 = vmatprep.subr.bf16.mxu0 0
      %3557 = vmatpush1.bf16.msra.mxu0 %v3537
      %3558 = vmatprep.subr.bf16.mxu0 0
      %3559 = vmatpush1.bf16.msra.mxu0 %v3538
      %3560 = vmatprep.subr.bf16.mxu0 0
      %3561 = vmatpush1.bf16.msra.mxu0 %v3539
      %3562 = vmatprep.subr.bf16.mxu0 0
      %3563 = vmatpush1.bf16.msra.mxu0 %v3540
      %3564 = vmatprep.subr.bf16.mxu0 0
      %3565 = vmatpush1.bf16.msra.mxu0 %v3541
      %3566 = vmatprep.subr.bf16.mxu0 0
      %3567 = vmatpush1.bf16.msra.mxu0 0
      %3568 = vmatprep.subr.bf16.mxu0 0
      %3569 = vmatpush1.bf16.msra.mxu0 0
      %3570 = vmatprep.subr.bf16.mxu0 0
      %3571 = vmatpush1.bf16.msra.mxu0 0
      %3572 = vmatprep.subr.bf16.mxu0 0
      %3573 = vmatpush1.bf16.msra.mxu0 0
      %3574 = vmatprep.subr.bf16.mxu0 0
      %3575 = vmatpush1.bf16.msra.mxu0 0
      %3576 = vmatprep.subr.bf16.mxu0 0
      %3577 = vmatpush1.bf16.msra.mxu0 0
      %3578 = vmatprep.subr.bf16.mxu0 0
      %3579 = vmatpush1.bf16.msra.mxu0 0
      %3580 = vmatprep.subr.bf16.mxu0 0
      %3581 = vmatpush1.bf16.msra.mxu0 0
      %3582 = vmatprep.mubr.bf16.mxu0 0
      %3583 = vmatmul.mubr.bf16.gmra.mrb[0].mxu0 %v3365
      %v3584 = vpop.f32.mrb[0].mxu0
      %v3585 = vadd.f32 0.0, %v3584
      %v3586 = vpop.f32.mrb[0].mxu0
      %v3587 = vpop.f32.mrb[0].mxu0
      %v3588 = vadd.f32 0.0, %v3587
      %v3589 = vpop.f32.mrb[0].mxu0
      %3590 = vmatprep.mubr.bf16.mxu0 0
      %3591 = vmatmul.mubr.bf16.gmra.mrb[0].mxu0 %v3373
      %v3592 = vpop.f32.mrb[0].mxu0
      %v3593 = vadd.f32 0.0, %v3592
      %v3594 = vpop.f32.mrb[0].mxu0
      %v3595 = vpop.f32.mrb[0].mxu0
      %v3596 = vadd.f32 0.0, %v3595
      %v3597 = vpop.f32.mrb[0].mxu0
      %3598 = vmatprep.mubr.bf16.mxu0 0
      %3599 = vmatmul.mubr.bf16.gmra.mrb[0].mxu0 %v3381
      %v3600 = vpop.f32.mrb[0].mxu0
      %v3601 = vadd.f32 0.0, %v3600
      %v3602 = vpop.f32.mrb[0].mxu0
      %v3603 = vpop.f32.mrb[0].mxu0
      %v3604 = vadd.f32 0.0, %v3603
      %v3605 = vpop.f32.mrb[0].mxu0
      %3606 = vmatprep.mubr.bf16.mxu0 0
      %3607 = vmatmul.mubr.bf16.gmra.mrb[0].mxu0 %v3389
      %v3608 = vpop.f32.mrb[0].mxu0
      %v3609 = vadd.f32 0.0, %v3608
      %v3610 = vpop.f32.mrb[0].mxu0
      %v3611 = vpop.f32.mrb[0].mxu0
      %v3612 = vadd.f32 0.0, %v3611
      %v3613 = vpop.f32.mrb[0].mxu0
      %3614 = vmatprep.mubr.bf16.mxu0 0
      %3615 = vmatmul.mubr.bf16.gmra.mrb[0].mxu0 %v3397
      %v3616 = vpop.f32.mrb[0].mxu0
      %v3617 = vadd.f32 0.0, %v3616
      %v3618 = vpop.f32.mrb[0].mxu0
      %v3619 = vpop.f32.mrb[0].mxu0
      %v3620 = vadd.f32 0.0, %v3619
      %v3621 = vpop.f32.mrb[0].mxu0
      %3622 = vmatprep.mubr.bf16.mxu0 0
      %3623 = vmatmul.mubr.bf16.gmra.mrb[0].mxu0 %v3405
      %v3624 = vpop.f32.mrb[0].mxu0
      %v3625 = vadd.f32 0.0, %v3624
      %v3626 = vpop.f32.mrb[0].mxu0
      %v3627 = vpop.f32.mrb[0].mxu0
      %v3628 = vadd.f32 0.0, %v3627
      %v3629 = vpop.f32.mrb[0].mxu0
      %3630 = vmatprep.mubr.bf16.mxu0 0
      %3631 = vmatmul.mubr.bf16.gmra.mrb[0].mxu0 %v3413
      %v3632 = vpop.f32.mrb[0].mxu0
      %v3633 = vadd.f32 0.0, %v3632
      %v3634 = vpop.f32.mrb[0].mxu0
      %v3635 = vpop.f32.mrb[0].mxu0
      %v3636 = vadd.f32 0.0, %v3635
      %v3637 = vpop.f32.mrb[0].mxu0
      %3638 = vmatprep.mubr.bf16.mxu0 0
      %3639 = vmatmul.mubr.bf16.gmra.mrb[0].mxu0 %v3421
      %v3640 = vpop.f32.mrb[0].mxu0
      %v3641 = vadd.f32 0.0, %v3640
      %v3642 = vpop.f32.mrb[0].mxu0
      %v3643 = vpop.f32.mrb[0].mxu0
      %v3644 = vadd.f32 0.0, %v3643
      %v3645 = vpop.f32.mrb[0].mxu0
      %3646 = vmatprep.mubr.bf16.mxu0 0
      %3647 = vmatmul.mubr.bf16.gmra.mrb[0].mxu0 %v3429
      %v3648 = vpop.f32.mrb[0].mxu0
      %v3649 = vadd.f32 0.0, %v3648
      %v3650 = vpop.f32.mrb[0].mxu0
      %v3651 = vpop.f32.mrb[0].mxu0
      %v3652 = vadd.f32 0.0, %v3651
      %v3653 = vpop.f32.mrb[0].mxu0
      %3654 = vmatprep.mubr.bf16.mxu0 0
      %3655 = vmatmul.mubr.bf16.gmra.mrb[0].mxu0 %v3437
      %v3656 = vpop.f32.mrb[0].mxu0
      %v3657 = vadd.f32 0.0, %v3656
      %v3658 = vpop.f32.mrb[0].mxu0
      %v3659 = vpop.f32.mrb[0].mxu0
      %v3660 = vadd.f32 0.0, %v3659
      %v3661 = vpop.f32.mrb[0].mxu0
      %3662 = vmatprep.mubr.bf16.mxu0 0
      %3663 = vmatmul.mubr.bf16.gmra.mrb[0].mxu0 %v3445
      %v3664 = vpop.f32.mrb[0].mxu0
      %v3665 = vadd.f32 0.0, %v3664
      %v3666 = vpop.f32.mrb[0].mxu0
      %v3667 = vpop.f32.mrb[0].mxu0
      %v3668 = vadd.f32 0.0, %v3667
      %v3669 = vpop.f32.mrb[0].mxu0
      %3670 = vmatprep.mubr.bf16.mxu0 0
      %3671 = vmatmul.mubr.bf16.gmra.mrb[0].mxu0 %v3453
      %v3672 = vpop.f32.mrb[0].mxu0
      %v3673 = vadd.f32 0.0, %v3672
      %v3674 = vpop.f32.mrb[0].mxu0
      %v3675 = vpop.f32.mrb[0].mxu0
      %v3676 = vadd.f32 0.0, %v3675
      %v3677 = vpop.f32.mrb[0].mxu0
      %3678 = vmatprep.mubr.bf16.mxu0 0
      %3679 = vmatmul.mubr.bf16.gmra.mrb[0].mxu0 %v3461
      %v3680 = vpop.f32.mrb[0].mxu0
      %v3681 = vadd.f32 0.0, %v3680
      %v3682 = vpop.f32.mrb[0].mxu0
      %v3683 = vpop.f32.mrb[0].mxu0
      %v3684 = vadd.f32 0.0, %v3683
      %v3685 = vpop.f32.mrb[0].mxu0
      %3686 = vmatprep.mubr.bf16.mxu0 0
      %3687 = vmatmul.mubr.bf16.gmra.mrb[0].mxu0 %v3469
      %v3688 = vpop.f32.mrb[0].mxu0
      %v3689 = vadd.f32 0.0, %v3688
      %v3690 = vpop.f32.mrb[0].mxu0
      %v3691 = vpop.f32.mrb[0].mxu0
      %v3692 = vadd.f32 0.0, %v3691
      %v3693 = vpop.f32.mrb[0].mxu0
      %3694 = vmatprep.mubr.bf16.mxu0 0
      %3695 = vmatmul.mubr.bf16.gmra.mrb[0].mxu0 %v3477
      %v3696 = vpop.f32.mrb[0].mxu0
      %v3697 = vadd.f32 0.0, %v3696
      %v3698 = vpop.f32.mrb[0].mxu0
      %v3699 = vpop.f32.mrb[0].mxu0
      %v3700 = vadd.f32 0.0, %v3699
      %v3701 = vpop.f32.mrb[0].mxu0
      %3702 = vmatprep.mubr.bf16.mxu0 0
      %3703 = vmatmul.mubr.bf16.gmra.mrb[0].mxu0 %v3485
      %v3704 = vpop.f32.mrb[0].mxu0
      %v3705 = vadd.f32 0.0, %v3704
      %v3706 = vpop.f32.mrb[0].mxu0
      %v3707 = vpop.f32.mrb[0].mxu0
      %v3708 = vadd.f32 0.0, %v3707
      %v3709 = vpop.f32.mrb[0].mxu0
      %3710 = vdwg.mxu0
      %v3711 = vld [vmem:[#allocation3] sm:$0xff]
      %v3712 = vld [vmem:[#allocation3 + $0x8] sm:$0xff]
      %v3713 = vld [vmem:[#allocation3 + $0x10] sm:$0xff]
      %v3714 = vld [vmem:[#allocation3 + $0x18] sm:$0xff]
      %v3715 = vld [vmem:[#allocation3 + $0x20] sm:$0xff]
      %v3716 = vld [vmem:[#allocation3 + $0x28] sm:$0xff]
      %v3717 = vld [vmem:[#allocation3 + $0x30] sm:$0xff]
      %v3718 = vld [vmem:[#allocation3 + $0x38] sm:$0xff]
      %v3719 = vld [vmem:[#allocation3 + $0x40] sm:$0xff]
      %v3720 = vld [vmem:[#allocation3 + $0x48] sm:$0xff]
      %v3721 = vld [vmem:[#allocation3 + $0x50] sm:$0xff]
      %v3722 = vld [vmem:[#allocation3 + $0x58] sm:$0xff]
      %v3723 = vld [vmem:[#allocation3 + $0x60] sm:$0xff]
      %v3724 = vld [vmem:[#allocation3 + $0x68] sm:$0xff]
      %v3725 = vld [vmem:[#allocation3 + $0x70] sm:$0xff]
      %v3726 = vld [vmem:[#allocation3 + $0x78] sm:$0xff]
      %v3727 = vld [vmem:[#allocation3 + $0x80] sm:$0xff]
      %v3728 = vld [vmem:[#allocation3 + $0x88] sm:$0xff]
      %v3729 = vld [vmem:[#allocation3 + $0x90] sm:$0xff]
      %v3730 = vld [vmem:[#allocation3 + $0x98] sm:$0xff]
      %v3731 = vld [vmem:[#allocation3 + $0xa0] sm:$0xff]
      %v3732 = vld [vmem:[#allocation3 + $0xa8] sm:$0xff]
      %v3733 = vld [vmem:[#allocation3 + $0xb0] sm:$0xff]
      %v3734 = vld [vmem:[#allocation3 + $0xb8] sm:$0xff]
      %v3735 = vld [vmem:[#allocation3 + $0xc0] sm:$0xff]
      %v3736 = vld [vmem:[#allocation3 + $0xc8] sm:$0xff]
      %v3737 = vld [vmem:[#allocation3 + $0xd0] sm:$0xff]
      %v3738 = vld [vmem:[#allocation3 + $0xd8] sm:$0xff]
      %v3739 = vld [vmem:[#allocation3 + $0xe0] sm:$0xff]
      %v3740 = vld [vmem:[#allocation3 + $0xe8] sm:$0xff]
      %v3741 = vld [vmem:[#allocation3 + $0xf0] sm:$0xff]
      %v3742 = vld [vmem:[#allocation3 + $0xf8] sm:$0xff]
      %v3743 = vadd.f32 %v3711, %v3585
      %v3744 = vadd.f32 %v3712, %v3588
      %v3745 = vadd.f32 %v3713, %v3593
      %v3746 = vadd.f32 %v3714, %v3596
      %v3747 = vadd.f32 %v3715, %v3601
      %v3748 = vadd.f32 %v3716, %v3604
      %v3749 = vadd.f32 %v3717, %v3609
      %v3750 = vadd.f32 %v3718, %v3612
      %v3751 = vadd.f32 %v3719, %v3617
      %v3752 = vadd.f32 %v3720, %v3620
      %v3753 = vadd.f32 %v3721, %v3625
      %v3754 = vadd.f32 %v3722, %v3628
      %v3755 = vadd.f32 %v3723, %v3633
      %v3756 = vadd.f32 %v3724, %v3636
      %v3757 = vadd.f32 %v3725, %v3641
      %v3758 = vadd.f32 %v3726, %v3644
      %v3759 = vadd.f32 %v3727, %v3649
      %v3760 = vadd.f32 %v3728, %v3652
      %v3761 = vadd.f32 %v3729, %v3657
      %v3762 = vadd.f32 %v3730, %v3660
      %v3763 = vadd.f32 %v3731, %v3665
      %v3764 = vadd.f32 %v3732, %v3668
      %v3765 = vadd.f32 %v3733, %v3673
      %v3766 = vadd.f32 %v3734, %v3676
      %v3767 = vadd.f32 %v3735, %v3681
      %v3768 = vadd.f32 %v3736, %v3684
      %v3769 = vadd.f32 %v3737, %v3689
      %v3770 = vadd.f32 %v3738, %v3692
      %v3771 = vadd.f32 %v3739, %v3697
      %v3772 = vadd.f32 %v3740, %v3700
      %v3773 = vadd.f32 %v3741, %v3705
      %v3774 = vadd.f32 %v3742, %v3708
      %3775 = vst [vmem:[#allocation3] sm:$0xff] %v3743
      %3776 = vst [vmem:[#allocation3 + $0x8] sm:$0xff] %v3744
      %3777 = vst [vmem:[#allocation3 + $0x10] sm:$0xff] %v3745
      %3778 = vst [vmem:[#allocation3 + $0x18] sm:$0xff] %v3746
      %3779 = vst [vmem:[#allocation3 + $0x20] sm:$0xff] %v3747
      %3780 = vst [vmem:[#allocation3 + $0x28] sm:$0xff] %v3748
      %3781 = vst [vmem:[#allocation3 + $0x30] sm:$0xff] %v3749
      %3782 = vst [vmem:[#allocation3 + $0x38] sm:$0xff] %v3750
      %3783 = vst [vmem:[#allocation3 + $0x40] sm:$0xff] %v3751
      %3784 = vst [vmem:[#allocation3 + $0x48] sm:$0xff] %v3752
      %3785 = vst [vmem:[#allocation3 + $0x50] sm:$0xff] %v3753
      %3786 = vst [vmem:[#allocation3 + $0x58] sm:$0xff] %v3754
      %3787 = vst [vmem:[#allocation3 + $0x60] sm:$0xff] %v3755
      %3788 = vst [vmem:[#allocation3 + $0x68] sm:$0xff] %v3756
      %3789 = vst [vmem:[#allocation3 + $0x70] sm:$0xff] %v3757
      %3790 = vst [vmem:[#allocation3 + $0x78] sm:$0xff] %v3758
      %3791 = vst [vmem:[#allocation3 + $0x80] sm:$0xff] %v3759
      %3792 = vst [vmem:[#allocation3 + $0x88] sm:$0xff] %v3760
      %3793 = vst [vmem:[#allocation3 + $0x90] sm:$0xff] %v3761
      %3794 = vst [vmem:[#allocation3 + $0x98] sm:$0xff] %v3762
      %3795 = vst [vmem:[#allocation3 + $0xa0] sm:$0xff] %v3763
      %3796 = vst [vmem:[#allocation3 + $0xa8] sm:$0xff] %v3764
      %3797 = vst [vmem:[#allocation3 + $0xb0] sm:$0xff] %v3765
      %3798 = vst [vmem:[#allocation3 + $0xb8] sm:$0xff] %v3766
      %3799 = vst [vmem:[#allocation3 + $0xc0] sm:$0xff] %v3767
      %3800 = vst [vmem:[#allocation3 + $0xc8] sm:$0xff] %v3768
      %3801 = vst [vmem:[#allocation3 + $0xd0] sm:$0xff] %v3769
      %3802 = vst [vmem:[#allocation3 + $0xd8] sm:$0xff] %v3770
      %3803 = vst [vmem:[#allocation3 + $0xe0] sm:$0xff] %v3771
      %3804 = vst [vmem:[#allocation3 + $0xe8] sm:$0xff] %v3772
      %3805 = vst [vmem:[#allocation3 + $0xf0] sm:$0xff] %v3773
      %3806 = vst [vmem:[#allocation3 + $0xf8] sm:$0xff] %v3774
      %v3807 = vld [vmem:[#allocation2 + $0x10] sm:$0x80]
      %v3808 = vld [vmem:[#allocation2 + $0x18] sm:$0xff]
      %v3809 = vld [vmem:[#allocation2 + $0x20] sm:$0xff]
      %v3810 = vld [vmem:[#allocation2 + $0x28] sm:$0xff]
      %v3811 = vld [vmem:[#allocation2 + $0x30] sm:$0xff]
      %v3812 = vld [vmem:[#allocation2 + $0x38] sm:$0xff]
      %v3813 = vld [vmem:[#allocation2 + $0x40] sm:$0xff]
      %v3814 = vld [vmem:[#allocation2 + $0x48] sm:$0xff]
      %v3815 = vld [vmem:[#allocation2 + $0x50] sm:$0xff]
      %v3816 = vld [vmem:[#allocation2 + $0x58] sm:$0xff]
      %v3817 = vld [vmem:[#allocation2 + $0x60] sm:$0xff]
      %v3818 = vld [vmem:[#allocation2 + $0x68] sm:$0xff]
      %v3819 = vld [vmem:[#allocation2 + $0x70] sm:$0xff]
      %v3820 = vld [vmem:[#allocation2 + $0x78] sm:$0xff]
      %v3821 = vld [vmem:[#allocation2 + $0x80] sm:$0xff]
      %v3822 = vld [vmem:[#allocation2 + $0x88] sm:$0xff]
      %v3823 = vld [vmem:[#allocation2 + $0x90] sm:$0xff]
      %v3824 = vmul.bf16 %v3807, %v916
      %v3825 = vmul.bf16 %v3808, %v924
      %v3826 = vmul.bf16 %v3809, %v932
      %v3827 = vmul.bf16 %v3810, %v940
      %v3828 = vmul.bf16 %v3811, %v948
      %v3829 = vmul.bf16 %v3812, %v956
      %v3830 = vmul.bf16 %v3813, %v964
      %v3831 = vmul.bf16 %v3814, %v972
      %v3832 = vmul.bf16 %v3815, %v980
      %v3833 = vmul.bf16 %v3816, %v988
      %v3834 = vmul.bf16 %v3817, %v996
      %v3835 = vmul.bf16 %v3818, %v1004
      %v3836 = vmul.bf16 %v3819, %v1012
      %v3837 = vmul.bf16 %v3820, %v1020
      %v3838 = vmul.bf16 %v3821, %v1028
      %v3839 = vmul.bf16 %v3822, %v1036
      %v3840 = vmul.bf16 %v3823, %v1039
      %v3841 = vld [vmem:[%s1 + $0x180] sm:$0xf]
      %v3842 = vld [vmem:[%s1 + $0x184] sm:$0xf]
      %v3843 = vld [vmem:[%s1 + $0x188] sm:$0xf]
      %v3844 = vld [vmem:[%s1 + $0x18c] sm:$0xf]
      %v3845 = vld [vmem:[%s1 + $0x190] sm:$0xf]
      %v3846 = vld [vmem:[%s1 + $0x194] sm:$0xf]
      %v3847 = vld [vmem:[%s1 + $0x198] sm:$0xf]
      %v3848 = vld [vmem:[%s1 + $0x19c] sm:$0xf]
      %v3849 = vld [vmem:[%s1 + $0x1a0] sm:$0xf]
      %v3850 = vld [vmem:[%s1 + $0x1a4] sm:$0xf]
      %v3851 = vld [vmem:[%s1 + $0x1a8] sm:$0xf]
      %v3852 = vld [vmem:[%s1 + $0x1ac] sm:$0xf]
      %v3853 = vld [vmem:[%s1 + $0x1b0] sm:$0xf]
      %v3854 = vld [vmem:[%s1 + $0x1b4] sm:$0xf]
      %v3855 = vld [vmem:[%s1 + $0x1b8] sm:$0xf]
      %v3856 = vld [vmem:[%s1 + $0x1bc] sm:$0xf]
      %v3858 = vshrl.u32 %v3824, 16
      %v3860 = vrot.slane %v3858, 7
      %v3862 = vshrl.u32 %v3825, 16
      %v3864 = vrot.slane %v3862, 7
      %v3865 = vshll.u32 %v3825, 16
      %v3867 = vor.u32 %v3864, %v3865
      %v3868 = vsel %vm1090, %v3860, %v3867
      %v3870 = vshrl.u32 %v3826, 16
      %v3872 = vrot.slane %v3870, 7
      %v3873 = vshll.u32 %v3826, 16
      %v3875 = vor.u32 %v3872, %v3873
      %v3876 = vsel %vm1090, %v3864, %v3875
      %v3878 = vshrl.u32 %v3827, 16
      %v3880 = vrot.slane %v3878, 7
      %v3881 = vshll.u32 %v3827, 16
      %v3883 = vor.u32 %v3880, %v3881
      %v3884 = vsel %vm1090, %v3872, %v3883
      %v3886 = vshrl.u32 %v3828, 16
      %v3888 = vrot.slane %v3886, 7
      %v3889 = vshll.u32 %v3828, 16
      %v3891 = vor.u32 %v3888, %v3889
      %v3892 = vsel %vm1090, %v3880, %v3891
      %v3894 = vshrl.u32 %v3829, 16
      %v3896 = vrot.slane %v3894, 7
      %v3897 = vshll.u32 %v3829, 16
      %v3899 = vor.u32 %v3896, %v3897
      %v3900 = vsel %vm1090, %v3888, %v3899
      %v3902 = vshrl.u32 %v3830, 16
      %v3904 = vrot.slane %v3902, 7
      %v3905 = vshll.u32 %v3830, 16
      %v3907 = vor.u32 %v3904, %v3905
      %v3908 = vsel %vm1090, %v3896, %v3907
      %v3910 = vshrl.u32 %v3831, 16
      %v3912 = vrot.slane %v3910, 7
      %v3913 = vshll.u32 %v3831, 16
      %v3915 = vor.u32 %v3912, %v3913
      %v3916 = vsel %vm1090, %v3904, %v3915
      %v3918 = vshrl.u32 %v3832, 16
      %v3920 = vrot.slane %v3918, 7
      %v3921 = vshll.u32 %v3832, 16
      %v3923 = vor.u32 %v3920, %v3921
      %v3924 = vsel %vm1090, %v3912, %v3923
      %v3926 = vshrl.u32 %v3833, 16
      %v3928 = vrot.slane %v3926, 7
      %v3929 = vshll.u32 %v3833, 16
      %v3931 = vor.u32 %v3928, %v3929
      %v3932 = vsel %vm1090, %v3920, %v3931
      %v3934 = vshrl.u32 %v3834, 16
      %v3936 = vrot.slane %v3934, 7
      %v3937 = vshll.u32 %v3834, 16
      %v3939 = vor.u32 %v3936, %v3937
      %v3940 = vsel %vm1090, %v3928, %v3939
      %v3942 = vshrl.u32 %v3835, 16
      %v3944 = vrot.slane %v3942, 7
      %v3945 = vshll.u32 %v3835, 16
      %v3947 = vor.u32 %v3944, %v3945
      %v3948 = vsel %vm1090, %v3936, %v3947
      %v3950 = vshrl.u32 %v3836, 16
      %v3952 = vrot.slane %v3950, 7
      %v3953 = vshll.u32 %v3836, 16
      %v3955 = vor.u32 %v3952, %v3953
      %v3956 = vsel %vm1090, %v3944, %v3955
      %v3958 = vshrl.u32 %v3837, 16
      %v3960 = vrot.slane %v3958, 7
      %v3961 = vshll.u32 %v3837, 16
      %v3963 = vor.u32 %v3960, %v3961
      %v3964 = vsel %vm1090, %v3952, %v3963
      %v3966 = vshrl.u32 %v3838, 16
      %v3968 = vrot.slane %v3966, 7
      %v3969 = vshll.u32 %v3838, 16
      %v3971 = vor.u32 %v3968, %v3969
      %v3972 = vsel %vm1090, %v3960, %v3971
      %v3974 = vshrl.u32 %v3839, 16
      %v3976 = vrot.slane %v3974, 7
      %v3977 = vshll.u32 %v3839, 16
      %v3979 = vor.u32 %v3976, %v3977
      %v3980 = vsel %vm1090, %v3968, %v3979
      %v3982 = vshrl.u32 %v3840, 16
      %v3984 = vrot.slane %v3982, 7
      %v3985 = vshll.u32 %v3840, 16
      %v3987 = vor.u32 %v3984, %v3985
      %v3988 = vsel %vm1090, %v3976, %v3987
      %v4021 = vunpack.c.l.b16 %v3841
      %v4022 = vunpack.c.l.b16 %v3842
      %v4023 = vunpack.c.l.b16 %v3843
      %v4024 = vunpack.c.l.b16 %v3844
      %v4025 = vunpack.c.l.b16 %v3845
      %v4026 = vunpack.c.l.b16 %v3846
      %v4027 = vunpack.c.l.b16 %v3847
      %v4028 = vunpack.c.l.b16 %v3848
      %v4029 = vunpack.c.l.b16 %v3849
      %v4030 = vunpack.c.l.b16 %v3850
      %v4031 = vunpack.c.l.b16 %v3851
      %v4032 = vunpack.c.l.b16 %v3852
      %v4033 = vunpack.c.l.b16 %v3853
      %v4034 = vunpack.c.l.b16 %v3854
      %v4035 = vunpack.c.l.b16 %v3855
      %v4036 = vunpack.c.l.b16 %v3856
      %v4037 = vpack.c.b16 %v4022, %v4021
      %v4038 = vpack.c.b16 %v4024, %v4023
      %v4039 = vpack.c.b16 %v4026, %v4025
      %v4040 = vpack.c.b16 %v4028, %v4027
      %v4041 = vpack.c.b16 %v4030, %v4029
      %v4042 = vpack.c.b16 %v4032, %v4031
      %v4043 = vpack.c.b16 %v4034, %v4033
      %v4044 = vpack.c.b16 %v4036, %v4035
      %4053 = vmatprep.subr.bf16.mxu0 0
      %4054 = vmatpush1.bf16.msra.mxu0 %v4037
      %4055 = vmatprep.subr.bf16.mxu0 0
      %4056 = vmatpush1.bf16.msra.mxu0 %v4038
      %4057 = vmatprep.subr.bf16.mxu0 0
      %4058 = vmatpush1.bf16.msra.mxu0 %v4039
      %4059 = vmatprep.subr.bf16.mxu0 0
      %4060 = vmatpush1.bf16.msra.mxu0 %v4040
      %4061 = vmatprep.subr.bf16.mxu0 0
      %4062 = vmatpush1.bf16.msra.mxu0 %v4041
      %4063 = vmatprep.subr.bf16.mxu0 0
      %4064 = vmatpush1.bf16.msra.mxu0 %v4042
      %4065 = vmatprep.subr.bf16.mxu0 0
      %4066 = vmatpush1.bf16.msra.mxu0 %v4043
      %4067 = vmatprep.subr.bf16.mxu0 0
      %4068 = vmatpush1.bf16.msra.mxu0 %v4044
      %4069 = vmatprep.subr.bf16.mxu0 0
      %4070 = vmatpush1.bf16.msra.mxu0 0
      %4071 = vmatprep.subr.bf16.mxu0 0
      %4072 = vmatpush1.bf16.msra.mxu0 0
      %4073 = vmatprep.subr.bf16.mxu0 0
      %4074 = vmatpush1.bf16.msra.mxu0 0
      %4075 = vmatprep.subr.bf16.mxu0 0
      %4076 = vmatpush1.bf16.msra.mxu0 0
      %4077 = vmatprep.subr.bf16.mxu0 0
      %4078 = vmatpush1.bf16.msra.mxu0 0
      %4079 = vmatprep.subr.bf16.mxu0 0
      %4080 = vmatpush1.bf16.msra.mxu0 0
      %4081 = vmatprep.subr.bf16.mxu0 0
      %4082 = vmatpush1.bf16.msra.mxu0 0
      %4083 = vmatprep.subr.bf16.mxu0 0
      %4084 = vmatpush1.bf16.msra.mxu0 0
      %4085 = vmatprep.mubr.bf16.mxu0 0
      %4086 = vmatmul.mubr.bf16.gmra.mrb[0].mxu0 %v3868
      %v4087 = vpop.f32.mrb[0].mxu0
      %v4088 = vadd.f32 0.0, %v4087
      %v4089 = vpop.f32.mrb[0].mxu0
      %v4090 = vpop.f32.mrb[0].mxu0
      %v4091 = vadd.f32 0.0, %v4090
      %v4092 = vpop.f32.mrb[0].mxu0
      %4093 = vmatprep.mubr.bf16.mxu0 0
      %4094 = vmatmul.mubr.bf16.gmra.mrb[0].mxu0 %v3876
      %v4095 = vpop.f32.mrb[0].mxu0
      %v4096 = vadd.f32 0.0, %v4095
      %v4097 = vpop.f32.mrb[0].mxu0
      %v4098 = vpop.f32.mrb[0].mxu0
      %v4099 = vadd.f32 0.0, %v4098
      %v4100 = vpop.f32.mrb[0].mxu0
      %4101 = vmatprep.mubr.bf16.mxu0 0
      %4102 = vmatmul.mubr.bf16.gmra.mrb[0].mxu0 %v3884
      %v4103 = vpop.f32.mrb[0].mxu0
      %v4104 = vadd.f32 0.0, %v4103
      %v4105 = vpop.f32.mrb[0].mxu0
      %v4106 = vpop.f32.mrb[0].mxu0
      %v4107 = vadd.f32 0.0, %v4106
      %v4108 = vpop.f32.mrb[0].mxu0
      %4109 = vmatprep.mubr.bf16.mxu0 0
      %4110 = vmatmul.mubr.bf16.gmra.mrb[0].mxu0 %v3892
      %v4111 = vpop.f32.mrb[0].mxu0
      %v4112 = vadd.f32 0.0, %v4111
      %v4113 = vpop.f32.mrb[0].mxu0
      %v4114 = vpop.f32.mrb[0].mxu0
      %v4115 = vadd.f32 0.0, %v4114
      %v4116 = vpop.f32.mrb[0].mxu0
      %4117 = vmatprep.mubr.bf16.mxu0 0
      %4118 = vmatmul.mubr.bf16.gmra.mrb[0].mxu0 %v3900
      %v4119 = vpop.f32.mrb[0].mxu0
      %v4120 = vadd.f32 0.0, %v4119
      %v4121 = vpop.f32.mrb[0].mxu0
      %v4122 = vpop.f32.mrb[0].mxu0
      %v4123 = vadd.f32 0.0, %v4122
      %v4124 = vpop.f32.mrb[0].mxu0
      %4125 = vmatprep.mubr.bf16.mxu0 0
      %4126 = vmatmul.mubr.bf16.gmra.mrb[0].mxu0 %v3908
      %v4127 = vpop.f32.mrb[0].mxu0
      %v4128 = vadd.f32 0.0, %v4127
      %v4129 = vpop.f32.mrb[0].mxu0
      %v4130 = vpop.f32.mrb[0].mxu0
      %v4131 = vadd.f32 0.0, %v4130
      %v4132 = vpop.f32.mrb[0].mxu0
      %4133 = vmatprep.mubr.bf16.mxu0 0
      %4134 = vmatmul.mubr.bf16.gmra.mrb[0].mxu0 %v3916
      %v4135 = vpop.f32.mrb[0].mxu0
      %v4136 = vadd.f32 0.0, %v4135
      %v4137 = vpop.f32.mrb[0].mxu0
      %v4138 = vpop.f32.mrb[0].mxu0
      %v4139 = vadd.f32 0.0, %v4138
      %v4140 = vpop.f32.mrb[0].mxu0
      %4141 = vmatprep.mubr.bf16.mxu0 0
      %4142 = vmatmul.mubr.bf16.gmra.mrb[0].mxu0 %v3924
      %v4143 = vpop.f32.mrb[0].mxu0
      %v4144 = vadd.f32 0.0, %v4143
      %v4145 = vpop.f32.mrb[0].mxu0
      %v4146 = vpop.f32.mrb[0].mxu0
      %v4147 = vadd.f32 0.0, %v4146
      %v4148 = vpop.f32.mrb[0].mxu0
      %4149 = vmatprep.mubr.bf16.mxu0 0
      %4150 = vmatmul.mubr.bf16.gmra.mrb[0].mxu0 %v3932
      %v4151 = vpop.f32.mrb[0].mxu0
      %v4152 = vadd.f32 0.0, %v4151
      %v4153 = vpop.f32.mrb[0].mxu0
      %v4154 = vpop.f32.mrb[0].mxu0
      %v4155 = vadd.f32 0.0, %v4154
      %v4156 = vpop.f32.mrb[0].mxu0
      %4157 = vmatprep.mubr.bf16.mxu0 0
      %4158 = vmatmul.mubr.bf16.gmra.mrb[0].mxu0 %v3940
      %v4159 = vpop.f32.mrb[0].mxu0
      %v4160 = vadd.f32 0.0, %v4159
      %v4161 = vpop.f32.mrb[0].mxu0
      %v4162 = vpop.f32.mrb[0].mxu0
      %v4163 = vadd.f32 0.0, %v4162
      %v4164 = vpop.f32.mrb[0].mxu0
      %4165 = vmatprep.mubr.bf16.mxu0 0
      %4166 = vmatmul.mubr.bf16.gmra.mrb[0].mxu0 %v3948
      %v4167 = vpop.f32.mrb[0].mxu0
      %v4168 = vadd.f32 0.0, %v4167
      %v4169 = vpop.f32.mrb[0].mxu0
      %v4170 = vpop.f32.mrb[0].mxu0
      %v4171 = vadd.f32 0.0, %v4170
      %v4172 = vpop.f32.mrb[0].mxu0
      %4173 = vmatprep.mubr.bf16.mxu0 0
      %4174 = vmatmul.mubr.bf16.gmra.mrb[0].mxu0 %v3956
      %v4175 = vpop.f32.mrb[0].mxu0
      %v4176 = vadd.f32 0.0, %v4175
      %v4177 = vpop.f32.mrb[0].mxu0
      %v4178 = vpop.f32.mrb[0].mxu0
      %v4179 = vadd.f32 0.0, %v4178
      %v4180 = vpop.f32.mrb[0].mxu0
      %4181 = vmatprep.mubr.bf16.mxu0 0
      %4182 = vmatmul.mubr.bf16.gmra.mrb[0].mxu0 %v3964
      %v4183 = vpop.f32.mrb[0].mxu0
      %v4184 = vadd.f32 0.0, %v4183
      %v4185 = vpop.f32.mrb[0].mxu0
      %v4186 = vpop.f32.mrb[0].mxu0
      %v4187 = vadd.f32 0.0, %v4186
      %v4188 = vpop.f32.mrb[0].mxu0
      %4189 = vmatprep.mubr.bf16.mxu0 0
      %4190 = vmatmul.mubr.bf16.gmra.mrb[0].mxu0 %v3972
      %v4191 = vpop.f32.mrb[0].mxu0
      %v4192 = vadd.f32 0.0, %v4191
      %v4193 = vpop.f32.mrb[0].mxu0
      %v4194 = vpop.f32.mrb[0].mxu0
      %v4195 = vadd.f32 0.0, %v4194
      %v4196 = vpop.f32.mrb[0].mxu0
      %4197 = vmatprep.mubr.bf16.mxu0 0
      %4198 = vmatmul.mubr.bf16.gmra.mrb[0].mxu0 %v3980
      %v4199 = vpop.f32.mrb[0].mxu0
      %v4200 = vadd.f32 0.0, %v4199
      %v4201 = vpop.f32.mrb[0].mxu0
      %v4202 = vpop.f32.mrb[0].mxu0
      %v4203 = vadd.f32 0.0, %v4202
      %v4204 = vpop.f32.mrb[0].mxu0
      %4205 = vmatprep.mubr.bf16.mxu0 0
      %4206 = vmatmul.mubr.bf16.gmra.mrb[0].mxu0 %v3988
      %v4207 = vpop.f32.mrb[0].mxu0
      %v4208 = vadd.f32 0.0, %v4207
      %v4209 = vpop.f32.mrb[0].mxu0
      %v4210 = vpop.f32.mrb[0].mxu0
      %v4211 = vadd.f32 0.0, %v4210
      %v4212 = vpop.f32.mrb[0].mxu0
      %4213 = vdwg.mxu0
      %v4214 = vld [vmem:[#allocation3] sm:$0xff]
      %v4215 = vld [vmem:[#allocation3 + $0x8] sm:$0xff]
      %v4216 = vld [vmem:[#allocation3 + $0x10] sm:$0xff]
      %v4217 = vld [vmem:[#allocation3 + $0x18] sm:$0xff]
      %v4218 = vld [vmem:[#allocation3 + $0x20] sm:$0xff]
      %v4219 = vld [vmem:[#allocation3 + $0x28] sm:$0xff]
      %v4220 = vld [vmem:[#allocation3 + $0x30] sm:$0xff]
      %v4221 = vld [vmem:[#allocation3 + $0x38] sm:$0xff]
      %v4222 = vld [vmem:[#allocation3 + $0x40] sm:$0xff]
      %v4223 = vld [vmem:[#allocation3 + $0x48] sm:$0xff]
      %v4224 = vld [vmem:[#allocation3 + $0x50] sm:$0xff]
      %v4225 = vld [vmem:[#allocation3 + $0x58] sm:$0xff]
      %v4226 = vld [vmem:[#allocation3 + $0x60] sm:$0xff]
      %v4227 = vld [vmem:[#allocation3 + $0x68] sm:$0xff]
      %v4228 = vld [vmem:[#allocation3 + $0x70] sm:$0xff]
      %v4229 = vld [vmem:[#allocation3 + $0x78] sm:$0xff]
      %v4230 = vld [vmem:[#allocation3 + $0x80] sm:$0xff]
      %v4231 = vld [vmem:[#allocation3 + $0x88] sm:$0xff]
      %v4232 = vld [vmem:[#allocation3 + $0x90] sm:$0xff]
      %v4233 = vld [vmem:[#allocation3 + $0x98] sm:$0xff]
      %v4234 = vld [vmem:[#allocation3 + $0xa0] sm:$0xff]
      %v4235 = vld [vmem:[#allocation3 + $0xa8] sm:$0xff]
      %v4236 = vld [vmem:[#allocation3 + $0xb0] sm:$0xff]
      %v4237 = vld [vmem:[#allocation3 + $0xb8] sm:$0xff]
      %v4238 = vld [vmem:[#allocation3 + $0xc0] sm:$0xff]
      %v4239 = vld [vmem:[#allocation3 + $0xc8] sm:$0xff]
      %v4240 = vld [vmem:[#allocation3 + $0xd0] sm:$0xff]
      %v4241 = vld [vmem:[#allocation3 + $0xd8] sm:$0xff]
      %v4242 = vld [vmem:[#allocation3 + $0xe0] sm:$0xff]
      %v4243 = vld [vmem:[#allocation3 + $0xe8] sm:$0xff]
      %v4244 = vld [vmem:[#allocation3 + $0xf0] sm:$0xff]
      %v4245 = vld [vmem:[#allocation3 + $0xf8] sm:$0xff]
      %v4246 = vadd.f32 %v4214, %v4088
      %v4247 = vadd.f32 %v4215, %v4091
      %v4248 = vadd.f32 %v4216, %v4096
      %v4249 = vadd.f32 %v4217, %v4099
      %v4250 = vadd.f32 %v4218, %v4104
      %v4251 = vadd.f32 %v4219, %v4107
      %v4252 = vadd.f32 %v4220, %v4112
      %v4253 = vadd.f32 %v4221, %v4115
      %v4254 = vadd.f32 %v4222, %v4120
      %v4255 = vadd.f32 %v4223, %v4123
      %v4256 = vadd.f32 %v4224, %v4128
      %v4257 = vadd.f32 %v4225, %v4131
      %v4258 = vadd.f32 %v4226, %v4136
      %v4259 = vadd.f32 %v4227, %v4139
      %v4260 = vadd.f32 %v4228, %v4144
      %v4261 = vadd.f32 %v4229, %v4147
      %v4262 = vadd.f32 %v4230, %v4152
      %v4263 = vadd.f32 %v4231, %v4155
      %v4264 = vadd.f32 %v4232, %v4160
      %v4265 = vadd.f32 %v4233, %v4163
      %v4266 = vadd.f32 %v4234, %v4168
      %v4267 = vadd.f32 %v4235, %v4171
      %v4268 = vadd.f32 %v4236, %v4176
      %v4269 = vadd.f32 %v4237, %v4179
      %v4270 = vadd.f32 %v4238, %v4184
      %v4271 = vadd.f32 %v4239, %v4187
      %v4272 = vadd.f32 %v4240, %v4192
      %v4273 = vadd.f32 %v4241, %v4195
      %v4274 = vadd.f32 %v4242, %v4200
      %v4275 = vadd.f32 %v4243, %v4203
      %v4276 = vadd.f32 %v4244, %v4208
      %v4277 = vadd.f32 %v4245, %v4211
      %4278 = vst [vmem:[#allocation3] sm:$0xff] %v4246
      %4279 = vst [vmem:[#allocation3 + $0x8] sm:$0xff] %v4247
      %4280 = vst [vmem:[#allocation3 + $0x10] sm:$0xff] %v4248
      %4281 = vst [vmem:[#allocation3 + $0x18] sm:$0xff] %v4249
      %4282 = vst [vmem:[#allocation3 + $0x20] sm:$0xff] %v4250
      %4283 = vst [vmem:[#allocation3 + $0x28] sm:$0xff] %v4251
      %4284 = vst [vmem:[#allocation3 + $0x30] sm:$0xff] %v4252
      %4285 = vst [vmem:[#allocation3 + $0x38] sm:$0xff] %v4253
      %4286 = vst [vmem:[#allocation3 + $0x40] sm:$0xff] %v4254
      %4287 = vst [vmem:[#allocation3 + $0x48] sm:$0xff] %v4255
      %4288 = vst [vmem:[#allocation3 + $0x50] sm:$0xff] %v4256
      %4289 = vst [vmem:[#allocation3 + $0x58] sm:$0xff] %v4257
      %4290 = vst [vmem:[#allocation3 + $0x60] sm:$0xff] %v4258
      %4291 = vst [vmem:[#allocation3 + $0x68] sm:$0xff] %v4259
      %4292 = vst [vmem:[#allocation3 + $0x70] sm:$0xff] %v4260
      %4293 = vst [vmem:[#allocation3 + $0x78] sm:$0xff] %v4261
      %4294 = vst [vmem:[#allocation3 + $0x80] sm:$0xff] %v4262
      %4295 = vst [vmem:[#allocation3 + $0x88] sm:$0xff] %v4263
      %4296 = vst [vmem:[#allocation3 + $0x90] sm:$0xff] %v4264
      %4297 = vst [vmem:[#allocation3 + $0x98] sm:$0xff] %v4265
      %4298 = vst [vmem:[#allocation3 + $0xa0] sm:$0xff] %v4266
      %4299 = vst [vmem:[#allocation3 + $0xa8] sm:$0xff] %v4267
      %4300 = vst [vmem:[#allocation3 + $0xb0] sm:$0xff] %v4268
      %4301 = vst [vmem:[#allocation3 + $0xb8] sm:$0xff] %v4269
      %4302 = vst [vmem:[#allocation3 + $0xc0] sm:$0xff] %v4270
      %4303 = vst [vmem:[#allocation3 + $0xc8] sm:$0xff] %v4271
      %4304 = vst [vmem:[#allocation3 + $0xd0] sm:$0xff] %v4272
      %4305 = vst [vmem:[#allocation3 + $0xd8] sm:$0xff] %v4273
      %4306 = vst [vmem:[#allocation3 + $0xe0] sm:$0xff] %v4274
      %4307 = vst [vmem:[#allocation3 + $0xe8] sm:$0xff] %v4275
      %4308 = vst [vmem:[#allocation3 + $0xf0] sm:$0xff] %v4276
      %4309 = vst [vmem:[#allocation3 + $0xf8] sm:$0xff] %v4277
      %v4310 = vld [vmem:[#allocation2 + $0x18] sm:$0xff]
      %v4311 = vld [vmem:[#allocation2 + $0x20] sm:$0xff]
      %v4312 = vld [vmem:[#allocation2 + $0x28] sm:$0xff]
      %v4313 = vld [vmem:[#allocation2 + $0x30] sm:$0xff]
      %v4314 = vld [vmem:[#allocation2 + $0x38] sm:$0xff]
      %v4315 = vld [vmem:[#allocation2 + $0x40] sm:$0xff]
      %v4316 = vld [vmem:[#allocation2 + $0x48] sm:$0xff]
      %v4317 = vld [vmem:[#allocation2 + $0x50] sm:$0xff]
      %v4318 = vld [vmem:[#allocation2 + $0x58] sm:$0xff]
      %v4319 = vld [vmem:[#allocation2 + $0x60] sm:$0xff]
      %v4320 = vld [vmem:[#allocation2 + $0x68] sm:$0xff]
      %v4321 = vld [vmem:[#allocation2 + $0x70] sm:$0xff]
      %v4322 = vld [vmem:[#allocation2 + $0x78] sm:$0xff]
      %v4323 = vld [vmem:[#allocation2 + $0x80] sm:$0xff]
      %v4324 = vld [vmem:[#allocation2 + $0x88] sm:$0xff]
      %v4325 = vld [vmem:[#allocation2 + $0x90] sm:$0xff]
      %v4326 = vld [vmem:[%s1 + $0x1c0] sm:$0xf]
      %v4327 = vld [vmem:[%s1 + $0x1c4] sm:$0xf]
      %v4328 = vld [vmem:[%s1 + $0x1c8] sm:$0xf]
      %v4329 = vld [vmem:[%s1 + $0x1cc] sm:$0xf]
      %v4330 = vld [vmem:[%s1 + $0x1d0] sm:$0xf]
      %v4331 = vld [vmem:[%s1 + $0x1d4] sm:$0xf]
      %v4332 = vld [vmem:[%s1 + $0x1d8] sm:$0xf]
      %v4333 = vld [vmem:[%s1 + $0x1dc] sm:$0xf]
      %v4334 = vld [vmem:[%s1 + $0x1e0] sm:$0xf]
      %v4335 = vld [vmem:[%s1 + $0x1e4] sm:$0xf]
      %v4336 = vld [vmem:[%s1 + $0x1e8] sm:$0xf]
      %v4337 = vld [vmem:[%s1 + $0x1ec] sm:$0xf]
      %v4338 = vld [vmem:[%s1 + $0x1f0] sm:$0xf]
      %v4339 = vld [vmem:[%s1 + $0x1f4] sm:$0xf]
      %v4340 = vld [vmem:[%s1 + $0x1f8] sm:$0xf]
      %v4341 = vld [vmem:[%s1 + $0x1fc] sm:$0xf]
      %v4358 = vunpack.c.l.b16 %v4326
      %v4359 = vunpack.c.l.b16 %v4327
      %v4360 = vunpack.c.l.b16 %v4328
      %v4361 = vunpack.c.l.b16 %v4329
      %v4362 = vunpack.c.l.b16 %v4330
      %v4363 = vunpack.c.l.b16 %v4331
      %v4364 = vunpack.c.l.b16 %v4332
      %v4365 = vunpack.c.l.b16 %v4333
      %v4366 = vunpack.c.l.b16 %v4334
      %v4367 = vunpack.c.l.b16 %v4335
      %v4368 = vunpack.c.l.b16 %v4336
      %v4369 = vunpack.c.l.b16 %v4337
      %v4370 = vunpack.c.l.b16 %v4338
      %v4371 = vunpack.c.l.b16 %v4339
      %v4372 = vunpack.c.l.b16 %v4340
      %v4373 = vunpack.c.l.b16 %v4341
      %v4374 = vpack.c.b16 %v4359, %v4358
      %v4375 = vpack.c.b16 %v4361, %v4360
      %v4376 = vpack.c.b16 %v4363, %v4362
      %v4377 = vpack.c.b16 %v4365, %v4364
      %v4378 = vpack.c.b16 %v4367, %v4366
      %v4379 = vpack.c.b16 %v4369, %v4368
      %v4380 = vpack.c.b16 %v4371, %v4370
      %v4381 = vpack.c.b16 %v4373, %v4372
      %4390 = vmatprep.subr.bf16.mxu0 0
      %4391 = vmatpush1.bf16.msra.mxu0 %v4374
      %4392 = vmatprep.subr.bf16.mxu0 0
      %4393 = vmatpush1.bf16.msra.mxu0 %v4375
      %4394 = vmatprep.subr.bf16.mxu0 0
      %4395 = vmatpush1.bf16.msra.mxu0 %v4376
      %4396 = vmatprep.subr.bf16.mxu0 0
      %4397 = vmatpush1.bf16.msra.mxu0 %v4377
      %4398 = vmatprep.subr.bf16.mxu0 0
      %4399 = vmatpush1.bf16.msra.mxu0 %v4378
      %4400 = vmatprep.subr.bf16.mxu0 0
      %4401 = vmatpush1.bf16.msra.mxu0 %v4379
      %4402 = vmatprep.subr.bf16.mxu0 0
      %4403 = vmatpush1.bf16.msra.mxu0 %v4380
      %4404 = vmatprep.subr.bf16.mxu0 0
      %4405 = vmatpush1.bf16.msra.mxu0 %v4381
      %4406 = vmatprep.subr.bf16.mxu0 0
      %4407 = vmatpush1.bf16.msra.mxu0 0
      %4408 = vmatprep.subr.bf16.mxu0 0
      %4409 = vmatpush1.bf16.msra.mxu0 0
      %4410 = vmatprep.subr.bf16.mxu0 0
      %4411 = vmatpush1.bf16.msra.mxu0 0
      %4412 = vmatprep.subr.bf16.mxu0 0
      %4413 = vmatpush1.bf16.msra.mxu0 0
      %4414 = vmatprep.subr.bf16.mxu0 0
      %4415 = vmatpush1.bf16.msra.mxu0 0
      %4416 = vmatprep.subr.bf16.mxu0 0
      %4417 = vmatpush1.bf16.msra.mxu0 0
      %4418 = vmatprep.subr.bf16.mxu0 0
      %4419 = vmatpush1.bf16.msra.mxu0 0
      %4420 = vmatprep.subr.bf16.mxu0 0
      %4421 = vmatpush1.bf16.msra.mxu0 0
      %4422 = vmatprep.mubr.bf16.mxu0 0
      %4423 = vmatmul.mubr.bf16.gmra.mrb[0].mxu0 %v4310
      %v4424 = vpop.f32.mrb[0].mxu0
      %v4425 = vadd.f32 0.0, %v4424
      %v4426 = vpop.f32.mrb[0].mxu0
      %v4427 = vpop.f32.mrb[0].mxu0
      %v4428 = vadd.f32 0.0, %v4427
      %v4429 = vpop.f32.mrb[0].mxu0
      %4430 = vmatprep.mubr.bf16.mxu0 0
      %4431 = vmatmul.mubr.bf16.gmra.mrb[0].mxu0 %v4311
      %v4432 = vpop.f32.mrb[0].mxu0
      %v4433 = vadd.f32 0.0, %v4432
      %v4434 = vpop.f32.mrb[0].mxu0
      %v4435 = vpop.f32.mrb[0].mxu0
      %v4436 = vadd.f32 0.0, %v4435
      %v4437 = vpop.f32.mrb[0].mxu0
      %4438 = vmatprep.mubr.bf16.mxu0 0
      %4439 = vmatmul.mubr.bf16.gmra.mrb[0].mxu0 %v4312
      %v4440 = vpop.f32.mrb[0].mxu0
      %v4441 = vadd.f32 0.0, %v4440
      %v4442 = vpop.f32.mrb[0].mxu0
      %v4443 = vpop.f32.mrb[0].mxu0
      %v4444 = vadd.f32 0.0, %v4443
      %v4445 = vpop.f32.mrb[0].mxu0
      %4446 = vmatprep.mubr.bf16.mxu0 0
      %4447 = vmatmul.mubr.bf16.gmra.mrb[0].mxu0 %v4313
      %v4448 = vpop.f32.mrb[0].mxu0
      %v4449 = vadd.f32 0.0, %v4448
      %v4450 = vpop.f32.mrb[0].mxu0
      %v4451 = vpop.f32.mrb[0].mxu0
      %v4452 = vadd.f32 0.0, %v4451
      %v4453 = vpop.f32.mrb[0].mxu0
      %4454 = vmatprep.mubr.bf16.mxu0 0
      %4455 = vmatmul.mubr.bf16.gmra.mrb[0].mxu0 %v4314
      %v4456 = vpop.f32.mrb[0].mxu0
      %v4457 = vadd.f32 0.0, %v4456
      %v4458 = vpop.f32.mrb[0].mxu0
      %v4459 = vpop.f32.mrb[0].mxu0
      %v4460 = vadd.f32 0.0, %v4459
      %v4461 = vpop.f32.mrb[0].mxu0
      %4462 = vmatprep.mubr.bf16.mxu0 0
      %4463 = vmatmul.mubr.bf16.gmra.mrb[0].mxu0 %v4315
      %v4464 = vpop.f32.mrb[0].mxu0
      %v4465 = vadd.f32 0.0, %v4464
      %v4466 = vpop.f32.mrb[0].mxu0
      %v4467 = vpop.f32.mrb[0].mxu0
      %v4468 = vadd.f32 0.0, %v4467
      %v4469 = vpop.f32.mrb[0].mxu0
      %4470 = vmatprep.mubr.bf16.mxu0 0
      %4471 = vmatmul.mubr.bf16.gmra.mrb[0].mxu0 %v4316
      %v4472 = vpop.f32.mrb[0].mxu0
      %v4473 = vadd.f32 0.0, %v4472
      %v4474 = vpop.f32.mrb[0].mxu0
      %v4475 = vpop.f32.mrb[0].mxu0
      %v4476 = vadd.f32 0.0, %v4475
      %v4477 = vpop.f32.mrb[0].mxu0
      %4478 = vmatprep.mubr.bf16.mxu0 0
      %4479 = vmatmul.mubr.bf16.gmra.mrb[0].mxu0 %v4317
      %v4480 = vpop.f32.mrb[0].mxu0
      %v4481 = vadd.f32 0.0, %v4480
      %v4482 = vpop.f32.mrb[0].mxu0
      %v4483 = vpop.f32.mrb[0].mxu0
      %v4484 = vadd.f32 0.0, %v4483
      %v4485 = vpop.f32.mrb[0].mxu0
      %4486 = vmatprep.mubr.bf16.mxu0 0
      %4487 = vmatmul.mubr.bf16.gmra.mrb[0].mxu0 %v4318
      %v4488 = vpop.f32.mrb[0].mxu0
      %v4489 = vadd.f32 0.0, %v4488
      %v4490 = vpop.f32.mrb[0].mxu0
      %v4491 = vpop.f32.mrb[0].mxu0
      %v4492 = vadd.f32 0.0, %v4491
      %v4493 = vpop.f32.mrb[0].mxu0
      %4494 = vmatprep.mubr.bf16.mxu0 0
      %4495 = vmatmul.mubr.bf16.gmra.mrb[0].mxu0 %v4319
      %v4496 = vpop.f32.mrb[0].mxu0
      %v4497 = vadd.f32 0.0, %v4496
      %v4498 = vpop.f32.mrb[0].mxu0
      %v4499 = vpop.f32.mrb[0].mxu0
      %v4500 = vadd.f32 0.0, %v4499
      %v4501 = vpop.f32.mrb[0].mxu0
      %4502 = vmatprep.mubr.bf16.mxu0 0
      %4503 = vmatmul.mubr.bf16.gmra.mrb[0].mxu0 %v4320
      %v4504 = vpop.f32.mrb[0].mxu0
      %v4505 = vadd.f32 0.0, %v4504
      %v4506 = vpop.f32.mrb[0].mxu0
      %v4507 = vpop.f32.mrb[0].mxu0
      %v4508 = vadd.f32 0.0, %v4507
      %v4509 = vpop.f32.mrb[0].mxu0
      %4510 = vmatprep.mubr.bf16.mxu0 0
      %4511 = vmatmul.mubr.bf16.gmra.mrb[0].mxu0 %v4321
      %v4512 = vpop.f32.mrb[0].mxu0
      %v4513 = vadd.f32 0.0, %v4512
      %v4514 = vpop.f32.mrb[0].mxu0
      %v4515 = vpop.f32.mrb[0].mxu0
      %v4516 = vadd.f32 0.0, %v4515
      %v4517 = vpop.f32.mrb[0].mxu0
      %4518 = vmatprep.mubr.bf16.mxu0 0
      %4519 = vmatmul.mubr.bf16.gmra.mrb[0].mxu0 %v4322
      %v4520 = vpop.f32.mrb[0].mxu0
      %v4521 = vadd.f32 0.0, %v4520
      %v4522 = vpop.f32.mrb[0].mxu0
      %v4523 = vpop.f32.mrb[0].mxu0
      %v4524 = vadd.f32 0.0, %v4523
      %v4525 = vpop.f32.mrb[0].mxu0
      %4526 = vmatprep.mubr.bf16.mxu0 0
      %4527 = vmatmul.mubr.bf16.gmra.mrb[0].mxu0 %v4323
      %v4528 = vpop.f32.mrb[0].mxu0
      %v4529 = vadd.f32 0.0, %v4528
      %v4530 = vpop.f32.mrb[0].mxu0
      %v4531 = vpop.f32.mrb[0].mxu0
      %v4532 = vadd.f32 0.0, %v4531
      %v4533 = vpop.f32.mrb[0].mxu0
      %4534 = vmatprep.mubr.bf16.mxu0 0
      %4535 = vmatmul.mubr.bf16.gmra.mrb[0].mxu0 %v4324
      %v4536 = vpop.f32.mrb[0].mxu0
      %v4537 = vadd.f32 0.0, %v4536
      %v4538 = vpop.f32.mrb[0].mxu0
      %v4539 = vpop.f32.mrb[0].mxu0
      %v4540 = vadd.f32 0.0, %v4539
      %v4541 = vpop.f32.mrb[0].mxu0
      %4542 = vmatprep.mubr.bf16.mxu0 0
      %4543 = vmatmul.mubr.bf16.gmra.mrb[0].mxu0 %v4325
      %v4544 = vpop.f32.mrb[0].mxu0
      %v4545 = vadd.f32 0.0, %v4544
      %v4546 = vpop.f32.mrb[0].mxu0
      %v4547 = vpop.f32.mrb[0].mxu0
      %v4548 = vadd.f32 0.0, %v4547
      %v4549 = vpop.f32.mrb[0].mxu0
      %4550 = vdwg.mxu0
      %v4551 = vld [vmem:[#allocation3] sm:$0xff]
      %v4552 = vld [vmem:[#allocation3 + $0x8] sm:$0xff]
      %v4553 = vld [vmem:[#allocation3 + $0x10] sm:$0xff]
      %v4554 = vld [vmem:[#allocation3 + $0x18] sm:$0xff]
      %v4555 = vld [vmem:[#allocation3 + $0x20] sm:$0xff]
      %v4556 = vld [vmem:[#allocation3 + $0x28] sm:$0xff]
      %v4557 = vld [vmem:[#allocation3 + $0x30] sm:$0xff]
      %v4558 = vld [vmem:[#allocation3 + $0x38] sm:$0xff]
      %v4559 = vld [vmem:[#allocation3 + $0x40] sm:$0xff]
      %v4560 = vld [vmem:[#allocation3 + $0x48] sm:$0xff]
      %v4561 = vld [vmem:[#allocation3 + $0x50] sm:$0xff]
      %v4562 = vld [vmem:[#allocation3 + $0x58] sm:$0xff]
      %v4563 = vld [vmem:[#allocation3 + $0x60] sm:$0xff]
      %v4564 = vld [vmem:[#allocation3 + $0x68] sm:$0xff]
      %v4565 = vld [vmem:[#allocation3 + $0x70] sm:$0xff]
      %v4566 = vld [vmem:[#allocation3 + $0x78] sm:$0xff]
      %v4567 = vld [vmem:[#allocation3 + $0x80] sm:$0xff]
      %v4568 = vld [vmem:[#allocation3 + $0x88] sm:$0xff]
      %v4569 = vld [vmem:[#allocation3 + $0x90] sm:$0xff]
      %v4570 = vld [vmem:[#allocation3 + $0x98] sm:$0xff]
      %v4571 = vld [vmem:[#allocation3 + $0xa0] sm:$0xff]
      %v4572 = vld [vmem:[#allocation3 + $0xa8] sm:$0xff]
      %v4573 = vld [vmem:[#allocation3 + $0xb0] sm:$0xff]
      %v4574 = vld [vmem:[#allocation3 + $0xb8] sm:$0xff]
      %v4575 = vld [vmem:[#allocation3 + $0xc0] sm:$0xff]
      %v4576 = vld [vmem:[#allocation3 + $0xc8] sm:$0xff]
      %v4577 = vld [vmem:[#allocation3 + $0xd0] sm:$0xff]
      %v4578 = vld [vmem:[#allocation3 + $0xd8] sm:$0xff]
      %v4579 = vld [vmem:[#allocation3 + $0xe0] sm:$0xff]
      %v4580 = vld [vmem:[#allocation3 + $0xe8] sm:$0xff]
      %v4581 = vld [vmem:[#allocation3 + $0xf0] sm:$0xff]
      %v4582 = vld [vmem:[#allocation3 + $0xf8] sm:$0xff]
      %v4583 = vadd.f32 %v4551, %v4425
      %v4584 = vadd.f32 %v4552, %v4428
      %v4585 = vadd.f32 %v4553, %v4433
      %v4586 = vadd.f32 %v4554, %v4436
      %v4587 = vadd.f32 %v4555, %v4441
      %v4588 = vadd.f32 %v4556, %v4444
      %v4589 = vadd.f32 %v4557, %v4449
      %v4590 = vadd.f32 %v4558, %v4452
      %v4591 = vadd.f32 %v4559, %v4457
      %v4592 = vadd.f32 %v4560, %v4460
      %v4593 = vadd.f32 %v4561, %v4465
      %v4594 = vadd.f32 %v4562, %v4468
      %v4595 = vadd.f32 %v4563, %v4473
      %v4596 = vadd.f32 %v4564, %v4476
      %v4597 = vadd.f32 %v4565, %v4481
      %v4598 = vadd.f32 %v4566, %v4484
      %v4599 = vadd.f32 %v4567, %v4489
      %v4600 = vadd.f32 %v4568, %v4492
      %v4601 = vadd.f32 %v4569, %v4497
      %v4602 = vadd.f32 %v4570, %v4500
      %v4603 = vadd.f32 %v4571, %v4505
      %v4604 = vadd.f32 %v4572, %v4508
      %v4605 = vadd.f32 %v4573, %v4513
      %v4606 = vadd.f32 %v4574, %v4516
      %v4607 = vadd.f32 %v4575, %v4521
      %v4608 = vadd.f32 %v4576, %v4524
      %v4609 = vadd.f32 %v4577, %v4529
      %v4610 = vadd.f32 %v4578, %v4532
      %v4611 = vadd.f32 %v4579, %v4537
      %v4612 = vadd.f32 %v4580, %v4540
      %v4613 = vadd.f32 %v4581, %v4545
      %v4614 = vadd.f32 %v4582, %v4548
      %4615 = vst [vmem:[#allocation3] sm:$0xff] %v4583
      %4616 = vst [vmem:[#allocation3 + $0x8] sm:$0xff] %v4584
      %4617 = vst [vmem:[#allocation3 + $0x10] sm:$0xff] %v4585
      %4618 = vst [vmem:[#allocation3 + $0x18] sm:$0xff] %v4586
      %4619 = vst [vmem:[#allocation3 + $0x20] sm:$0xff] %v4587
      %4620 = vst [vmem:[#allocation3 + $0x28] sm:$0xff] %v4588
      %4621 = vst [vmem:[#allocation3 + $0x30] sm:$0xff] %v4589
      %4622 = vst [vmem:[#allocation3 + $0x38] sm:$0xff] %v4590
      %4623 = vst [vmem:[#allocation3 + $0x40] sm:$0xff] %v4591
      %4624 = vst [vmem:[#allocation3 + $0x48] sm:$0xff] %v4592
      %4625 = vst [vmem:[#allocation3 + $0x50] sm:$0xff] %v4593
      %4626 = vst [vmem:[#allocation3 + $0x58] sm:$0xff] %v4594
      %4627 = vst [vmem:[#allocation3 + $0x60] sm:$0xff] %v4595
      %4628 = vst [vmem:[#allocation3 + $0x68] sm:$0xff] %v4596
      %4629 = vst [vmem:[#allocation3 + $0x70] sm:$0xff] %v4597
      %4630 = vst [vmem:[#allocation3 + $0x78] sm:$0xff] %v4598
      %4631 = vst [vmem:[#allocation3 + $0x80] sm:$0xff] %v4599
      %4632 = vst [vmem:[#allocation3 + $0x88] sm:$0xff] %v4600
      %4633 = vst [vmem:[#allocation3 + $0x90] sm:$0xff] %v4601
      %4634 = vst [vmem:[#allocation3 + $0x98] sm:$0xff] %v4602
      %4635 = vst [vmem:[#allocation3 + $0xa0] sm:$0xff] %v4603
      %4636 = vst [vmem:[#allocation3 + $0xa8] sm:$0xff] %v4604
      %4637 = vst [vmem:[#allocation3 + $0xb0] sm:$0xff] %v4605
      %4638 = vst [vmem:[#allocation3 + $0xb8] sm:$0xff] %v4606
      %4639 = vst [vmem:[#allocation3 + $0xc0] sm:$0xff] %v4607
      %4640 = vst [vmem:[#allocation3 + $0xc8] sm:$0xff] %v4608
      %4641 = vst [vmem:[#allocation3 + $0xd0] sm:$0xff] %v4609
      %4642 = vst [vmem:[#allocation3 + $0xd8] sm:$0xff] %v4610
      %4643 = vst [vmem:[#allocation3 + $0xe0] sm:$0xff] %v4611
      %4644 = vst [vmem:[#allocation3 + $0xe8] sm:$0xff] %v4612
      %4645 = vst [vmem:[#allocation3 + $0xf0] sm:$0xff] %v4613
      %4646 = vst [vmem:[#allocation3 + $0xf8] sm:$0xff] %v4614
      %v4647 = vld [vmem:[#allocation2 + $0x18] sm:$0xff]
      %v4648 = vld [vmem:[#allocation2 + $0x20] sm:$0xff]
      %v4649 = vld [vmem:[#allocation2 + $0x28] sm:$0xff]
      %v4650 = vld [vmem:[#allocation2 + $0x30] sm:$0xff]
      %v4651 = vld [vmem:[#allocation2 + $0x38] sm:$0xff]
      %v4652 = vld [vmem:[#allocation2 + $0x40] sm:$0xff]
      %v4653 = vld [vmem:[#allocation2 + $0x48] sm:$0xff]
      %v4654 = vld [vmem:[#allocation2 + $0x50] sm:$0xff]
      %v4655 = vld [vmem:[#allocation2 + $0x58] sm:$0xff]
      %v4656 = vld [vmem:[#allocation2 + $0x60] sm:$0xff]
      %v4657 = vld [vmem:[#allocation2 + $0x68] sm:$0xff]
      %v4658 = vld [vmem:[#allocation2 + $0x70] sm:$0xff]
      %v4659 = vld [vmem:[#allocation2 + $0x78] sm:$0xff]
      %v4660 = vld [vmem:[#allocation2 + $0x80] sm:$0xff]
      %v4661 = vld [vmem:[#allocation2 + $0x88] sm:$0xff]
      %v4662 = vld [vmem:[#allocation2 + $0x90] sm:$0xff]
      %v4663 = vld [vmem:[#allocation2 + $0x98] sm:$0x1]
      %v4664 = vmul.bf16 %v4647, %v1840
      %v4665 = vmul.bf16 %v4648, %v1848
      %v4666 = vmul.bf16 %v4649, %v1856
      %v4667 = vmul.bf16 %v4650, %v1864
      %v4668 = vmul.bf16 %v4651, %v1872
      %v4669 = vmul.bf16 %v4652, %v1880
      %v4670 = vmul.bf16 %v4653, %v1888
      %v4671 = vmul.bf16 %v4654, %v1896
      %v4672 = vmul.bf16 %v4655, %v1904
      %v4673 = vmul.bf16 %v4656, %v1912
      %v4674 = vmul.bf16 %v4657, %v1920
      %v4675 = vmul.bf16 %v4658, %v1928
      %v4676 = vmul.bf16 %v4659, %v1936
      %v4677 = vmul.bf16 %v4660, %v1944
      %v4678 = vmul.bf16 %v4661, %v1952
      %v4679 = vmul.bf16 %v4662, %v1960
      %v4680 = vmul.bf16 %v4663, %v1956
      %v4681 = vld [vmem:[%s1 + $0x200] sm:$0xf]
      %v4682 = vld [vmem:[%s1 + $0x204] sm:$0xf]
      %v4683 = vld [vmem:[%s1 + $0x208] sm:$0xf]
      %v4684 = vld [vmem:[%s1 + $0x20c] sm:$0xf]
      %v4685 = vld [vmem:[%s1 + $0x210] sm:$0xf]
      %v4686 = vld [vmem:[%s1 + $0x214] sm:$0xf]
      %v4687 = vld [vmem:[%s1 + $0x218] sm:$0xf]
      %v4688 = vld [vmem:[%s1 + $0x21c] sm:$0xf]
      %v4689 = vld [vmem:[%s1 + $0x220] sm:$0xf]
      %v4690 = vld [vmem:[%s1 + $0x224] sm:$0xf]
      %v4691 = vld [vmem:[%s1 + $0x228] sm:$0xf]
      %v4692 = vld [vmem:[%s1 + $0x22c] sm:$0xf]
      %v4693 = vld [vmem:[%s1 + $0x230] sm:$0xf]
      %v4694 = vld [vmem:[%s1 + $0x234] sm:$0xf]
      %v4695 = vld [vmem:[%s1 + $0x238] sm:$0xf]
      %v4696 = vld [vmem:[%s1 + $0x23c] sm:$0xf]
      %v4698 = vshrl.u32 %v4664, 16
      %v4700 = vshll.u32 %v4664, 16
      %v4702 = vrot.slane %v4700, 1
      %v4703 = vor.u32 %v4698, %v4702
      %v4705 = vshll.u32 %v4665, 16
      %v4707 = vrot.slane %v4705, 1
      %v4708 = vsel %vm912, %v4703, %v4707
      %v4709 = vshrl.u32 %v4665, 16
      %v4711 = vor.u32 %v4709, %v4707
      %v4713 = vshll.u32 %v4666, 16
      %v4715 = vrot.slane %v4713, 1
      %v4716 = vsel %vm912, %v4711, %v4715
      %v4717 = vshrl.u32 %v4666, 16
      %v4719 = vor.u32 %v4717, %v4715
      %v4721 = vshll.u32 %v4667, 16
      %v4723 = vrot.slane %v4721, 1
      %v4724 = vsel %vm912, %v4719, %v4723
      %v4725 = vshrl.u32 %v4667, 16
      %v4727 = vor.u32 %v4725, %v4723
      %v4729 = vshll.u32 %v4668, 16
      %v4731 = vrot.slane %v4729, 1
      %v4732 = vsel %vm912, %v4727, %v4731
      %v4733 = vshrl.u32 %v4668, 16
      %v4735 = vor.u32 %v4733, %v4731
      %v4737 = vshll.u32 %v4669, 16
      %v4739 = vrot.slane %v4737, 1
      %v4740 = vsel %vm912, %v4735, %v4739
      %v4741 = vshrl.u32 %v4669, 16
      %v4743 = vor.u32 %v4741, %v4739
      %v4745 = vshll.u32 %v4670, 16
      %v4747 = vrot.slane %v4745, 1
      %v4748 = vsel %vm912, %v4743, %v4747
      %v4749 = vshrl.u32 %v4670, 16
      %v4751 = vor.u32 %v4749, %v4747
      %v4753 = vshll.u32 %v4671, 16
      %v4755 = vrot.slane %v4753, 1
      %v4756 = vsel %vm912, %v4751, %v4755
      %v4757 = vshrl.u32 %v4671, 16
      %v4759 = vor.u32 %v4757, %v4755
      %v4761 = vshll.u32 %v4672, 16
      %v4763 = vrot.slane %v4761, 1
      %v4764 = vsel %vm912, %v4759, %v4763
      %v4765 = vshrl.u32 %v4672, 16
      %v4767 = vor.u32 %v4765, %v4763
      %v4769 = vshll.u32 %v4673, 16
      %v4771 = vrot.slane %v4769, 1
      %v4772 = vsel %vm912, %v4767, %v4771
      %v4773 = vshrl.u32 %v4673, 16
      %v4775 = vor.u32 %v4773, %v4771
      %v4777 = vshll.u32 %v4674, 16
      %v4779 = vrot.slane %v4777, 1
      %v4780 = vsel %vm912, %v4775, %v4779
      %v4781 = vshrl.u32 %v4674, 16
      %v4783 = vor.u32 %v4781, %v4779
      %v4785 = vshll.u32 %v4675, 16
      %v4787 = vrot.slane %v4785, 1
      %v4788 = vsel %vm912, %v4783, %v4787
      %v4789 = vshrl.u32 %v4675, 16
      %v4791 = vor.u32 %v4789, %v4787
      %v4793 = vshll.u32 %v4676, 16
      %v4795 = vrot.slane %v4793, 1
      %v4796 = vsel %vm912, %v4791, %v4795
      %v4797 = vshrl.u32 %v4676, 16
      %v4799 = vor.u32 %v4797, %v4795
      %v4801 = vshll.u32 %v4677, 16
      %v4803 = vrot.slane %v4801, 1
      %v4804 = vsel %vm912, %v4799, %v4803
      %v4805 = vshrl.u32 %v4677, 16
      %v4807 = vor.u32 %v4805, %v4803
      %v4809 = vshll.u32 %v4678, 16
      %v4811 = vrot.slane %v4809, 1
      %v4812 = vsel %vm912, %v4807, %v4811
      %v4813 = vshrl.u32 %v4678, 16
      %v4815 = vor.u32 %v4813, %v4811
      %v4817 = vshll.u32 %v4679, 16
      %v4819 = vrot.slane %v4817, 1
      %v4820 = vsel %vm912, %v4815, %v4819
      %v4821 = vshrl.u32 %v4679, 16
      %v4823 = vor.u32 %v4821, %v4819
      %v4825 = vshll.u32 %v4680, 16
      %v4827 = vrot.slane %v4825, 1
      %v4828 = vsel %vm912, %v4823, %v4827
      %v4861 = vunpack.c.l.b16 %v4681
      %v4862 = vunpack.c.l.b16 %v4682
      %v4863 = vunpack.c.l.b16 %v4683
      %v4864 = vunpack.c.l.b16 %v4684
      %v4865 = vunpack.c.l.b16 %v4685
      %v4866 = vunpack.c.l.b16 %v4686
      %v4867 = vunpack.c.l.b16 %v4687
      %v4868 = vunpack.c.l.b16 %v4688
      %v4869 = vunpack.c.l.b16 %v4689
      %v4870 = vunpack.c.l.b16 %v4690
      %v4871 = vunpack.c.l.b16 %v4691
      %v4872 = vunpack.c.l.b16 %v4692
      %v4873 = vunpack.c.l.b16 %v4693
      %v4874 = vunpack.c.l.b16 %v4694
      %v4875 = vunpack.c.l.b16 %v4695
      %v4876 = vunpack.c.l.b16 %v4696
      %v4877 = vpack.c.b16 %v4862, %v4861
      %v4878 = vpack.c.b16 %v4864, %v4863
      %v4879 = vpack.c.b16 %v4866, %v4865
      %v4880 = vpack.c.b16 %v4868, %v4867
      %v4881 = vpack.c.b16 %v4870, %v4869
      %v4882 = vpack.c.b16 %v4872, %v4871
      %v4883 = vpack.c.b16 %v4874, %v4873
      %v4884 = vpack.c.b16 %v4876, %v4875
      %4893 = vmatprep.subr.bf16.mxu0 0
      %4894 = vmatpush1.bf16.msra.mxu0 %v4877
      %4895 = vmatprep.subr.bf16.mxu0 0
      %4896 = vmatpush1.bf16.msra.mxu0 %v4878
      %4897 = vmatprep.subr.bf16.mxu0 0
      %4898 = vmatpush1.bf16.msra.mxu0 %v4879
      %4899 = vmatprep.subr.bf16.mxu0 0
      %4900 = vmatpush1.bf16.msra.mxu0 %v4880
      %4901 = vmatprep.subr.bf16.mxu0 0
      %4902 = vmatpush1.bf16.msra.mxu0 %v4881
      %4903 = vmatprep.subr.bf16.mxu0 0
      %4904 = vmatpush1.bf16.msra.mxu0 %v4882
      %4905 = vmatprep.subr.bf16.mxu0 0
      %4906 = vmatpush1.bf16.msra.mxu0 %v4883
      %4907 = vmatprep.subr.bf16.mxu0 0
      %4908 = vmatpush1.bf16.msra.mxu0 %v4884
      %4909 = vmatprep.subr.bf16.mxu0 0
      %4910 = vmatpush1.bf16.msra.mxu0 0
      %4911 = vmatprep.subr.bf16.mxu0 0
      %4912 = vmatpush1.bf16.msra.mxu0 0
      %4913 = vmatprep.subr.bf16.mxu0 0
      %4914 = vmatpush1.bf16.msra.mxu0 0
      %4915 = vmatprep.subr.bf16.mxu0 0
      %4916 = vmatpush1.bf16.msra.mxu0 0
      %4917 = vmatprep.subr.bf16.mxu0 0
      %4918 = vmatpush1.bf16.msra.mxu0 0
      %4919 = vmatprep.subr.bf16.mxu0 0
      %4920 = vmatpush1.bf16.msra.mxu0 0
      %4921 = vmatprep.subr.bf16.mxu0 0
      %4922 = vmatpush1.bf16.msra.mxu0 0
      %4923 = vmatprep.subr.bf16.mxu0 0
      %4924 = vmatpush1.bf16.msra.mxu0 0
      %4925 = vmatprep.mubr.bf16.mxu0 0
      %4926 = vmatmul.mubr.bf16.gmra.mrb[0].mxu0 %v4708
      %v4927 = vpop.f32.mrb[0].mxu0
      %v4928 = vadd.f32 0.0, %v4927
      %v4929 = vpop.f32.mrb[0].mxu0
      %v4930 = vpop.f32.mrb[0].mxu0
      %v4931 = vadd.f32 0.0, %v4930
      %v4932 = vpop.f32.mrb[0].mxu0
      %4933 = vmatprep.mubr.bf16.mxu0 0
      %4934 = vmatmul.mubr.bf16.gmra.mrb[0].mxu0 %v4716
      %v4935 = vpop.f32.mrb[0].mxu0
      %v4936 = vadd.f32 0.0, %v4935
      %v4937 = vpop.f32.mrb[0].mxu0
      %v4938 = vpop.f32.mrb[0].mxu0
      %v4939 = vadd.f32 0.0, %v4938
      %v4940 = vpop.f32.mrb[0].mxu0
      %4941 = vmatprep.mubr.bf16.mxu0 0
      %4942 = vmatmul.mubr.bf16.gmra.mrb[0].mxu0 %v4724
      %v4943 = vpop.f32.mrb[0].mxu0
      %v4944 = vadd.f32 0.0, %v4943
      %v4945 = vpop.f32.mrb[0].mxu0
      %v4946 = vpop.f32.mrb[0].mxu0
      %v4947 = vadd.f32 0.0, %v4946
      %v4948 = vpop.f32.mrb[0].mxu0
      %4949 = vmatprep.mubr.bf16.mxu0 0
      %4950 = vmatmul.mubr.bf16.gmra.mrb[0].mxu0 %v4732
      %v4951 = vpop.f32.mrb[0].mxu0
      %v4952 = vadd.f32 0.0, %v4951
      %v4953 = vpop.f32.mrb[0].mxu0
      %v4954 = vpop.f32.mrb[0].mxu0
      %v4955 = vadd.f32 0.0, %v4954
      %v4956 = vpop.f32.mrb[0].mxu0
      %4957 = vmatprep.mubr.bf16.mxu0 0
      %4958 = vmatmul.mubr.bf16.gmra.mrb[0].mxu0 %v4740
      %v4959 = vpop.f32.mrb[0].mxu0
      %v4960 = vadd.f32 0.0, %v4959
      %v4961 = vpop.f32.mrb[0].mxu0
      %v4962 = vpop.f32.mrb[0].mxu0
      %v4963 = vadd.f32 0.0, %v4962
      %v4964 = vpop.f32.mrb[0].mxu0
      %4965 = vmatprep.mubr.bf16.mxu0 0
      %4966 = vmatmul.mubr.bf16.gmra.mrb[0].mxu0 %v4748
      %v4967 = vpop.f32.mrb[0].mxu0
      %v4968 = vadd.f32 0.0, %v4967
      %v4969 = vpop.f32.mrb[0].mxu0
      %v4970 = vpop.f32.mrb[0].mxu0
      %v4971 = vadd.f32 0.0, %v4970
      %v4972 = vpop.f32.mrb[0].mxu0
      %4973 = vmatprep.mubr.bf16.mxu0 0
      %4974 = vmatmul.mubr.bf16.gmra.mrb[0].mxu0 %v4756
      %v4975 = vpop.f32.mrb[0].mxu0
      %v4976 = vadd.f32 0.0, %v4975
      %v4977 = vpop.f32.mrb[0].mxu0
      %v4978 = vpop.f32.mrb[0].mxu0
      %v4979 = vadd.f32 0.0, %v4978
      %v4980 = vpop.f32.mrb[0].mxu0
      %4981 = vmatprep.mubr.bf16.mxu0 0
      %4982 = vmatmul.mubr.bf16.gmra.mrb[0].mxu0 %v4764
      %v4983 = vpop.f32.mrb[0].mxu0
      %v4984 = vadd.f32 0.0, %v4983
      %v4985 = vpop.f32.mrb[0].mxu0
      %v4986 = vpop.f32.mrb[0].mxu0
      %v4987 = vadd.f32 0.0, %v4986
      %v4988 = vpop.f32.mrb[0].mxu0
      %4989 = vmatprep.mubr.bf16.mxu0 0
      %4990 = vmatmul.mubr.bf16.gmra.mrb[0].mxu0 %v4772
      %v4991 = vpop.f32.mrb[0].mxu0
      %v4992 = vadd.f32 0.0, %v4991
      %v4993 = vpop.f32.mrb[0].mxu0
      %v4994 = vpop.f32.mrb[0].mxu0
      %v4995 = vadd.f32 0.0, %v4994
      %v4996 = vpop.f32.mrb[0].mxu0
      %4997 = vmatprep.mubr.bf16.mxu0 0
      %4998 = vmatmul.mubr.bf16.gmra.mrb[0].mxu0 %v4780
      %v4999 = vpop.f32.mrb[0].mxu0
      %v5000 = vadd.f32 0.0, %v4999
      %v5001 = vpop.f32.mrb[0].mxu0
      %v5002 = vpop.f32.mrb[0].mxu0
      %v5003 = vadd.f32 0.0, %v5002
      %v5004 = vpop.f32.mrb[0].mxu0
      %5005 = vmatprep.mubr.bf16.mxu0 0
      %5006 = vmatmul.mubr.bf16.gmra.mrb[0].mxu0 %v4788
      %v5007 = vpop.f32.mrb[0].mxu0
      %v5008 = vadd.f32 0.0, %v5007
      %v5009 = vpop.f32.mrb[0].mxu0
      %v5010 = vpop.f32.mrb[0].mxu0
      %v5011 = vadd.f32 0.0, %v5010
      %v5012 = vpop.f32.mrb[0].mxu0
      %5013 = vmatprep.mubr.bf16.mxu0 0
      %5014 = vmatmul.mubr.bf16.gmra.mrb[0].mxu0 %v4796
      %v5015 = vpop.f32.mrb[0].mxu0
      %v5016 = vadd.f32 0.0, %v5015
      %v5017 = vpop.f32.mrb[0].mxu0
      %v5018 = vpop.f32.mrb[0].mxu0
      %v5019 = vadd.f32 0.0, %v5018
      %v5020 = vpop.f32.mrb[0].mxu0
      %5021 = vmatprep.mubr.bf16.mxu0 0
      %5022 = vmatmul.mubr.bf16.gmra.mrb[0].mxu0 %v4804
      %v5023 = vpop.f32.mrb[0].mxu0
      %v5024 = vadd.f32 0.0, %v5023
      %v5025 = vpop.f32.mrb[0].mxu0
      %v5026 = vpop.f32.mrb[0].mxu0
      %v5027 = vadd.f32 0.0, %v5026
      %v5028 = vpop.f32.mrb[0].mxu0
      %5029 = vmatprep.mubr.bf16.mxu0 0
      %5030 = vmatmul.mubr.bf16.gmra.mrb[0].mxu0 %v4812
      %v5031 = vpop.f32.mrb[0].mxu0
      %v5032 = vadd.f32 0.0, %v5031
      %v5033 = vpop.f32.mrb[0].mxu0
      %v5034 = vpop.f32.mrb[0].mxu0
      %v5035 = vadd.f32 0.0, %v5034
      %v5036 = vpop.f32.mrb[0].mxu0
      %5037 = vmatprep.mubr.bf16.mxu0 0
      %5038 = vmatmul.mubr.bf16.gmra.mrb[0].mxu0 %v4820
      %v5039 = vpop.f32.mrb[0].mxu0
      %v5040 = vadd.f32 0.0, %v5039
      %v5041 = vpop.f32.mrb[0].mxu0
      %v5042 = vpop.f32.mrb[0].mxu0
      %v5043 = vadd.f32 0.0, %v5042
      %v5044 = vpop.f32.mrb[0].mxu0
      %5045 = vmatprep.mubr.bf16.mxu0 0
      %5046 = vmatmul.mubr.bf16.gmra.mrb[0].mxu0 %v4828
      %v5047 = vpop.f32.mrb[0].mxu0
      %v5048 = vadd.f32 0.0, %v5047
      %v5049 = vpop.f32.mrb[0].mxu0
      %v5050 = vpop.f32.mrb[0].mxu0
      %v5051 = vadd.f32 0.0, %v5050
      %v5052 = vpop.f32.mrb[0].mxu0
      %5053 = vdwg.mxu0
      %v5054 = vld [vmem:[#allocation3] sm:$0xff]
      %v5055 = vld [vmem:[#allocation3 + $0x8] sm:$0xff]
      %v5056 = vld [vmem:[#allocation3 + $0x10] sm:$0xff]
      %v5057 = vld [vmem:[#allocation3 + $0x18] sm:$0xff]
      %v5058 = vld [vmem:[#allocation3 + $0x20] sm:$0xff]
      %v5059 = vld [vmem:[#allocation3 + $0x28] sm:$0xff]
      %v5060 = vld [vmem:[#allocation3 + $0x30] sm:$0xff]
      %v5061 = vld [vmem:[#allocation3 + $0x38] sm:$0xff]
      %v5062 = vld [vmem:[#allocation3 + $0x40] sm:$0xff]
      %v5063 = vld [vmem:[#allocation3 + $0x48] sm:$0xff]
      %v5064 = vld [vmem:[#allocation3 + $0x50] sm:$0xff]
      %v5065 = vld [vmem:[#allocation3 + $0x58] sm:$0xff]
      %v5066 = vld [vmem:[#allocation3 + $0x60] sm:$0xff]
      %v5067 = vld [vmem:[#allocation3 + $0x68] sm:$0xff]
      %v5068 = vld [vmem:[#allocation3 + $0x70] sm:$0xff]
      %v5069 = vld [vmem:[#allocation3 + $0x78] sm:$0xff]
      %v5070 = vld [vmem:[#allocation3 + $0x80] sm:$0xff]
      %v5071 = vld [vmem:[#allocation3 + $0x88] sm:$0xff]
      %v5072 = vld [vmem:[#allocation3 + $0x90] sm:$0xff]
      %v5073 = vld [vmem:[#allocation3 + $0x98] sm:$0xff]
      %v5074 = vld [vmem:[#allocation3 + $0xa0] sm:$0xff]
      %v5075 = vld [vmem:[#allocation3 + $0xa8] sm:$0xff]
      %v5076 = vld [vmem:[#allocation3 + $0xb0] sm:$0xff]
      %v5077 = vld [vmem:[#allocation3 + $0xb8] sm:$0xff]
      %v5078 = vld [vmem:[#allocation3 + $0xc0] sm:$0xff]
      %v5079 = vld [vmem:[#allocation3 + $0xc8] sm:$0xff]
      %v5080 = vld [vmem:[#allocation3 + $0xd0] sm:$0xff]
      %v5081 = vld [vmem:[#allocation3 + $0xd8] sm:$0xff]
      %v5082 = vld [vmem:[#allocation3 + $0xe0] sm:$0xff]
      %v5083 = vld [vmem:[#allocation3 + $0xe8] sm:$0xff]
      %v5084 = vld [vmem:[#allocation3 + $0xf0] sm:$0xff]
      %v5085 = vld [vmem:[#allocation3 + $0xf8] sm:$0xff]
      %v5086 = vadd.f32 %v5054, %v4928
      %v5087 = vadd.f32 %v5055, %v4931
      %v5088 = vadd.f32 %v5056, %v4936
      %v5089 = vadd.f32 %v5057, %v4939
      %v5090 = vadd.f32 %v5058, %v4944
      %v5091 = vadd.f32 %v5059, %v4947
      %v5092 = vadd.f32 %v5060, %v4952
      %v5093 = vadd.f32 %v5061, %v4955
      %v5094 = vadd.f32 %v5062, %v4960
      %v5095 = vadd.f32 %v5063, %v4963
      %v5096 = vadd.f32 %v5064, %v4968
      %v5097 = vadd.f32 %v5065, %v4971
      %v5098 = vadd.f32 %v5066, %v4976
      %v5099 = vadd.f32 %v5067, %v4979
      %v5100 = vadd.f32 %v5068, %v4984
      %v5101 = vadd.f32 %v5069, %v4987
      %v5102 = vadd.f32 %v5070, %v4992
      %v5103 = vadd.f32 %v5071, %v4995
      %v5104 = vadd.f32 %v5072, %v5000
      %v5105 = vadd.f32 %v5073, %v5003
      %v5106 = vadd.f32 %v5074, %v5008
      %v5107 = vadd.f32 %v5075, %v5011
      %v5108 = vadd.f32 %v5076, %v5016
      %v5109 = vadd.f32 %v5077, %v5019
      %v5110 = vadd.f32 %v5078, %v5024
      %v5111 = vadd.f32 %v5079, %v5027
      %v5112 = vadd.f32 %v5080, %v5032
      %v5113 = vadd.f32 %v5081, %v5035
      %v5114 = vadd.f32 %v5082, %v5040
      %v5115 = vadd.f32 %v5083, %v5043
      %v5116 = vadd.f32 %v5084, %v5048
      %v5117 = vadd.f32 %v5085, %v5051
      %5118 = vst [vmem:[#allocation3] sm:$0xff] %v5086
      %5119 = vst [vmem:[#allocation3 + $0x8] sm:$0xff] %v5087
      %5120 = vst [vmem:[#allocation3 + $0x10] sm:$0xff] %v5088
      %5121 = vst [vmem:[#allocation3 + $0x18] sm:$0xff] %v5089
      %5122 = vst [vmem:[#allocation3 + $0x20] sm:$0xff] %v5090
      %5123 = vst [vmem:[#allocation3 + $0x28] sm:$0xff] %v5091
      %5124 = vst [vmem:[#allocation3 + $0x30] sm:$0xff] %v5092
      %5125 = vst [vmem:[#allocation3 + $0x38] sm:$0xff] %v5093
      %5126 = vst [vmem:[#allocation3 + $0x40] sm:$0xff] %v5094
      %5127 = vst [vmem:[#allocation3 + $0x48] sm:$0xff] %v5095
      %5128 = vst [vmem:[#allocation3 + $0x50] sm:$0xff] %v5096
      %5129 = vst [vmem:[#allocation3 + $0x58] sm:$0xff] %v5097
      %5130 = vst [vmem:[#allocation3 + $0x60] sm:$0xff] %v5098
      %5131 = vst [vmem:[#allocation3 + $0x68] sm:$0xff] %v5099
      %5132 = vst [vmem:[#allocation3 + $0x70] sm:$0xff] %v5100
      %5133 = vst [vmem:[#allocation3 + $0x78] sm:$0xff] %v5101
      %5134 = vst [vmem:[#allocation3 + $0x80] sm:$0xff] %v5102
      %5135 = vst [vmem:[#allocation3 + $0x88] sm:$0xff] %v5103
      %5136 = vst [vmem:[#allocation3 + $0x90] sm:$0xff] %v5104
      %5137 = vst [vmem:[#allocation3 + $0x98] sm:$0xff] %v5105
      %5138 = vst [vmem:[#allocation3 + $0xa0] sm:$0xff] %v5106
      %5139 = vst [vmem:[#allocation3 + $0xa8] sm:$0xff] %v5107
      %5140 = vst [vmem:[#allocation3 + $0xb0] sm:$0xff] %v5108
      %5141 = vst [vmem:[#allocation3 + $0xb8] sm:$0xff] %v5109
      %5142 = vst [vmem:[#allocation3 + $0xc0] sm:$0xff] %v5110
      %5143 = vst [vmem:[#allocation3 + $0xc8] sm:$0xff] %v5111
      %5144 = vst [vmem:[#allocation3 + $0xd0] sm:$0xff] %v5112
      %5145 = vst [vmem:[#allocation3 + $0xd8] sm:$0xff] %v5113
      %5146 = vst [vmem:[#allocation3 + $0xe0] sm:$0xff] %v5114
      %5147 = vst [vmem:[#allocation3 + $0xe8] sm:$0xff] %v5115
      %5148 = vst [vmem:[#allocation3 + $0xf0] sm:$0xff] %v5116
      %5149 = vst [vmem:[#allocation3 + $0xf8] sm:$0xff] %v5117
      %v5150 = vld [vmem:[#allocation3] sm:$0xff]
      %v5151 = vld [vmem:[#allocation3 + $0x8] sm:$0xff]
      %v5152 = vld [vmem:[#allocation3 + $0x10] sm:$0xff]
      %v5153 = vld [vmem:[#allocation3 + $0x18] sm:$0xff]
      %v5154 = vld [vmem:[#allocation3 + $0x20] sm:$0xff]
      %v5155 = vld [vmem:[#allocation3 + $0x28] sm:$0xff]
      %v5156 = vld [vmem:[#allocation3 + $0x30] sm:$0xff]
      %v5157 = vld [vmem:[#allocation3 + $0x38] sm:$0xff]
      %v5158 = vld [vmem:[#allocation3 + $0x40] sm:$0xff]
      %v5159 = vld [vmem:[#allocation3 + $0x48] sm:$0xff]
      %v5160 = vld [vmem:[#allocation3 + $0x50] sm:$0xff]
      %v5161 = vld [vmem:[#allocation3 + $0x58] sm:$0xff]
      %v5162 = vld [vmem:[#allocation3 + $0x60] sm:$0xff]
      %v5163 = vld [vmem:[#allocation3 + $0x68] sm:$0xff]
      %v5164 = vld [vmem:[#allocation3 + $0x70] sm:$0xff]
      %v5165 = vld [vmem:[#allocation3 + $0x78] sm:$0xff]
      %v5166 = vld [vmem:[#allocation3 + $0x80] sm:$0xff]
      %v5167 = vld [vmem:[#allocation3 + $0x88] sm:$0xff]
      %v5168 = vld [vmem:[#allocation3 + $0x90] sm:$0xff]
      %v5169 = vld [vmem:[#allocation3 + $0x98] sm:$0xff]
      %v5170 = vld [vmem:[#allocation3 + $0xa0] sm:$0xff]
      %v5171 = vld [vmem:[#allocation3 + $0xa8] sm:$0xff]
      %v5172 = vld [vmem:[#allocation3 + $0xb0] sm:$0xff]
      %v5173 = vld [vmem:[#allocation3 + $0xb8] sm:$0xff]
      %v5174 = vld [vmem:[#allocation3 + $0xc0] sm:$0xff]
      %v5175 = vld [vmem:[#allocation3 + $0xc8] sm:$0xff]
      %v5176 = vld [vmem:[#allocation3 + $0xd0] sm:$0xff]
      %v5177 = vld [vmem:[#allocation3 + $0xd8] sm:$0xff]
      %v5178 = vld [vmem:[#allocation3 + $0xe0] sm:$0xff]
      %v5179 = vld [vmem:[#allocation3 + $0xe8] sm:$0xff]
      %v5180 = vld [vmem:[#allocation3 + $0xf0] sm:$0xff]
      %v5181 = vld [vmem:[#allocation3 + $0xf8] sm:$0xff]
      %v5182 = vpack.c.bf16 %v5151, %v5150
      %v5183 = vpack.c.bf16 %v5153, %v5152
      %v5184 = vpack.c.bf16 %v5155, %v5154
      %v5185 = vpack.c.bf16 %v5157, %v5156
      %v5186 = vpack.c.bf16 %v5159, %v5158
      %v5187 = vpack.c.bf16 %v5161, %v5160
      %v5188 = vpack.c.bf16 %v5163, %v5162
      %v5189 = vpack.c.bf16 %v5165, %v5164
      %v5190 = vpack.c.bf16 %v5167, %v5166
      %v5191 = vpack.c.bf16 %v5169, %v5168
      %v5192 = vpack.c.bf16 %v5171, %v5170
      %v5193 = vpack.c.bf16 %v5173, %v5172
      %v5194 = vpack.c.bf16 %v5175, %v5174
      %v5195 = vpack.c.bf16 %v5177, %v5176
      %v5196 = vpack.c.bf16 %v5179, %v5178
      %v5197 = vpack.c.bf16 %v5181, %v5180
      %v5214 = vunpack.c.l.b16 %v5182
      %v5215 = vunpack.c.h.b16 %v5182
      %v5216 = vunpack.c.l.b16 %v5183
      %v5217 = vunpack.c.h.b16 %v5183
      %v5218 = vunpack.c.l.b16 %v5184
      %v5219 = vunpack.c.h.b16 %v5184
      %v5220 = vunpack.c.l.b16 %v5185
      %v5221 = vunpack.c.h.b16 %v5185
      %v5222 = vunpack.c.l.b16 %v5186
      %v5223 = vunpack.c.h.b16 %v5186
      %v5224 = vunpack.c.l.b16 %v5187
      %v5225 = vunpack.c.h.b16 %v5187
      %v5226 = vunpack.c.l.b16 %v5188
      %v5227 = vunpack.c.h.b16 %v5188
      %v5228 = vunpack.c.l.b16 %v5189
      %v5229 = vunpack.c.h.b16 %v5189
      %v5230 = vunpack.c.l.b16 %v5190
      %v5231 = vunpack.c.h.b16 %v5190
      %v5232 = vunpack.c.l.b16 %v5191
      %v5233 = vunpack.c.h.b16 %v5191
      %v5234 = vunpack.c.l.b16 %v5192
      %v5235 = vunpack.c.h.b16 %v5192
      %v5236 = vunpack.c.l.b16 %v5193
      %v5237 = vunpack.c.h.b16 %v5193
      %v5238 = vunpack.c.l.b16 %v5194
      %v5239 = vunpack.c.h.b16 %v5194
      %v5240 = vunpack.c.l.b16 %v5195
      %v5241 = vunpack.c.h.b16 %v5195
      %v5242 = vunpack.c.l.b16 %v5196
      %v5243 = vunpack.c.h.b16 %v5196
      %v5244 = vunpack.c.l.b16 %v5197
      %v5245 = vunpack.c.h.b16 %v5197
      %v5246 = vpack.c.b16 %v5214, %v5214
      %v5247 = vpack.c.b16 %v5215, %v5215
      %v5248 = vpack.c.b16 %v5216, %v5216
      %v5249 = vpack.c.b16 %v5217, %v5217
      %v5250 = vpack.c.b16 %v5218, %v5218
      %v5251 = vpack.c.b16 %v5219, %v5219
      %v5252 = vpack.c.b16 %v5220, %v5220
      %v5253 = vpack.c.b16 %v5221, %v5221
      %v5254 = vpack.c.b16 %v5222, %v5222
      %v5255 = vpack.c.b16 %v5223, %v5223
      %v5256 = vpack.c.b16 %v5224, %v5224
      %v5257 = vpack.c.b16 %v5225, %v5225
      %v5258 = vpack.c.b16 %v5226, %v5226
      %v5259 = vpack.c.b16 %v5227, %v5227
      %v5260 = vpack.c.b16 %v5228, %v5228
      %v5261 = vpack.c.b16 %v5229, %v5229
      %v5262 = vpack.c.b16 %v5230, %v5230
      %v5263 = vpack.c.b16 %v5231, %v5231
      %v5264 = vpack.c.b16 %v5232, %v5232
      %v5265 = vpack.c.b16 %v5233, %v5233
      %v5266 = vpack.c.b16 %v5234, %v5234
      %v5267 = vpack.c.b16 %v5235, %v5235
      %v5268 = vpack.c.b16 %v5236, %v5236
      %v5269 = vpack.c.b16 %v5237, %v5237
      %v5270 = vpack.c.b16 %v5238, %v5238
      %v5271 = vpack.c.b16 %v5239, %v5239
      %v5272 = vpack.c.b16 %v5240, %v5240
      %v5273 = vpack.c.b16 %v5241, %v5241
      %v5274 = vpack.c.b16 %v5242, %v5242
      %v5275 = vpack.c.b16 %v5243, %v5243
      %v5276 = vpack.c.b16 %v5244, %v5244
      %v5277 = vpack.c.b16 %v5245, %v5245
      %5310 = vst [vmem:[%s179] sm:$0xf] %v5246
      %5311 = vst [vmem:[%s179 + $0x4] sm:$0xf] %v5247
      %5312 = vst [vmem:[%s179 + $0x8] sm:$0xf] %v5248
      %5313 = vst [vmem:[%s179 + $0xc] sm:$0xf] %v5249
      %5314 = vst [vmem:[%s179 + $0x10] sm:$0xf] %v5250
      %5315 = vst [vmem:[%s179 + $0x14] sm:$0xf] %v5251
      %5316 = vst [vmem:[%s179 + $0x18] sm:$0xf] %v5252
      %5317 = vst [vmem:[%s179 + $0x1c] sm:$0xf] %v5253
      %5318 = vst [vmem:[%s179 + $0x20] sm:$0xf] %v5254
      %5319 = vst [vmem:[%s179 + $0x24] sm:$0xf] %v5255
      %5320 = vst [vmem:[%s179 + $0x28] sm:$0xf] %v5256
      %5321 = vst [vmem:[%s179 + $0x2c] sm:$0xf] %v5257
      %5322 = vst [vmem:[%s179 + $0x30] sm:$0xf] %v5258
      %5323 = vst [vmem:[%s179 + $0x34] sm:$0xf] %v5259
      %5324 = vst [vmem:[%s179 + $0x38] sm:$0xf] %v5260
      %5325 = vst [vmem:[%s179 + $0x3c] sm:$0xf] %v5261
      %5326 = vst [vmem:[%s179 + $0x40] sm:$0xf] %v5262
      %5327 = vst [vmem:[%s179 + $0x44] sm:$0xf] %v5263
      %5328 = vst [vmem:[%s179 + $0x48] sm:$0xf] %v5264
      %5329 = vst [vmem:[%s179 + $0x4c] sm:$0xf] %v5265
      %5330 = vst [vmem:[%s179 + $0x50] sm:$0xf] %v5266
      %5331 = vst [vmem:[%s179 + $0x54] sm:$0xf] %v5267
      %5332 = vst [vmem:[%s179 + $0x58] sm:$0xf] %v5268
      %5333 = vst [vmem:[%s179 + $0x5c] sm:$0xf] %v5269
      %5334 = vst [vmem:[%s179 + $0x60] sm:$0xf] %v5270
      %5335 = vst [vmem:[%s179 + $0x64] sm:$0xf] %v5271
      %5336 = vst [vmem:[%s179 + $0x68] sm:$0xf] %v5272
      %5337 = vst [vmem:[%s179 + $0x6c] sm:$0xf] %v5273
      %5338 = vst [vmem:[%s179 + $0x70] sm:$0xf] %v5274
      %5339 = vst [vmem:[%s179 + $0x74] sm:$0xf] %v5275
      %5340 = vst [vmem:[%s179 + $0x78] sm:$0xf] %v5276
      %5341 = vst [vmem:[%s179 + $0x7c] sm:$0xf] %v5277
      %v5342 = vadd.f32 %v5150, %v5151
      %v5343 = vadd.f32 %v5342, %v5152
      %v5344 = vadd.f32 %v5343, %v5153
      %v5345 = vadd.f32 %v5344, %v5154
      %v5346 = vadd.f32 %v5345, %v5155
      %v5347 = vadd.f32 %v5346, %v5156
      %v5348 = vadd.f32 %v5347, %v5157
      %v5349 = vadd.f32 %v5348, %v5158
      %v5350 = vadd.f32 %v5349, %v5159
      %v5351 = vadd.f32 %v5350, %v5160
      %v5352 = vadd.f32 %v5351, %v5161
      %v5353 = vadd.f32 %v5352, %v5162
      %v5354 = vadd.f32 %v5353, %v5163
      %v5355 = vadd.f32 %v5354, %v5164
      %v5356 = vadd.f32 %v5355, %v5165
      %v5357 = vadd.f32 %v5356, %v5166
      %v5358 = vadd.f32 %v5357, %v5167
      %v5359 = vadd.f32 %v5358, %v5168
      %v5360 = vadd.f32 %v5359, %v5169
      %v5361 = vadd.f32 %v5360, %v5170
      %v5362 = vadd.f32 %v5361, %v5171
      %v5363 = vadd.f32 %v5362, %v5172
      %v5364 = vadd.f32 %v5363, %v5173
      %v5365 = vadd.f32 %v5364, %v5174
      %v5366 = vadd.f32 %v5365, %v5175
      %v5367 = vadd.f32 %v5366, %v5176
      %v5368 = vadd.f32 %v5367, %v5177
      %v5369 = vadd.f32 %v5368, %v5178
      %v5370 = vadd.f32 %v5369, %v5179
      %v5371 = vadd.f32 %v5370, %v5180
      %v5372 = vadd.f32 %v5371, %v5181
      %v5373 = vrot.slane %v5372, 4
      %v5374 = vadd.f32 %v5372, %v5373
      %v5375 = vrot.slane %v5374, 2
      %v5376 = vadd.f32 %v5374, %v5375
      %v5377 = vrot.slane %v5376, 1
      %v5378 = vadd.f32 %v5376, %v5377
      %v5379 = vrcp.pop 256.0
      %v5380 = vmul.f32 %v5378, %v5379
      %v5381 = vsub.f32 %v5150, %v5380
      %v5382 = vsub.f32 %v5151, %v5380
      %v5383 = vsub.f32 %v5152, %v5380
      %v5384 = vsub.f32 %v5153, %v5380
      %v5385 = vsub.f32 %v5154, %v5380
      %v5386 = vsub.f32 %v5155, %v5380
      %v5387 = vsub.f32 %v5156, %v5380
      %v5388 = vsub.f32 %v5157, %v5380
      %v5389 = vsub.f32 %v5158, %v5380
      %v5390 = vsub.f32 %v5159, %v5380
      %v5391 = vsub.f32 %v5160, %v5380
      %v5392 = vsub.f32 %v5161, %v5380
      %v5393 = vsub.f32 %v5162, %v5380
      %v5394 = vsub.f32 %v5163, %v5380
      %v5395 = vsub.f32 %v5164, %v5380
      %v5396 = vsub.f32 %v5165, %v5380
      %v5397 = vsub.f32 %v5166, %v5380
      %v5398 = vsub.f32 %v5167, %v5380
      %v5399 = vsub.f32 %v5168, %v5380
      %v5400 = vsub.f32 %v5169, %v5380
      %v5401 = vsub.f32 %v5170, %v5380
      %v5402 = vsub.f32 %v5171, %v5380
      %v5403 = vsub.f32 %v5172, %v5380
      %v5404 = vsub.f32 %v5173, %v5380
      %v5405 = vsub.f32 %v5174, %v5380
      %v5406 = vsub.f32 %v5175, %v5380
      %v5407 = vsub.f32 %v5176, %v5380
      %v5408 = vsub.f32 %v5177, %v5380
      %v5409 = vsub.f32 %v5178, %v5380
      %v5410 = vsub.f32 %v5179, %v5380
      %v5411 = vsub.f32 %v5180, %v5380
      %v5412 = vsub.f32 %v5181, %v5380
      %v5413 = vmul.f32 %v5381, %v5381
      %v5414 = vmul.f32 %v5382, %v5382
      %v5415 = vmul.f32 %v5383, %v5383
      %v5416 = vmul.f32 %v5384, %v5384
      %v5417 = vmul.f32 %v5385, %v5385
      %v5418 = vmul.f32 %v5386, %v5386
      %v5419 = vmul.f32 %v5387, %v5387
      %v5420 = vmul.f32 %v5388, %v5388
      %v5421 = vmul.f32 %v5389, %v5389
      %v5422 = vmul.f32 %v5390, %v5390
      %v5423 = vmul.f32 %v5391, %v5391
      %v5424 = vmul.f32 %v5392, %v5392
      %v5425 = vmul.f32 %v5393, %v5393
      %v5426 = vmul.f32 %v5394, %v5394
      %v5427 = vmul.f32 %v5395, %v5395
      %v5428 = vmul.f32 %v5396, %v5396
      %v5429 = vmul.f32 %v5397, %v5397
      %v5430 = vmul.f32 %v5398, %v5398
      %v5431 = vmul.f32 %v5399, %v5399
      %v5432 = vmul.f32 %v5400, %v5400
      %v5433 = vmul.f32 %v5401, %v5401
      %v5434 = vmul.f32 %v5402, %v5402
      %v5435 = vmul.f32 %v5403, %v5403
      %v5436 = vmul.f32 %v5404, %v5404
      %v5437 = vmul.f32 %v5405, %v5405
      %v5438 = vmul.f32 %v5406, %v5406
      %v5439 = vmul.f32 %v5407, %v5407
      %v5440 = vmul.f32 %v5408, %v5408
      %v5441 = vmul.f32 %v5409, %v5409
      %v5442 = vmul.f32 %v5410, %v5410
      %v5443 = vmul.f32 %v5411, %v5411
      %v5444 = vmul.f32 %v5412, %v5412
      %v5445 = vadd.f32 %v5413, %v5414
      %v5446 = vadd.f32 %v5445, %v5415
      %v5447 = vadd.f32 %v5446, %v5416
      %v5448 = vadd.f32 %v5447, %v5417
      %v5449 = vadd.f32 %v5448, %v5418
      %v5450 = vadd.f32 %v5449, %v5419
      %v5451 = vadd.f32 %v5450, %v5420
      %v5452 = vadd.f32 %v5451, %v5421
      %v5453 = vadd.f32 %v5452, %v5422
      %v5454 = vadd.f32 %v5453, %v5423
      %v5455 = vadd.f32 %v5454, %v5424
      %v5456 = vadd.f32 %v5455, %v5425
      %v5457 = vadd.f32 %v5456, %v5426
      %v5458 = vadd.f32 %v5457, %v5427
      %v5459 = vadd.f32 %v5458, %v5428
      %v5460 = vadd.f32 %v5459, %v5429
      %v5461 = vadd.f32 %v5460, %v5430
      %v5462 = vadd.f32 %v5461, %v5431
      %v5463 = vadd.f32 %v5462, %v5432
      %v5464 = vadd.f32 %v5463, %v5433
      %v5465 = vadd.f32 %v5464, %v5434
      %v5466 = vadd.f32 %v5465, %v5435
      %v5467 = vadd.f32 %v5466, %v5436
      %v5468 = vadd.f32 %v5467, %v5437
      %v5469 = vadd.f32 %v5468, %v5438
      %v5470 = vadd.f32 %v5469, %v5439
      %v5471 = vadd.f32 %v5470, %v5440
      %v5472 = vadd.f32 %v5471, %v5441
      %v5473 = vadd.f32 %v5472, %v5442
      %v5474 = vadd.f32 %v5473, %v5443
      %v5475 = vadd.f32 %v5474, %v5444
      %v5476 = vrot.slane %v5475, 4
      %v5477 = vadd.f32 %v5475, %v5476
      %v5478 = vrot.slane %v5477, 2
      %v5479 = vadd.f32 %v5477, %v5478
      %v5480 = vrot.slane %v5479, 1
      %v5481 = vadd.f32 %v5479, %v5480
      %vm5482 = vcmask 1040384
      %v5483 = vsel %vm5482, %v5380, %v5481
      %5484 = vst [vmem:[%s184] sm:$0x3] %v5483
      %s5485 = smul.u32 32, %s15
      %p5486 = scmp.lt.s32.totalorder %s5485, 63
      %s5487 = scalar_select %p5486, %s5485, 63
      %s5488 = smul.addr %s5487, 4
      %s5489 = scalar_lea.vmem %s2, %s5488
      %p5490 = scmp.lt.s32.totalorder %s15, 1
      %s5491 = scalar_select %p5490, %s15, 1
      %s5492 = smul.addr %s5491, 2
      %s5493 = scalar_lea.vmem %s3, %s5492
      // Predicated region
      $region29: #{basicblock_forward.3} parent=27 // pred_check
        %p5494 = pneg %p80
      $region30: #{basicblock_forward.3} parent=27 // pred_check_branch
        %5496 = sbr.rel (%p5494) target = $region32
      $region31: #{basicblock_forward.3} parent=27 // pred_region
        %s5497 = smul.u32 32, %s15
      $region32: #{basicblock_forward.3} parent=27 // pred_fallthru
        _
      // Predicated region
      $region33: #{basicblock_forward.3} parent=27 // pred_check
        %p5498 = pneg %p106
      $region34: #{basicblock_forward.3} parent=27 // pred_check_branch
        %5500 = sbr.rel (%p5498) target = $region36
      $region35: #{basicblock_forward.3} parent=27 // pred_region
        _
      $region36: #{basicblock_forward.3} parent=27 // pred_fallthru
        _
    $region28: #{basicblock_forward.3} parent=5 // pred_fallthru
      _
    %p5501 = scmp.le.s32.totalorder 2, %s10
    // Predicated region
    $region37: #{basicblock_forward.3} parent=5 // pred_check
      %p5502 = pneg %p5501
    $region38: #{basicblock_forward.3} parent=5 // pred_check_branch
      %5504 = sbr.rel (%p5502) target = $region40
    $region39: #{basicblock_forward.3} parent=5 // pred_region
      %s5505 = ssub.s32 %s10, 2
      // Predicated region
      $region41: #{basicblock_forward.3} parent=39 // pred_check
        %p5506 = pneg %p86
      $region42: #{basicblock_forward.3} parent=39 // pred_check_branch
        %5508 = sbr.rel (%p5506) target = $region44
      $region43: #{basicblock_forward.3} parent=39 // pred_region
        %s5509 = smul.u32 32, %s16
        %p5510 = scmp.lt.s32.totalorder %s5509, 63
        %s5511 = scalar_select %p5510, %s5509, 63
        %s5512 = smul.addr %s5511, 4
        %s5513 = scalar_lea.vmem %s2, %s5512
      $region44: #{basicblock_forward.3} parent=39 // pred_fallthru
        _
      // Predicated region
      $region45: #{basicblock_forward.3} parent=39 // pred_check
        %p5514 = pneg %p112
      $region46: #{basicblock_forward.3} parent=39 // pred_check_branch
        %5516 = sbr.rel (%p5514) target = $region48
      $region47: #{basicblock_forward.3} parent=39 // pred_region
        %p5517 = scmp.lt.s32.totalorder %s16, 1
        %s5518 = scalar_select %p5517, %s16, 1
        %s5519 = smul.addr %s5518, 2
        %s5520 = scalar_lea.vmem %s3, %s5519
      $region48: #{basicblock_forward.3} parent=39 // pred_fallthru
        _
    $region40: #{basicblock_forward.3} parent=5 // pred_fallthru
      _
  $region6: #{basicblock_forward.3} parent=0 // loop_footer
    %s14 = sadd.s32 1, %s10
  $region7: #{basicblock_forward.3} parent=0 // loop_footer_branch
    %9 = sbr.rel target = $region3
  $region8: #{basicblock_forward.3} parent=0 // loop_exit
    _

// kernel: basicblock_forward.4
$region0: #{basicblock_forward.4}
  #allocation0 [shape = 'u32[]', space=smem, size = 0x4, offset = 0x4, fixed_abs, tag = 'smem constant byte address 0x4 - core index']
  #allocation1 [shape = 'u32[144,128]{1,0:T(1,128)}', space=vmem, size = 0x12000, scoped, tag = 'internal scratch']
  #allocation2 [shape = 'bf16[320,128]{1,0:T(16,128)(2,1)}', space=vmem, size = 0x14000, scoped, tag = 'scratch operand']
  #allocation3 [shape = 'f32[256,128]{1,0:T(8,128)}', space=vmem, size = 0x20000, scoped, tag = 'scratch operand']
  %s0 = inlined_call_operand.vmem [shape: bf16[512,128], index: 0, kind: input, shape index: {}]
  %s1 = inlined_call_operand.vmem [shape: f32[2,128], index: 1, kind: input, shape index: {}]
  %s2 = inlined_call_operand.vmem [shape: bf16[1152,128], index: 2, kind: input, shape index: {}]
  %s3 = inlined_call_operand.vmem [shape: bf16[512,128], index: 3, kind: output, shape index: {0}]
  %s4 = inlined_call_operand.vmem [shape: f32[2,2,128], index: 4, kind: output, shape index: {1}]
  %5 = xla_tuple %s3, %s4
  %s6 = sld [smem:[#allocation0]]
  $region53: #{basicblock_forward.4} parent=0
    _
  %s8 = ssub.s32 1, %s6
  %s9 = scalar_select 0, %s8, %s6
  loop: start=0, step=1, limit=4
  $region2: #{basicblock_forward.4} parent=0 // loop_pre_header
    _
  $region3: #{basicblock_forward.4} parent=0 // loop_header
    %s11 = sphi 0, %s15
    %p12 = scmp.ge.s32.totalorder %s11, 4
    %s21 = sphi 0, %s23
    %s24 = sphi 0, %s21
    %s25 = sphi 0, %s24
    %s41 = sphi 0, %s25
    %s45 = sphi 0, %s45
    %s47 = sphi 0, %s45
    %s48 = sphi 0, %s47
    %s62 = sphi 0, %s48
    %s66 = sphi 0, %s66
    %s68 = sphi 0, %s66
    %s69 = sphi 0, %s68
    %s83 = sphi 0, %s69
    %s89 = sphi 0, %s91
    %s92 = sphi 0, %s89
    %s93 = sphi 0, %s92
    %s109 = sphi 0, %s93
    %s115 = sphi 0, %s117
    %s118 = sphi 0, %s115
    %s119 = sphi 0, %s118
    %s135 = sphi 0, %s119
  $region4: #{basicblock_forward.4} parent=0 // loop_header_branch
    %14 = sbr.rel (%p12) target = $region8
  $region5: #{basicblock_forward.4} parent=0 // loop_body
    %s16 = ssub.s32 %s11, 1
    %s17 = ssub.s32 %s11, 2
    %s18 = sadd.s32 %s11, 1
    %s19 = ssub.s32 %s11, %s18
    %p20 = scmp.eq.s32.totalorder %s19, 0
    %s22 = sadd.s32 %s21, 1
    %s23 = scalar_select %p20, %s21, %s22
    %p26 = pneg %p20
    %p27 = scmp.eq.s32.totalorder %s11, 1
    %p28 = por %p26, %p27
    %p29 = scmp.ne.s32.totalorder %s21, %s24
    %p30 = scmp.eq.s32.totalorder %s11, 0
    %p31 = por %p29, %p30
    %p32 = scmp.ne.s32.totalorder %s21, %s24
    %p33 = scmp.eq.s32.totalorder %s16, 1
    %p34 = por %p32, %p33
    %p35 = scmp.ne.s32.totalorder %s24, %s25
    %p36 = scmp.eq.s32.totalorder %s16, 0
    %p37 = por %p35, %p36
    %p38 = scmp.ne.s32.totalorder %s24, %s25
    %p39 = scmp.eq.s32.totalorder %s17, 1
    %p40 = por %p38, %p39
    %p42 = scmp.ne.s32.totalorder %s25, %s41
    %p43 = scmp.eq.s32.totalorder %s17, 0
    %p44 = por %p42, %p43
    %s46 = sadd.s32 %s45, 1
    %p49 = scmp.eq.s32.totalorder %s11, 1
    %p50 = scmp.ne.s32.totalorder %s45, %s47
    %p51 = scmp.eq.s32.totalorder %s11, 0
    %p52 = por %p50, %p51
    %p53 = scmp.ne.s32.totalorder %s45, %s47
    %p54 = scmp.eq.s32.totalorder %s16, 1
    %p55 = por %p53, %p54
    %p56 = scmp.ne.s32.totalorder %s47, %s48
    %p57 = scmp.eq.s32.totalorder %s16, 0
    %p58 = por %p56, %p57
    %p59 = scmp.ne.s32.totalorder %s47, %s48
    %p60 = scmp.eq.s32.totalorder %s17, 1
    %p61 = por %p59, %p60
    %p63 = scmp.ne.s32.totalorder %s48, %s62
    %p64 = scmp.eq.s32.totalorder %s17, 0
    %p65 = por %p63, %p64
    %s67 = sadd.s32 %s66, 1
    %p70 = scmp.eq.s32.totalorder %s11, 1
    %p71 = scmp.ne.s32.totalorder %s66, %s68
    %p72 = scmp.eq.s32.totalorder %s11, 0
    %p73 = por %p71, %p72
    %p74 = scmp.ne.s32.totalorder %s66, %s68
    %p75 = scmp.eq.s32.totalorder %s16, 1
    %p76 = por %p74, %p75
    %p77 = scmp.ne.s32.totalorder %s68, %s69
    %p78 = scmp.eq.s32.totalorder %s16, 0
    %p79 = por %p77, %p78
    %p80 = scmp.ne.s32.totalorder %s68, %s69
    %p81 = scmp.eq.s32.totalorder %s17, 1
    %p82 = por %p80, %p81
    %p84 = scmp.ne.s32.totalorder %s69, %s83
    %p85 = scmp.eq.s32.totalorder %s17, 0
    %p86 = por %p84, %p85
    %s87 = ssub.s32 %s11, %s18
    %p88 = scmp.eq.s32.totalorder %s87, 0
    %s90 = sadd.s32 %s89, 1
    %s91 = scalar_select %p88, %s89, %s90
    %p94 = pneg %p88
    %p95 = scmp.eq.s32.totalorder %s11, 1
    %p96 = por %p94, %p95
    %p97 = scmp.ne.s32.totalorder %s89, %s92
    %p98 = scmp.eq.s32.totalorder %s11, 0
    %p99 = por %p97, %p98
    %p100 = scmp.ne.s32.totalorder %s89, %s92
    %p101 = scmp.eq.s32.totalorder %s16, 1
    %p102 = por %p100, %p101
    %p103 = scmp.ne.s32.totalorder %s92, %s93
    %p104 = scmp.eq.s32.totalorder %s16, 0
    %p105 = por %p103, %p104
    %p106 = scmp.ne.s32.totalorder %s92, %s93
    %p107 = scmp.eq.s32.totalorder %s17, 1
    %p108 = por %p106, %p107
    %p110 = scmp.ne.s32.totalorder %s93, %s109
    %p111 = scmp.eq.s32.totalorder %s17, 0
    %p112 = por %p110, %p111
    %s113 = ssub.s32 %s11, %s18
    %p114 = scmp.eq.s32.totalorder %s113, 0
    %s116 = sadd.s32 %s115, 1
    %s117 = scalar_select %p114, %s115, %s116
    %p120 = pneg %p114
    %p121 = scmp.eq.s32.totalorder %s11, 1
    %p122 = por %p120, %p121
    %p123 = scmp.ne.s32.totalorder %s115, %s118
    %p124 = scmp.eq.s32.totalorder %s11, 0
    %p125 = por %p123, %p124
    %p126 = scmp.ne.s32.totalorder %s115, %s118
    %p127 = scmp.eq.s32.totalorder %s16, 1
    %p128 = por %p126, %p127
    %p129 = scmp.ne.s32.totalorder %s118, %s119
    %p130 = scmp.eq.s32.totalorder %s16, 0
    %p131 = por %p129, %p130
    %p132 = scmp.ne.s32.totalorder %s118, %s119
    %p133 = scmp.eq.s32.totalorder %s17, 1
    %p134 = por %p132, %p133
    %p136 = scmp.ne.s32.totalorder %s119, %s135
    %p137 = scmp.eq.s32.totalorder %s17, 0
    %p138 = por %p136, %p137
    %p139 = scmp.le.s32.totalorder 1, %s11
    %p140 = scmp.lt.s32.totalorder %s11, 3
    %p141 = pnand %p139, %p140
    %p142 = pneg %p141
    // Predicated region
    $region9: #{basicblock_forward.4} parent=5 // pred_check
      _
    $region10: #{basicblock_forward.4} parent=5 // pred_check_branch
      %144 = sbr.rel (%p141) target = $region12
    $region11: #{basicblock_forward.4} parent=5 // pred_region
      %s145 = ssub.s32 %s11, 1
      // Predicated region
      $region13: #{basicblock_forward.4} parent=11 // pred_check
        %p146 = pneg %p58
      $region14: #{basicblock_forward.4} parent=11 // pred_check_branch
        %148 = sbr.rel (%p146) target = $region16
      $region15: #{basicblock_forward.4} parent=11 // pred_region
        _
      $region16: #{basicblock_forward.4} parent=11 // pred_fallthru
        _
      // Predicated region
      $region17: #{basicblock_forward.4} parent=11 // pred_check
        %p149 = pneg %p79
      $region18: #{basicblock_forward.4} parent=11 // pred_check_branch
        %151 = sbr.rel (%p149) target = $region20
      $region19: #{basicblock_forward.4} parent=11 // pred_region
        _
      $region20: #{basicblock_forward.4} parent=11 // pred_fallthru
        _
    $region12: #{basicblock_forward.4} parent=5 // pred_fallthru
      _
    %p152 = scmp.lt.s32.totalorder %s11, 2
    // Predicated region
    $region21: #{basicblock_forward.4} parent=5 // pred_check
      %p153 = pneg %p152
    $region22: #{basicblock_forward.4} parent=5 // pred_check_branch
      %155 = sbr.rel (%p153) target = $region24
    $region23: #{basicblock_forward.4} parent=5 // pred_region
      // Predicated region
      $region25: #{basicblock_forward.4} parent=23 // pred_check
        %p156 = pneg %p31
      $region26: #{basicblock_forward.4} parent=23 // pred_check_branch
        %158 = sbr.rel (%p156) target = $region28
      $region27: #{basicblock_forward.4} parent=23 // pred_region
        %s159 = smul.u32 32, %s11
        %p160 = scmp.lt.s32.totalorder %s159, 63
        %s161 = scalar_select %p160, %s159, 63
        %s162 = smul.addr %s161, 4
        %s163 = scalar_lea.vmem %s0, %s162
        %s164 = smul.u32 32, %s11
      $region28: #{basicblock_forward.4} parent=23 // pred_fallthru
        _
    $region24: #{basicblock_forward.4} parent=5 // pred_fallthru
      _
    %p165 = scmp.le.s32.totalorder 1, %s11
    %p166 = scmp.lt.s32.totalorder %s11, 3
    %p167 = pnand %p165, %p166
    %p168 = pneg %p167
    // Predicated region
    $region29: #{basicblock_forward.4} parent=5 // pred_check
      _
    $region30: #{basicblock_forward.4} parent=5 // pred_check_branch
      %170 = sbr.rel (%p167) target = $region32
    $region31: #{basicblock_forward.4} parent=5 // pred_region
      %s171 = ssub.s32 %s11, 1
      %s172 = smul.u32 32, %s16
      %p173 = scmp.lt.s32.totalorder %s172, 63
      %s174 = scalar_select %p173, %s172, 63
      %s175 = smul.addr %s174, 4
      %s176 = scalar_lea.vmem %s0, %s175
      %p177 = pneg %p37
      %p178 = pneg %p34
      %p179 = pneg %p58
      %p180 = pneg %p55
      %p181 = pneg %p79
      %p182 = pneg %p76
      %p183 = pneg %p105
      %p184 = pneg %p102
      %s185 = smul.u32 32, %s16
      %p186 = scmp.lt.s32.totalorder %s185, 63
      %s187 = scalar_select %p186, %s185, 63
      %s188 = smul.addr %s187, 4
      %s189 = scalar_lea.vmem %s3, %s188
      %p190 = pneg %p131
      %p191 = pneg %p128
      %p192 = scmp.lt.s32.totalorder %s16, 1
      %s193 = scalar_select %p192, %s16, 1
      %s194 = smul.addr %s193, 2
      %s195 = scalar_lea.vmem %s4, %s194
      %s196 = smul.u32 32, %s16
      %p197 = scmp.lt.s32.totalorder %s196, 63
      %s198 = scalar_select %p197, %s196, 63
      %s199 = smul.addr %s198, 4
      %s200 = scalar_lea.vmem %s0, %s199
      %s201 = smul.u32 32, %s16
      %s202 = smul.u32 32, %s16
      %p203 = scmp.lt.s32.totalorder %s202, 63
      %s204 = scalar_select %p203, %s202, 63
      %s205 = smul.addr %s204, 4
      %s206 = scalar_lea.vmem %s3, %s205
      %s207 = smul.u32 32, %s16
      %p208 = scmp.lt.s32.totalorder %s16, 1
      %s209 = scalar_select %p208, %s16, 1
      %s210 = smul.addr %s209, 2
      %s211 = scalar_lea.vmem %s4, %s210
      %v213 = vld [vmem:[%s200] sm:$0xf]
      %v214 = vld [vmem:[%s200 + $0x4] sm:$0xf]
      %v215 = vld [vmem:[%s200 + $0x8] sm:$0xf]
      %v216 = vld [vmem:[%s200 + $0xc] sm:$0xf]
      %v217 = vld [vmem:[%s200 + $0x10] sm:$0xf]
      %v218 = vld [vmem:[%s200 + $0x14] sm:$0xf]
      %v219 = vld [vmem:[%s200 + $0x18] sm:$0xf]
      %v220 = vld [vmem:[%s200 + $0x1c] sm:$0xf]
      %v221 = vld [vmem:[%s200 + $0x20] sm:$0xf]
      %v222 = vld [vmem:[%s200 + $0x24] sm:$0xf]
      %v223 = vld [vmem:[%s200 + $0x28] sm:$0xf]
      %v224 = vld [vmem:[%s200 + $0x2c] sm:$0xf]
      %v225 = vld [vmem:[%s200 + $0x30] sm:$0xf]
      %v226 = vld [vmem:[%s200 + $0x34] sm:$0xf]
      %v227 = vld [vmem:[%s200 + $0x38] sm:$0xf]
      %v228 = vld [vmem:[%s200 + $0x3c] sm:$0xf]
      %v229 = vld [vmem:[%s200 + $0x40] sm:$0xf]
      %v230 = vld [vmem:[%s200 + $0x44] sm:$0xf]
      %v231 = vld [vmem:[%s200 + $0x48] sm:$0xf]
      %v232 = vld [vmem:[%s200 + $0x4c] sm:$0xf]
      %v233 = vld [vmem:[%s200 + $0x50] sm:$0xf]
      %v234 = vld [vmem:[%s200 + $0x54] sm:$0xf]
      %v235 = vld [vmem:[%s200 + $0x58] sm:$0xf]
      %v236 = vld [vmem:[%s200 + $0x5c] sm:$0xf]
      %v237 = vld [vmem:[%s200 + $0x60] sm:$0xf]
      %v238 = vld [vmem:[%s200 + $0x64] sm:$0xf]
      %v239 = vld [vmem:[%s200 + $0x68] sm:$0xf]
      %v240 = vld [vmem:[%s200 + $0x6c] sm:$0xf]
      %v241 = vld [vmem:[%s200 + $0x70] sm:$0xf]
      %v242 = vld [vmem:[%s200 + $0x74] sm:$0xf]
      %v243 = vld [vmem:[%s200 + $0x78] sm:$0xf]
      %v244 = vld [vmem:[%s200 + $0x7c] sm:$0xf]
      %v245 = vld [vmem:[%s1] sm:$0x1]
      %v246 = vld [vmem:[%s1 + $0x1] sm:$0x1]
      %v247 = vunpack.c.l.bf16 %v213
      %v248 = vunpack.c.l.bf16 %v214
      %v249 = vunpack.c.l.bf16 %v215
      %v250 = vunpack.c.l.bf16 %v216
      %v251 = vunpack.c.l.bf16 %v217
      %v252 = vunpack.c.l.bf16 %v218
      %v253 = vunpack.c.l.bf16 %v219
      %v254 = vunpack.c.l.bf16 %v220
      %v255 = vunpack.c.l.bf16 %v221
      %v256 = vunpack.c.l.bf16 %v222
      %v257 = vunpack.c.l.bf16 %v223
      %v258 = vunpack.c.l.bf16 %v224
      %v259 = vunpack.c.l.bf16 %v225
      %v260 = vunpack.c.l.bf16 %v226
      %v261 = vunpack.c.l.bf16 %v227
      %v262 = vunpack.c.l.bf16 %v228
      %v263 = vunpack.c.l.bf16 %v229
      %v264 = vunpack.c.l.bf16 %v230
      %v265 = vunpack.c.l.bf16 %v231
      %v266 = vunpack.c.l.bf16 %v232
      %v267 = vunpack.c.l.bf16 %v233
      %v268 = vunpack.c.l.bf16 %v234
      %v269 = vunpack.c.l.bf16 %v235
      %v270 = vunpack.c.l.bf16 %v236
      %v271 = vunpack.c.l.bf16 %v237
      %v272 = vunpack.c.l.bf16 %v238
      %v273 = vunpack.c.l.bf16 %v239
      %v274 = vunpack.c.l.bf16 %v240
      %v275 = vunpack.c.l.bf16 %v241
      %v276 = vunpack.c.l.bf16 %v242
      %v277 = vunpack.c.l.bf16 %v243
      %v278 = vunpack.c.l.bf16 %v244
      %v279 = vlaneseq
      %v280 = vshrl.u32 %v279, 7
      %v281 = vsub.s32 0, %v280
      %v282 = vrot.slane %v245, %v281
      %v283 = vmul.f32 %v247, %v282
      %v284 = vmul.f32 %v248, %v282
      %v285 = vmul.f32 %v249, %v282
      %v286 = vmul.f32 %v250, %v282
      %v287 = vmul.f32 %v251, %v282
      %v288 = vmul.f32 %v252, %v282
      %v289 = vmul.f32 %v253, %v282
      %v290 = vmul.f32 %v254, %v282
      %v291 = vmul.f32 %v255, %v282
      %v292 = vmul.f32 %v256, %v282
      %v293 = vmul.f32 %v257, %v282
      %v294 = vmul.f32 %v258, %v282
      %v295 = vmul.f32 %v259, %v282
      %v296 = vmul.f32 %v260, %v282
      %v297 = vmul.f32 %v261, %v282
      %v298 = vmul.f32 %v262, %v282
      %v299 = vmul.f32 %v263, %v282
      %v300 = vmul.f32 %v264, %v282
      %v301 = vmul.f32 %v265, %v282
      %v302 = vmul.f32 %v266, %v282
      %v303 = vmul.f32 %v267, %v282
      %v304 = vmul.f32 %v268, %v282
      %v305 = vmul.f32 %v269, %v282
      %v306 = vmul.f32 %v270, %v282
      %v307 = vmul.f32 %v271, %v282
      %v308 = vmul.f32 %v272, %v282
      %v309 = vmul.f32 %v273, %v282
      %v310 = vmul.f32 %v274, %v282
      %v311 = vmul.f32 %v275, %v282
      %v312 = vmul.f32 %v276, %v282
      %v313 = vmul.f32 %v277, %v282
      %v314 = vmul.f32 %v278, %v282
      %v315 = vlaneseq
      %v316 = vshrl.u32 %v315, 7
      %v317 = vsub.s32 0, %v316
      %v318 = vrot.slane %v246, %v317
      %v319 = vadd.f32 %v283, %v318
      %v320 = vadd.f32 %v284, %v318
      %v321 = vadd.f32 %v285, %v318
      %v322 = vadd.f32 %v286, %v318
      %v323 = vadd.f32 %v287, %v318
      %v324 = vadd.f32 %v288, %v318
      %v325 = vadd.f32 %v289, %v318
      %v326 = vadd.f32 %v290, %v318
      %v327 = vadd.f32 %v291, %v318
      %v328 = vadd.f32 %v292, %v318
      %v329 = vadd.f32 %v293, %v318
      %v330 = vadd.f32 %v294, %v318
      %v331 = vadd.f32 %v295, %v318
      %v332 = vadd.f32 %v296, %v318
      %v333 = vadd.f32 %v297, %v318
      %v334 = vadd.f32 %v298, %v318
      %v335 = vadd.f32 %v299, %v318
      %v336 = vadd.f32 %v300, %v318
      %v337 = vadd.f32 %v301, %v318
      %v338 = vadd.f32 %v302, %v318
      %v339 = vadd.f32 %v303, %v318
      %v340 = vadd.f32 %v304, %v318
      %v341 = vadd.f32 %v305, %v318
      %v342 = vadd.f32 %v306, %v318
      %v343 = vadd.f32 %v307, %v318
      %v344 = vadd.f32 %v308, %v318
      %v345 = vadd.f32 %v309, %v318
      %v346 = vadd.f32 %v310, %v318
      %v347 = vadd.f32 %v311, %v318
      %v348 = vadd.f32 %v312, %v318
      %v349 = vadd.f32 %v313, %v318
      %v350 = vadd.f32 %v314, %v318
      %v351 = vmax.f32 %v319, 0.0
      %v352 = vmax.f32 %v320, 0.0
      %v353 = vmax.f32 %v321, 0.0
      %v354 = vmax.f32 %v322, 0.0
      %v355 = vmax.f32 %v323, 0.0
      %v356 = vmax.f32 %v324, 0.0
      %v357 = vmax.f32 %v325, 0.0
      %v358 = vmax.f32 %v326, 0.0
      %v359 = vmax.f32 %v327, 0.0
      %v360 = vmax.f32 %v328, 0.0
      %v361 = vmax.f32 %v329, 0.0
      %v362 = vmax.f32 %v330, 0.0
      %v363 = vmax.f32 %v331, 0.0
      %v364 = vmax.f32 %v332, 0.0
      %v365 = vmax.f32 %v333, 0.0
      %v366 = vmax.f32 %v334, 0.0
      %v367 = vmax.f32 %v335, 0.0
      %v368 = vmax.f32 %v336, 0.0
      %v369 = vmax.f32 %v337, 0.0
      %v370 = vmax.f32 %v338, 0.0
      %v371 = vmax.f32 %v339, 0.0
      %v372 = vmax.f32 %v340, 0.0
      %v373 = vmax.f32 %v341, 0.0
      %v374 = vmax.f32 %v342, 0.0
      %v375 = vmax.f32 %v343, 0.0
      %v376 = vmax.f32 %v344, 0.0
      %v377 = vmax.f32 %v345, 0.0
      %v378 = vmax.f32 %v346, 0.0
      %v379 = vmax.f32 %v347, 0.0
      %v380 = vmax.f32 %v348, 0.0
      %v381 = vmax.f32 %v349, 0.0
      %v382 = vmax.f32 %v350, 0.0
      %v383 = vpack.c.bf16 %v352, %v351
      %v384 = vpack.c.bf16 %v354, %v353
      %v385 = vpack.c.bf16 %v356, %v355
      %v386 = vpack.c.bf16 %v358, %v357
      %v387 = vpack.c.bf16 %v360, %v359
      %v388 = vpack.c.bf16 %v362, %v361
      %v389 = vpack.c.bf16 %v364, %v363
      %v390 = vpack.c.bf16 %v366, %v365
      %v391 = vpack.c.bf16 %v368, %v367
      %v392 = vpack.c.bf16 %v370, %v369
      %v393 = vpack.c.bf16 %v372, %v371
      %v394 = vpack.c.bf16 %v374, %v373
      %v395 = vpack.c.bf16 %v376, %v375
      %v396 = vpack.c.bf16 %v378, %v377
      %v397 = vpack.c.bf16 %v380, %v379
      %v398 = vpack.c.bf16 %v382, %v381
      %399 = vst [vmem:[#allocation2] sm:$0xff] 0
      %400 = vst [vmem:[#allocation2 + $0x8] sm:$0xff] 0
      %401 = vst [vmem:[#allocation2 + $0x90] sm:$0xff] 0
      %402 = vst [vmem:[#allocation2 + $0x98] sm:$0xff] 0
      %403 = vst [vmem:[#allocation2 + $0x10] sm:$0xff] %v383
      %404 = vst [vmem:[#allocation2 + $0x18] sm:$0xff] %v384
      %405 = vst [vmem:[#allocation2 + $0x20] sm:$0xff] %v385
      %406 = vst [vmem:[#allocation2 + $0x28] sm:$0xff] %v386
      %407 = vst [vmem:[#allocation2 + $0x30] sm:$0xff] %v387
      %408 = vst [vmem:[#allocation2 + $0x38] sm:$0xff] %v388
      %409 = vst [vmem:[#allocation2 + $0x40] sm:$0xff] %v389
      %410 = vst [vmem:[#allocation2 + $0x48] sm:$0xff] %v390
      %411 = vst [vmem:[#allocation2 + $0x50] sm:$0xff] %v391
      %412 = vst [vmem:[#allocation2 + $0x58] sm:$0xff] %v392
      %413 = vst [vmem:[#allocation2 + $0x60] sm:$0xff] %v393
      %414 = vst [vmem:[#allocation2 + $0x68] sm:$0xff] %v394
      %415 = vst [vmem:[#allocation2 + $0x70] sm:$0xff] %v395
      %416 = vst [vmem:[#allocation2 + $0x78] sm:$0xff] %v396
      %417 = vst [vmem:[#allocation2 + $0x80] sm:$0xff] %v397
      %418 = vst [vmem:[#allocation2 + $0x88] sm:$0xff] %v398
      %v419 = vlaneseq
      %v420 = vshrl.u32 %v419, 7
      %v421 = vadd.s32 %v420, 8
      %v422 = vadd.s32 %v420, 16
      %v423 = vadd.s32 %v420, 24
      %v424 = vadd.s32 %v420, 32
      %v425 = vadd.s32 %v420, 40
      %v426 = vadd.s32 %v420, 48
      %v427 = vadd.s32 %v420, 56
      %v428 = vadd.s32 %v420, 64
      %v429 = vadd.s32 %v420, 72
      %v430 = vadd.s32 %v420, 80
      %v431 = vadd.s32 %v420, 88
      %v432 = vadd.s32 %v420, 96
      %v433 = vadd.s32 %v420, 104
      %v434 = vadd.s32 %v420, 112
      %v435 = vadd.s32 %v420, 120
      %v436 = vadd.s32 %v420, 128
      %v437 = vadd.s32 %v420, 136
      %v438 = vadd.s32 %v420, 144
      %v439 = vadd.s32 %v420, 152
      %v440 = vadd.s32 %v420, 160
      %v441 = vadd.s32 %v420, 168
      %v442 = vadd.s32 %v420, 176
      %v443 = vadd.s32 %v420, 184
      %v444 = vadd.s32 %v420, 192
      %v445 = vadd.s32 %v420, 200
      %v446 = vadd.s32 %v420, 208
      %v447 = vadd.s32 %v420, 216
      %v448 = vadd.s32 %v420, 224
      %v449 = vadd.s32 %v420, 232
      %v450 = vadd.s32 %v420, 240
      %v451 = vadd.s32 %v420, 248
      %vm452 = vcmp.lt.s32.totalorder %v420, 0
      %v453 = vsub.s32 0, %v420
      %v454 = vsel %vm452, %v453, %v420
      %v455 = vshrl.u32 %v454, 4
      %v456 = vand.u32 %v454, 15
      %v457 = vsub.s32 0, %v456
      %v458 = vsel %vm452, %v457, %v456
      %vm459 = vcmp.lt.s32.totalorder %v421, 0
      %v460 = vsub.s32 0, %v421
      %v461 = vsel %vm459, %v460, %v421
      %v462 = vshrl.u32 %v461, 4
      %v463 = vand.u32 %v461, 15
      %v464 = vsub.s32 0, %v463
      %v465 = vsel %vm459, %v464, %v463
      %vm466 = vcmp.lt.s32.totalorder %v422, 0
      %v467 = vsub.s32 0, %v422
      %v468 = vsel %vm466, %v467, %v422
      %v469 = vshrl.u32 %v468, 4
      %v470 = vand.u32 %v468, 15
      %v471 = vsub.s32 0, %v470
      %v472 = vsel %vm466, %v471, %v470
      %vm473 = vcmp.lt.s32.totalorder %v423, 0
      %v474 = vsub.s32 0, %v423
      %v475 = vsel %vm473, %v474, %v423
      %v476 = vshrl.u32 %v475, 4
      %v477 = vand.u32 %v475, 15
      %v478 = vsub.s32 0, %v477
      %v479 = vsel %vm473, %v478, %v477
      %vm480 = vcmp.lt.s32.totalorder %v424, 0
      %v481 = vsub.s32 0, %v424
      %v482 = vsel %vm480, %v481, %v424
      %v483 = vshrl.u32 %v482, 4
      %v484 = vand.u32 %v482, 15
      %v485 = vsub.s32 0, %v484
      %v486 = vsel %vm480, %v485, %v484
      %vm487 = vcmp.lt.s32.totalorder %v425, 0
      %v488 = vsub.s32 0, %v425
      %v489 = vsel %vm487, %v488, %v425
      %v490 = vshrl.u32 %v489, 4
      %v491 = vand.u32 %v489, 15
      %v492 = vsub.s32 0, %v491
      %v493 = vsel %vm487, %v492, %v491
      %vm494 = vcmp.lt.s32.totalorder %v426, 0
      %v495 = vsub.s32 0, %v426
      %v496 = vsel %vm494, %v495, %v426
      %v497 = vshrl.u32 %v496, 4
      %v498 = vand.u32 %v496, 15
      %v499 = vsub.s32 0, %v498
      %v500 = vsel %vm494, %v499, %v498
      %vm501 = vcmp.lt.s32.totalorder %v427, 0
      %v502 = vsub.s32 0, %v427
      %v503 = vsel %vm501, %v502, %v427
      %v504 = vshrl.u32 %v503, 4
      %v505 = vand.u32 %v503, 15
      %v506 = vsub.s32 0, %v505
      %v507 = vsel %vm501, %v506, %v505
      %vm508 = vcmp.lt.s32.totalorder %v428, 0
      %v509 = vsub.s32 0, %v428
      %v510 = vsel %vm508, %v509, %v428
      %v511 = vshrl.u32 %v510, 4
      %v512 = vand.u32 %v510, 15
      %v513 = vsub.s32 0, %v512
      %v514 = vsel %vm508, %v513, %v512
      %vm515 = vcmp.lt.s32.totalorder %v429, 0
      %v516 = vsub.s32 0, %v429
      %v517 = vsel %vm515, %v516, %v429
      %v518 = vshrl.u32 %v517, 4
      %v519 = vand.u32 %v517, 15
      %v520 = vsub.s32 0, %v519
      %v521 = vsel %vm515, %v520, %v519
      %vm522 = vcmp.lt.s32.totalorder %v430, 0
      %v523 = vsub.s32 0, %v430
      %v524 = vsel %vm522, %v523, %v430
      %v525 = vshrl.u32 %v524, 4
      %v526 = vand.u32 %v524, 15
      %v527 = vsub.s32 0, %v526
      %v528 = vsel %vm522, %v527, %v526
      %vm529 = vcmp.lt.s32.totalorder %v431, 0
      %v530 = vsub.s32 0, %v431
      %v531 = vsel %vm529, %v530, %v431
      %v532 = vshrl.u32 %v531, 4
      %v533 = vand.u32 %v531, 15
      %v534 = vsub.s32 0, %v533
      %v535 = vsel %vm529, %v534, %v533
      %vm536 = vcmp.lt.s32.totalorder %v432, 0
      %v537 = vsub.s32 0, %v432
      %v538 = vsel %vm536, %v537, %v432
      %v539 = vshrl.u32 %v538, 4
      %v540 = vand.u32 %v538, 15
      %v541 = vsub.s32 0, %v540
      %v542 = vsel %vm536, %v541, %v540
      %vm543 = vcmp.lt.s32.totalorder %v433, 0
      %v544 = vsub.s32 0, %v433
      %v545 = vsel %vm543, %v544, %v433
      %v546 = vshrl.u32 %v545, 4
      %v547 = vand.u32 %v545, 15
      %v548 = vsub.s32 0, %v547
      %v549 = vsel %vm543, %v548, %v547
      %vm550 = vcmp.lt.s32.totalorder %v434, 0
      %v551 = vsub.s32 0, %v434
      %v552 = vsel %vm550, %v551, %v434
      %v553 = vshrl.u32 %v552, 4
      %v554 = vand.u32 %v552, 15
      %v555 = vsub.s32 0, %v554
      %v556 = vsel %vm550, %v555, %v554
      %vm557 = vcmp.lt.s32.totalorder %v435, 0
      %v558 = vsub.s32 0, %v435
      %v559 = vsel %vm557, %v558, %v435
      %v560 = vshrl.u32 %v559, 4
      %v561 = vand.u32 %v559, 15
      %v562 = vsub.s32 0, %v561
      %v563 = vsel %vm557, %v562, %v561
      %vm564 = vcmp.lt.s32.totalorder %v436, 0
      %v565 = vsub.s32 0, %v436
      %v566 = vsel %vm564, %v565, %v436
      %v567 = vshrl.u32 %v566, 4
      %v568 = vand.u32 %v566, 15
      %v569 = vsub.s32 0, %v568
      %v570 = vsel %vm564, %v569, %v568
      %vm571 = vcmp.lt.s32.totalorder %v437, 0
      %v572 = vsub.s32 0, %v437
      %v573 = vsel %vm571, %v572, %v437
      %v574 = vshrl.u32 %v573, 4
      %v575 = vand.u32 %v573, 15
      %v576 = vsub.s32 0, %v575
      %v577 = vsel %vm571, %v576, %v575
      %vm578 = vcmp.lt.s32.totalorder %v438, 0
      %v579 = vsub.s32 0, %v438
      %v580 = vsel %vm578, %v579, %v438
      %v581 = vshrl.u32 %v580, 4
      %v582 = vand.u32 %v580, 15
      %v583 = vsub.s32 0, %v582
      %v584 = vsel %vm578, %v583, %v582
      %vm585 = vcmp.lt.s32.totalorder %v439, 0
      %v586 = vsub.s32 0, %v439
      %v587 = vsel %vm585, %v586, %v439
      %v588 = vshrl.u32 %v587, 4
      %v589 = vand.u32 %v587, 15
      %v590 = vsub.s32 0, %v589
      %v591 = vsel %vm585, %v590, %v589
      %vm592 = vcmp.lt.s32.totalorder %v440, 0
      %v593 = vsub.s32 0, %v440
      %v594 = vsel %vm592, %v593, %v440
      %v595 = vshrl.u32 %v594, 4
      %v596 = vand.u32 %v594, 15
      %v597 = vsub.s32 0, %v596
      %v598 = vsel %vm592, %v597, %v596
      %vm599 = vcmp.lt.s32.totalorder %v441, 0
      %v600 = vsub.s32 0, %v441
      %v601 = vsel %vm599, %v600, %v441
      %v602 = vshrl.u32 %v601, 4
      %v603 = vand.u32 %v601, 15
      %v604 = vsub.s32 0, %v603
      %v605 = vsel %vm599, %v604, %v603
      %vm606 = vcmp.lt.s32.totalorder %v442, 0
      %v607 = vsub.s32 0, %v442
      %v608 = vsel %vm606, %v607, %v442
      %v609 = vshrl.u32 %v608, 4
      %v610 = vand.u32 %v608, 15
      %v611 = vsub.s32 0, %v610
      %v612 = vsel %vm606, %v611, %v610
      %vm613 = vcmp.lt.s32.totalorder %v443, 0
      %v614 = vsub.s32 0, %v443
      %v615 = vsel %vm613, %v614, %v443
      %v616 = vshrl.u32 %v615, 4
      %v617 = vand.u32 %v615, 15
      %v618 = vsub.s32 0, %v617
      %v619 = vsel %vm613, %v618, %v617
      %vm620 = vcmp.lt.s32.totalorder %v444, 0
      %v621 = vsub.s32 0, %v444
      %v622 = vsel %vm620, %v621, %v444
      %v623 = vshrl.u32 %v622, 4
      %v624 = vand.u32 %v622, 15
      %v625 = vsub.s32 0, %v624
      %v626 = vsel %vm620, %v625, %v624
      %vm627 = vcmp.lt.s32.totalorder %v445, 0
      %v628 = vsub.s32 0, %v445
      %v629 = vsel %vm627, %v628, %v445
      %v630 = vshrl.u32 %v629, 4
      %v631 = vand.u32 %v629, 15
      %v632 = vsub.s32 0, %v631
      %v633 = vsel %vm627, %v632, %v631
      %vm634 = vcmp.lt.s32.totalorder %v446, 0
      %v635 = vsub.s32 0, %v446
      %v636 = vsel %vm634, %v635, %v446
      %v637 = vshrl.u32 %v636, 4
      %v638 = vand.u32 %v636, 15
      %v639 = vsub.s32 0, %v638
      %v640 = vsel %vm634, %v639, %v638
      %vm641 = vcmp.lt.s32.totalorder %v447, 0
      %v642 = vsub.s32 0, %v447
      %v643 = vsel %vm641, %v642, %v447
      %v644 = vshrl.u32 %v643, 4
      %v645 = vand.u32 %v643, 15
      %v646 = vsub.s32 0, %v645
      %v647 = vsel %vm641, %v646, %v645
      %vm648 = vcmp.lt.s32.totalorder %v448, 0
      %v649 = vsub.s32 0, %v448
      %v650 = vsel %vm648, %v649, %v448
      %v651 = vshrl.u32 %v650, 4
      %v652 = vand.u32 %v650, 15
      %v653 = vsub.s32 0, %v652
      %v654 = vsel %vm648, %v653, %v652
      %vm655 = vcmp.lt.s32.totalorder %v449, 0
      %v656 = vsub.s32 0, %v449
      %v657 = vsel %vm655, %v656, %v449
      %v658 = vshrl.u32 %v657, 4
      %v659 = vand.u32 %v657, 15
      %v660 = vsub.s32 0, %v659
      %v661 = vsel %vm655, %v660, %v659
      %vm662 = vcmp.lt.s32.totalorder %v450, 0
      %v663 = vsub.s32 0, %v450
      %v664 = vsel %vm662, %v663, %v450
      %v665 = vshrl.u32 %v664, 4
      %v666 = vand.u32 %v664, 15
      %v667 = vsub.s32 0, %v666
      %v668 = vsel %vm662, %v667, %v666
      %vm669 = vcmp.lt.s32.totalorder %v451, 0
      %v670 = vsub.s32 0, %v451
      %v671 = vsel %vm669, %v670, %v451
      %v672 = vshrl.u32 %v671, 4
      %v673 = vand.u32 %v671, 15
      %v674 = vsub.s32 0, %v673
      %v675 = vsel %vm669, %v674, %v673
      %vm676 = vcmp.ne.s32.totalorder %v458, 0
      %vm677 = vcmp.ne.s32.totalorder %v465, 0
      %vm678 = vcmp.ne.s32.totalorder %v472, 0
      %vm679 = vcmp.ne.s32.totalorder %v479, 0
      %vm680 = vcmp.ne.s32.totalorder %v486, 0
      %vm681 = vcmp.ne.s32.totalorder %v493, 0
      %vm682 = vcmp.ne.s32.totalorder %v500, 0
      %vm683 = vcmp.ne.s32.totalorder %v507, 0
      %vm684 = vcmp.ne.s32.totalorder %v514, 0
      %vm685 = vcmp.ne.s32.totalorder %v521, 0
      %vm686 = vcmp.ne.s32.totalorder %v528, 0
      %vm687 = vcmp.ne.s32.totalorder %v535, 0
      %vm688 = vcmp.ne.s32.totalorder %v542, 0
      %vm689 = vcmp.ne.s32.totalorder %v549, 0
      %vm690 = vcmp.ne.s32.totalorder %v556, 0
      %vm691 = vcmp.ne.s32.totalorder %v563, 0
      %vm692 = vcmp.ne.s32.totalorder %v570, 0
      %vm693 = vcmp.ne.s32.totalorder %v577, 0
      %vm694 = vcmp.ne.s32.totalorder %v584, 0
      %vm695 = vcmp.ne.s32.totalorder %v591, 0
      %vm696 = vcmp.ne.s32.totalorder %v598, 0
      %vm697 = vcmp.ne.s32.totalorder %v605, 0
      %vm698 = vcmp.ne.s32.totalorder %v612, 0
      %vm699 = vcmp.ne.s32.totalorder %v619, 0
      %vm700 = vcmp.ne.s32.totalorder %v626, 0
      %vm701 = vcmp.ne.s32.totalorder %v633, 0
      %vm702 = vcmp.ne.s32.totalorder %v640, 0
      %vm703 = vcmp.ne.s32.totalorder %v647, 0
      %vm704 = vcmp.ne.s32.totalorder %v654, 0
      %vm705 = vcmp.ne.s32.totalorder %v661, 0
      %vm706 = vcmp.ne.s32.totalorder %v668, 0
      %vm707 = vcmp.ne.s32.totalorder %v675, 0
      %vm708 = vcmp.lt.s32.totalorder %v458, 0
      %vm709 = vcmp.lt.s32.totalorder %v465, 0
      %vm710 = vcmp.lt.s32.totalorder %v472, 0
      %vm711 = vcmp.lt.s32.totalorder %v479, 0
      %vm712 = vcmp.lt.s32.totalorder %v486, 0
      %vm713 = vcmp.lt.s32.totalorder %v493, 0
      %vm714 = vcmp.lt.s32.totalorder %v500, 0
      %vm715 = vcmp.lt.s32.totalorder %v507, 0
      %vm716 = vcmp.lt.s32.totalorder %v514, 0
      %vm717 = vcmp.lt.s32.totalorder %v521, 0
      %vm718 = vcmp.lt.s32.totalorder %v528, 0
      %vm719 = vcmp.lt.s32.totalorder %v535, 0
      %vm720 = vcmp.lt.s32.totalorder %v542, 0
      %vm721 = vcmp.lt.s32.totalorder %v549, 0
      %vm722 = vcmp.lt.s32.totalorder %v556, 0
      %vm723 = vcmp.lt.s32.totalorder %v563, 0
      %vm724 = vcmp.lt.s32.totalorder %v570, 0
      %vm725 = vcmp.lt.s32.totalorder %v577, 0
      %vm726 = vcmp.lt.s32.totalorder %v584, 0
      %vm727 = vcmp.lt.s32.totalorder %v591, 0
      %vm728 = vcmp.lt.s32.totalorder %v598, 0
      %vm729 = vcmp.lt.s32.totalorder %v605, 0
      %vm730 = vcmp.lt.s32.totalorder %v612, 0
      %vm731 = vcmp.lt.s32.totalorder %v619, 0
      %vm732 = vcmp.lt.s32.totalorder %v626, 0
      %vm733 = vcmp.lt.s32.totalorder %v633, 0
      %vm734 = vcmp.lt.s32.totalorder %v640, 0
      %vm735 = vcmp.lt.s32.totalorder %v647, 0
      %vm736 = vcmp.lt.s32.totalorder %v654, 0
      %vm737 = vcmp.lt.s32.totalorder %v661, 0
      %vm738 = vcmp.lt.s32.totalorder %v668, 0
      %vm739 = vcmp.lt.s32.totalorder %v675, 0
      %vm740 = vmand %vm708, %vm676
      %vm741 = vmand %vm709, %vm677
      %vm742 = vmand %vm710, %vm678
      %vm743 = vmand %vm711, %vm679
      %vm744 = vmand %vm712, %vm680
      %vm745 = vmand %vm713, %vm681
      %vm746 = vmand %vm714, %vm682
      %vm747 = vmand %vm715, %vm683
      %vm748 = vmand %vm716, %vm684
      %vm749 = vmand %vm717, %vm685
      %vm750 = vmand %vm718, %vm686
      %vm751 = vmand %vm719, %vm687
      %vm752 = vmand %vm720, %vm688
      %vm753 = vmand %vm721, %vm689
      %vm754 = vmand %vm722, %vm690
      %vm755 = vmand %vm723, %vm691
      %vm756 = vmand %vm724, %vm692
      %vm757 = vmand %vm725, %vm693
      %vm758 = vmand %vm726, %vm694
      %vm759 = vmand %vm727, %vm695
      %vm760 = vmand %vm728, %vm696
      %vm761 = vmand %vm729, %vm697
      %vm762 = vmand %vm730, %vm698
      %vm763 = vmand %vm731, %vm699
      %vm764 = vmand %vm732, %vm700
      %vm765 = vmand %vm733, %vm701
      %vm766 = vmand %vm734, %vm702
      %vm767 = vmand %vm735, %vm703
      %vm768 = vmand %vm736, %vm704
      %vm769 = vmand %vm737, %vm705
      %vm770 = vmand %vm738, %vm706
      %vm771 = vmand %vm739, %vm707
      %v772 = vadd.s32 %v458, 16
      %v773 = vadd.s32 %v465, 16
      %v774 = vadd.s32 %v472, 16
      %v775 = vadd.s32 %v479, 16
      %v776 = vadd.s32 %v486, 16
      %v777 = vadd.s32 %v493, 16
      %v778 = vadd.s32 %v500, 16
      %v779 = vadd.s32 %v507, 16
      %v780 = vadd.s32 %v514, 16
      %v781 = vadd.s32 %v521, 16
      %v782 = vadd.s32 %v528, 16
      %v783 = vadd.s32 %v535, 16
      %v784 = vadd.s32 %v542, 16
      %v785 = vadd.s32 %v549, 16
      %v786 = vadd.s32 %v556, 16
      %v787 = vadd.s32 %v563, 16
      %v788 = vadd.s32 %v570, 16
      %v789 = vadd.s32 %v577, 16
      %v790 = vadd.s32 %v584, 16
      %v791 = vadd.s32 %v591, 16
      %v792 = vadd.s32 %v598, 16
      %v793 = vadd.s32 %v605, 16
      %v794 = vadd.s32 %v612, 16
      %v795 = vadd.s32 %v619, 16
      %v796 = vadd.s32 %v626, 16
      %v797 = vadd.s32 %v633, 16
      %v798 = vadd.s32 %v640, 16
      %v799 = vadd.s32 %v647, 16
      %v800 = vadd.s32 %v654, 16
      %v801 = vadd.s32 %v661, 16
      %v802 = vadd.s32 %v668, 16
      %v803 = vadd.s32 %v675, 16
      %v804 = vsel %vm740, %v772, %v458
      %v805 = vsel %vm741, %v773, %v465
      %v806 = vsel %vm742, %v774, %v472
      %v807 = vsel %vm743, %v775, %v479
      %v808 = vsel %vm744, %v776, %v486
      %v809 = vsel %vm745, %v777, %v493
      %v810 = vsel %vm746, %v778, %v500
      %v811 = vsel %vm747, %v779, %v507
      %v812 = vsel %vm748, %v780, %v514
      %v813 = vsel %vm749, %v781, %v521
      %v814 = vsel %vm750, %v782, %v528
      %v815 = vsel %vm751, %v783, %v535
      %v816 = vsel %vm752, %v784, %v542
      %v817 = vsel %vm753, %v785, %v549
      %v818 = vsel %vm754, %v786, %v556
      %v819 = vsel %vm755, %v787, %v563
      %v820 = vsel %vm756, %v788, %v570
      %v821 = vsel %vm757, %v789, %v577
      %v822 = vsel %vm758, %v790, %v584
      %v823 = vsel %vm759, %v791, %v591
      %v824 = vsel %vm760, %v792, %v598
      %v825 = vsel %vm761, %v793, %v605
      %v826 = vsel %vm762, %v794, %v612
      %v827 = vsel %vm763, %v795, %v619
      %v828 = vsel %vm764, %v796, %v626
      %v829 = vsel %vm765, %v797, %v633
      %v830 = vsel %vm766, %v798, %v640
      %v831 = vsel %vm767, %v799, %v647
      %v832 = vsel %vm768, %v800, %v654
      %v833 = vsel %vm769, %v801, %v661
      %v834 = vsel %vm770, %v802, %v668
      %v835 = vsel %vm771, %v803, %v675
      %vm836 = vcmp.gt.s32.totalorder %v804, 0
      %vm837 = vcmp.gt.s32.totalorder %v805, 0
      %vm838 = vcmp.gt.s32.totalorder %v806, 0
      %vm839 = vcmp.gt.s32.totalorder %v807, 0
      %vm840 = vcmp.gt.s32.totalorder %v808, 0
      %vm841 = vcmp.gt.s32.totalorder %v809, 0
      %vm842 = vcmp.gt.s32.totalorder %v810, 0
      %vm843 = vcmp.gt.s32.totalorder %v811, 0
      %vm844 = vcmp.gt.s32.totalorder %v812, 0
      %vm845 = vcmp.gt.s32.totalorder %v813, 0
      %vm846 = vcmp.gt.s32.totalorder %v814, 0
      %vm847 = vcmp.gt.s32.totalorder %v815, 0
      %vm848 = vcmp.gt.s32.totalorder %v816, 0
      %vm849 = vcmp.gt.s32.totalorder %v817, 0
      %vm850 = vcmp.gt.s32.totalorder %v818, 0
      %vm851 = vcmp.gt.s32.totalorder %v819, 0
      %vm852 = vcmp.gt.s32.totalorder %v820, 0
      %vm853 = vcmp.gt.s32.totalorder %v821, 0
      %vm854 = vcmp.gt.s32.totalorder %v822, 0
      %vm855 = vcmp.gt.s32.totalorder %v823, 0
      %vm856 = vcmp.gt.s32.totalorder %v824, 0
      %vm857 = vcmp.gt.s32.totalorder %v825, 0
      %vm858 = vcmp.gt.s32.totalorder %v826, 0
      %vm859 = vcmp.gt.s32.totalorder %v827, 0
      %vm860 = vcmp.gt.s32.totalorder %v828, 0
      %vm861 = vcmp.gt.s32.totalorder %v829, 0
      %vm862 = vcmp.gt.s32.totalorder %v830, 0
      %vm863 = vcmp.gt.s32.totalorder %v831, 0
      %vm864 = vcmp.gt.s32.totalorder %v832, 0
      %vm865 = vcmp.gt.s32.totalorder %v833, 0
      %vm866 = vcmp.gt.s32.totalorder %v834, 0
      %vm867 = vcmp.gt.s32.totalorder %v835, 0
      %v868 = vsel %vm836, 1, 0
      %v869 = vsel %vm837, 1, 0
      %v870 = vsel %vm838, 1, 0
      %v871 = vsel %vm839, 1, 0
      %v872 = vsel %vm840, 1, 0
      %v873 = vsel %vm841, 1, 0
      %v874 = vsel %vm842, 1, 0
      %v875 = vsel %vm843, 1, 0
      %v876 = vsel %vm844, 1, 0
      %v877 = vsel %vm845, 1, 0
      %v878 = vsel %vm846, 1, 0
      %v879 = vsel %vm847, 1, 0
      %v880 = vsel %vm848, 1, 0
      %v881 = vsel %vm849, 1, 0
      %v882 = vsel %vm850, 1, 0
      %v883 = vsel %vm851, 1, 0
      %v884 = vsel %vm852, 1, 0
      %v885 = vsel %vm853, 1, 0
      %v886 = vsel %vm854, 1, 0
      %v887 = vsel %vm855, 1, 0
      %v888 = vsel %vm856, 1, 0
      %v889 = vsel %vm857, 1, 0
      %v890 = vsel %vm858, 1, 0
      %v891 = vsel %vm859, 1, 0
      %v892 = vsel %vm860, 1, 0
      %v893 = vsel %vm861, 1, 0
      %v894 = vsel %vm862, 1, 0
      %v895 = vsel %vm863, 1, 0
      %v896 = vsel %vm864, 1, 0
      %v897 = vsel %vm865, 1, 0
      %v898 = vsel %vm866, 1, 0
      %v899 = vsel %vm867, 1, 0
      %v900 = vcvt.s32.f32 %v868
      %v901 = vcvt.s32.f32 %v869
      %v902 = vcvt.s32.f32 %v870
      %v903 = vcvt.s32.f32 %v871
      %v904 = vcvt.s32.f32 %v872
      %v905 = vcvt.s32.f32 %v873
      %v906 = vcvt.s32.f32 %v874
      %v907 = vcvt.s32.f32 %v875
      %v908 = vcvt.s32.f32 %v876
      %v909 = vcvt.s32.f32 %v877
      %v910 = vcvt.s32.f32 %v878
      %v911 = vcvt.s32.f32 %v879
      %v912 = vcvt.s32.f32 %v880
      %v913 = vcvt.s32.f32 %v881
      %v914 = vcvt.s32.f32 %v882
      %v915 = vcvt.s32.f32 %v883
      %v916 = vcvt.s32.f32 %v884
      %v917 = vcvt.s32.f32 %v885
      %v918 = vcvt.s32.f32 %v886
      %v919 = vcvt.s32.f32 %v887
      %v920 = vcvt.s32.f32 %v888
      %v921 = vcvt.s32.f32 %v889
      %v922 = vcvt.s32.f32 %v890
      %v923 = vcvt.s32.f32 %v891
      %v924 = vcvt.s32.f32 %v892
      %v925 = vcvt.s32.f32 %v893
      %v926 = vcvt.s32.f32 %v894
      %v927 = vcvt.s32.f32 %v895
      %v928 = vcvt.s32.f32 %v896
      %v929 = vcvt.s32.f32 %v897
      %v930 = vcvt.s32.f32 %v898
      %v931 = vcvt.s32.f32 %v899
      %v932 = vpack.c.bf16 %v901, %v900
      %v933 = vpack.c.bf16 %v903, %v902
      %v934 = vpack.c.bf16 %v905, %v904
      %v935 = vpack.c.bf16 %v907, %v906
      %v936 = vpack.c.bf16 %v909, %v908
      %v937 = vpack.c.bf16 %v911, %v910
      %v938 = vpack.c.bf16 %v913, %v912
      %v939 = vpack.c.bf16 %v915, %v914
      %v940 = vpack.c.bf16 %v917, %v916
      %v941 = vpack.c.bf16 %v919, %v918
      %v942 = vpack.c.bf16 %v921, %v920
      %v943 = vpack.c.bf16 %v923, %v922
      %v944 = vpack.c.bf16 %v925, %v924
      %v945 = vpack.c.bf16 %v927, %v926
      %v946 = vpack.c.bf16 %v929, %v928
      %v947 = vpack.c.bf16 %v931, %v930
      %vm948 = vcmp.lt.s32.totalorder %v804, 15
      %vm949 = vcmp.lt.s32.totalorder %v805, 15
      %vm950 = vcmp.lt.s32.totalorder %v806, 15
      %vm951 = vcmp.lt.s32.totalorder %v807, 15
      %vm952 = vcmp.lt.s32.totalorder %v808, 15
      %vm953 = vcmp.lt.s32.totalorder %v809, 15
      %vm954 = vcmp.lt.s32.totalorder %v810, 15
      %vm955 = vcmp.lt.s32.totalorder %v811, 15
      %vm956 = vcmp.lt.s32.totalorder %v812, 15
      %vm957 = vcmp.lt.s32.totalorder %v813, 15
      %vm958 = vcmp.lt.s32.totalorder %v814, 15
      %vm959 = vcmp.lt.s32.totalorder %v815, 15
      %vm960 = vcmp.lt.s32.totalorder %v816, 15
      %vm961 = vcmp.lt.s32.totalorder %v817, 15
      %vm962 = vcmp.lt.s32.totalorder %v818, 15
      %vm963 = vcmp.lt.s32.totalorder %v819, 15
      %vm964 = vcmp.lt.s32.totalorder %v820, 15
      %vm965 = vcmp.lt.s32.totalorder %v821, 15
      %vm966 = vcmp.lt.s32.totalorder %v822, 15
      %vm967 = vcmp.lt.s32.totalorder %v823, 15
      %vm968 = vcmp.lt.s32.totalorder %v824, 15
      %vm969 = vcmp.lt.s32.totalorder %v825, 15
      %vm970 = vcmp.lt.s32.totalorder %v826, 15
      %vm971 = vcmp.lt.s32.totalorder %v827, 15
      %vm972 = vcmp.lt.s32.totalorder %v828, 15
      %vm973 = vcmp.lt.s32.totalorder %v829, 15
      %vm974 = vcmp.lt.s32.totalorder %v830, 15
      %vm975 = vcmp.lt.s32.totalorder %v831, 15
      %vm976 = vcmp.lt.s32.totalorder %v832, 15
      %vm977 = vcmp.lt.s32.totalorder %v833, 15
      %vm978 = vcmp.lt.s32.totalorder %v834, 15
      %vm979 = vcmp.lt.s32.totalorder %v835, 15
      %v980 = vsel %vm948, 1, 0
      %v981 = vsel %vm949, 1, 0
      %v982 = vsel %vm950, 1, 0
      %v983 = vsel %vm951, 1, 0
      %v984 = vsel %vm952, 1, 0
      %v985 = vsel %vm953, 1, 0
      %v986 = vsel %vm954, 1, 0
      %v987 = vsel %vm955, 1, 0
      %v988 = vsel %vm956, 1, 0
      %v989 = vsel %vm957, 1, 0
      %v990 = vsel %vm958, 1, 0
      %v991 = vsel %vm959, 1, 0
      %v992 = vsel %vm960, 1, 0
      %v993 = vsel %vm961, 1, 0
      %v994 = vsel %vm962, 1, 0
      %v995 = vsel %vm963, 1, 0
      %v996 = vsel %vm964, 1, 0
      %v997 = vsel %vm965, 1, 0
      %v998 = vsel %vm966, 1, 0
      %v999 = vsel %vm967, 1, 0
      %v1000 = vsel %vm968, 1, 0
      %v1001 = vsel %vm969, 1, 0
      %v1002 = vsel %vm970, 1, 0
      %v1003 = vsel %vm971, 1, 0
      %v1004 = vsel %vm972, 1, 0
      %v1005 = vsel %vm973, 1, 0
      %v1006 = vsel %vm974, 1, 0
      %v1007 = vsel %vm975, 1, 0
      %v1008 = vsel %vm976, 1, 0
      %v1009 = vsel %vm977, 1, 0
      %v1010 = vsel %vm978, 1, 0
      %v1011 = vsel %vm979, 1, 0
      %v1012 = vcvt.s32.f32 %v980
      %v1013 = vcvt.s32.f32 %v981
      %v1014 = vcvt.s32.f32 %v982
      %v1015 = vcvt.s32.f32 %v983
      %v1016 = vcvt.s32.f32 %v984
      %v1017 = vcvt.s32.f32 %v985
      %v1018 = vcvt.s32.f32 %v986
      %v1019 = vcvt.s32.f32 %v987
      %v1020 = vcvt.s32.f32 %v988
      %v1021 = vcvt.s32.f32 %v989
      %v1022 = vcvt.s32.f32 %v990
      %v1023 = vcvt.s32.f32 %v991
      %v1024 = vcvt.s32.f32 %v992
      %v1025 = vcvt.s32.f32 %v993
      %v1026 = vcvt.s32.f32 %v994
      %v1027 = vcvt.s32.f32 %v995
      %v1028 = vcvt.s32.f32 %v996
      %v1029 = vcvt.s32.f32 %v997
      %v1030 = vcvt.s32.f32 %v998
      %v1031 = vcvt.s32.f32 %v999
      %v1032 = vcvt.s32.f32 %v1000
      %v1033 = vcvt.s32.f32 %v1001
      %v1034 = vcvt.s32.f32 %v1002
      %v1035 = vcvt.s32.f32 %v1003
      %v1036 = vcvt.s32.f32 %v1004
      %v1037 = vcvt.s32.f32 %v1005
      %v1038 = vcvt.s32.f32 %v1006
      %v1039 = vcvt.s32.f32 %v1007
      %v1040 = vcvt.s32.f32 %v1008
      %v1041 = vcvt.s32.f32 %v1009
      %v1042 = vcvt.s32.f32 %v1010
      %v1043 = vcvt.s32.f32 %v1011
      %v1044 = vpack.c.bf16 %v1013, %v1012
      %v1045 = vpack.c.bf16 %v1015, %v1014
      %v1046 = vpack.c.bf16 %v1017, %v1016
      %v1047 = vpack.c.bf16 %v1019, %v1018
      %v1048 = vpack.c.bf16 %v1021, %v1020
      %v1049 = vpack.c.bf16 %v1023, %v1022
      %v1050 = vpack.c.bf16 %v1025, %v1024
      %v1051 = vpack.c.bf16 %v1027, %v1026
      %v1052 = vpack.c.bf16 %v1029, %v1028
      %v1053 = vpack.c.bf16 %v1031, %v1030
      %v1054 = vpack.c.bf16 %v1033, %v1032
      %v1055 = vpack.c.bf16 %v1035, %v1034
      %v1056 = vpack.c.bf16 %v1037, %v1036
      %v1057 = vpack.c.bf16 %v1039, %v1038
      %v1058 = vpack.c.bf16 %v1041, %v1040
      %v1059 = vpack.c.bf16 %v1043, %v1042
      %v1060 = vld [vmem:[#allocation2] sm:$0x80]
      %v1061 = vld [vmem:[#allocation2 + $0x8] sm:$0xff]
      %v1062 = vld [vmem:[#allocation2 + $0x10] sm:$0xff]
      %v1063 = vld [vmem:[#allocation2 + $0x18] sm:$0xff]
      %v1064 = vld [vmem:[#allocation2 + $0x20] sm:$0xff]
      %v1065 = vld [vmem:[#allocation2 + $0x28] sm:$0xff]
      %v1066 = vld [vmem:[#allocation2 + $0x30] sm:$0xff]
      %v1067 = vld [vmem:[#allocation2 + $0x38] sm:$0xff]
      %v1068 = vld [vmem:[#allocation2 + $0x40] sm:$0xff]
      %v1069 = vld [vmem:[#allocation2 + $0x48] sm:$0xff]
      %v1070 = vld [vmem:[#allocation2 + $0x50] sm:$0xff]
      %v1071 = vld [vmem:[#allocation2 + $0x58] sm:$0xff]
      %v1072 = vld [vmem:[#allocation2 + $0x60] sm:$0xff]
      %v1073 = vld [vmem:[#allocation2 + $0x68] sm:$0xff]
      %v1074 = vld [vmem:[#allocation2 + $0x70] sm:$0xff]
      %v1075 = vld [vmem:[#allocation2 + $0x78] sm:$0xff]
      %v1076 = vld [vmem:[#allocation2 + $0x80] sm:$0xff]
      %vm1077 = vsmask.f32 7424
      %v1079 = vshll.u32 %v932, 16
      %v1081 = vrot.slane %v1079, 1
      %v1082 = vshrl.u32 %v932, 16
      %v1084 = vor.u32 %v1082, %v1081
      %v1086 = vshll.u32 %v933, 16
      %v1088 = vrot.slane %v1086, 1
      %v1089 = vsel %vm1077, %v1084, %v1088
      %v1090 = vshrl.u32 %v933, 16
      %v1092 = vor.u32 %v1090, %v1088
      %v1094 = vshll.u32 %v934, 16
      %v1096 = vrot.slane %v1094, 1
      %v1097 = vsel %vm1077, %v1092, %v1096
      %v1098 = vshrl.u32 %v934, 16
      %v1100 = vor.u32 %v1098, %v1096
      %v1102 = vshll.u32 %v935, 16
      %v1104 = vrot.slane %v1102, 1
      %v1105 = vsel %vm1077, %v1100, %v1104
      %v1106 = vshrl.u32 %v935, 16
      %v1108 = vor.u32 %v1106, %v1104
      %v1110 = vshll.u32 %v936, 16
      %v1112 = vrot.slane %v1110, 1
      %v1113 = vsel %vm1077, %v1108, %v1112
      %v1114 = vshrl.u32 %v936, 16
      %v1116 = vor.u32 %v1114, %v1112
      %v1118 = vshll.u32 %v937, 16
      %v1120 = vrot.slane %v1118, 1
      %v1121 = vsel %vm1077, %v1116, %v1120
      %v1122 = vshrl.u32 %v937, 16
      %v1124 = vor.u32 %v1122, %v1120
      %v1126 = vshll.u32 %v938, 16
      %v1128 = vrot.slane %v1126, 1
      %v1129 = vsel %vm1077, %v1124, %v1128
      %v1130 = vshrl.u32 %v938, 16
      %v1132 = vor.u32 %v1130, %v1128
      %v1134 = vshll.u32 %v939, 16
      %v1136 = vrot.slane %v1134, 1
      %v1137 = vsel %vm1077, %v1132, %v1136
      %v1138 = vshrl.u32 %v939, 16
      %v1140 = vor.u32 %v1138, %v1136
      %v1142 = vshll.u32 %v940, 16
      %v1144 = vrot.slane %v1142, 1
      %v1145 = vsel %vm1077, %v1140, %v1144
      %v1146 = vshrl.u32 %v940, 16
      %v1148 = vor.u32 %v1146, %v1144
      %v1150 = vshll.u32 %v941, 16
      %v1152 = vrot.slane %v1150, 1
      %v1153 = vsel %vm1077, %v1148, %v1152
      %v1154 = vshrl.u32 %v941, 16
      %v1156 = vor.u32 %v1154, %v1152
      %v1158 = vshll.u32 %v942, 16
      %v1160 = vrot.slane %v1158, 1
      %v1161 = vsel %vm1077, %v1156, %v1160
      %v1162 = vshrl.u32 %v942, 16
      %v1164 = vor.u32 %v1162, %v1160
      %v1166 = vshll.u32 %v943, 16
      %v1168 = vrot.slane %v1166, 1
      %v1169 = vsel %vm1077, %v1164, %v1168
      %v1170 = vshrl.u32 %v943, 16
      %v1172 = vor.u32 %v1170, %v1168
      %v1174 = vshll.u32 %v944, 16
      %v1176 = vrot.slane %v1174, 1
      %v1177 = vsel %vm1077, %v1172, %v1176
      %v1178 = vshrl.u32 %v944, 16
      %v1180 = vor.u32 %v1178, %v1176
      %v1182 = vshll.u32 %v945, 16
      %v1184 = vrot.slane %v1182, 1
      %v1185 = vsel %vm1077, %v1180, %v1184
      %v1186 = vshrl.u32 %v945, 16
      %v1188 = vor.u32 %v1186, %v1184
      %v1190 = vshll.u32 %v946, 16
      %v1192 = vrot.slane %v1190, 1
      %v1193 = vsel %vm1077, %v1188, %v1192
      %v1194 = vshrl.u32 %v946, 16
      %v1196 = vor.u32 %v1194, %v1192
      %v1198 = vshll.u32 %v947, 16
      %v1200 = vrot.slane %v1198, 1
      %v1201 = vsel %vm1077, %v1196, %v1200
      %v1202 = vshrl.u32 %v947, 16
      %v1204 = vor.u32 %v1202, %v1200
      %v1222 = vmul.bf16 %v1060, %v1081
      %v1223 = vmul.bf16 %v1061, %v1089
      %v1224 = vmul.bf16 %v1062, %v1097
      %v1225 = vmul.bf16 %v1063, %v1105
      %v1226 = vmul.bf16 %v1064, %v1113
      %v1227 = vmul.bf16 %v1065, %v1121
      %v1228 = vmul.bf16 %v1066, %v1129
      %v1229 = vmul.bf16 %v1067, %v1137
      %v1230 = vmul.bf16 %v1068, %v1145
      %v1231 = vmul.bf16 %v1069, %v1153
      %v1232 = vmul.bf16 %v1070, %v1161
      %v1233 = vmul.bf16 %v1071, %v1169
      %v1234 = vmul.bf16 %v1072, %v1177
      %v1235 = vmul.bf16 %v1073, %v1185
      %v1236 = vmul.bf16 %v1074, %v1193
      %v1237 = vmul.bf16 %v1075, %v1201
      %v1238 = vmul.bf16 %v1076, %v1204
      %v1239 = vld [vmem:[%s2] sm:$0xf]
      %v1240 = vld [vmem:[%s2 + $0x4] sm:$0xf]
      %v1241 = vld [vmem:[%s2 + $0x8] sm:$0xf]
      %v1242 = vld [vmem:[%s2 + $0xc] sm:$0xf]
      %v1243 = vld [vmem:[%s2 + $0x10] sm:$0xf]
      %v1244 = vld [vmem:[%s2 + $0x14] sm:$0xf]
      %v1245 = vld [vmem:[%s2 + $0x18] sm:$0xf]
      %v1246 = vld [vmem:[%s2 + $0x1c] sm:$0xf]
      %v1247 = vld [vmem:[%s2 + $0x20] sm:$0xf]
      %v1248 = vld [vmem:[%s2 + $0x24] sm:$0xf]
      %v1249 = vld [vmem:[%s2 + $0x28] sm:$0xf]
      %v1250 = vld [vmem:[%s2 + $0x2c] sm:$0xf]
      %v1251 = vld [vmem:[%s2 + $0x30] sm:$0xf]
      %v1252 = vld [vmem:[%s2 + $0x34] sm:$0xf]
      %v1253 = vld [vmem:[%s2 + $0x38] sm:$0xf]
      %v1254 = vld [vmem:[%s2 + $0x3c] sm:$0xf]
      %vm1255 = vsmask.f32 256
      %v1257 = vshrl.u32 %v1222, 16
      %v1259 = vrot.slane %v1257, 7
      %v1261 = vshrl.u32 %v1223, 16
      %v1263 = vrot.slane %v1261, 7
      %v1264 = vshll.u32 %v1223, 16
      %v1266 = vor.u32 %v1263, %v1264
      %v1267 = vsel %vm1255, %v1259, %v1266
      %v1269 = vshrl.u32 %v1224, 16
      %v1271 = vrot.slane %v1269, 7
      %v1272 = vshll.u32 %v1224, 16
      %v1274 = vor.u32 %v1271, %v1272
      %v1275 = vsel %vm1255, %v1263, %v1274
      %v1277 = vshrl.u32 %v1225, 16
      %v1279 = vrot.slane %v1277, 7
      %v1280 = vshll.u32 %v1225, 16
      %v1282 = vor.u32 %v1279, %v1280
      %v1283 = vsel %vm1255, %v1271, %v1282
      %v1285 = vshrl.u32 %v1226, 16
      %v1287 = vrot.slane %v1285, 7
      %v1288 = vshll.u32 %v1226, 16
      %v1290 = vor.u32 %v1287, %v1288
      %v1291 = vsel %vm1255, %v1279, %v1290
      %v1293 = vshrl.u32 %v1227, 16
      %v1295 = vrot.slane %v1293, 7
      %v1296 = vshll.u32 %v1227, 16
      %v1298 = vor.u32 %v1295, %v1296
      %v1299 = vsel %vm1255, %v1287, %v1298
      %v1301 = vshrl.u32 %v1228, 16
      %v1303 = vrot.slane %v1301, 7
      %v1304 = vshll.u32 %v1228, 16
      %v1306 = vor.u32 %v1303, %v1304
      %v1307 = vsel %vm1255, %v1295, %v1306
      %v1309 = vshrl.u32 %v1229, 16
      %v1311 = vrot.slane %v1309, 7
      %v1312 = vshll.u32 %v1229, 16
      %v1314 = vor.u32 %v1311, %v1312
      %v1315 = vsel %vm1255, %v1303, %v1314
      %v1317 = vshrl.u32 %v1230, 16
      %v1319 = vrot.slane %v1317, 7
      %v1320 = vshll.u32 %v1230, 16
      %v1322 = vor.u32 %v1319, %v1320
      %v1323 = vsel %vm1255, %v1311, %v1322
      %v1325 = vshrl.u32 %v1231, 16
      %v1327 = vrot.slane %v1325, 7
      %v1328 = vshll.u32 %v1231, 16
      %v1330 = vor.u32 %v1327, %v1328
      %v1331 = vsel %vm1255, %v1319, %v1330
      %v1333 = vshrl.u32 %v1232, 16
      %v1335 = vrot.slane %v1333, 7
      %v1336 = vshll.u32 %v1232, 16
      %v1338 = vor.u32 %v1335, %v1336
      %v1339 = vsel %vm1255, %v1327, %v1338
      %v1341 = vshrl.u32 %v1233, 16
      %v1343 = vrot.slane %v1341, 7
      %v1344 = vshll.u32 %v1233, 16
      %v1346 = vor.u32 %v1343, %v1344
      %v1347 = vsel %vm1255, %v1335, %v1346
      %v1349 = vshrl.u32 %v1234, 16
      %v1351 = vrot.slane %v1349, 7
      %v1352 = vshll.u32 %v1234, 16
      %v1354 = vor.u32 %v1351, %v1352
      %v1355 = vsel %vm1255, %v1343, %v1354
      %v1357 = vshrl.u32 %v1235, 16
      %v1359 = vrot.slane %v1357, 7
      %v1360 = vshll.u32 %v1235, 16
      %v1362 = vor.u32 %v1359, %v1360
      %v1363 = vsel %vm1255, %v1351, %v1362
      %v1365 = vshrl.u32 %v1236, 16
      %v1367 = vrot.slane %v1365, 7
      %v1368 = vshll.u32 %v1236, 16
      %v1370 = vor.u32 %v1367, %v1368
      %v1371 = vsel %vm1255, %v1359, %v1370
      %v1373 = vshrl.u32 %v1237, 16
      %v1375 = vrot.slane %v1373, 7
      %v1376 = vshll.u32 %v1237, 16
      %v1378 = vor.u32 %v1375, %v1376
      %v1379 = vsel %vm1255, %v1367, %v1378
      %v1381 = vshrl.u32 %v1238, 16
      %v1383 = vrot.slane %v1381, 7
      %v1384 = vshll.u32 %v1238, 16
      %v1386 = vor.u32 %v1383, %v1384
      %v1387 = vsel %vm1255, %v1375, %v1386
      %v1420 = vunpack.c.l.b16 %v1239
      %v1421 = vunpack.c.l.b16 %v1240
      %v1422 = vunpack.c.l.b16 %v1241
      %v1423 = vunpack.c.l.b16 %v1242
      %v1424 = vunpack.c.l.b16 %v1243
      %v1425 = vunpack.c.l.b16 %v1244
      %v1426 = vunpack.c.l.b16 %v1245
      %v1427 = vunpack.c.l.b16 %v1246
      %v1428 = vunpack.c.l.b16 %v1247
      %v1429 = vunpack.c.l.b16 %v1248
      %v1430 = vunpack.c.l.b16 %v1249
      %v1431 = vunpack.c.l.b16 %v1250
      %v1432 = vunpack.c.l.b16 %v1251
      %v1433 = vunpack.c.l.b16 %v1252
      %v1434 = vunpack.c.l.b16 %v1253
      %v1435 = vunpack.c.l.b16 %v1254
      %v1436 = vpack.c.b16 %v1421, %v1420
      %v1437 = vpack.c.b16 %v1423, %v1422
      %v1438 = vpack.c.b16 %v1425, %v1424
      %v1439 = vpack.c.b16 %v1427, %v1426
      %v1440 = vpack.c.b16 %v1429, %v1428
      %v1441 = vpack.c.b16 %v1431, %v1430
      %v1442 = vpack.c.b16 %v1433, %v1432
      %v1443 = vpack.c.b16 %v1435, %v1434
      %1452 = vmatprep.subr.bf16.mxu0 0
      %1453 = vmatpush1.bf16.msra.mxu0 %v1436
      %1454 = vmatprep.subr.bf16.mxu0 0
      %1455 = vmatpush1.bf16.msra.mxu0 %v1437
      %1456 = vmatprep.subr.bf16.mxu0 0
      %1457 = vmatpush1.bf16.msra.mxu0 %v1438
      %1458 = vmatprep.subr.bf16.mxu0 0
      %1459 = vmatpush1.bf16.msra.mxu0 %v1439
      %1460 = vmatprep.subr.bf16.mxu0 0
      %1461 = vmatpush1.bf16.msra.mxu0 %v1440
      %1462 = vmatprep.subr.bf16.mxu0 0
      %1463 = vmatpush1.bf16.msra.mxu0 %v1441
      %1464 = vmatprep.subr.bf16.mxu0 0
      %1465 = vmatpush1.bf16.msra.mxu0 %v1442
      %1466 = vmatprep.subr.bf16.mxu0 0
      %1467 = vmatpush1.bf16.msra.mxu0 %v1443
      %1468 = vmatprep.subr.bf16.mxu0 0
      %1469 = vmatpush1.bf16.msra.mxu0 0
      %1470 = vmatprep.subr.bf16.mxu0 0
      %1471 = vmatpush1.bf16.msra.mxu0 0
      %1472 = vmatprep.subr.bf16.mxu0 0
      %1473 = vmatpush1.bf16.msra.mxu0 0
      %1474 = vmatprep.subr.bf16.mxu0 0
      %1475 = vmatpush1.bf16.msra.mxu0 0
      %1476 = vmatprep.subr.bf16.mxu0 0
      %1477 = vmatpush1.bf16.msra.mxu0 0
      %1478 = vmatprep.subr.bf16.mxu0 0
      %1479 = vmatpush1.bf16.msra.mxu0 0
      %1480 = vmatprep.subr.bf16.mxu0 0
      %1481 = vmatpush1.bf16.msra.mxu0 0
      %1482 = vmatprep.subr.bf16.mxu0 0
      %1483 = vmatpush1.bf16.msra.mxu0 0
      %1484 = vmatprep.mubr.bf16.mxu0 0
      %1485 = vmatmul.mubr.bf16.gmra.mrb[0].mxu0 %v1267
      %v1486 = vpop.f32.mrb[0].mxu0
      %v1487 = vadd.f32 0.0, %v1486
      %v1488 = vpop.f32.mrb[0].mxu0
      %v1489 = vpop.f32.mrb[0].mxu0
      %v1490 = vadd.f32 0.0, %v1489
      %v1491 = vpop.f32.mrb[0].mxu0
      %1492 = vmatprep.mubr.bf16.mxu0 0
      %1493 = vmatmul.mubr.bf16.gmra.mrb[0].mxu0 %v1275
      %v1494 = vpop.f32.mrb[0].mxu0
      %v1495 = vadd.f32 0.0, %v1494
      %v1496 = vpop.f32.mrb[0].mxu0
      %v1497 = vpop.f32.mrb[0].mxu0
      %v1498 = vadd.f32 0.0, %v1497
      %v1499 = vpop.f32.mrb[0].mxu0
      %1500 = vmatprep.mubr.bf16.mxu0 0
      %1501 = vmatmul.mubr.bf16.gmra.mrb[0].mxu0 %v1283
      %v1502 = vpop.f32.mrb[0].mxu0
      %v1503 = vadd.f32 0.0, %v1502
      %v1504 = vpop.f32.mrb[0].mxu0
      %v1505 = vpop.f32.mrb[0].mxu0
      %v1506 = vadd.f32 0.0, %v1505
      %v1507 = vpop.f32.mrb[0].mxu0
      %1508 = vmatprep.mubr.bf16.mxu0 0
      %1509 = vmatmul.mubr.bf16.gmra.mrb[0].mxu0 %v1291
      %v1510 = vpop.f32.mrb[0].mxu0
      %v1511 = vadd.f32 0.0, %v1510
      %v1512 = vpop.f32.mrb[0].mxu0
      %v1513 = vpop.f32.mrb[0].mxu0
      %v1514 = vadd.f32 0.0, %v1513
      %v1515 = vpop.f32.mrb[0].mxu0
      %1516 = vmatprep.mubr.bf16.mxu0 0
      %1517 = vmatmul.mubr.bf16.gmra.mrb[0].mxu0 %v1299
      %v1518 = vpop.f32.mrb[0].mxu0
      %v1519 = vadd.f32 0.0, %v1518
      %v1520 = vpop.f32.mrb[0].mxu0
      %v1521 = vpop.f32.mrb[0].mxu0
      %v1522 = vadd.f32 0.0, %v1521
      %v1523 = vpop.f32.mrb[0].mxu0
      %1524 = vmatprep.mubr.bf16.mxu0 0
      %1525 = vmatmul.mubr.bf16.gmra.mrb[0].mxu0 %v1307
      %v1526 = vpop.f32.mrb[0].mxu0
      %v1527 = vadd.f32 0.0, %v1526
      %v1528 = vpop.f32.mrb[0].mxu0
      %v1529 = vpop.f32.mrb[0].mxu0
      %v1530 = vadd.f32 0.0, %v1529
      %v1531 = vpop.f32.mrb[0].mxu0
      %1532 = vmatprep.mubr.bf16.mxu0 0
      %1533 = vmatmul.mubr.bf16.gmra.mrb[0].mxu0 %v1315
      %v1534 = vpop.f32.mrb[0].mxu0
      %v1535 = vadd.f32 0.0, %v1534
      %v1536 = vpop.f32.mrb[0].mxu0
      %v1537 = vpop.f32.mrb[0].mxu0
      %v1538 = vadd.f32 0.0, %v1537
      %v1539 = vpop.f32.mrb[0].mxu0
      %1540 = vmatprep.mubr.bf16.mxu0 0
      %1541 = vmatmul.mubr.bf16.gmra.mrb[0].mxu0 %v1323
      %v1542 = vpop.f32.mrb[0].mxu0
      %v1543 = vadd.f32 0.0, %v1542
      %v1544 = vpop.f32.mrb[0].mxu0
      %v1545 = vpop.f32.mrb[0].mxu0
      %v1546 = vadd.f32 0.0, %v1545
      %v1547 = vpop.f32.mrb[0].mxu0
      %1548 = vmatprep.mubr.bf16.mxu0 0
      %1549 = vmatmul.mubr.bf16.gmra.mrb[0].mxu0 %v1331
      %v1550 = vpop.f32.mrb[0].mxu0
      %v1551 = vadd.f32 0.0, %v1550
      %v1552 = vpop.f32.mrb[0].mxu0
      %v1553 = vpop.f32.mrb[0].mxu0
      %v1554 = vadd.f32 0.0, %v1553
      %v1555 = vpop.f32.mrb[0].mxu0
      %1556 = vmatprep.mubr.bf16.mxu0 0
      %1557 = vmatmul.mubr.bf16.gmra.mrb[0].mxu0 %v1339
      %v1558 = vpop.f32.mrb[0].mxu0
      %v1559 = vadd.f32 0.0, %v1558
      %v1560 = vpop.f32.mrb[0].mxu0
      %v1561 = vpop.f32.mrb[0].mxu0
      %v1562 = vadd.f32 0.0, %v1561
      %v1563 = vpop.f32.mrb[0].mxu0
      %1564 = vmatprep.mubr.bf16.mxu0 0
      %1565 = vmatmul.mubr.bf16.gmra.mrb[0].mxu0 %v1347
      %v1566 = vpop.f32.mrb[0].mxu0
      %v1567 = vadd.f32 0.0, %v1566
      %v1568 = vpop.f32.mrb[0].mxu0
      %v1569 = vpop.f32.mrb[0].mxu0
      %v1570 = vadd.f32 0.0, %v1569
      %v1571 = vpop.f32.mrb[0].mxu0
      %1572 = vmatprep.mubr.bf16.mxu0 0
      %1573 = vmatmul.mubr.bf16.gmra.mrb[0].mxu0 %v1355
      %v1574 = vpop.f32.mrb[0].mxu0
      %v1575 = vadd.f32 0.0, %v1574
      %v1576 = vpop.f32.mrb[0].mxu0
      %v1577 = vpop.f32.mrb[0].mxu0
      %v1578 = vadd.f32 0.0, %v1577
      %v1579 = vpop.f32.mrb[0].mxu0
      %1580 = vmatprep.mubr.bf16.mxu0 0
      %1581 = vmatmul.mubr.bf16.gmra.mrb[0].mxu0 %v1363
      %v1582 = vpop.f32.mrb[0].mxu0
      %v1583 = vadd.f32 0.0, %v1582
      %v1584 = vpop.f32.mrb[0].mxu0
      %v1585 = vpop.f32.mrb[0].mxu0
      %v1586 = vadd.f32 0.0, %v1585
      %v1587 = vpop.f32.mrb[0].mxu0
      %1588 = vmatprep.mubr.bf16.mxu0 0
      %1589 = vmatmul.mubr.bf16.gmra.mrb[0].mxu0 %v1371
      %v1590 = vpop.f32.mrb[0].mxu0
      %v1591 = vadd.f32 0.0, %v1590
      %v1592 = vpop.f32.mrb[0].mxu0
      %v1593 = vpop.f32.mrb[0].mxu0
      %v1594 = vadd.f32 0.0, %v1593
      %v1595 = vpop.f32.mrb[0].mxu0
      %1596 = vmatprep.mubr.bf16.mxu0 0
      %1597 = vmatmul.mubr.bf16.gmra.mrb[0].mxu0 %v1379
      %v1598 = vpop.f32.mrb[0].mxu0
      %v1599 = vadd.f32 0.0, %v1598
      %v1600 = vpop.f32.mrb[0].mxu0
      %v1601 = vpop.f32.mrb[0].mxu0
      %v1602 = vadd.f32 0.0, %v1601
      %v1603 = vpop.f32.mrb[0].mxu0
      %1604 = vmatprep.mubr.bf16.mxu0 0
      %1605 = vmatmul.mubr.bf16.gmra.mrb[0].mxu0 %v1387
      %v1606 = vpop.f32.mrb[0].mxu0
      %v1607 = vadd.f32 0.0, %v1606
      %v1608 = vpop.f32.mrb[0].mxu0
      %v1609 = vpop.f32.mrb[0].mxu0
      %v1610 = vadd.f32 0.0, %v1609
      %v1611 = vpop.f32.mrb[0].mxu0
      %1612 = vdwg.mxu0
      %1613 = vst [vmem:[#allocation3] sm:$0xff] %v1487
      %1614 = vst [vmem:[#allocation3 + $0x8] sm:$0xff] %v1490
      %1615 = vst [vmem:[#allocation3 + $0x10] sm:$0xff] %v1495
      %1616 = vst [vmem:[#allocation3 + $0x18] sm:$0xff] %v1498
      %1617 = vst [vmem:[#allocation3 + $0x20] sm:$0xff] %v1503
      %1618 = vst [vmem:[#allocation3 + $0x28] sm:$0xff] %v1506
      %1619 = vst [vmem:[#allocation3 + $0x30] sm:$0xff] %v1511
      %1620 = vst [vmem:[#allocation3 + $0x38] sm:$0xff] %v1514
      %1621 = vst [vmem:[#allocation3 + $0x40] sm:$0xff] %v1519
      %1622 = vst [vmem:[#allocation3 + $0x48] sm:$0xff] %v1522
      %1623 = vst [vmem:[#allocation3 + $0x50] sm:$0xff] %v1527
      %1624 = vst [vmem:[#allocation3 + $0x58] sm:$0xff] %v1530
      %1625 = vst [vmem:[#allocation3 + $0x60] sm:$0xff] %v1535
      %1626 = vst [vmem:[#allocation3 + $0x68] sm:$0xff] %v1538
      %1627 = vst [vmem:[#allocation3 + $0x70] sm:$0xff] %v1543
      %1628 = vst [vmem:[#allocation3 + $0x78] sm:$0xff] %v1546
      %1629 = vst [vmem:[#allocation3 + $0x80] sm:$0xff] %v1551
      %1630 = vst [vmem:[#allocation3 + $0x88] sm:$0xff] %v1554
      %1631 = vst [vmem:[#allocation3 + $0x90] sm:$0xff] %v1559
      %1632 = vst [vmem:[#allocation3 + $0x98] sm:$0xff] %v1562
      %1633 = vst [vmem:[#allocation3 + $0xa0] sm:$0xff] %v1567
      %1634 = vst [vmem:[#allocation3 + $0xa8] sm:$0xff] %v1570
      %1635 = vst [vmem:[#allocation3 + $0xb0] sm:$0xff] %v1575
      %1636 = vst [vmem:[#allocation3 + $0xb8] sm:$0xff] %v1578
      %1637 = vst [vmem:[#allocation3 + $0xc0] sm:$0xff] %v1583
      %1638 = vst [vmem:[#allocation3 + $0xc8] sm:$0xff] %v1586
      %1639 = vst [vmem:[#allocation3 + $0xd0] sm:$0xff] %v1591
      %1640 = vst [vmem:[#allocation3 + $0xd8] sm:$0xff] %v1594
      %1641 = vst [vmem:[#allocation3 + $0xe0] sm:$0xff] %v1599
      %1642 = vst [vmem:[#allocation3 + $0xe8] sm:$0xff] %v1602
      %1643 = vst [vmem:[#allocation3 + $0xf0] sm:$0xff] %v1607
      %1644 = vst [vmem:[#allocation3 + $0xf8] sm:$0xff] %v1610
      %v1645 = vld [vmem:[#allocation2 + $0x8] sm:$0xff]
      %v1646 = vld [vmem:[#allocation2 + $0x10] sm:$0xff]
      %v1647 = vld [vmem:[#allocation2 + $0x18] sm:$0xff]
      %v1648 = vld [vmem:[#allocation2 + $0x20] sm:$0xff]
      %v1649 = vld [vmem:[#allocation2 + $0x28] sm:$0xff]
      %v1650 = vld [vmem:[#allocation2 + $0x30] sm:$0xff]
      %v1651 = vld [vmem:[#allocation2 + $0x38] sm:$0xff]
      %v1652 = vld [vmem:[#allocation2 + $0x40] sm:$0xff]
      %v1653 = vld [vmem:[#allocation2 + $0x48] sm:$0xff]
      %v1654 = vld [vmem:[#allocation2 + $0x50] sm:$0xff]
      %v1655 = vld [vmem:[#allocation2 + $0x58] sm:$0xff]
      %v1656 = vld [vmem:[#allocation2 + $0x60] sm:$0xff]
      %v1657 = vld [vmem:[#allocation2 + $0x68] sm:$0xff]
      %v1658 = vld [vmem:[#allocation2 + $0x70] sm:$0xff]
      %v1659 = vld [vmem:[#allocation2 + $0x78] sm:$0xff]
      %v1660 = vld [vmem:[#allocation2 + $0x80] sm:$0xff]
      %v1661 = vld [vmem:[%s2 + $0x40] sm:$0xf]
      %v1662 = vld [vmem:[%s2 + $0x44] sm:$0xf]
      %v1663 = vld [vmem:[%s2 + $0x48] sm:$0xf]
      %v1664 = vld [vmem:[%s2 + $0x4c] sm:$0xf]
      %v1665 = vld [vmem:[%s2 + $0x50] sm:$0xf]
      %v1666 = vld [vmem:[%s2 + $0x54] sm:$0xf]
      %v1667 = vld [vmem:[%s2 + $0x58] sm:$0xf]
      %v1668 = vld [vmem:[%s2 + $0x5c] sm:$0xf]
      %v1669 = vld [vmem:[%s2 + $0x60] sm:$0xf]
      %v1670 = vld [vmem:[%s2 + $0x64] sm:$0xf]
      %v1671 = vld [vmem:[%s2 + $0x68] sm:$0xf]
      %v1672 = vld [vmem:[%s2 + $0x6c] sm:$0xf]
      %v1673 = vld [vmem:[%s2 + $0x70] sm:$0xf]
      %v1674 = vld [vmem:[%s2 + $0x74] sm:$0xf]
      %v1675 = vld [vmem:[%s2 + $0x78] sm:$0xf]
      %v1676 = vld [vmem:[%s2 + $0x7c] sm:$0xf]
      %v1693 = vunpack.c.l.b16 %v1661
      %v1694 = vunpack.c.l.b16 %v1662
      %v1695 = vunpack.c.l.b16 %v1663
      %v1696 = vunpack.c.l.b16 %v1664
      %v1697 = vunpack.c.l.b16 %v1665
      %v1698 = vunpack.c.l.b16 %v1666
      %v1699 = vunpack.c.l.b16 %v1667
      %v1700 = vunpack.c.l.b16 %v1668
      %v1701 = vunpack.c.l.b16 %v1669
      %v1702 = vunpack.c.l.b16 %v1670
      %v1703 = vunpack.c.l.b16 %v1671
      %v1704 = vunpack.c.l.b16 %v1672
      %v1705 = vunpack.c.l.b16 %v1673
      %v1706 = vunpack.c.l.b16 %v1674
      %v1707 = vunpack.c.l.b16 %v1675
      %v1708 = vunpack.c.l.b16 %v1676
      %v1709 = vpack.c.b16 %v1694, %v1693
      %v1710 = vpack.c.b16 %v1696, %v1695
      %v1711 = vpack.c.b16 %v1698, %v1697
      %v1712 = vpack.c.b16 %v1700, %v1699
      %v1713 = vpack.c.b16 %v1702, %v1701
      %v1714 = vpack.c.b16 %v1704, %v1703
      %v1715 = vpack.c.b16 %v1706, %v1705
      %v1716 = vpack.c.b16 %v1708, %v1707
      %1725 = vmatprep.subr.bf16.mxu0 0
      %1726 = vmatpush1.bf16.msra.mxu0 %v1709
      %1727 = vmatprep.subr.bf16.mxu0 0
      %1728 = vmatpush1.bf16.msra.mxu0 %v1710
      %1729 = vmatprep.subr.bf16.mxu0 0
      %1730 = vmatpush1.bf16.msra.mxu0 %v1711
      %1731 = vmatprep.subr.bf16.mxu0 0
      %1732 = vmatpush1.bf16.msra.mxu0 %v1712
      %1733 = vmatprep.subr.bf16.mxu0 0
      %1734 = vmatpush1.bf16.msra.mxu0 %v1713
      %1735 = vmatprep.subr.bf16.mxu0 0
      %1736 = vmatpush1.bf16.msra.mxu0 %v1714
      %1737 = vmatprep.subr.bf16.mxu0 0
      %1738 = vmatpush1.bf16.msra.mxu0 %v1715
      %1739 = vmatprep.subr.bf16.mxu0 0
      %1740 = vmatpush1.bf16.msra.mxu0 %v1716
      %1741 = vmatprep.subr.bf16.mxu0 0
      %1742 = vmatpush1.bf16.msra.mxu0 0
      %1743 = vmatprep.subr.bf16.mxu0 0
      %1744 = vmatpush1.bf16.msra.mxu0 0
      %1745 = vmatprep.subr.bf16.mxu0 0
      %1746 = vmatpush1.bf16.msra.mxu0 0
      %1747 = vmatprep.subr.bf16.mxu0 0
      %1748 = vmatpush1.bf16.msra.mxu0 0
      %1749 = vmatprep.subr.bf16.mxu0 0
      %1750 = vmatpush1.bf16.msra.mxu0 0
      %1751 = vmatprep.subr.bf16.mxu0 0
      %1752 = vmatpush1.bf16.msra.mxu0 0
      %1753 = vmatprep.subr.bf16.mxu0 0
      %1754 = vmatpush1.bf16.msra.mxu0 0
      %1755 = vmatprep.subr.bf16.mxu0 0
      %1756 = vmatpush1.bf16.msra.mxu0 0
      %1757 = vmatprep.mubr.bf16.mxu0 0
      %1758 = vmatmul.mubr.bf16.gmra.mrb[0].mxu0 %v1645
      %v1759 = vpop.f32.mrb[0].mxu0
      %v1760 = vadd.f32 0.0, %v1759
      %v1761 = vpop.f32.mrb[0].mxu0
      %v1762 = vpop.f32.mrb[0].mxu0
      %v1763 = vadd.f32 0.0, %v1762
      %v1764 = vpop.f32.mrb[0].mxu0
      %1765 = vmatprep.mubr.bf16.mxu0 0
      %1766 = vmatmul.mubr.bf16.gmra.mrb[0].mxu0 %v1646
      %v1767 = vpop.f32.mrb[0].mxu0
      %v1768 = vadd.f32 0.0, %v1767
      %v1769 = vpop.f32.mrb[0].mxu0
      %v1770 = vpop.f32.mrb[0].mxu0
      %v1771 = vadd.f32 0.0, %v1770
      %v1772 = vpop.f32.mrb[0].mxu0
      %1773 = vmatprep.mubr.bf16.mxu0 0
      %1774 = vmatmul.mubr.bf16.gmra.mrb[0].mxu0 %v1647
      %v1775 = vpop.f32.mrb[0].mxu0
      %v1776 = vadd.f32 0.0, %v1775
      %v1777 = vpop.f32.mrb[0].mxu0
      %v1778 = vpop.f32.mrb[0].mxu0
      %v1779 = vadd.f32 0.0, %v1778
      %v1780 = vpop.f32.mrb[0].mxu0
      %1781 = vmatprep.mubr.bf16.mxu0 0
      %1782 = vmatmul.mubr.bf16.gmra.mrb[0].mxu0 %v1648
      %v1783 = vpop.f32.mrb[0].mxu0
      %v1784 = vadd.f32 0.0, %v1783
      %v1785 = vpop.f32.mrb[0].mxu0
      %v1786 = vpop.f32.mrb[0].mxu0
      %v1787 = vadd.f32 0.0, %v1786
      %v1788 = vpop.f32.mrb[0].mxu0
      %1789 = vmatprep.mubr.bf16.mxu0 0
      %1790 = vmatmul.mubr.bf16.gmra.mrb[0].mxu0 %v1649
      %v1791 = vpop.f32.mrb[0].mxu0
      %v1792 = vadd.f32 0.0, %v1791
      %v1793 = vpop.f32.mrb[0].mxu0
      %v1794 = vpop.f32.mrb[0].mxu0
      %v1795 = vadd.f32 0.0, %v1794
      %v1796 = vpop.f32.mrb[0].mxu0
      %1797 = vmatprep.mubr.bf16.mxu0 0
      %1798 = vmatmul.mubr.bf16.gmra.mrb[0].mxu0 %v1650
      %v1799 = vpop.f32.mrb[0].mxu0
      %v1800 = vadd.f32 0.0, %v1799
      %v1801 = vpop.f32.mrb[0].mxu0
      %v1802 = vpop.f32.mrb[0].mxu0
      %v1803 = vadd.f32 0.0, %v1802
      %v1804 = vpop.f32.mrb[0].mxu0
      %1805 = vmatprep.mubr.bf16.mxu0 0
      %1806 = vmatmul.mubr.bf16.gmra.mrb[0].mxu0 %v1651
      %v1807 = vpop.f32.mrb[0].mxu0
      %v1808 = vadd.f32 0.0, %v1807
      %v1809 = vpop.f32.mrb[0].mxu0
      %v1810 = vpop.f32.mrb[0].mxu0
      %v1811 = vadd.f32 0.0, %v1810
      %v1812 = vpop.f32.mrb[0].mxu0
      %1813 = vmatprep.mubr.bf16.mxu0 0
      %1814 = vmatmul.mubr.bf16.gmra.mrb[0].mxu0 %v1652
      %v1815 = vpop.f32.mrb[0].mxu0
      %v1816 = vadd.f32 0.0, %v1815
      %v1817 = vpop.f32.mrb[0].mxu0
      %v1818 = vpop.f32.mrb[0].mxu0
      %v1819 = vadd.f32 0.0, %v1818
      %v1820 = vpop.f32.mrb[0].mxu0
      %1821 = vmatprep.mubr.bf16.mxu0 0
      %1822 = vmatmul.mubr.bf16.gmra.mrb[0].mxu0 %v1653
      %v1823 = vpop.f32.mrb[0].mxu0
      %v1824 = vadd.f32 0.0, %v1823
      %v1825 = vpop.f32.mrb[0].mxu0
      %v1826 = vpop.f32.mrb[0].mxu0
      %v1827 = vadd.f32 0.0, %v1826
      %v1828 = vpop.f32.mrb[0].mxu0
      %1829 = vmatprep.mubr.bf16.mxu0 0
      %1830 = vmatmul.mubr.bf16.gmra.mrb[0].mxu0 %v1654
      %v1831 = vpop.f32.mrb[0].mxu0
      %v1832 = vadd.f32 0.0, %v1831
      %v1833 = vpop.f32.mrb[0].mxu0
      %v1834 = vpop.f32.mrb[0].mxu0
      %v1835 = vadd.f32 0.0, %v1834
      %v1836 = vpop.f32.mrb[0].mxu0
      %1837 = vmatprep.mubr.bf16.mxu0 0
      %1838 = vmatmul.mubr.bf16.gmra.mrb[0].mxu0 %v1655
      %v1839 = vpop.f32.mrb[0].mxu0
      %v1840 = vadd.f32 0.0, %v1839
      %v1841 = vpop.f32.mrb[0].mxu0
      %v1842 = vpop.f32.mrb[0].mxu0
      %v1843 = vadd.f32 0.0, %v1842
      %v1844 = vpop.f32.mrb[0].mxu0
      %1845 = vmatprep.mubr.bf16.mxu0 0
      %1846 = vmatmul.mubr.bf16.gmra.mrb[0].mxu0 %v1656
      %v1847 = vpop.f32.mrb[0].mxu0
      %v1848 = vadd.f32 0.0, %v1847
      %v1849 = vpop.f32.mrb[0].mxu0
      %v1850 = vpop.f32.mrb[0].mxu0
      %v1851 = vadd.f32 0.0, %v1850
      %v1852 = vpop.f32.mrb[0].mxu0
      %1853 = vmatprep.mubr.bf16.mxu0 0
      %1854 = vmatmul.mubr.bf16.gmra.mrb[0].mxu0 %v1657
      %v1855 = vpop.f32.mrb[0].mxu0
      %v1856 = vadd.f32 0.0, %v1855
      %v1857 = vpop.f32.mrb[0].mxu0
      %v1858 = vpop.f32.mrb[0].mxu0
      %v1859 = vadd.f32 0.0, %v1858
      %v1860 = vpop.f32.mrb[0].mxu0
      %1861 = vmatprep.mubr.bf16.mxu0 0
      %1862 = vmatmul.mubr.bf16.gmra.mrb[0].mxu0 %v1658
      %v1863 = vpop.f32.mrb[0].mxu0
      %v1864 = vadd.f32 0.0, %v1863
      %v1865 = vpop.f32.mrb[0].mxu0
      %v1866 = vpop.f32.mrb[0].mxu0
      %v1867 = vadd.f32 0.0, %v1866
      %v1868 = vpop.f32.mrb[0].mxu0
      %1869 = vmatprep.mubr.bf16.mxu0 0
      %1870 = vmatmul.mubr.bf16.gmra.mrb[0].mxu0 %v1659
      %v1871 = vpop.f32.mrb[0].mxu0
      %v1872 = vadd.f32 0.0, %v1871
      %v1873 = vpop.f32.mrb[0].mxu0
      %v1874 = vpop.f32.mrb[0].mxu0
      %v1875 = vadd.f32 0.0, %v1874
      %v1876 = vpop.f32.mrb[0].mxu0
      %1877 = vmatprep.mubr.bf16.mxu0 0
      %1878 = vmatmul.mubr.bf16.gmra.mrb[0].mxu0 %v1660
      %v1879 = vpop.f32.mrb[0].mxu0
      %v1880 = vadd.f32 0.0, %v1879
      %v1881 = vpop.f32.mrb[0].mxu0
      %v1882 = vpop.f32.mrb[0].mxu0
      %v1883 = vadd.f32 0.0, %v1882
      %v1884 = vpop.f32.mrb[0].mxu0
      %1885 = vdwg.mxu0
      %v1886 = vld [vmem:[#allocation3] sm:$0xff]
      %v1887 = vld [vmem:[#allocation3 + $0x8] sm:$0xff]
      %v1888 = vld [vmem:[#allocation3 + $0x10] sm:$0xff]
      %v1889 = vld [vmem:[#allocation3 + $0x18] sm:$0xff]
      %v1890 = vld [vmem:[#allocation3 + $0x20] sm:$0xff]
      %v1891 = vld [vmem:[#allocation3 + $0x28] sm:$0xff]
      %v1892 = vld [vmem:[#allocation3 + $0x30] sm:$0xff]
      %v1893 = vld [vmem:[#allocation3 + $0x38] sm:$0xff]
      %v1894 = vld [vmem:[#allocation3 + $0x40] sm:$0xff]
      %v1895 = vld [vmem:[#allocation3 + $0x48] sm:$0xff]
      %v1896 = vld [vmem:[#allocation3 + $0x50] sm:$0xff]
      %v1897 = vld [vmem:[#allocation3 + $0x58] sm:$0xff]
      %v1898 = vld [vmem:[#allocation3 + $0x60] sm:$0xff]
      %v1899 = vld [vmem:[#allocation3 + $0x68] sm:$0xff]
      %v1900 = vld [vmem:[#allocation3 + $0x70] sm:$0xff]
      %v1901 = vld [vmem:[#allocation3 + $0x78] sm:$0xff]
      %v1902 = vld [vmem:[#allocation3 + $0x80] sm:$0xff]
      %v1903 = vld [vmem:[#allocation3 + $0x88] sm:$0xff]
      %v1904 = vld [vmem:[#allocation3 + $0x90] sm:$0xff]
      %v1905 = vld [vmem:[#allocation3 + $0x98] sm:$0xff]
      %v1906 = vld [vmem:[#allocation3 + $0xa0] sm:$0xff]
      %v1907 = vld [vmem:[#allocation3 + $0xa8] sm:$0xff]
      %v1908 = vld [vmem:[#allocation3 + $0xb0] sm:$0xff]
      %v1909 = vld [vmem:[#allocation3 + $0xb8] sm:$0xff]
      %v1910 = vld [vmem:[#allocation3 + $0xc0] sm:$0xff]
      %v1911 = vld [vmem:[#allocation3 + $0xc8] sm:$0xff]
      %v1912 = vld [vmem:[#allocation3 + $0xd0] sm:$0xff]
      %v1913 = vld [vmem:[#allocation3 + $0xd8] sm:$0xff]
      %v1914 = vld [vmem:[#allocation3 + $0xe0] sm:$0xff]
      %v1915 = vld [vmem:[#allocation3 + $0xe8] sm:$0xff]
      %v1916 = vld [vmem:[#allocation3 + $0xf0] sm:$0xff]
      %v1917 = vld [vmem:[#allocation3 + $0xf8] sm:$0xff]
      %v1918 = vadd.f32 %v1886, %v1760
      %v1919 = vadd.f32 %v1887, %v1763
      %v1920 = vadd.f32 %v1888, %v1768
      %v1921 = vadd.f32 %v1889, %v1771
      %v1922 = vadd.f32 %v1890, %v1776
      %v1923 = vadd.f32 %v1891, %v1779
      %v1924 = vadd.f32 %v1892, %v1784
      %v1925 = vadd.f32 %v1893, %v1787
      %v1926 = vadd.f32 %v1894, %v1792
      %v1927 = vadd.f32 %v1895, %v1795
      %v1928 = vadd.f32 %v1896, %v1800
      %v1929 = vadd.f32 %v1897, %v1803
      %v1930 = vadd.f32 %v1898, %v1808
      %v1931 = vadd.f32 %v1899, %v1811
      %v1932 = vadd.f32 %v1900, %v1816
      %v1933 = vadd.f32 %v1901, %v1819
      %v1934 = vadd.f32 %v1902, %v1824
      %v1935 = vadd.f32 %v1903, %v1827
      %v1936 = vadd.f32 %v1904, %v1832
      %v1937 = vadd.f32 %v1905, %v1835
      %v1938 = vadd.f32 %v1906, %v1840
      %v1939 = vadd.f32 %v1907, %v1843
      %v1940 = vadd.f32 %v1908, %v1848
      %v1941 = vadd.f32 %v1909, %v1851
      %v1942 = vadd.f32 %v1910, %v1856
      %v1943 = vadd.f32 %v1911, %v1859
      %v1944 = vadd.f32 %v1912, %v1864
      %v1945 = vadd.f32 %v1913, %v1867
      %v1946 = vadd.f32 %v1914, %v1872
      %v1947 = vadd.f32 %v1915, %v1875
      %v1948 = vadd.f32 %v1916, %v1880
      %v1949 = vadd.f32 %v1917, %v1883
      %1950 = vst [vmem:[#allocation3] sm:$0xff] %v1918
      %1951 = vst [vmem:[#allocation3 + $0x8] sm:$0xff] %v1919
      %1952 = vst [vmem:[#allocation3 + $0x10] sm:$0xff] %v1920
      %1953 = vst [vmem:[#allocation3 + $0x18] sm:$0xff] %v1921
      %1954 = vst [vmem:[#allocation3 + $0x20] sm:$0xff] %v1922
      %1955 = vst [vmem:[#allocation3 + $0x28] sm:$0xff] %v1923
      %1956 = vst [vmem:[#allocation3 + $0x30] sm:$0xff] %v1924
      %1957 = vst [vmem:[#allocation3 + $0x38] sm:$0xff] %v1925
      %1958 = vst [vmem:[#allocation3 + $0x40] sm:$0xff] %v1926
      %1959 = vst [vmem:[#allocation3 + $0x48] sm:$0xff] %v1927
      %1960 = vst [vmem:[#allocation3 + $0x50] sm:$0xff] %v1928
      %1961 = vst [vmem:[#allocation3 + $0x58] sm:$0xff] %v1929
      %1962 = vst [vmem:[#allocation3 + $0x60] sm:$0xff] %v1930
      %1963 = vst [vmem:[#allocation3 + $0x68] sm:$0xff] %v1931
      %1964 = vst [vmem:[#allocation3 + $0x70] sm:$0xff] %v1932
      %1965 = vst [vmem:[#allocation3 + $0x78] sm:$0xff] %v1933
      %1966 = vst [vmem:[#allocation3 + $0x80] sm:$0xff] %v1934
      %1967 = vst [vmem:[#allocation3 + $0x88] sm:$0xff] %v1935
      %1968 = vst [vmem:[#allocation3 + $0x90] sm:$0xff] %v1936
      %1969 = vst [vmem:[#allocation3 + $0x98] sm:$0xff] %v1937
      %1970 = vst [vmem:[#allocation3 + $0xa0] sm:$0xff] %v1938
      %1971 = vst [vmem:[#allocation3 + $0xa8] sm:$0xff] %v1939
      %1972 = vst [vmem:[#allocation3 + $0xb0] sm:$0xff] %v1940
      %1973 = vst [vmem:[#allocation3 + $0xb8] sm:$0xff] %v1941
      %1974 = vst [vmem:[#allocation3 + $0xc0] sm:$0xff] %v1942
      %1975 = vst [vmem:[#allocation3 + $0xc8] sm:$0xff] %v1943
      %1976 = vst [vmem:[#allocation3 + $0xd0] sm:$0xff] %v1944
      %1977 = vst [vmem:[#allocation3 + $0xd8] sm:$0xff] %v1945
      %1978 = vst [vmem:[#allocation3 + $0xe0] sm:$0xff] %v1946
      %1979 = vst [vmem:[#allocation3 + $0xe8] sm:$0xff] %v1947
      %1980 = vst [vmem:[#allocation3 + $0xf0] sm:$0xff] %v1948
      %1981 = vst [vmem:[#allocation3 + $0xf8] sm:$0xff] %v1949
      %v1982 = vld [vmem:[#allocation2 + $0x8] sm:$0xff]
      %v1983 = vld [vmem:[#allocation2 + $0x10] sm:$0xff]
      %v1984 = vld [vmem:[#allocation2 + $0x18] sm:$0xff]
      %v1985 = vld [vmem:[#allocation2 + $0x20] sm:$0xff]
      %v1986 = vld [vmem:[#allocation2 + $0x28] sm:$0xff]
      %v1987 = vld [vmem:[#allocation2 + $0x30] sm:$0xff]
      %v1988 = vld [vmem:[#allocation2 + $0x38] sm:$0xff]
      %v1989 = vld [vmem:[#allocation2 + $0x40] sm:$0xff]
      %v1990 = vld [vmem:[#allocation2 + $0x48] sm:$0xff]
      %v1991 = vld [vmem:[#allocation2 + $0x50] sm:$0xff]
      %v1992 = vld [vmem:[#allocation2 + $0x58] sm:$0xff]
      %v1993 = vld [vmem:[#allocation2 + $0x60] sm:$0xff]
      %v1994 = vld [vmem:[#allocation2 + $0x68] sm:$0xff]
      %v1995 = vld [vmem:[#allocation2 + $0x70] sm:$0xff]
      %v1996 = vld [vmem:[#allocation2 + $0x78] sm:$0xff]
      %v1997 = vld [vmem:[#allocation2 + $0x80] sm:$0xff]
      %v1998 = vld [vmem:[#allocation2 + $0x88] sm:$0x1]
      %v2000 = vshrl.u32 %v1044, 16
      %v2002 = vrot.slane %v2000, 7
      %v2003 = vshll.u32 %v1044, 16
      %v2005 = vor.u32 %v2002, %v2003
      %v2007 = vshrl.u32 %v1045, 16
      %v2009 = vrot.slane %v2007, 7
      %v2010 = vshll.u32 %v1045, 16
      %v2012 = vor.u32 %v2009, %v2010
      %v2013 = vsel %vm1255, %v2002, %v2012
      %v2015 = vshrl.u32 %v1046, 16
      %v2017 = vrot.slane %v2015, 7
      %v2018 = vshll.u32 %v1046, 16
      %v2020 = vor.u32 %v2017, %v2018
      %v2021 = vsel %vm1255, %v2009, %v2020
      %v2023 = vshrl.u32 %v1047, 16
      %v2025 = vrot.slane %v2023, 7
      %v2026 = vshll.u32 %v1047, 16
      %v2028 = vor.u32 %v2025, %v2026
      %v2029 = vsel %vm1255, %v2017, %v2028
      %v2031 = vshrl.u32 %v1048, 16
      %v2033 = vrot.slane %v2031, 7
      %v2034 = vshll.u32 %v1048, 16
      %v2036 = vor.u32 %v2033, %v2034
      %v2037 = vsel %vm1255, %v2025, %v2036
      %v2039 = vshrl.u32 %v1049, 16
      %v2041 = vrot.slane %v2039, 7
      %v2042 = vshll.u32 %v1049, 16
      %v2044 = vor.u32 %v2041, %v2042
      %v2045 = vsel %vm1255, %v2033, %v2044
      %v2047 = vshrl.u32 %v1050, 16
      %v2049 = vrot.slane %v2047, 7
      %v2050 = vshll.u32 %v1050, 16
      %v2052 = vor.u32 %v2049, %v2050
      %v2053 = vsel %vm1255, %v2041, %v2052
      %v2055 = vshrl.u32 %v1051, 16
      %v2057 = vrot.slane %v2055, 7
      %v2058 = vshll.u32 %v1051, 16
      %v2060 = vor.u32 %v2057, %v2058
      %v2061 = vsel %vm1255, %v2049, %v2060
      %v2063 = vshrl.u32 %v1052, 16
      %v2065 = vrot.slane %v2063, 7
      %v2066 = vshll.u32 %v1052, 16
      %v2068 = vor.u32 %v2065, %v2066
      %v2069 = vsel %vm1255, %v2057, %v2068
      %v2071 = vshrl.u32 %v1053, 16
      %v2073 = vrot.slane %v2071, 7
      %v2074 = vshll.u32 %v1053, 16
      %v2076 = vor.u32 %v2073, %v2074
      %v2077 = vsel %vm1255, %v2065, %v2076
      %v2079 = vshrl.u32 %v1054, 16
      %v2081 = vrot.slane %v2079, 7
      %v2082 = vshll.u32 %v1054, 16
      %v2084 = vor.u32 %v2081, %v2082
      %v2085 = vsel %vm1255, %v2073, %v2084
      %v2087 = vshrl.u32 %v1055, 16
      %v2089 = vrot.slane %v2087, 7
      %v2090 = vshll.u32 %v1055, 16
      %v2092 = vor.u32 %v2089, %v2090
      %v2093 = vsel %vm1255, %v2081, %v2092
      %v2095 = vshrl.u32 %v1056, 16
      %v2097 = vrot.slane %v2095, 7
      %v2098 = vshll.u32 %v1056, 16
      %v2100 = vor.u32 %v2097, %v2098
      %v2101 = vsel %vm1255, %v2089, %v2100
      %v2103 = vshrl.u32 %v1057, 16
      %v2105 = vrot.slane %v2103, 7
      %v2106 = vshll.u32 %v1057, 16
      %v2108 = vor.u32 %v2105, %v2106
      %v2109 = vsel %vm1255, %v2097, %v2108
      %v2111 = vshrl.u32 %v1058, 16
      %v2113 = vrot.slane %v2111, 7
      %v2114 = vshll.u32 %v1058, 16
      %v2116 = vor.u32 %v2113, %v2114
      %v2117 = vsel %vm1255, %v2105, %v2116
      %v2119 = vshrl.u32 %v1059, 16
      %v2121 = vrot.slane %v2119, 7
      %v2122 = vshll.u32 %v1059, 16
      %v2124 = vor.u32 %v2121, %v2122
      %v2125 = vsel %vm1255, %v2113, %v2124
      %v2143 = vmul.bf16 %v1982, %v2005
      %v2144 = vmul.bf16 %v1983, %v2013
      %v2145 = vmul.bf16 %v1984, %v2021
      %v2146 = vmul.bf16 %v1985, %v2029
      %v2147 = vmul.bf16 %v1986, %v2037
      %v2148 = vmul.bf16 %v1987, %v2045
      %v2149 = vmul.bf16 %v1988, %v2053
      %v2150 = vmul.bf16 %v1989, %v2061
      %v2151 = vmul.bf16 %v1990, %v2069
      %v2152 = vmul.bf16 %v1991, %v2077
      %v2153 = vmul.bf16 %v1992, %v2085
      %v2154 = vmul.bf16 %v1993, %v2093
      %v2155 = vmul.bf16 %v1994, %v2101
      %v2156 = vmul.bf16 %v1995, %v2109
      %v2157 = vmul.bf16 %v1996, %v2117
      %v2158 = vmul.bf16 %v1997, %v2125
      %v2159 = vmul.bf16 %v1998, %v2121
      %v2160 = vld [vmem:[%s2 + $0x80] sm:$0xf]
      %v2161 = vld [vmem:[%s2 + $0x84] sm:$0xf]
      %v2162 = vld [vmem:[%s2 + $0x88] sm:$0xf]
      %v2163 = vld [vmem:[%s2 + $0x8c] sm:$0xf]
      %v2164 = vld [vmem:[%s2 + $0x90] sm:$0xf]
      %v2165 = vld [vmem:[%s2 + $0x94] sm:$0xf]
      %v2166 = vld [vmem:[%s2 + $0x98] sm:$0xf]
      %v2167 = vld [vmem:[%s2 + $0x9c] sm:$0xf]
      %v2168 = vld [vmem:[%s2 + $0xa0] sm:$0xf]
      %v2169 = vld [vmem:[%s2 + $0xa4] sm:$0xf]
      %v2170 = vld [vmem:[%s2 + $0xa8] sm:$0xf]
      %v2171 = vld [vmem:[%s2 + $0xac] sm:$0xf]
      %v2172 = vld [vmem:[%s2 + $0xb0] sm:$0xf]
      %v2173 = vld [vmem:[%s2 + $0xb4] sm:$0xf]
      %v2174 = vld [vmem:[%s2 + $0xb8] sm:$0xf]
      %v2175 = vld [vmem:[%s2 + $0xbc] sm:$0xf]
      %v2177 = vshrl.u32 %v2143, 16
      %v2179 = vshll.u32 %v2143, 16
      %v2181 = vrot.slane %v2179, 1
      %v2182 = vor.u32 %v2177, %v2181
      %v2184 = vshll.u32 %v2144, 16
      %v2186 = vrot.slane %v2184, 1
      %v2187 = vsel %vm1077, %v2182, %v2186
      %v2188 = vshrl.u32 %v2144, 16
      %v2190 = vor.u32 %v2188, %v2186
      %v2192 = vshll.u32 %v2145, 16
      %v2194 = vrot.slane %v2192, 1
      %v2195 = vsel %vm1077, %v2190, %v2194
      %v2196 = vshrl.u32 %v2145, 16
      %v2198 = vor.u32 %v2196, %v2194
      %v2200 = vshll.u32 %v2146, 16
      %v2202 = vrot.slane %v2200, 1
      %v2203 = vsel %vm1077, %v2198, %v2202
      %v2204 = vshrl.u32 %v2146, 16
      %v2206 = vor.u32 %v2204, %v2202
      %v2208 = vshll.u32 %v2147, 16
      %v2210 = vrot.slane %v2208, 1
      %v2211 = vsel %vm1077, %v2206, %v2210
      %v2212 = vshrl.u32 %v2147, 16
      %v2214 = vor.u32 %v2212, %v2210
      %v2216 = vshll.u32 %v2148, 16
      %v2218 = vrot.slane %v2216, 1
      %v2219 = vsel %vm1077, %v2214, %v2218
      %v2220 = vshrl.u32 %v2148, 16
      %v2222 = vor.u32 %v2220, %v2218
      %v2224 = vshll.u32 %v2149, 16
      %v2226 = vrot.slane %v2224, 1
      %v2227 = vsel %vm1077, %v2222, %v2226
      %v2228 = vshrl.u32 %v2149, 16
      %v2230 = vor.u32 %v2228, %v2226
      %v2232 = vshll.u32 %v2150, 16
      %v2234 = vrot.slane %v2232, 1
      %v2235 = vsel %vm1077, %v2230, %v2234
      %v2236 = vshrl.u32 %v2150, 16
      %v2238 = vor.u32 %v2236, %v2234
      %v2240 = vshll.u32 %v2151, 16
      %v2242 = vrot.slane %v2240, 1
      %v2243 = vsel %vm1077, %v2238, %v2242
      %v2244 = vshrl.u32 %v2151, 16
      %v2246 = vor.u32 %v2244, %v2242
      %v2248 = vshll.u32 %v2152, 16
      %v2250 = vrot.slane %v2248, 1
      %v2251 = vsel %vm1077, %v2246, %v2250
      %v2252 = vshrl.u32 %v2152, 16
      %v2254 = vor.u32 %v2252, %v2250
      %v2256 = vshll.u32 %v2153, 16
      %v2258 = vrot.slane %v2256, 1
      %v2259 = vsel %vm1077, %v2254, %v2258
      %v2260 = vshrl.u32 %v2153, 16
      %v2262 = vor.u32 %v2260, %v2258
      %v2264 = vshll.u32 %v2154, 16
      %v2266 = vrot.slane %v2264, 1
      %v2267 = vsel %vm1077, %v2262, %v2266
      %v2268 = vshrl.u32 %v2154, 16
      %v2270 = vor.u32 %v2268, %v2266
      %v2272 = vshll.u32 %v2155, 16
      %v2274 = vrot.slane %v2272, 1
      %v2275 = vsel %vm1077, %v2270, %v2274
      %v2276 = vshrl.u32 %v2155, 16
      %v2278 = vor.u32 %v2276, %v2274
      %v2280 = vshll.u32 %v2156, 16
      %v2282 = vrot.slane %v2280, 1
      %v2283 = vsel %vm1077, %v2278, %v2282
      %v2284 = vshrl.u32 %v2156, 16
      %v2286 = vor.u32 %v2284, %v2282
      %v2288 = vshll.u32 %v2157, 16
      %v2290 = vrot.slane %v2288, 1
      %v2291 = vsel %vm1077, %v2286, %v2290
      %v2292 = vshrl.u32 %v2157, 16
      %v2294 = vor.u32 %v2292, %v2290
      %v2296 = vshll.u32 %v2158, 16
      %v2298 = vrot.slane %v2296, 1
      %v2299 = vsel %vm1077, %v2294, %v2298
      %v2300 = vshrl.u32 %v2158, 16
      %v2302 = vor.u32 %v2300, %v2298
      %v2304 = vshll.u32 %v2159, 16
      %v2306 = vrot.slane %v2304, 1
      %v2307 = vsel %vm1077, %v2302, %v2306
      %v2340 = vunpack.c.l.b16 %v2160
      %v2341 = vunpack.c.l.b16 %v2161
      %v2342 = vunpack.c.l.b16 %v2162
      %v2343 = vunpack.c.l.b16 %v2163
      %v2344 = vunpack.c.l.b16 %v2164
      %v2345 = vunpack.c.l.b16 %v2165
      %v2346 = vunpack.c.l.b16 %v2166
      %v2347 = vunpack.c.l.b16 %v2167
      %v2348 = vunpack.c.l.b16 %v2168
      %v2349 = vunpack.c.l.b16 %v2169
      %v2350 = vunpack.c.l.b16 %v2170
      %v2351 = vunpack.c.l.b16 %v2171
      %v2352 = vunpack.c.l.b16 %v2172
      %v2353 = vunpack.c.l.b16 %v2173
      %v2354 = vunpack.c.l.b16 %v2174
      %v2355 = vunpack.c.l.b16 %v2175
      %v2356 = vpack.c.b16 %v2341, %v2340
      %v2357 = vpack.c.b16 %v2343, %v2342
      %v2358 = vpack.c.b16 %v2345, %v2344
      %v2359 = vpack.c.b16 %v2347, %v2346
      %v2360 = vpack.c.b16 %v2349, %v2348
      %v2361 = vpack.c.b16 %v2351, %v2350
      %v2362 = vpack.c.b16 %v2353, %v2352
      %v2363 = vpack.c.b16 %v2355, %v2354
      %2372 = vmatprep.subr.bf16.mxu0 0
      %2373 = vmatpush1.bf16.msra.mxu0 %v2356
      %2374 = vmatprep.subr.bf16.mxu0 0
      %2375 = vmatpush1.bf16.msra.mxu0 %v2357
      %2376 = vmatprep.subr.bf16.mxu0 0
      %2377 = vmatpush1.bf16.msra.mxu0 %v2358
      %2378 = vmatprep.subr.bf16.mxu0 0
      %2379 = vmatpush1.bf16.msra.mxu0 %v2359
      %2380 = vmatprep.subr.bf16.mxu0 0
      %2381 = vmatpush1.bf16.msra.mxu0 %v2360
      %2382 = vmatprep.subr.bf16.mxu0 0
      %2383 = vmatpush1.bf16.msra.mxu0 %v2361
      %2384 = vmatprep.subr.bf16.mxu0 0
      %2385 = vmatpush1.bf16.msra.mxu0 %v2362
      %2386 = vmatprep.subr.bf16.mxu0 0
      %2387 = vmatpush1.bf16.msra.mxu0 %v2363
      %2388 = vmatprep.subr.bf16.mxu0 0
      %2389 = vmatpush1.bf16.msra.mxu0 0
      %2390 = vmatprep.subr.bf16.mxu0 0
      %2391 = vmatpush1.bf16.msra.mxu0 0
      %2392 = vmatprep.subr.bf16.mxu0 0
      %2393 = vmatpush1.bf16.msra.mxu0 0
      %2394 = vmatprep.subr.bf16.mxu0 0
      %2395 = vmatpush1.bf16.msra.mxu0 0
      %2396 = vmatprep.subr.bf16.mxu0 0
      %2397 = vmatpush1.bf16.msra.mxu0 0
      %2398 = vmatprep.subr.bf16.mxu0 0
      %2399 = vmatpush1.bf16.msra.mxu0 0
      %2400 = vmatprep.subr.bf16.mxu0 0
      %2401 = vmatpush1.bf16.msra.mxu0 0
      %2402 = vmatprep.subr.bf16.mxu0 0
      %2403 = vmatpush1.bf16.msra.mxu0 0
      %2404 = vmatprep.mubr.bf16.mxu0 0
      %2405 = vmatmul.mubr.bf16.gmra.mrb[0].mxu0 %v2187
      %v2406 = vpop.f32.mrb[0].mxu0
      %v2407 = vadd.f32 0.0, %v2406
      %v2408 = vpop.f32.mrb[0].mxu0
      %v2409 = vpop.f32.mrb[0].mxu0
      %v2410 = vadd.f32 0.0, %v2409
      %v2411 = vpop.f32.mrb[0].mxu0
      %2412 = vmatprep.mubr.bf16.mxu0 0
      %2413 = vmatmul.mubr.bf16.gmra.mrb[0].mxu0 %v2195
      %v2414 = vpop.f32.mrb[0].mxu0
      %v2415 = vadd.f32 0.0, %v2414
      %v2416 = vpop.f32.mrb[0].mxu0
      %v2417 = vpop.f32.mrb[0].mxu0
      %v2418 = vadd.f32 0.0, %v2417
      %v2419 = vpop.f32.mrb[0].mxu0
      %2420 = vmatprep.mubr.bf16.mxu0 0
      %2421 = vmatmul.mubr.bf16.gmra.mrb[0].mxu0 %v2203
      %v2422 = vpop.f32.mrb[0].mxu0
      %v2423 = vadd.f32 0.0, %v2422
      %v2424 = vpop.f32.mrb[0].mxu0
      %v2425 = vpop.f32.mrb[0].mxu0
      %v2426 = vadd.f32 0.0, %v2425
      %v2427 = vpop.f32.mrb[0].mxu0
      %2428 = vmatprep.mubr.bf16.mxu0 0
      %2429 = vmatmul.mubr.bf16.gmra.mrb[0].mxu0 %v2211
      %v2430 = vpop.f32.mrb[0].mxu0
      %v2431 = vadd.f32 0.0, %v2430
      %v2432 = vpop.f32.mrb[0].mxu0
      %v2433 = vpop.f32.mrb[0].mxu0
      %v2434 = vadd.f32 0.0, %v2433
      %v2435 = vpop.f32.mrb[0].mxu0
      %2436 = vmatprep.mubr.bf16.mxu0 0
      %2437 = vmatmul.mubr.bf16.gmra.mrb[0].mxu0 %v2219
      %v2438 = vpop.f32.mrb[0].mxu0
      %v2439 = vadd.f32 0.0, %v2438
      %v2440 = vpop.f32.mrb[0].mxu0
      %v2441 = vpop.f32.mrb[0].mxu0
      %v2442 = vadd.f32 0.0, %v2441
      %v2443 = vpop.f32.mrb[0].mxu0
      %2444 = vmatprep.mubr.bf16.mxu0 0
      %2445 = vmatmul.mubr.bf16.gmra.mrb[0].mxu0 %v2227
      %v2446 = vpop.f32.mrb[0].mxu0
      %v2447 = vadd.f32 0.0, %v2446
      %v2448 = vpop.f32.mrb[0].mxu0
      %v2449 = vpop.f32.mrb[0].mxu0
      %v2450 = vadd.f32 0.0, %v2449
      %v2451 = vpop.f32.mrb[0].mxu0
      %2452 = vmatprep.mubr.bf16.mxu0 0
      %2453 = vmatmul.mubr.bf16.gmra.mrb[0].mxu0 %v2235
      %v2454 = vpop.f32.mrb[0].mxu0
      %v2455 = vadd.f32 0.0, %v2454
      %v2456 = vpop.f32.mrb[0].mxu0
      %v2457 = vpop.f32.mrb[0].mxu0
      %v2458 = vadd.f32 0.0, %v2457
      %v2459 = vpop.f32.mrb[0].mxu0
      %2460 = vmatprep.mubr.bf16.mxu0 0
      %2461 = vmatmul.mubr.bf16.gmra.mrb[0].mxu0 %v2243
      %v2462 = vpop.f32.mrb[0].mxu0
      %v2463 = vadd.f32 0.0, %v2462
      %v2464 = vpop.f32.mrb[0].mxu0
      %v2465 = vpop.f32.mrb[0].mxu0
      %v2466 = vadd.f32 0.0, %v2465
      %v2467 = vpop.f32.mrb[0].mxu0
      %2468 = vmatprep.mubr.bf16.mxu0 0
      %2469 = vmatmul.mubr.bf16.gmra.mrb[0].mxu0 %v2251
      %v2470 = vpop.f32.mrb[0].mxu0
      %v2471 = vadd.f32 0.0, %v2470
      %v2472 = vpop.f32.mrb[0].mxu0
      %v2473 = vpop.f32.mrb[0].mxu0
      %v2474 = vadd.f32 0.0, %v2473
      %v2475 = vpop.f32.mrb[0].mxu0
      %2476 = vmatprep.mubr.bf16.mxu0 0
      %2477 = vmatmul.mubr.bf16.gmra.mrb[0].mxu0 %v2259
      %v2478 = vpop.f32.mrb[0].mxu0
      %v2479 = vadd.f32 0.0, %v2478
      %v2480 = vpop.f32.mrb[0].mxu0
      %v2481 = vpop.f32.mrb[0].mxu0
      %v2482 = vadd.f32 0.0, %v2481
      %v2483 = vpop.f32.mrb[0].mxu0
      %2484 = vmatprep.mubr.bf16.mxu0 0
      %2485 = vmatmul.mubr.bf16.gmra.mrb[0].mxu0 %v2267
      %v2486 = vpop.f32.mrb[0].mxu0
      %v2487 = vadd.f32 0.0, %v2486
      %v2488 = vpop.f32.mrb[0].mxu0
      %v2489 = vpop.f32.mrb[0].mxu0
      %v2490 = vadd.f32 0.0, %v2489
      %v2491 = vpop.f32.mrb[0].mxu0
      %2492 = vmatprep.mubr.bf16.mxu0 0
      %2493 = vmatmul.mubr.bf16.gmra.mrb[0].mxu0 %v2275
      %v2494 = vpop.f32.mrb[0].mxu0
      %v2495 = vadd.f32 0.0, %v2494
      %v2496 = vpop.f32.mrb[0].mxu0
      %v2497 = vpop.f32.mrb[0].mxu0
      %v2498 = vadd.f32 0.0, %v2497
      %v2499 = vpop.f32.mrb[0].mxu0
      %2500 = vmatprep.mubr.bf16.mxu0 0
      %2501 = vmatmul.mubr.bf16.gmra.mrb[0].mxu0 %v2283
      %v2502 = vpop.f32.mrb[0].mxu0
      %v2503 = vadd.f32 0.0, %v2502
      %v2504 = vpop.f32.mrb[0].mxu0
      %v2505 = vpop.f32.mrb[0].mxu0
      %v2506 = vadd.f32 0.0, %v2505
      %v2507 = vpop.f32.mrb[0].mxu0
      %2508 = vmatprep.mubr.bf16.mxu0 0
      %2509 = vmatmul.mubr.bf16.gmra.mrb[0].mxu0 %v2291
      %v2510 = vpop.f32.mrb[0].mxu0
      %v2511 = vadd.f32 0.0, %v2510
      %v2512 = vpop.f32.mrb[0].mxu0
      %v2513 = vpop.f32.mrb[0].mxu0
      %v2514 = vadd.f32 0.0, %v2513
      %v2515 = vpop.f32.mrb[0].mxu0
      %2516 = vmatprep.mubr.bf16.mxu0 0
      %2517 = vmatmul.mubr.bf16.gmra.mrb[0].mxu0 %v2299
      %v2518 = vpop.f32.mrb[0].mxu0
      %v2519 = vadd.f32 0.0, %v2518
      %v2520 = vpop.f32.mrb[0].mxu0
      %v2521 = vpop.f32.mrb[0].mxu0
      %v2522 = vadd.f32 0.0, %v2521
      %v2523 = vpop.f32.mrb[0].mxu0
      %2524 = vmatprep.mubr.bf16.mxu0 0
      %2525 = vmatmul.mubr.bf16.gmra.mrb[0].mxu0 %v2307
      %v2526 = vpop.f32.mrb[0].mxu0
      %v2527 = vadd.f32 0.0, %v2526
      %v2528 = vpop.f32.mrb[0].mxu0
      %v2529 = vpop.f32.mrb[0].mxu0
      %v2530 = vadd.f32 0.0, %v2529
      %v2531 = vpop.f32.mrb[0].mxu0
      %2532 = vdwg.mxu0
      %v2533 = vld [vmem:[#allocation3] sm:$0xff]
      %v2534 = vld [vmem:[#allocation3 + $0x8] sm:$0xff]
      %v2535 = vld [vmem:[#allocation3 + $0x10] sm:$0xff]
      %v2536 = vld [vmem:[#allocation3 + $0x18] sm:$0xff]
      %v2537 = vld [vmem:[#allocation3 + $0x20] sm:$0xff]
      %v2538 = vld [vmem:[#allocation3 + $0x28] sm:$0xff]
      %v2539 = vld [vmem:[#allocation3 + $0x30] sm:$0xff]
      %v2540 = vld [vmem:[#allocation3 + $0x38] sm:$0xff]
      %v2541 = vld [vmem:[#allocation3 + $0x40] sm:$0xff]
      %v2542 = vld [vmem:[#allocation3 + $0x48] sm:$0xff]
      %v2543 = vld [vmem:[#allocation3 + $0x50] sm:$0xff]
      %v2544 = vld [vmem:[#allocation3 + $0x58] sm:$0xff]
      %v2545 = vld [vmem:[#allocation3 + $0x60] sm:$0xff]
      %v2546 = vld [vmem:[#allocation3 + $0x68] sm:$0xff]
      %v2547 = vld [vmem:[#allocation3 + $0x70] sm:$0xff]
      %v2548 = vld [vmem:[#allocation3 + $0x78] sm:$0xff]
      %v2549 = vld [vmem:[#allocation3 + $0x80] sm:$0xff]
      %v2550 = vld [vmem:[#allocation3 + $0x88] sm:$0xff]
      %v2551 = vld [vmem:[#allocation3 + $0x90] sm:$0xff]
      %v2552 = vld [vmem:[#allocation3 + $0x98] sm:$0xff]
      %v2553 = vld [vmem:[#allocation3 + $0xa0] sm:$0xff]
      %v2554 = vld [vmem:[#allocation3 + $0xa8] sm:$0xff]
      %v2555 = vld [vmem:[#allocation3 + $0xb0] sm:$0xff]
      %v2556 = vld [vmem:[#allocation3 + $0xb8] sm:$0xff]
      %v2557 = vld [vmem:[#allocation3 + $0xc0] sm:$0xff]
      %v2558 = vld [vmem:[#allocation3 + $0xc8] sm:$0xff]
      %v2559 = vld [vmem:[#allocation3 + $0xd0] sm:$0xff]
      %v2560 = vld [vmem:[#allocation3 + $0xd8] sm:$0xff]
      %v2561 = vld [vmem:[#allocation3 + $0xe0] sm:$0xff]
      %v2562 = vld [vmem:[#allocation3 + $0xe8] sm:$0xff]
      %v2563 = vld [vmem:[#allocation3 + $0xf0] sm:$0xff]
      %v2564 = vld [vmem:[#allocation3 + $0xf8] sm:$0xff]
      %v2565 = vadd.f32 %v2533, %v2407
      %v2566 = vadd.f32 %v2534, %v2410
      %v2567 = vadd.f32 %v2535, %v2415
      %v2568 = vadd.f32 %v2536, %v2418
      %v2569 = vadd.f32 %v2537, %v2423
      %v2570 = vadd.f32 %v2538, %v2426
      %v2571 = vadd.f32 %v2539, %v2431
      %v2572 = vadd.f32 %v2540, %v2434
      %v2573 = vadd.f32 %v2541, %v2439
      %v2574 = vadd.f32 %v2542, %v2442
      %v2575 = vadd.f32 %v2543, %v2447
      %v2576 = vadd.f32 %v2544, %v2450
      %v2577 = vadd.f32 %v2545, %v2455
      %v2578 = vadd.f32 %v2546, %v2458
      %v2579 = vadd.f32 %v2547, %v2463
      %v2580 = vadd.f32 %v2548, %v2466
      %v2581 = vadd.f32 %v2549, %v2471
      %v2582 = vadd.f32 %v2550, %v2474
      %v2583 = vadd.f32 %v2551, %v2479
      %v2584 = vadd.f32 %v2552, %v2482
      %v2585 = vadd.f32 %v2553, %v2487
      %v2586 = vadd.f32 %v2554, %v2490
      %v2587 = vadd.f32 %v2555, %v2495
      %v2588 = vadd.f32 %v2556, %v2498
      %v2589 = vadd.f32 %v2557, %v2503
      %v2590 = vadd.f32 %v2558, %v2506
      %v2591 = vadd.f32 %v2559, %v2511
      %v2592 = vadd.f32 %v2560, %v2514
      %v2593 = vadd.f32 %v2561, %v2519
      %v2594 = vadd.f32 %v2562, %v2522
      %v2595 = vadd.f32 %v2563, %v2527
      %v2596 = vadd.f32 %v2564, %v2530
      %2597 = vst [vmem:[#allocation3] sm:$0xff] %v2565
      %2598 = vst [vmem:[#allocation3 + $0x8] sm:$0xff] %v2566
      %2599 = vst [vmem:[#allocation3 + $0x10] sm:$0xff] %v2567
      %2600 = vst [vmem:[#allocation3 + $0x18] sm:$0xff] %v2568
      %2601 = vst [vmem:[#allocation3 + $0x20] sm:$0xff] %v2569
      %2602 = vst [vmem:[#allocation3 + $0x28] sm:$0xff] %v2570
      %2603 = vst [vmem:[#allocation3 + $0x30] sm:$0xff] %v2571
      %2604 = vst [vmem:[#allocation3 + $0x38] sm:$0xff] %v2572
      %2605 = vst [vmem:[#allocation3 + $0x40] sm:$0xff] %v2573
      %2606 = vst [vmem:[#allocation3 + $0x48] sm:$0xff] %v2574
      %2607 = vst [vmem:[#allocation3 + $0x50] sm:$0xff] %v2575
      %2608 = vst [vmem:[#allocation3 + $0x58] sm:$0xff] %v2576
      %2609 = vst [vmem:[#allocation3 + $0x60] sm:$0xff] %v2577
      %2610 = vst [vmem:[#allocation3 + $0x68] sm:$0xff] %v2578
      %2611 = vst [vmem:[#allocation3 + $0x70] sm:$0xff] %v2579
      %2612 = vst [vmem:[#allocation3 + $0x78] sm:$0xff] %v2580
      %2613 = vst [vmem:[#allocation3 + $0x80] sm:$0xff] %v2581
      %2614 = vst [vmem:[#allocation3 + $0x88] sm:$0xff] %v2582
      %2615 = vst [vmem:[#allocation3 + $0x90] sm:$0xff] %v2583
      %2616 = vst [vmem:[#allocation3 + $0x98] sm:$0xff] %v2584
      %2617 = vst [vmem:[#allocation3 + $0xa0] sm:$0xff] %v2585
      %2618 = vst [vmem:[#allocation3 + $0xa8] sm:$0xff] %v2586
      %2619 = vst [vmem:[#allocation3 + $0xb0] sm:$0xff] %v2587
      %2620 = vst [vmem:[#allocation3 + $0xb8] sm:$0xff] %v2588
      %2621 = vst [vmem:[#allocation3 + $0xc0] sm:$0xff] %v2589
      %2622 = vst [vmem:[#allocation3 + $0xc8] sm:$0xff] %v2590
      %2623 = vst [vmem:[#allocation3 + $0xd0] sm:$0xff] %v2591
      %2624 = vst [vmem:[#allocation3 + $0xd8] sm:$0xff] %v2592
      %2625 = vst [vmem:[#allocation3 + $0xe0] sm:$0xff] %v2593
      %2626 = vst [vmem:[#allocation3 + $0xe8] sm:$0xff] %v2594
      %2627 = vst [vmem:[#allocation3 + $0xf0] sm:$0xff] %v2595
      %2628 = vst [vmem:[#allocation3 + $0xf8] sm:$0xff] %v2596
      %v2629 = vld [vmem:[#allocation2 + $0x8] sm:$0x80]
      %v2630 = vld [vmem:[#allocation2 + $0x10] sm:$0xff]
      %v2631 = vld [vmem:[#allocation2 + $0x18] sm:$0xff]
      %v2632 = vld [vmem:[#allocation2 + $0x20] sm:$0xff]
      %v2633 = vld [vmem:[#allocation2 + $0x28] sm:$0xff]
      %v2634 = vld [vmem:[#allocation2 + $0x30] sm:$0xff]
      %v2635 = vld [vmem:[#allocation2 + $0x38] sm:$0xff]
      %v2636 = vld [vmem:[#allocation2 + $0x40] sm:$0xff]
      %v2637 = vld [vmem:[#allocation2 + $0x48] sm:$0xff]
      %v2638 = vld [vmem:[#allocation2 + $0x50] sm:$0xff]
      %v2639 = vld [vmem:[#allocation2 + $0x58] sm:$0xff]
      %v2640 = vld [vmem:[#allocation2 + $0x60] sm:$0xff]
      %v2641 = vld [vmem:[#allocation2 + $0x68] sm:$0xff]
      %v2642 = vld [vmem:[#allocation2 + $0x70] sm:$0xff]
      %v2643 = vld [vmem:[#allocation2 + $0x78] sm:$0xff]
      %v2644 = vld [vmem:[#allocation2 + $0x80] sm:$0xff]
      %v2645 = vld [vmem:[#allocation2 + $0x88] sm:$0xff]
      %v2646 = vmul.bf16 %v2629, %v1081
      %v2647 = vmul.bf16 %v2630, %v1089
      %v2648 = vmul.bf16 %v2631, %v1097
      %v2649 = vmul.bf16 %v2632, %v1105
      %v2650 = vmul.bf16 %v2633, %v1113
      %v2651 = vmul.bf16 %v2634, %v1121
      %v2652 = vmul.bf16 %v2635, %v1129
      %v2653 = vmul.bf16 %v2636, %v1137
      %v2654 = vmul.bf16 %v2637, %v1145
      %v2655 = vmul.bf16 %v2638, %v1153
      %v2656 = vmul.bf16 %v2639, %v1161
      %v2657 = vmul.bf16 %v2640, %v1169
      %v2658 = vmul.bf16 %v2641, %v1177
      %v2659 = vmul.bf16 %v2642, %v1185
      %v2660 = vmul.bf16 %v2643, %v1193
      %v2661 = vmul.bf16 %v2644, %v1201
      %v2662 = vmul.bf16 %v2645, %v1204
      %v2663 = vld [vmem:[%s2 + $0xc0] sm:$0xf]
      %v2664 = vld [vmem:[%s2 + $0xc4] sm:$0xf]
      %v2665 = vld [vmem:[%s2 + $0xc8] sm:$0xf]
      %v2666 = vld [vmem:[%s2 + $0xcc] sm:$0xf]
      %v2667 = vld [vmem:[%s2 + $0xd0] sm:$0xf]
      %v2668 = vld [vmem:[%s2 + $0xd4] sm:$0xf]
      %v2669 = vld [vmem:[%s2 + $0xd8] sm:$0xf]
      %v2670 = vld [vmem:[%s2 + $0xdc] sm:$0xf]
      %v2671 = vld [vmem:[%s2 + $0xe0] sm:$0xf]
      %v2672 = vld [vmem:[%s2 + $0xe4] sm:$0xf]
      %v2673 = vld [vmem:[%s2 + $0xe8] sm:$0xf]
      %v2674 = vld [vmem:[%s2 + $0xec] sm:$0xf]
      %v2675 = vld [vmem:[%s2 + $0xf0] sm:$0xf]
      %v2676 = vld [vmem:[%s2 + $0xf4] sm:$0xf]
      %v2677 = vld [vmem:[%s2 + $0xf8] sm:$0xf]
      %v2678 = vld [vmem:[%s2 + $0xfc] sm:$0xf]
      %v2680 = vshrl.u32 %v2646, 16
      %v2682 = vrot.slane %v2680, 7
      %v2684 = vshrl.u32 %v2647, 16
      %v2686 = vrot.slane %v2684, 7
      %v2687 = vshll.u32 %v2647, 16
      %v2689 = vor.u32 %v2686, %v2687
      %v2690 = vsel %vm1255, %v2682, %v2689
      %v2692 = vshrl.u32 %v2648, 16
      %v2694 = vrot.slane %v2692, 7
      %v2695 = vshll.u32 %v2648, 16
      %v2697 = vor.u32 %v2694, %v2695
      %v2698 = vsel %vm1255, %v2686, %v2697
      %v2700 = vshrl.u32 %v2649, 16
      %v2702 = vrot.slane %v2700, 7
      %v2703 = vshll.u32 %v2649, 16
      %v2705 = vor.u32 %v2702, %v2703
      %v2706 = vsel %vm1255, %v2694, %v2705
      %v2708 = vshrl.u32 %v2650, 16
      %v2710 = vrot.slane %v2708, 7
      %v2711 = vshll.u32 %v2650, 16
      %v2713 = vor.u32 %v2710, %v2711
      %v2714 = vsel %vm1255, %v2702, %v2713
      %v2716 = vshrl.u32 %v2651, 16
      %v2718 = vrot.slane %v2716, 7
      %v2719 = vshll.u32 %v2651, 16
      %v2721 = vor.u32 %v2718, %v2719
      %v2722 = vsel %vm1255, %v2710, %v2721
      %v2724 = vshrl.u32 %v2652, 16
      %v2726 = vrot.slane %v2724, 7
      %v2727 = vshll.u32 %v2652, 16
      %v2729 = vor.u32 %v2726, %v2727
      %v2730 = vsel %vm1255, %v2718, %v2729
      %v2732 = vshrl.u32 %v2653, 16
      %v2734 = vrot.slane %v2732, 7
      %v2735 = vshll.u32 %v2653, 16
      %v2737 = vor.u32 %v2734, %v2735
      %v2738 = vsel %vm1255, %v2726, %v2737
      %v2740 = vshrl.u32 %v2654, 16
      %v2742 = vrot.slane %v2740, 7
      %v2743 = vshll.u32 %v2654, 16
      %v2745 = vor.u32 %v2742, %v2743
      %v2746 = vsel %vm1255, %v2734, %v2745
      %v2748 = vshrl.u32 %v2655, 16
      %v2750 = vrot.slane %v2748, 7
      %v2751 = vshll.u32 %v2655, 16
      %v2753 = vor.u32 %v2750, %v2751
      %v2754 = vsel %vm1255, %v2742, %v2753
      %v2756 = vshrl.u32 %v2656, 16
      %v2758 = vrot.slane %v2756, 7
      %v2759 = vshll.u32 %v2656, 16
      %v2761 = vor.u32 %v2758, %v2759
      %v2762 = vsel %vm1255, %v2750, %v2761
      %v2764 = vshrl.u32 %v2657, 16
      %v2766 = vrot.slane %v2764, 7
      %v2767 = vshll.u32 %v2657, 16
      %v2769 = vor.u32 %v2766, %v2767
      %v2770 = vsel %vm1255, %v2758, %v2769
      %v2772 = vshrl.u32 %v2658, 16
      %v2774 = vrot.slane %v2772, 7
      %v2775 = vshll.u32 %v2658, 16
      %v2777 = vor.u32 %v2774, %v2775
      %v2778 = vsel %vm1255, %v2766, %v2777
      %v2780 = vshrl.u32 %v2659, 16
      %v2782 = vrot.slane %v2780, 7
      %v2783 = vshll.u32 %v2659, 16
      %v2785 = vor.u32 %v2782, %v2783
      %v2786 = vsel %vm1255, %v2774, %v2785
      %v2788 = vshrl.u32 %v2660, 16
      %v2790 = vrot.slane %v2788, 7
      %v2791 = vshll.u32 %v2660, 16
      %v2793 = vor.u32 %v2790, %v2791
      %v2794 = vsel %vm1255, %v2782, %v2793
      %v2796 = vshrl.u32 %v2661, 16
      %v2798 = vrot.slane %v2796, 7
      %v2799 = vshll.u32 %v2661, 16
      %v2801 = vor.u32 %v2798, %v2799
      %v2802 = vsel %vm1255, %v2790, %v2801
      %v2804 = vshrl.u32 %v2662, 16
      %v2806 = vrot.slane %v2804, 7
      %v2807 = vshll.u32 %v2662, 16
      %v2809 = vor.u32 %v2806, %v2807
      %v2810 = vsel %vm1255, %v2798, %v2809
      %v2843 = vunpack.c.l.b16 %v2663
      %v2844 = vunpack.c.l.b16 %v2664
      %v2845 = vunpack.c.l.b16 %v2665
      %v2846 = vunpack.c.l.b16 %v2666
      %v2847 = vunpack.c.l.b16 %v2667
      %v2848 = vunpack.c.l.b16 %v2668
      %v2849 = vunpack.c.l.b16 %v2669
      %v2850 = vunpack.c.l.b16 %v2670
      %v2851 = vunpack.c.l.b16 %v2671
      %v2852 = vunpack.c.l.b16 %v2672
      %v2853 = vunpack.c.l.b16 %v2673
      %v2854 = vunpack.c.l.b16 %v2674
      %v2855 = vunpack.c.l.b16 %v2675
      %v2856 = vunpack.c.l.b16 %v2676
      %v2857 = vunpack.c.l.b16 %v2677
      %v2858 = vunpack.c.l.b16 %v2678
      %v2859 = vpack.c.b16 %v2844, %v2843
      %v2860 = vpack.c.b16 %v2846, %v2845
      %v2861 = vpack.c.b16 %v2848, %v2847
      %v2862 = vpack.c.b16 %v2850, %v2849
      %v2863 = vpack.c.b16 %v2852, %v2851
      %v2864 = vpack.c.b16 %v2854, %v2853
      %v2865 = vpack.c.b16 %v2856, %v2855
      %v2866 = vpack.c.b16 %v2858, %v2857
      %2875 = vmatprep.subr.bf16.mxu0 0
      %2876 = vmatpush1.bf16.msra.mxu0 %v2859
      %2877 = vmatprep.subr.bf16.mxu0 0
      %2878 = vmatpush1.bf16.msra.mxu0 %v2860
      %2879 = vmatprep.subr.bf16.mxu0 0
      %2880 = vmatpush1.bf16.msra.mxu0 %v2861
      %2881 = vmatprep.subr.bf16.mxu0 0
      %2882 = vmatpush1.bf16.msra.mxu0 %v2862
      %2883 = vmatprep.subr.bf16.mxu0 0
      %2884 = vmatpush1.bf16.msra.mxu0 %v2863
      %2885 = vmatprep.subr.bf16.mxu0 0
      %2886 = vmatpush1.bf16.msra.mxu0 %v2864
      %2887 = vmatprep.subr.bf16.mxu0 0
      %2888 = vmatpush1.bf16.msra.mxu0 %v2865
      %2889 = vmatprep.subr.bf16.mxu0 0
      %2890 = vmatpush1.bf16.msra.mxu0 %v2866
      %2891 = vmatprep.subr.bf16.mxu0 0
      %2892 = vmatpush1.bf16.msra.mxu0 0
      %2893 = vmatprep.subr.bf16.mxu0 0
      %2894 = vmatpush1.bf16.msra.mxu0 0
      %2895 = vmatprep.subr.bf16.mxu0 0
      %2896 = vmatpush1.bf16.msra.mxu0 0
      %2897 = vmatprep.subr.bf16.mxu0 0
      %2898 = vmatpush1.bf16.msra.mxu0 0
      %2899 = vmatprep.subr.bf16.mxu0 0
      %2900 = vmatpush1.bf16.msra.mxu0 0
      %2901 = vmatprep.subr.bf16.mxu0 0
      %2902 = vmatpush1.bf16.msra.mxu0 0
      %2903 = vmatprep.subr.bf16.mxu0 0
      %2904 = vmatpush1.bf16.msra.mxu0 0
      %2905 = vmatprep.subr.bf16.mxu0 0
      %2906 = vmatpush1.bf16.msra.mxu0 0
      %2907 = vmatprep.mubr.bf16.mxu0 0
      %2908 = vmatmul.mubr.bf16.gmra.mrb[0].mxu0 %v2690
      %v2909 = vpop.f32.mrb[0].mxu0
      %v2910 = vadd.f32 0.0, %v2909
      %v2911 = vpop.f32.mrb[0].mxu0
      %v2912 = vpop.f32.mrb[0].mxu0
      %v2913 = vadd.f32 0.0, %v2912
      %v2914 = vpop.f32.mrb[0].mxu0
      %2915 = vmatprep.mubr.bf16.mxu0 0
      %2916 = vmatmul.mubr.bf16.gmra.mrb[0].mxu0 %v2698
      %v2917 = vpop.f32.mrb[0].mxu0
      %v2918 = vadd.f32 0.0, %v2917
      %v2919 = vpop.f32.mrb[0].mxu0
      %v2920 = vpop.f32.mrb[0].mxu0
      %v2921 = vadd.f32 0.0, %v2920
      %v2922 = vpop.f32.mrb[0].mxu0
      %2923 = vmatprep.mubr.bf16.mxu0 0
      %2924 = vmatmul.mubr.bf16.gmra.mrb[0].mxu0 %v2706
      %v2925 = vpop.f32.mrb[0].mxu0
      %v2926 = vadd.f32 0.0, %v2925
      %v2927 = vpop.f32.mrb[0].mxu0
      %v2928 = vpop.f32.mrb[0].mxu0
      %v2929 = vadd.f32 0.0, %v2928
      %v2930 = vpop.f32.mrb[0].mxu0
      %2931 = vmatprep.mubr.bf16.mxu0 0
      %2932 = vmatmul.mubr.bf16.gmra.mrb[0].mxu0 %v2714
      %v2933 = vpop.f32.mrb[0].mxu0
      %v2934 = vadd.f32 0.0, %v2933
      %v2935 = vpop.f32.mrb[0].mxu0
      %v2936 = vpop.f32.mrb[0].mxu0
      %v2937 = vadd.f32 0.0, %v2936
      %v2938 = vpop.f32.mrb[0].mxu0
      %2939 = vmatprep.mubr.bf16.mxu0 0
      %2940 = vmatmul.mubr.bf16.gmra.mrb[0].mxu0 %v2722
      %v2941 = vpop.f32.mrb[0].mxu0
      %v2942 = vadd.f32 0.0, %v2941
      %v2943 = vpop.f32.mrb[0].mxu0
      %v2944 = vpop.f32.mrb[0].mxu0
      %v2945 = vadd.f32 0.0, %v2944
      %v2946 = vpop.f32.mrb[0].mxu0
      %2947 = vmatprep.mubr.bf16.mxu0 0
      %2948 = vmatmul.mubr.bf16.gmra.mrb[0].mxu0 %v2730
      %v2949 = vpop.f32.mrb[0].mxu0
      %v2950 = vadd.f32 0.0, %v2949
      %v2951 = vpop.f32.mrb[0].mxu0
      %v2952 = vpop.f32.mrb[0].mxu0
      %v2953 = vadd.f32 0.0, %v2952
      %v2954 = vpop.f32.mrb[0].mxu0
      %2955 = vmatprep.mubr.bf16.mxu0 0
      %2956 = vmatmul.mubr.bf16.gmra.mrb[0].mxu0 %v2738
      %v2957 = vpop.f32.mrb[0].mxu0
      %v2958 = vadd.f32 0.0, %v2957
      %v2959 = vpop.f32.mrb[0].mxu0
      %v2960 = vpop.f32.mrb[0].mxu0
      %v2961 = vadd.f32 0.0, %v2960
      %v2962 = vpop.f32.mrb[0].mxu0
      %2963 = vmatprep.mubr.bf16.mxu0 0
      %2964 = vmatmul.mubr.bf16.gmra.mrb[0].mxu0 %v2746
      %v2965 = vpop.f32.mrb[0].mxu0
      %v2966 = vadd.f32 0.0, %v2965
      %v2967 = vpop.f32.mrb[0].mxu0
      %v2968 = vpop.f32.mrb[0].mxu0
      %v2969 = vadd.f32 0.0, %v2968
      %v2970 = vpop.f32.mrb[0].mxu0
      %2971 = vmatprep.mubr.bf16.mxu0 0
      %2972 = vmatmul.mubr.bf16.gmra.mrb[0].mxu0 %v2754
      %v2973 = vpop.f32.mrb[0].mxu0
      %v2974 = vadd.f32 0.0, %v2973
      %v2975 = vpop.f32.mrb[0].mxu0
      %v2976 = vpop.f32.mrb[0].mxu0
      %v2977 = vadd.f32 0.0, %v2976
      %v2978 = vpop.f32.mrb[0].mxu0
      %2979 = vmatprep.mubr.bf16.mxu0 0
      %2980 = vmatmul.mubr.bf16.gmra.mrb[0].mxu0 %v2762
      %v2981 = vpop.f32.mrb[0].mxu0
      %v2982 = vadd.f32 0.0, %v2981
      %v2983 = vpop.f32.mrb[0].mxu0
      %v2984 = vpop.f32.mrb[0].mxu0
      %v2985 = vadd.f32 0.0, %v2984
      %v2986 = vpop.f32.mrb[0].mxu0
      %2987 = vmatprep.mubr.bf16.mxu0 0
      %2988 = vmatmul.mubr.bf16.gmra.mrb[0].mxu0 %v2770
      %v2989 = vpop.f32.mrb[0].mxu0
      %v2990 = vadd.f32 0.0, %v2989
      %v2991 = vpop.f32.mrb[0].mxu0
      %v2992 = vpop.f32.mrb[0].mxu0
      %v2993 = vadd.f32 0.0, %v2992
      %v2994 = vpop.f32.mrb[0].mxu0
      %2995 = vmatprep.mubr.bf16.mxu0 0
      %2996 = vmatmul.mubr.bf16.gmra.mrb[0].mxu0 %v2778
      %v2997 = vpop.f32.mrb[0].mxu0
      %v2998 = vadd.f32 0.0, %v2997
      %v2999 = vpop.f32.mrb[0].mxu0
      %v3000 = vpop.f32.mrb[0].mxu0
      %v3001 = vadd.f32 0.0, %v3000
      %v3002 = vpop.f32.mrb[0].mxu0
      %3003 = vmatprep.mubr.bf16.mxu0 0
      %3004 = vmatmul.mubr.bf16.gmra.mrb[0].mxu0 %v2786
      %v3005 = vpop.f32.mrb[0].mxu0
      %v3006 = vadd.f32 0.0, %v3005
      %v3007 = vpop.f32.mrb[0].mxu0
      %v3008 = vpop.f32.mrb[0].mxu0
      %v3009 = vadd.f32 0.0, %v3008
      %v3010 = vpop.f32.mrb[0].mxu0
      %3011 = vmatprep.mubr.bf16.mxu0 0
      %3012 = vmatmul.mubr.bf16.gmra.mrb[0].mxu0 %v2794
      %v3013 = vpop.f32.mrb[0].mxu0
      %v3014 = vadd.f32 0.0, %v3013
      %v3015 = vpop.f32.mrb[0].mxu0
      %v3016 = vpop.f32.mrb[0].mxu0
      %v3017 = vadd.f32 0.0, %v3016
      %v3018 = vpop.f32.mrb[0].mxu0
      %3019 = vmatprep.mubr.bf16.mxu0 0
      %3020 = vmatmul.mubr.bf16.gmra.mrb[0].mxu0 %v2802
      %v3021 = vpop.f32.mrb[0].mxu0
      %v3022 = vadd.f32 0.0, %v3021
      %v3023 = vpop.f32.mrb[0].mxu0
      %v3024 = vpop.f32.mrb[0].mxu0
      %v3025 = vadd.f32 0.0, %v3024
      %v3026 = vpop.f32.mrb[0].mxu0
      %3027 = vmatprep.mubr.bf16.mxu0 0
      %3028 = vmatmul.mubr.bf16.gmra.mrb[0].mxu0 %v2810
      %v3029 = vpop.f32.mrb[0].mxu0
      %v3030 = vadd.f32 0.0, %v3029
      %v3031 = vpop.f32.mrb[0].mxu0
      %v3032 = vpop.f32.mrb[0].mxu0
      %v3033 = vadd.f32 0.0, %v3032
      %v3034 = vpop.f32.mrb[0].mxu0
      %3035 = vdwg.mxu0
      %v3036 = vld [vmem:[#allocation3] sm:$0xff]
      %v3037 = vld [vmem:[#allocation3 + $0x8] sm:$0xff]
      %v3038 = vld [vmem:[#allocation3 + $0x10] sm:$0xff]
      %v3039 = vld [vmem:[#allocation3 + $0x18] sm:$0xff]
      %v3040 = vld [vmem:[#allocation3 + $0x20] sm:$0xff]
      %v3041 = vld [vmem:[#allocation3 + $0x28] sm:$0xff]
      %v3042 = vld [vmem:[#allocation3 + $0x30] sm:$0xff]
      %v3043 = vld [vmem:[#allocation3 + $0x38] sm:$0xff]
      %v3044 = vld [vmem:[#allocation3 + $0x40] sm:$0xff]
      %v3045 = vld [vmem:[#allocation3 + $0x48] sm:$0xff]
      %v3046 = vld [vmem:[#allocation3 + $0x50] sm:$0xff]
      %v3047 = vld [vmem:[#allocation3 + $0x58] sm:$0xff]
      %v3048 = vld [vmem:[#allocation3 + $0x60] sm:$0xff]
      %v3049 = vld [vmem:[#allocation3 + $0x68] sm:$0xff]
      %v3050 = vld [vmem:[#allocation3 + $0x70] sm:$0xff]
      %v3051 = vld [vmem:[#allocation3 + $0x78] sm:$0xff]
      %v3052 = vld [vmem:[#allocation3 + $0x80] sm:$0xff]
      %v3053 = vld [vmem:[#allocation3 + $0x88] sm:$0xff]
      %v3054 = vld [vmem:[#allocation3 + $0x90] sm:$0xff]
      %v3055 = vld [vmem:[#allocation3 + $0x98] sm:$0xff]
      %v3056 = vld [vmem:[#allocation3 + $0xa0] sm:$0xff]
      %v3057 = vld [vmem:[#allocation3 + $0xa8] sm:$0xff]
      %v3058 = vld [vmem:[#allocation3 + $0xb0] sm:$0xff]
      %v3059 = vld [vmem:[#allocation3 + $0xb8] sm:$0xff]
      %v3060 = vld [vmem:[#allocation3 + $0xc0] sm:$0xff]
      %v3061 = vld [vmem:[#allocation3 + $0xc8] sm:$0xff]
      %v3062 = vld [vmem:[#allocation3 + $0xd0] sm:$0xff]
      %v3063 = vld [vmem:[#allocation3 + $0xd8] sm:$0xff]
      %v3064 = vld [vmem:[#allocation3 + $0xe0] sm:$0xff]
      %v3065 = vld [vmem:[#allocation3 + $0xe8] sm:$0xff]
      %v3066 = vld [vmem:[#allocation3 + $0xf0] sm:$0xff]
      %v3067 = vld [vmem:[#allocation3 + $0xf8] sm:$0xff]
      %v3068 = vadd.f32 %v3036, %v2910
      %v3069 = vadd.f32 %v3037, %v2913
      %v3070 = vadd.f32 %v3038, %v2918
      %v3071 = vadd.f32 %v3039, %v2921
      %v3072 = vadd.f32 %v3040, %v2926
      %v3073 = vadd.f32 %v3041, %v2929
      %v3074 = vadd.f32 %v3042, %v2934
      %v3075 = vadd.f32 %v3043, %v2937
      %v3076 = vadd.f32 %v3044, %v2942
      %v3077 = vadd.f32 %v3045, %v2945
      %v3078 = vadd.f32 %v3046, %v2950
      %v3079 = vadd.f32 %v3047, %v2953
      %v3080 = vadd.f32 %v3048, %v2958
      %v3081 = vadd.f32 %v3049, %v2961
      %v3082 = vadd.f32 %v3050, %v2966
      %v3083 = vadd.f32 %v3051, %v2969
      %v3084 = vadd.f32 %v3052, %v2974
      %v3085 = vadd.f32 %v3053, %v2977
      %v3086 = vadd.f32 %v3054, %v2982
      %v3087 = vadd.f32 %v3055, %v2985
      %v3088 = vadd.f32 %v3056, %v2990
      %v3089 = vadd.f32 %v3057, %v2993
      %v3090 = vadd.f32 %v3058, %v2998
      %v3091 = vadd.f32 %v3059, %v3001
      %v3092 = vadd.f32 %v3060, %v3006
      %v3093 = vadd.f32 %v3061, %v3009
      %v3094 = vadd.f32 %v3062, %v3014
      %v3095 = vadd.f32 %v3063, %v3017
      %v3096 = vadd.f32 %v3064, %v3022
      %v3097 = vadd.f32 %v3065, %v3025
      %v3098 = vadd.f32 %v3066, %v3030
      %v3099 = vadd.f32 %v3067, %v3033
      %3100 = vst [vmem:[#allocation3] sm:$0xff] %v3068
      %3101 = vst [vmem:[#allocation3 + $0x8] sm:$0xff] %v3069
      %3102 = vst [vmem:[#allocation3 + $0x10] sm:$0xff] %v3070
      %3103 = vst [vmem:[#allocation3 + $0x18] sm:$0xff] %v3071
      %3104 = vst [vmem:[#allocation3 + $0x20] sm:$0xff] %v3072
      %3105 = vst [vmem:[#allocation3 + $0x28] sm:$0xff] %v3073
      %3106 = vst [vmem:[#allocation3 + $0x30] sm:$0xff] %v3074
      %3107 = vst [vmem:[#allocation3 + $0x38] sm:$0xff] %v3075
      %3108 = vst [vmem:[#allocation3 + $0x40] sm:$0xff] %v3076
      %3109 = vst [vmem:[#allocation3 + $0x48] sm:$0xff] %v3077
      %3110 = vst [vmem:[#allocation3 + $0x50] sm:$0xff] %v3078
      %3111 = vst [vmem:[#allocation3 + $0x58] sm:$0xff] %v3079
      %3112 = vst [vmem:[#allocation3 + $0x60] sm:$0xff] %v3080
      %3113 = vst [vmem:[#allocation3 + $0x68] sm:$0xff] %v3081
      %3114 = vst [vmem:[#allocation3 + $0x70] sm:$0xff] %v3082
      %3115 = vst [vmem:[#allocation3 + $0x78] sm:$0xff] %v3083
      %3116 = vst [vmem:[#allocation3 + $0x80] sm:$0xff] %v3084
      %3117 = vst [vmem:[#allocation3 + $0x88] sm:$0xff] %v3085
      %3118 = vst [vmem:[#allocation3 + $0x90] sm:$0xff] %v3086
      %3119 = vst [vmem:[#allocation3 + $0x98] sm:$0xff] %v3087
      %3120 = vst [vmem:[#allocation3 + $0xa0] sm:$0xff] %v3088
      %3121 = vst [vmem:[#allocation3 + $0xa8] sm:$0xff] %v3089
      %3122 = vst [vmem:[#allocation3 + $0xb0] sm:$0xff] %v3090
      %3123 = vst [vmem:[#allocation3 + $0xb8] sm:$0xff] %v3091
      %3124 = vst [vmem:[#allocation3 + $0xc0] sm:$0xff] %v3092
      %3125 = vst [vmem:[#allocation3 + $0xc8] sm:$0xff] %v3093
      %3126 = vst [vmem:[#allocation3 + $0xd0] sm:$0xff] %v3094
      %3127 = vst [vmem:[#allocation3 + $0xd8] sm:$0xff] %v3095
      %3128 = vst [vmem:[#allocation3 + $0xe0] sm:$0xff] %v3096
      %3129 = vst [vmem:[#allocation3 + $0xe8] sm:$0xff] %v3097
      %3130 = vst [vmem:[#allocation3 + $0xf0] sm:$0xff] %v3098
      %3131 = vst [vmem:[#allocation3 + $0xf8] sm:$0xff] %v3099
      %v3132 = vld [vmem:[#allocation2 + $0x10] sm:$0xff]
      %v3133 = vld [vmem:[#allocation2 + $0x18] sm:$0xff]
      %v3134 = vld [vmem:[#allocation2 + $0x20] sm:$0xff]
      %v3135 = vld [vmem:[#allocation2 + $0x28] sm:$0xff]
      %v3136 = vld [vmem:[#allocation2 + $0x30] sm:$0xff]
      %v3137 = vld [vmem:[#allocation2 + $0x38] sm:$0xff]
      %v3138 = vld [vmem:[#allocation2 + $0x40] sm:$0xff]
      %v3139 = vld [vmem:[#allocation2 + $0x48] sm:$0xff]
      %v3140 = vld [vmem:[#allocation2 + $0x50] sm:$0xff]
      %v3141 = vld [vmem:[#allocation2 + $0x58] sm:$0xff]
      %v3142 = vld [vmem:[#allocation2 + $0x60] sm:$0xff]
      %v3143 = vld [vmem:[#allocation2 + $0x68] sm:$0xff]
      %v3144 = vld [vmem:[#allocation2 + $0x70] sm:$0xff]
      %v3145 = vld [vmem:[#allocation2 + $0x78] sm:$0xff]
      %v3146 = vld [vmem:[#allocation2 + $0x80] sm:$0xff]
      %v3147 = vld [vmem:[#allocation2 + $0x88] sm:$0xff]
      %v3148 = vld [vmem:[%s2 + $0x100] sm:$0xf]
      %v3149 = vld [vmem:[%s2 + $0x104] sm:$0xf]
      %v3150 = vld [vmem:[%s2 + $0x108] sm:$0xf]
      %v3151 = vld [vmem:[%s2 + $0x10c] sm:$0xf]
      %v3152 = vld [vmem:[%s2 + $0x110] sm:$0xf]
      %v3153 = vld [vmem:[%s2 + $0x114] sm:$0xf]
      %v3154 = vld [vmem:[%s2 + $0x118] sm:$0xf]
      %v3155 = vld [vmem:[%s2 + $0x11c] sm:$0xf]
      %v3156 = vld [vmem:[%s2 + $0x120] sm:$0xf]
      %v3157 = vld [vmem:[%s2 + $0x124] sm:$0xf]
      %v3158 = vld [vmem:[%s2 + $0x128] sm:$0xf]
      %v3159 = vld [vmem:[%s2 + $0x12c] sm:$0xf]
      %v3160 = vld [vmem:[%s2 + $0x130] sm:$0xf]
      %v3161 = vld [vmem:[%s2 + $0x134] sm:$0xf]
      %v3162 = vld [vmem:[%s2 + $0x138] sm:$0xf]
      %v3163 = vld [vmem:[%s2 + $0x13c] sm:$0xf]
      %v3180 = vunpack.c.l.b16 %v3148
      %v3181 = vunpack.c.l.b16 %v3149
      %v3182 = vunpack.c.l.b16 %v3150
      %v3183 = vunpack.c.l.b16 %v3151
      %v3184 = vunpack.c.l.b16 %v3152
      %v3185 = vunpack.c.l.b16 %v3153
      %v3186 = vunpack.c.l.b16 %v3154
      %v3187 = vunpack.c.l.b16 %v3155
      %v3188 = vunpack.c.l.b16 %v3156
      %v3189 = vunpack.c.l.b16 %v3157
      %v3190 = vunpack.c.l.b16 %v3158
      %v3191 = vunpack.c.l.b16 %v3159
      %v3192 = vunpack.c.l.b16 %v3160
      %v3193 = vunpack.c.l.b16 %v3161
      %v3194 = vunpack.c.l.b16 %v3162
      %v3195 = vunpack.c.l.b16 %v3163
      %v3196 = vpack.c.b16 %v3181, %v3180
      %v3197 = vpack.c.b16 %v3183, %v3182
      %v3198 = vpack.c.b16 %v3185, %v3184
      %v3199 = vpack.c.b16 %v3187, %v3186
      %v3200 = vpack.c.b16 %v3189, %v3188
      %v3201 = vpack.c.b16 %v3191, %v3190
      %v3202 = vpack.c.b16 %v3193, %v3192
      %v3203 = vpack.c.b16 %v3195, %v3194
      %3212 = vmatprep.subr.bf16.mxu0 0
      %3213 = vmatpush1.bf16.msra.mxu0 %v3196
      %3214 = vmatprep.subr.bf16.mxu0 0
      %3215 = vmatpush1.bf16.msra.mxu0 %v3197
      %3216 = vmatprep.subr.bf16.mxu0 0
      %3217 = vmatpush1.bf16.msra.mxu0 %v3198
      %3218 = vmatprep.subr.bf16.mxu0 0
      %3219 = vmatpush1.bf16.msra.mxu0 %v3199
      %3220 = vmatprep.subr.bf16.mxu0 0
      %3221 = vmatpush1.bf16.msra.mxu0 %v3200
      %3222 = vmatprep.subr.bf16.mxu0 0
      %3223 = vmatpush1.bf16.msra.mxu0 %v3201
      %3224 = vmatprep.subr.bf16.mxu0 0
      %3225 = vmatpush1.bf16.msra.mxu0 %v3202
      %3226 = vmatprep.subr.bf16.mxu0 0
      %3227 = vmatpush1.bf16.msra.mxu0 %v3203
      %3228 = vmatprep.subr.bf16.mxu0 0
      %3229 = vmatpush1.bf16.msra.mxu0 0
      %3230 = vmatprep.subr.bf16.mxu0 0
      %3231 = vmatpush1.bf16.msra.mxu0 0
      %3232 = vmatprep.subr.bf16.mxu0 0
      %3233 = vmatpush1.bf16.msra.mxu0 0
      %3234 = vmatprep.subr.bf16.mxu0 0
      %3235 = vmatpush1.bf16.msra.mxu0 0
      %3236 = vmatprep.subr.bf16.mxu0 0
      %3237 = vmatpush1.bf16.msra.mxu0 0
      %3238 = vmatprep.subr.bf16.mxu0 0
      %3239 = vmatpush1.bf16.msra.mxu0 0
      %3240 = vmatprep.subr.bf16.mxu0 0
      %3241 = vmatpush1.bf16.msra.mxu0 0
      %3242 = vmatprep.subr.bf16.mxu0 0
      %3243 = vmatpush1.bf16.msra.mxu0 0
      %3244 = vmatprep.mubr.bf16.mxu0 0
      %3245 = vmatmul.mubr.bf16.gmra.mrb[0].mxu0 %v3132
      %v3246 = vpop.f32.mrb[0].mxu0
      %v3247 = vadd.f32 0.0, %v3246
      %v3248 = vpop.f32.mrb[0].mxu0
      %v3249 = vpop.f32.mrb[0].mxu0
      %v3250 = vadd.f32 0.0, %v3249
      %v3251 = vpop.f32.mrb[0].mxu0
      %3252 = vmatprep.mubr.bf16.mxu0 0
      %3253 = vmatmul.mubr.bf16.gmra.mrb[0].mxu0 %v3133
      %v3254 = vpop.f32.mrb[0].mxu0
      %v3255 = vadd.f32 0.0, %v3254
      %v3256 = vpop.f32.mrb[0].mxu0
      %v3257 = vpop.f32.mrb[0].mxu0
      %v3258 = vadd.f32 0.0, %v3257
      %v3259 = vpop.f32.mrb[0].mxu0
      %3260 = vmatprep.mubr.bf16.mxu0 0
      %3261 = vmatmul.mubr.bf16.gmra.mrb[0].mxu0 %v3134
      %v3262 = vpop.f32.mrb[0].mxu0
      %v3263 = vadd.f32 0.0, %v3262
      %v3264 = vpop.f32.mrb[0].mxu0
      %v3265 = vpop.f32.mrb[0].mxu0
      %v3266 = vadd.f32 0.0, %v3265
      %v3267 = vpop.f32.mrb[0].mxu0
      %3268 = vmatprep.mubr.bf16.mxu0 0
      %3269 = vmatmul.mubr.bf16.gmra.mrb[0].mxu0 %v3135
      %v3270 = vpop.f32.mrb[0].mxu0
      %v3271 = vadd.f32 0.0, %v3270
      %v3272 = vpop.f32.mrb[0].mxu0
      %v3273 = vpop.f32.mrb[0].mxu0
      %v3274 = vadd.f32 0.0, %v3273
      %v3275 = vpop.f32.mrb[0].mxu0
      %3276 = vmatprep.mubr.bf16.mxu0 0
      %3277 = vmatmul.mubr.bf16.gmra.mrb[0].mxu0 %v3136
      %v3278 = vpop.f32.mrb[0].mxu0
      %v3279 = vadd.f32 0.0, %v3278
      %v3280 = vpop.f32.mrb[0].mxu0
      %v3281 = vpop.f32.mrb[0].mxu0
      %v3282 = vadd.f32 0.0, %v3281
      %v3283 = vpop.f32.mrb[0].mxu0
      %3284 = vmatprep.mubr.bf16.mxu0 0
      %3285 = vmatmul.mubr.bf16.gmra.mrb[0].mxu0 %v3137
      %v3286 = vpop.f32.mrb[0].mxu0
      %v3287 = vadd.f32 0.0, %v3286
      %v3288 = vpop.f32.mrb[0].mxu0
      %v3289 = vpop.f32.mrb[0].mxu0
      %v3290 = vadd.f32 0.0, %v3289
      %v3291 = vpop.f32.mrb[0].mxu0
      %3292 = vmatprep.mubr.bf16.mxu0 0
      %3293 = vmatmul.mubr.bf16.gmra.mrb[0].mxu0 %v3138
      %v3294 = vpop.f32.mrb[0].mxu0
      %v3295 = vadd.f32 0.0, %v3294
      %v3296 = vpop.f32.mrb[0].mxu0
      %v3297 = vpop.f32.mrb[0].mxu0
      %v3298 = vadd.f32 0.0, %v3297
      %v3299 = vpop.f32.mrb[0].mxu0
      %3300 = vmatprep.mubr.bf16.mxu0 0
      %3301 = vmatmul.mubr.bf16.gmra.mrb[0].mxu0 %v3139
      %v3302 = vpop.f32.mrb[0].mxu0
      %v3303 = vadd.f32 0.0, %v3302
      %v3304 = vpop.f32.mrb[0].mxu0
      %v3305 = vpop.f32.mrb[0].mxu0
      %v3306 = vadd.f32 0.0, %v3305
      %v3307 = vpop.f32.mrb[0].mxu0
      %3308 = vmatprep.mubr.bf16.mxu0 0
      %3309 = vmatmul.mubr.bf16.gmra.mrb[0].mxu0 %v3140
      %v3310 = vpop.f32.mrb[0].mxu0
      %v3311 = vadd.f32 0.0, %v3310
      %v3312 = vpop.f32.mrb[0].mxu0
      %v3313 = vpop.f32.mrb[0].mxu0
      %v3314 = vadd.f32 0.0, %v3313
      %v3315 = vpop.f32.mrb[0].mxu0
      %3316 = vmatprep.mubr.bf16.mxu0 0
      %3317 = vmatmul.mubr.bf16.gmra.mrb[0].mxu0 %v3141
      %v3318 = vpop.f32.mrb[0].mxu0
      %v3319 = vadd.f32 0.0, %v3318
      %v3320 = vpop.f32.mrb[0].mxu0
      %v3321 = vpop.f32.mrb[0].mxu0
      %v3322 = vadd.f32 0.0, %v3321
      %v3323 = vpop.f32.mrb[0].mxu0
      %3324 = vmatprep.mubr.bf16.mxu0 0
      %3325 = vmatmul.mubr.bf16.gmra.mrb[0].mxu0 %v3142
      %v3326 = vpop.f32.mrb[0].mxu0
      %v3327 = vadd.f32 0.0, %v3326
      %v3328 = vpop.f32.mrb[0].mxu0
      %v3329 = vpop.f32.mrb[0].mxu0
      %v3330 = vadd.f32 0.0, %v3329
      %v3331 = vpop.f32.mrb[0].mxu0
      %3332 = vmatprep.mubr.bf16.mxu0 0
      %3333 = vmatmul.mubr.bf16.gmra.mrb[0].mxu0 %v3143
      %v3334 = vpop.f32.mrb[0].mxu0
      %v3335 = vadd.f32 0.0, %v3334
      %v3336 = vpop.f32.mrb[0].mxu0
      %v3337 = vpop.f32.mrb[0].mxu0
      %v3338 = vadd.f32 0.0, %v3337
      %v3339 = vpop.f32.mrb[0].mxu0
      %3340 = vmatprep.mubr.bf16.mxu0 0
      %3341 = vmatmul.mubr.bf16.gmra.mrb[0].mxu0 %v3144
      %v3342 = vpop.f32.mrb[0].mxu0
      %v3343 = vadd.f32 0.0, %v3342
      %v3344 = vpop.f32.mrb[0].mxu0
      %v3345 = vpop.f32.mrb[0].mxu0
      %v3346 = vadd.f32 0.0, %v3345
      %v3347 = vpop.f32.mrb[0].mxu0
      %3348 = vmatprep.mubr.bf16.mxu0 0
      %3349 = vmatmul.mubr.bf16.gmra.mrb[0].mxu0 %v3145
      %v3350 = vpop.f32.mrb[0].mxu0
      %v3351 = vadd.f32 0.0, %v3350
      %v3352 = vpop.f32.mrb[0].mxu0
      %v3353 = vpop.f32.mrb[0].mxu0
      %v3354 = vadd.f32 0.0, %v3353
      %v3355 = vpop.f32.mrb[0].mxu0
      %3356 = vmatprep.mubr.bf16.mxu0 0
      %3357 = vmatmul.mubr.bf16.gmra.mrb[0].mxu0 %v3146
      %v3358 = vpop.f32.mrb[0].mxu0
      %v3359 = vadd.f32 0.0, %v3358
      %v3360 = vpop.f32.mrb[0].mxu0
      %v3361 = vpop.f32.mrb[0].mxu0
      %v3362 = vadd.f32 0.0, %v3361
      %v3363 = vpop.f32.mrb[0].mxu0
      %3364 = vmatprep.mubr.bf16.mxu0 0
      %3365 = vmatmul.mubr.bf16.gmra.mrb[0].mxu0 %v3147
      %v3366 = vpop.f32.mrb[0].mxu0
      %v3367 = vadd.f32 0.0, %v3366
      %v3368 = vpop.f32.mrb[0].mxu0
      %v3369 = vpop.f32.mrb[0].mxu0
      %v3370 = vadd.f32 0.0, %v3369
      %v3371 = vpop.f32.mrb[0].mxu0
      %3372 = vdwg.mxu0
      %v3373 = vld [vmem:[#allocation3] sm:$0xff]
      %v3374 = vld [vmem:[#allocation3 + $0x8] sm:$0xff]
      %v3375 = vld [vmem:[#allocation3 + $0x10] sm:$0xff]
      %v3376 = vld [vmem:[#allocation3 + $0x18] sm:$0xff]
      %v3377 = vld [vmem:[#allocation3 + $0x20] sm:$0xff]
      %v3378 = vld [vmem:[#allocation3 + $0x28] sm:$0xff]
      %v3379 = vld [vmem:[#allocation3 + $0x30] sm:$0xff]
      %v3380 = vld [vmem:[#allocation3 + $0x38] sm:$0xff]
      %v3381 = vld [vmem:[#allocation3 + $0x40] sm:$0xff]
      %v3382 = vld [vmem:[#allocation3 + $0x48] sm:$0xff]
      %v3383 = vld [vmem:[#allocation3 + $0x50] sm:$0xff]
      %v3384 = vld [vmem:[#allocation3 + $0x58] sm:$0xff]
      %v3385 = vld [vmem:[#allocation3 + $0x60] sm:$0xff]
      %v3386 = vld [vmem:[#allocation3 + $0x68] sm:$0xff]
      %v3387 = vld [vmem:[#allocation3 + $0x70] sm:$0xff]
      %v3388 = vld [vmem:[#allocation3 + $0x78] sm:$0xff]
      %v3389 = vld [vmem:[#allocation3 + $0x80] sm:$0xff]
      %v3390 = vld [vmem:[#allocation3 + $0x88] sm:$0xff]
      %v3391 = vld [vmem:[#allocation3 + $0x90] sm:$0xff]
      %v3392 = vld [vmem:[#allocation3 + $0x98] sm:$0xff]
      %v3393 = vld [vmem:[#allocation3 + $0xa0] sm:$0xff]
      %v3394 = vld [vmem:[#allocation3 + $0xa8] sm:$0xff]
      %v3395 = vld [vmem:[#allocation3 + $0xb0] sm:$0xff]
      %v3396 = vld [vmem:[#allocation3 + $0xb8] sm:$0xff]
      %v3397 = vld [vmem:[#allocation3 + $0xc0] sm:$0xff]
      %v3398 = vld [vmem:[#allocation3 + $0xc8] sm:$0xff]
      %v3399 = vld [vmem:[#allocation3 + $0xd0] sm:$0xff]
      %v3400 = vld [vmem:[#allocation3 + $0xd8] sm:$0xff]
      %v3401 = vld [vmem:[#allocation3 + $0xe0] sm:$0xff]
      %v3402 = vld [vmem:[#allocation3 + $0xe8] sm:$0xff]
      %v3403 = vld [vmem:[#allocation3 + $0xf0] sm:$0xff]
      %v3404 = vld [vmem:[#allocation3 + $0xf8] sm:$0xff]
      %v3405 = vadd.f32 %v3373, %v3247
      %v3406 = vadd.f32 %v3374, %v3250
      %v3407 = vadd.f32 %v3375, %v3255
      %v3408 = vadd.f32 %v3376, %v3258
      %v3409 = vadd.f32 %v3377, %v3263
      %v3410 = vadd.f32 %v3378, %v3266
      %v3411 = vadd.f32 %v3379, %v3271
      %v3412 = vadd.f32 %v3380, %v3274
      %v3413 = vadd.f32 %v3381, %v3279
      %v3414 = vadd.f32 %v3382, %v3282
      %v3415 = vadd.f32 %v3383, %v3287
      %v3416 = vadd.f32 %v3384, %v3290
      %v3417 = vadd.f32 %v3385, %v3295
      %v3418 = vadd.f32 %v3386, %v3298
      %v3419 = vadd.f32 %v3387, %v3303
      %v3420 = vadd.f32 %v3388, %v3306
      %v3421 = vadd.f32 %v3389, %v3311
      %v3422 = vadd.f32 %v3390, %v3314
      %v3423 = vadd.f32 %v3391, %v3319
      %v3424 = vadd.f32 %v3392, %v3322
      %v3425 = vadd.f32 %v3393, %v3327
      %v3426 = vadd.f32 %v3394, %v3330
      %v3427 = vadd.f32 %v3395, %v3335
      %v3428 = vadd.f32 %v3396, %v3338
      %v3429 = vadd.f32 %v3397, %v3343
      %v3430 = vadd.f32 %v3398, %v3346
      %v3431 = vadd.f32 %v3399, %v3351
      %v3432 = vadd.f32 %v3400, %v3354
      %v3433 = vadd.f32 %v3401, %v3359
      %v3434 = vadd.f32 %v3402, %v3362
      %v3435 = vadd.f32 %v3403, %v3367
      %v3436 = vadd.f32 %v3404, %v3370
      %3437 = vst [vmem:[#allocation3] sm:$0xff] %v3405
      %3438 = vst [vmem:[#allocation3 + $0x8] sm:$0xff] %v3406
      %3439 = vst [vmem:[#allocation3 + $0x10] sm:$0xff] %v3407
      %3440 = vst [vmem:[#allocation3 + $0x18] sm:$0xff] %v3408
      %3441 = vst [vmem:[#allocation3 + $0x20] sm:$0xff] %v3409
      %3442 = vst [vmem:[#allocation3 + $0x28] sm:$0xff] %v3410
      %3443 = vst [vmem:[#allocation3 + $0x30] sm:$0xff] %v3411
      %3444 = vst [vmem:[#allocation3 + $0x38] sm:$0xff] %v3412
      %3445 = vst [vmem:[#allocation3 + $0x40] sm:$0xff] %v3413
      %3446 = vst [vmem:[#allocation3 + $0x48] sm:$0xff] %v3414
      %3447 = vst [vmem:[#allocation3 + $0x50] sm:$0xff] %v3415
      %3448 = vst [vmem:[#allocation3 + $0x58] sm:$0xff] %v3416
      %3449 = vst [vmem:[#allocation3 + $0x60] sm:$0xff] %v3417
      %3450 = vst [vmem:[#allocation3 + $0x68] sm:$0xff] %v3418
      %3451 = vst [vmem:[#allocation3 + $0x70] sm:$0xff] %v3419
      %3452 = vst [vmem:[#allocation3 + $0x78] sm:$0xff] %v3420
      %3453 = vst [vmem:[#allocation3 + $0x80] sm:$0xff] %v3421
      %3454 = vst [vmem:[#allocation3 + $0x88] sm:$0xff] %v3422
      %3455 = vst [vmem:[#allocation3 + $0x90] sm:$0xff] %v3423
      %3456 = vst [vmem:[#allocation3 + $0x98] sm:$0xff] %v3424
      %3457 = vst [vmem:[#allocation3 + $0xa0] sm:$0xff] %v3425
      %3458 = vst [vmem:[#allocation3 + $0xa8] sm:$0xff] %v3426
      %3459 = vst [vmem:[#allocation3 + $0xb0] sm:$0xff] %v3427
      %3460 = vst [vmem:[#allocation3 + $0xb8] sm:$0xff] %v3428
      %3461 = vst [vmem:[#allocation3 + $0xc0] sm:$0xff] %v3429
      %3462 = vst [vmem:[#allocation3 + $0xc8] sm:$0xff] %v3430
      %3463 = vst [vmem:[#allocation3 + $0xd0] sm:$0xff] %v3431
      %3464 = vst [vmem:[#allocation3 + $0xd8] sm:$0xff] %v3432
      %3465 = vst [vmem:[#allocation3 + $0xe0] sm:$0xff] %v3433
      %3466 = vst [vmem:[#allocation3 + $0xe8] sm:$0xff] %v3434
      %3467 = vst [vmem:[#allocation3 + $0xf0] sm:$0xff] %v3435
      %3468 = vst [vmem:[#allocation3 + $0xf8] sm:$0xff] %v3436
      %v3469 = vld [vmem:[#allocation2 + $0x10] sm:$0xff]
      %v3470 = vld [vmem:[#allocation2 + $0x18] sm:$0xff]
      %v3471 = vld [vmem:[#allocation2 + $0x20] sm:$0xff]
      %v3472 = vld [vmem:[#allocation2 + $0x28] sm:$0xff]
      %v3473 = vld [vmem:[#allocation2 + $0x30] sm:$0xff]
      %v3474 = vld [vmem:[#allocation2 + $0x38] sm:$0xff]
      %v3475 = vld [vmem:[#allocation2 + $0x40] sm:$0xff]
      %v3476 = vld [vmem:[#allocation2 + $0x48] sm:$0xff]
      %v3477 = vld [vmem:[#allocation2 + $0x50] sm:$0xff]
      %v3478 = vld [vmem:[#allocation2 + $0x58] sm:$0xff]
      %v3479 = vld [vmem:[#allocation2 + $0x60] sm:$0xff]
      %v3480 = vld [vmem:[#allocation2 + $0x68] sm:$0xff]
      %v3481 = vld [vmem:[#allocation2 + $0x70] sm:$0xff]
      %v3482 = vld [vmem:[#allocation2 + $0x78] sm:$0xff]
      %v3483 = vld [vmem:[#allocation2 + $0x80] sm:$0xff]
      %v3484 = vld [vmem:[#allocation2 + $0x88] sm:$0xff]
      %v3485 = vld [vmem:[#allocation2 + $0x90] sm:$0x1]
      %v3486 = vmul.bf16 %v3469, %v2005
      %v3487 = vmul.bf16 %v3470, %v2013
      %v3488 = vmul.bf16 %v3471, %v2021
      %v3489 = vmul.bf16 %v3472, %v2029
      %v3490 = vmul.bf16 %v3473, %v2037
      %v3491 = vmul.bf16 %v3474, %v2045
      %v3492 = vmul.bf16 %v3475, %v2053
      %v3493 = vmul.bf16 %v3476, %v2061
      %v3494 = vmul.bf16 %v3477, %v2069
      %v3495 = vmul.bf16 %v3478, %v2077
      %v3496 = vmul.bf16 %v3479, %v2085
      %v3497 = vmul.bf16 %v3480, %v2093
      %v3498 = vmul.bf16 %v3481, %v2101
      %v3499 = vmul.bf16 %v3482, %v2109
      %v3500 = vmul.bf16 %v3483, %v2117
      %v3501 = vmul.bf16 %v3484, %v2125
      %v3502 = vmul.bf16 %v3485, %v2121
      %v3503 = vld [vmem:[%s2 + $0x140] sm:$0xf]
      %v3504 = vld [vmem:[%s2 + $0x144] sm:$0xf]
      %v3505 = vld [vmem:[%s2 + $0x148] sm:$0xf]
      %v3506 = vld [vmem:[%s2 + $0x14c] sm:$0xf]
      %v3507 = vld [vmem:[%s2 + $0x150] sm:$0xf]
      %v3508 = vld [vmem:[%s2 + $0x154] sm:$0xf]
      %v3509 = vld [vmem:[%s2 + $0x158] sm:$0xf]
      %v3510 = vld [vmem:[%s2 + $0x15c] sm:$0xf]
      %v3511 = vld [vmem:[%s2 + $0x160] sm:$0xf]
      %v3512 = vld [vmem:[%s2 + $0x164] sm:$0xf]
      %v3513 = vld [vmem:[%s2 + $0x168] sm:$0xf]
      %v3514 = vld [vmem:[%s2 + $0x16c] sm:$0xf]
      %v3515 = vld [vmem:[%s2 + $0x170] sm:$0xf]
      %v3516 = vld [vmem:[%s2 + $0x174] sm:$0xf]
      %v3517 = vld [vmem:[%s2 + $0x178] sm:$0xf]
      %v3518 = vld [vmem:[%s2 + $0x17c] sm:$0xf]
      %v3520 = vshrl.u32 %v3486, 16
      %v3522 = vshll.u32 %v3486, 16
      %v3524 = vrot.slane %v3522, 1
      %v3525 = vor.u32 %v3520, %v3524
      %v3527 = vshll.u32 %v3487, 16
      %v3529 = vrot.slane %v3527, 1
      %v3530 = vsel %vm1077, %v3525, %v3529
      %v3531 = vshrl.u32 %v3487, 16
      %v3533 = vor.u32 %v3531, %v3529
      %v3535 = vshll.u32 %v3488, 16
      %v3537 = vrot.slane %v3535, 1
      %v3538 = vsel %vm1077, %v3533, %v3537
      %v3539 = vshrl.u32 %v3488, 16
      %v3541 = vor.u32 %v3539, %v3537
      %v3543 = vshll.u32 %v3489, 16
      %v3545 = vrot.slane %v3543, 1
      %v3546 = vsel %vm1077, %v3541, %v3545
      %v3547 = vshrl.u32 %v3489, 16
      %v3549 = vor.u32 %v3547, %v3545
      %v3551 = vshll.u32 %v3490, 16
      %v3553 = vrot.slane %v3551, 1
      %v3554 = vsel %vm1077, %v3549, %v3553
      %v3555 = vshrl.u32 %v3490, 16
      %v3557 = vor.u32 %v3555, %v3553
      %v3559 = vshll.u32 %v3491, 16
      %v3561 = vrot.slane %v3559, 1
      %v3562 = vsel %vm1077, %v3557, %v3561
      %v3563 = vshrl.u32 %v3491, 16
      %v3565 = vor.u32 %v3563, %v3561
      %v3567 = vshll.u32 %v3492, 16
      %v3569 = vrot.slane %v3567, 1
      %v3570 = vsel %vm1077, %v3565, %v3569
      %v3571 = vshrl.u32 %v3492, 16
      %v3573 = vor.u32 %v3571, %v3569
      %v3575 = vshll.u32 %v3493, 16
      %v3577 = vrot.slane %v3575, 1
      %v3578 = vsel %vm1077, %v3573, %v3577
      %v3579 = vshrl.u32 %v3493, 16
      %v3581 = vor.u32 %v3579, %v3577
      %v3583 = vshll.u32 %v3494, 16
      %v3585 = vrot.slane %v3583, 1
      %v3586 = vsel %vm1077, %v3581, %v3585
      %v3587 = vshrl.u32 %v3494, 16
      %v3589 = vor.u32 %v3587, %v3585
      %v3591 = vshll.u32 %v3495, 16
      %v3593 = vrot.slane %v3591, 1
      %v3594 = vsel %vm1077, %v3589, %v3593
      %v3595 = vshrl.u32 %v3495, 16
      %v3597 = vor.u32 %v3595, %v3593
      %v3599 = vshll.u32 %v3496, 16
      %v3601 = vrot.slane %v3599, 1
      %v3602 = vsel %vm1077, %v3597, %v3601
      %v3603 = vshrl.u32 %v3496, 16
      %v3605 = vor.u32 %v3603, %v3601
      %v3607 = vshll.u32 %v3497, 16
      %v3609 = vrot.slane %v3607, 1
      %v3610 = vsel %vm1077, %v3605, %v3609
      %v3611 = vshrl.u32 %v3497, 16
      %v3613 = vor.u32 %v3611, %v3609
      %v3615 = vshll.u32 %v3498, 16
      %v3617 = vrot.slane %v3615, 1
      %v3618 = vsel %vm1077, %v3613, %v3617
      %v3619 = vshrl.u32 %v3498, 16
      %v3621 = vor.u32 %v3619, %v3617
      %v3623 = vshll.u32 %v3499, 16
      %v3625 = vrot.slane %v3623, 1
      %v3626 = vsel %vm1077, %v3621, %v3625
      %v3627 = vshrl.u32 %v3499, 16
      %v3629 = vor.u32 %v3627, %v3625
      %v3631 = vshll.u32 %v3500, 16
      %v3633 = vrot.slane %v3631, 1
      %v3634 = vsel %vm1077, %v3629, %v3633
      %v3635 = vshrl.u32 %v3500, 16
      %v3637 = vor.u32 %v3635, %v3633
      %v3639 = vshll.u32 %v3501, 16
      %v3641 = vrot.slane %v3639, 1
      %v3642 = vsel %vm1077, %v3637, %v3641
      %v3643 = vshrl.u32 %v3501, 16
      %v3645 = vor.u32 %v3643, %v3641
      %v3647 = vshll.u32 %v3502, 16
      %v3649 = vrot.slane %v3647, 1
      %v3650 = vsel %vm1077, %v3645, %v3649
      %v3683 = vunpack.c.l.b16 %v3503
      %v3684 = vunpack.c.l.b16 %v3504
      %v3685 = vunpack.c.l.b16 %v3505
      %v3686 = vunpack.c.l.b16 %v3506
      %v3687 = vunpack.c.l.b16 %v3507
      %v3688 = vunpack.c.l.b16 %v3508
      %v3689 = vunpack.c.l.b16 %v3509
      %v3690 = vunpack.c.l.b16 %v3510
      %v3691 = vunpack.c.l.b16 %v3511
      %v3692 = vunpack.c.l.b16 %v3512
      %v3693 = vunpack.c.l.b16 %v3513
      %v3694 = vunpack.c.l.b16 %v3514
      %v3695 = vunpack.c.l.b16 %v3515
      %v3696 = vunpack.c.l.b16 %v3516
      %v3697 = vunpack.c.l.b16 %v3517
      %v3698 = vunpack.c.l.b16 %v3518
      %v3699 = vpack.c.b16 %v3684, %v3683
      %v3700 = vpack.c.b16 %v3686, %v3685
      %v3701 = vpack.c.b16 %v3688, %v3687
      %v3702 = vpack.c.b16 %v3690, %v3689
      %v3703 = vpack.c.b16 %v3692, %v3691
      %v3704 = vpack.c.b16 %v3694, %v3693
      %v3705 = vpack.c.b16 %v3696, %v3695
      %v3706 = vpack.c.b16 %v3698, %v3697
      %3715 = vmatprep.subr.bf16.mxu0 0
      %3716 = vmatpush1.bf16.msra.mxu0 %v3699
      %3717 = vmatprep.subr.bf16.mxu0 0
      %3718 = vmatpush1.bf16.msra.mxu0 %v3700
      %3719 = vmatprep.subr.bf16.mxu0 0
      %3720 = vmatpush1.bf16.msra.mxu0 %v3701
      %3721 = vmatprep.subr.bf16.mxu0 0
      %3722 = vmatpush1.bf16.msra.mxu0 %v3702
      %3723 = vmatprep.subr.bf16.mxu0 0
      %3724 = vmatpush1.bf16.msra.mxu0 %v3703
      %3725 = vmatprep.subr.bf16.mxu0 0
      %3726 = vmatpush1.bf16.msra.mxu0 %v3704
      %3727 = vmatprep.subr.bf16.mxu0 0
      %3728 = vmatpush1.bf16.msra.mxu0 %v3705
      %3729 = vmatprep.subr.bf16.mxu0 0
      %3730 = vmatpush1.bf16.msra.mxu0 %v3706
      %3731 = vmatprep.subr.bf16.mxu0 0
      %3732 = vmatpush1.bf16.msra.mxu0 0
      %3733 = vmatprep.subr.bf16.mxu0 0
      %3734 = vmatpush1.bf16.msra.mxu0 0
      %3735 = vmatprep.subr.bf16.mxu0 0
      %3736 = vmatpush1.bf16.msra.mxu0 0
      %3737 = vmatprep.subr.bf16.mxu0 0
      %3738 = vmatpush1.bf16.msra.mxu0 0
      %3739 = vmatprep.subr.bf16.mxu0 0
      %3740 = vmatpush1.bf16.msra.mxu0 0
      %3741 = vmatprep.subr.bf16.mxu0 0
      %3742 = vmatpush1.bf16.msra.mxu0 0
      %3743 = vmatprep.subr.bf16.mxu0 0
      %3744 = vmatpush1.bf16.msra.mxu0 0
      %3745 = vmatprep.subr.bf16.mxu0 0
      %3746 = vmatpush1.bf16.msra.mxu0 0
      %3747 = vmatprep.mubr.bf16.mxu0 0
      %3748 = vmatmul.mubr.bf16.gmra.mrb[0].mxu0 %v3530
      %v3749 = vpop.f32.mrb[0].mxu0
      %v3750 = vadd.f32 0.0, %v3749
      %v3751 = vpop.f32.mrb[0].mxu0
      %v3752 = vpop.f32.mrb[0].mxu0
      %v3753 = vadd.f32 0.0, %v3752
      %v3754 = vpop.f32.mrb[0].mxu0
      %3755 = vmatprep.mubr.bf16.mxu0 0
      %3756 = vmatmul.mubr.bf16.gmra.mrb[0].mxu0 %v3538
      %v3757 = vpop.f32.mrb[0].mxu0
      %v3758 = vadd.f32 0.0, %v3757
      %v3759 = vpop.f32.mrb[0].mxu0
      %v3760 = vpop.f32.mrb[0].mxu0
      %v3761 = vadd.f32 0.0, %v3760
      %v3762 = vpop.f32.mrb[0].mxu0
      %3763 = vmatprep.mubr.bf16.mxu0 0
      %3764 = vmatmul.mubr.bf16.gmra.mrb[0].mxu0 %v3546
      %v3765 = vpop.f32.mrb[0].mxu0
      %v3766 = vadd.f32 0.0, %v3765
      %v3767 = vpop.f32.mrb[0].mxu0
      %v3768 = vpop.f32.mrb[0].mxu0
      %v3769 = vadd.f32 0.0, %v3768
      %v3770 = vpop.f32.mrb[0].mxu0
      %3771 = vmatprep.mubr.bf16.mxu0 0
      %3772 = vmatmul.mubr.bf16.gmra.mrb[0].mxu0 %v3554
      %v3773 = vpop.f32.mrb[0].mxu0
      %v3774 = vadd.f32 0.0, %v3773
      %v3775 = vpop.f32.mrb[0].mxu0
      %v3776 = vpop.f32.mrb[0].mxu0
      %v3777 = vadd.f32 0.0, %v3776
      %v3778 = vpop.f32.mrb[0].mxu0
      %3779 = vmatprep.mubr.bf16.mxu0 0
      %3780 = vmatmul.mubr.bf16.gmra.mrb[0].mxu0 %v3562
      %v3781 = vpop.f32.mrb[0].mxu0
      %v3782 = vadd.f32 0.0, %v3781
      %v3783 = vpop.f32.mrb[0].mxu0
      %v3784 = vpop.f32.mrb[0].mxu0
      %v3785 = vadd.f32 0.0, %v3784
      %v3786 = vpop.f32.mrb[0].mxu0
      %3787 = vmatprep.mubr.bf16.mxu0 0
      %3788 = vmatmul.mubr.bf16.gmra.mrb[0].mxu0 %v3570
      %v3789 = vpop.f32.mrb[0].mxu0
      %v3790 = vadd.f32 0.0, %v3789
      %v3791 = vpop.f32.mrb[0].mxu0
      %v3792 = vpop.f32.mrb[0].mxu0
      %v3793 = vadd.f32 0.0, %v3792
      %v3794 = vpop.f32.mrb[0].mxu0
      %3795 = vmatprep.mubr.bf16.mxu0 0
      %3796 = vmatmul.mubr.bf16.gmra.mrb[0].mxu0 %v3578
      %v3797 = vpop.f32.mrb[0].mxu0
      %v3798 = vadd.f32 0.0, %v3797
      %v3799 = vpop.f32.mrb[0].mxu0
      %v3800 = vpop.f32.mrb[0].mxu0
      %v3801 = vadd.f32 0.0, %v3800
      %v3802 = vpop.f32.mrb[0].mxu0
      %3803 = vmatprep.mubr.bf16.mxu0 0
      %3804 = vmatmul.mubr.bf16.gmra.mrb[0].mxu0 %v3586
      %v3805 = vpop.f32.mrb[0].mxu0
      %v3806 = vadd.f32 0.0, %v3805
      %v3807 = vpop.f32.mrb[0].mxu0
      %v3808 = vpop.f32.mrb[0].mxu0
      %v3809 = vadd.f32 0.0, %v3808
      %v3810 = vpop.f32.mrb[0].mxu0
      %3811 = vmatprep.mubr.bf16.mxu0 0
      %3812 = vmatmul.mubr.bf16.gmra.mrb[0].mxu0 %v3594
      %v3813 = vpop.f32.mrb[0].mxu0
      %v3814 = vadd.f32 0.0, %v3813
      %v3815 = vpop.f32.mrb[0].mxu0
      %v3816 = vpop.f32.mrb[0].mxu0
      %v3817 = vadd.f32 0.0, %v3816
      %v3818 = vpop.f32.mrb[0].mxu0
      %3819 = vmatprep.mubr.bf16.mxu0 0
      %3820 = vmatmul.mubr.bf16.gmra.mrb[0].mxu0 %v3602
      %v3821 = vpop.f32.mrb[0].mxu0
      %v3822 = vadd.f32 0.0, %v3821
      %v3823 = vpop.f32.mrb[0].mxu0
      %v3824 = vpop.f32.mrb[0].mxu0
      %v3825 = vadd.f32 0.0, %v3824
      %v3826 = vpop.f32.mrb[0].mxu0
      %3827 = vmatprep.mubr.bf16.mxu0 0
      %3828 = vmatmul.mubr.bf16.gmra.mrb[0].mxu0 %v3610
      %v3829 = vpop.f32.mrb[0].mxu0
      %v3830 = vadd.f32 0.0, %v3829
      %v3831 = vpop.f32.mrb[0].mxu0
      %v3832 = vpop.f32.mrb[0].mxu0
      %v3833 = vadd.f32 0.0, %v3832
      %v3834 = vpop.f32.mrb[0].mxu0
      %3835 = vmatprep.mubr.bf16.mxu0 0
      %3836 = vmatmul.mubr.bf16.gmra.mrb[0].mxu0 %v3618
      %v3837 = vpop.f32.mrb[0].mxu0
      %v3838 = vadd.f32 0.0, %v3837
      %v3839 = vpop.f32.mrb[0].mxu0
      %v3840 = vpop.f32.mrb[0].mxu0
      %v3841 = vadd.f32 0.0, %v3840
      %v3842 = vpop.f32.mrb[0].mxu0
      %3843 = vmatprep.mubr.bf16.mxu0 0
      %3844 = vmatmul.mubr.bf16.gmra.mrb[0].mxu0 %v3626
      %v3845 = vpop.f32.mrb[0].mxu0
      %v3846 = vadd.f32 0.0, %v3845
      %v3847 = vpop.f32.mrb[0].mxu0
      %v3848 = vpop.f32.mrb[0].mxu0
      %v3849 = vadd.f32 0.0, %v3848
      %v3850 = vpop.f32.mrb[0].mxu0
      %3851 = vmatprep.mubr.bf16.mxu0 0
      %3852 = vmatmul.mubr.bf16.gmra.mrb[0].mxu0 %v3634
      %v3853 = vpop.f32.mrb[0].mxu0
      %v3854 = vadd.f32 0.0, %v3853
      %v3855 = vpop.f32.mrb[0].mxu0
      %v3856 = vpop.f32.mrb[0].mxu0
      %v3857 = vadd.f32 0.0, %v3856
      %v3858 = vpop.f32.mrb[0].mxu0
      %3859 = vmatprep.mubr.bf16.mxu0 0
      %3860 = vmatmul.mubr.bf16.gmra.mrb[0].mxu0 %v3642
      %v3861 = vpop.f32.mrb[0].mxu0
      %v3862 = vadd.f32 0.0, %v3861
      %v3863 = vpop.f32.mrb[0].mxu0
      %v3864 = vpop.f32.mrb[0].mxu0
      %v3865 = vadd.f32 0.0, %v3864
      %v3866 = vpop.f32.mrb[0].mxu0
      %3867 = vmatprep.mubr.bf16.mxu0 0
      %3868 = vmatmul.mubr.bf16.gmra.mrb[0].mxu0 %v3650
      %v3869 = vpop.f32.mrb[0].mxu0
      %v3870 = vadd.f32 0.0, %v3869
      %v3871 = vpop.f32.mrb[0].mxu0
      %v3872 = vpop.f32.mrb[0].mxu0
      %v3873 = vadd.f32 0.0, %v3872
      %v3874 = vpop.f32.mrb[0].mxu0
      %3875 = vdwg.mxu0
      %v3876 = vld [vmem:[#allocation3] sm:$0xff]
      %v3877 = vld [vmem:[#allocation3 + $0x8] sm:$0xff]
      %v3878 = vld [vmem:[#allocation3 + $0x10] sm:$0xff]
      %v3879 = vld [vmem:[#allocation3 + $0x18] sm:$0xff]
      %v3880 = vld [vmem:[#allocation3 + $0x20] sm:$0xff]
      %v3881 = vld [vmem:[#allocation3 + $0x28] sm:$0xff]
      %v3882 = vld [vmem:[#allocation3 + $0x30] sm:$0xff]
      %v3883 = vld [vmem:[#allocation3 + $0x38] sm:$0xff]
      %v3884 = vld [vmem:[#allocation3 + $0x40] sm:$0xff]
      %v3885 = vld [vmem:[#allocation3 + $0x48] sm:$0xff]
      %v3886 = vld [vmem:[#allocation3 + $0x50] sm:$0xff]
      %v3887 = vld [vmem:[#allocation3 + $0x58] sm:$0xff]
      %v3888 = vld [vmem:[#allocation3 + $0x60] sm:$0xff]
      %v3889 = vld [vmem:[#allocation3 + $0x68] sm:$0xff]
      %v3890 = vld [vmem:[#allocation3 + $0x70] sm:$0xff]
      %v3891 = vld [vmem:[#allocation3 + $0x78] sm:$0xff]
      %v3892 = vld [vmem:[#allocation3 + $0x80] sm:$0xff]
      %v3893 = vld [vmem:[#allocation3 + $0x88] sm:$0xff]
      %v3894 = vld [vmem:[#allocation3 + $0x90] sm:$0xff]
      %v3895 = vld [vmem:[#allocation3 + $0x98] sm:$0xff]
      %v3896 = vld [vmem:[#allocation3 + $0xa0] sm:$0xff]
      %v3897 = vld [vmem:[#allocation3 + $0xa8] sm:$0xff]
      %v3898 = vld [vmem:[#allocation3 + $0xb0] sm:$0xff]
      %v3899 = vld [vmem:[#allocation3 + $0xb8] sm:$0xff]
      %v3900 = vld [vmem:[#allocation3 + $0xc0] sm:$0xff]
      %v3901 = vld [vmem:[#allocation3 + $0xc8] sm:$0xff]
      %v3902 = vld [vmem:[#allocation3 + $0xd0] sm:$0xff]
      %v3903 = vld [vmem:[#allocation3 + $0xd8] sm:$0xff]
      %v3904 = vld [vmem:[#allocation3 + $0xe0] sm:$0xff]
      %v3905 = vld [vmem:[#allocation3 + $0xe8] sm:$0xff]
      %v3906 = vld [vmem:[#allocation3 + $0xf0] sm:$0xff]
      %v3907 = vld [vmem:[#allocation3 + $0xf8] sm:$0xff]
      %v3908 = vadd.f32 %v3876, %v3750
      %v3909 = vadd.f32 %v3877, %v3753
      %v3910 = vadd.f32 %v3878, %v3758
      %v3911 = vadd.f32 %v3879, %v3761
      %v3912 = vadd.f32 %v3880, %v3766
      %v3913 = vadd.f32 %v3881, %v3769
      %v3914 = vadd.f32 %v3882, %v3774
      %v3915 = vadd.f32 %v3883, %v3777
      %v3916 = vadd.f32 %v3884, %v3782
      %v3917 = vadd.f32 %v3885, %v3785
      %v3918 = vadd.f32 %v3886, %v3790
      %v3919 = vadd.f32 %v3887, %v3793
      %v3920 = vadd.f32 %v3888, %v3798
      %v3921 = vadd.f32 %v3889, %v3801
      %v3922 = vadd.f32 %v3890, %v3806
      %v3923 = vadd.f32 %v3891, %v3809
      %v3924 = vadd.f32 %v3892, %v3814
      %v3925 = vadd.f32 %v3893, %v3817
      %v3926 = vadd.f32 %v3894, %v3822
      %v3927 = vadd.f32 %v3895, %v3825
      %v3928 = vadd.f32 %v3896, %v3830
      %v3929 = vadd.f32 %v3897, %v3833
      %v3930 = vadd.f32 %v3898, %v3838
      %v3931 = vadd.f32 %v3899, %v3841
      %v3932 = vadd.f32 %v3900, %v3846
      %v3933 = vadd.f32 %v3901, %v3849
      %v3934 = vadd.f32 %v3902, %v3854
      %v3935 = vadd.f32 %v3903, %v3857
      %v3936 = vadd.f32 %v3904, %v3862
      %v3937 = vadd.f32 %v3905, %v3865
      %v3938 = vadd.f32 %v3906, %v3870
      %v3939 = vadd.f32 %v3907, %v3873
      %3940 = vst [vmem:[#allocation3] sm:$0xff] %v3908
      %3941 = vst [vmem:[#allocation3 + $0x8] sm:$0xff] %v3909
      %3942 = vst [vmem:[#allocation3 + $0x10] sm:$0xff] %v3910
      %3943 = vst [vmem:[#allocation3 + $0x18] sm:$0xff] %v3911
      %3944 = vst [vmem:[#allocation3 + $0x20] sm:$0xff] %v3912
      %3945 = vst [vmem:[#allocation3 + $0x28] sm:$0xff] %v3913
      %3946 = vst [vmem:[#allocation3 + $0x30] sm:$0xff] %v3914
      %3947 = vst [vmem:[#allocation3 + $0x38] sm:$0xff] %v3915
      %3948 = vst [vmem:[#allocation3 + $0x40] sm:$0xff] %v3916
      %3949 = vst [vmem:[#allocation3 + $0x48] sm:$0xff] %v3917
      %3950 = vst [vmem:[#allocation3 + $0x50] sm:$0xff] %v3918
      %3951 = vst [vmem:[#allocation3 + $0x58] sm:$0xff] %v3919
      %3952 = vst [vmem:[#allocation3 + $0x60] sm:$0xff] %v3920
      %3953 = vst [vmem:[#allocation3 + $0x68] sm:$0xff] %v3921
      %3954 = vst [vmem:[#allocation3 + $0x70] sm:$0xff] %v3922
      %3955 = vst [vmem:[#allocation3 + $0x78] sm:$0xff] %v3923
      %3956 = vst [vmem:[#allocation3 + $0x80] sm:$0xff] %v3924
      %3957 = vst [vmem:[#allocation3 + $0x88] sm:$0xff] %v3925
      %3958 = vst [vmem:[#allocation3 + $0x90] sm:$0xff] %v3926
      %3959 = vst [vmem:[#allocation3 + $0x98] sm:$0xff] %v3927
      %3960 = vst [vmem:[#allocation3 + $0xa0] sm:$0xff] %v3928
      %3961 = vst [vmem:[#allocation3 + $0xa8] sm:$0xff] %v3929
      %3962 = vst [vmem:[#allocation3 + $0xb0] sm:$0xff] %v3930
      %3963 = vst [vmem:[#allocation3 + $0xb8] sm:$0xff] %v3931
      %3964 = vst [vmem:[#allocation3 + $0xc0] sm:$0xff] %v3932
      %3965 = vst [vmem:[#allocation3 + $0xc8] sm:$0xff] %v3933
      %3966 = vst [vmem:[#allocation3 + $0xd0] sm:$0xff] %v3934
      %3967 = vst [vmem:[#allocation3 + $0xd8] sm:$0xff] %v3935
      %3968 = vst [vmem:[#allocation3 + $0xe0] sm:$0xff] %v3936
      %3969 = vst [vmem:[#allocation3 + $0xe8] sm:$0xff] %v3937
      %3970 = vst [vmem:[#allocation3 + $0xf0] sm:$0xff] %v3938
      %3971 = vst [vmem:[#allocation3 + $0xf8] sm:$0xff] %v3939
      %v3972 = vld [vmem:[#allocation2 + $0x10] sm:$0x80]
      %v3973 = vld [vmem:[#allocation2 + $0x18] sm:$0xff]
      %v3974 = vld [vmem:[#allocation2 + $0x20] sm:$0xff]
      %v3975 = vld [vmem:[#allocation2 + $0x28] sm:$0xff]
      %v3976 = vld [vmem:[#allocation2 + $0x30] sm:$0xff]
      %v3977 = vld [vmem:[#allocation2 + $0x38] sm:$0xff]
      %v3978 = vld [vmem:[#allocation2 + $0x40] sm:$0xff]
      %v3979 = vld [vmem:[#allocation2 + $0x48] sm:$0xff]
      %v3980 = vld [vmem:[#allocation2 + $0x50] sm:$0xff]
      %v3981 = vld [vmem:[#allocation2 + $0x58] sm:$0xff]
      %v3982 = vld [vmem:[#allocation2 + $0x60] sm:$0xff]
      %v3983 = vld [vmem:[#allocation2 + $0x68] sm:$0xff]
      %v3984 = vld [vmem:[#allocation2 + $0x70] sm:$0xff]
      %v3985 = vld [vmem:[#allocation2 + $0x78] sm:$0xff]
      %v3986 = vld [vmem:[#allocation2 + $0x80] sm:$0xff]
      %v3987 = vld [vmem:[#allocation2 + $0x88] sm:$0xff]
      %v3988 = vld [vmem:[#allocation2 + $0x90] sm:$0xff]
      %v3989 = vmul.bf16 %v3972, %v1081
      %v3990 = vmul.bf16 %v3973, %v1089
      %v3991 = vmul.bf16 %v3974, %v1097
      %v3992 = vmul.bf16 %v3975, %v1105
      %v3993 = vmul.bf16 %v3976, %v1113
      %v3994 = vmul.bf16 %v3977, %v1121
      %v3995 = vmul.bf16 %v3978, %v1129
      %v3996 = vmul.bf16 %v3979, %v1137
      %v3997 = vmul.bf16 %v3980, %v1145
      %v3998 = vmul.bf16 %v3981, %v1153
      %v3999 = vmul.bf16 %v3982, %v1161
      %v4000 = vmul.bf16 %v3983, %v1169
      %v4001 = vmul.bf16 %v3984, %v1177
      %v4002 = vmul.bf16 %v3985, %v1185
      %v4003 = vmul.bf16 %v3986, %v1193
      %v4004 = vmul.bf16 %v3987, %v1201
      %v4005 = vmul.bf16 %v3988, %v1204
      %v4006 = vld [vmem:[%s2 + $0x180] sm:$0xf]
      %v4007 = vld [vmem:[%s2 + $0x184] sm:$0xf]
      %v4008 = vld [vmem:[%s2 + $0x188] sm:$0xf]
      %v4009 = vld [vmem:[%s2 + $0x18c] sm:$0xf]
      %v4010 = vld [vmem:[%s2 + $0x190] sm:$0xf]
      %v4011 = vld [vmem:[%s2 + $0x194] sm:$0xf]
      %v4012 = vld [vmem:[%s2 + $0x198] sm:$0xf]
      %v4013 = vld [vmem:[%s2 + $0x19c] sm:$0xf]
      %v4014 = vld [vmem:[%s2 + $0x1a0] sm:$0xf]
      %v4015 = vld [vmem:[%s2 + $0x1a4] sm:$0xf]
      %v4016 = vld [vmem:[%s2 + $0x1a8] sm:$0xf]
      %v4017 = vld [vmem:[%s2 + $0x1ac] sm:$0xf]
      %v4018 = vld [vmem:[%s2 + $0x1b0] sm:$0xf]
      %v4019 = vld [vmem:[%s2 + $0x1b4] sm:$0xf]
      %v4020 = vld [vmem:[%s2 + $0x1b8] sm:$0xf]
      %v4021 = vld [vmem:[%s2 + $0x1bc] sm:$0xf]
      %v4023 = vshrl.u32 %v3989, 16
      %v4025 = vrot.slane %v4023, 7
      %v4027 = vshrl.u32 %v3990, 16
      %v4029 = vrot.slane %v4027, 7
      %v4030 = vshll.u32 %v3990, 16
      %v4032 = vor.u32 %v4029, %v4030
      %v4033 = vsel %vm1255, %v4025, %v4032
      %v4035 = vshrl.u32 %v3991, 16
      %v4037 = vrot.slane %v4035, 7
      %v4038 = vshll.u32 %v3991, 16
      %v4040 = vor.u32 %v4037, %v4038
      %v4041 = vsel %vm1255, %v4029, %v4040
      %v4043 = vshrl.u32 %v3992, 16
      %v4045 = vrot.slane %v4043, 7
      %v4046 = vshll.u32 %v3992, 16
      %v4048 = vor.u32 %v4045, %v4046
      %v4049 = vsel %vm1255, %v4037, %v4048
      %v4051 = vshrl.u32 %v3993, 16
      %v4053 = vrot.slane %v4051, 7
      %v4054 = vshll.u32 %v3993, 16
      %v4056 = vor.u32 %v4053, %v4054
      %v4057 = vsel %vm1255, %v4045, %v4056
      %v4059 = vshrl.u32 %v3994, 16
      %v4061 = vrot.slane %v4059, 7
      %v4062 = vshll.u32 %v3994, 16
      %v4064 = vor.u32 %v4061, %v4062
      %v4065 = vsel %vm1255, %v4053, %v4064
      %v4067 = vshrl.u32 %v3995, 16
      %v4069 = vrot.slane %v4067, 7
      %v4070 = vshll.u32 %v3995, 16
      %v4072 = vor.u32 %v4069, %v4070
      %v4073 = vsel %vm1255, %v4061, %v4072
      %v4075 = vshrl.u32 %v3996, 16
      %v4077 = vrot.slane %v4075, 7
      %v4078 = vshll.u32 %v3996, 16
      %v4080 = vor.u32 %v4077, %v4078
      %v4081 = vsel %vm1255, %v4069, %v4080
      %v4083 = vshrl.u32 %v3997, 16
      %v4085 = vrot.slane %v4083, 7
      %v4086 = vshll.u32 %v3997, 16
      %v4088 = vor.u32 %v4085, %v4086
      %v4089 = vsel %vm1255, %v4077, %v4088
      %v4091 = vshrl.u32 %v3998, 16
      %v4093 = vrot.slane %v4091, 7
      %v4094 = vshll.u32 %v3998, 16
      %v4096 = vor.u32 %v4093, %v4094
      %v4097 = vsel %vm1255, %v4085, %v4096
      %v4099 = vshrl.u32 %v3999, 16
      %v4101 = vrot.slane %v4099, 7
      %v4102 = vshll.u32 %v3999, 16
      %v4104 = vor.u32 %v4101, %v4102
      %v4105 = vsel %vm1255, %v4093, %v4104
      %v4107 = vshrl.u32 %v4000, 16
      %v4109 = vrot.slane %v4107, 7
      %v4110 = vshll.u32 %v4000, 16
      %v4112 = vor.u32 %v4109, %v4110
      %v4113 = vsel %vm1255, %v4101, %v4112
      %v4115 = vshrl.u32 %v4001, 16
      %v4117 = vrot.slane %v4115, 7
      %v4118 = vshll.u32 %v4001, 16
      %v4120 = vor.u32 %v4117, %v4118
      %v4121 = vsel %vm1255, %v4109, %v4120
      %v4123 = vshrl.u32 %v4002, 16
      %v4125 = vrot.slane %v4123, 7
      %v4126 = vshll.u32 %v4002, 16
      %v4128 = vor.u32 %v4125, %v4126
      %v4129 = vsel %vm1255, %v4117, %v4128
      %v4131 = vshrl.u32 %v4003, 16
      %v4133 = vrot.slane %v4131, 7
      %v4134 = vshll.u32 %v4003, 16
      %v4136 = vor.u32 %v4133, %v4134
      %v4137 = vsel %vm1255, %v4125, %v4136
      %v4139 = vshrl.u32 %v4004, 16
      %v4141 = vrot.slane %v4139, 7
      %v4142 = vshll.u32 %v4004, 16
      %v4144 = vor.u32 %v4141, %v4142
      %v4145 = vsel %vm1255, %v4133, %v4144
      %v4147 = vshrl.u32 %v4005, 16
      %v4149 = vrot.slane %v4147, 7
      %v4150 = vshll.u32 %v4005, 16
      %v4152 = vor.u32 %v4149, %v4150
      %v4153 = vsel %vm1255, %v4141, %v4152
      %v4186 = vunpack.c.l.b16 %v4006
      %v4187 = vunpack.c.l.b16 %v4007
      %v4188 = vunpack.c.l.b16 %v4008
      %v4189 = vunpack.c.l.b16 %v4009
      %v4190 = vunpack.c.l.b16 %v4010
      %v4191 = vunpack.c.l.b16 %v4011
      %v4192 = vunpack.c.l.b16 %v4012
      %v4193 = vunpack.c.l.b16 %v4013
      %v4194 = vunpack.c.l.b16 %v4014
      %v4195 = vunpack.c.l.b16 %v4015
      %v4196 = vunpack.c.l.b16 %v4016
      %v4197 = vunpack.c.l.b16 %v4017
      %v4198 = vunpack.c.l.b16 %v4018
      %v4199 = vunpack.c.l.b16 %v4019
      %v4200 = vunpack.c.l.b16 %v4020
      %v4201 = vunpack.c.l.b16 %v4021
      %v4202 = vpack.c.b16 %v4187, %v4186
      %v4203 = vpack.c.b16 %v4189, %v4188
      %v4204 = vpack.c.b16 %v4191, %v4190
      %v4205 = vpack.c.b16 %v4193, %v4192
      %v4206 = vpack.c.b16 %v4195, %v4194
      %v4207 = vpack.c.b16 %v4197, %v4196
      %v4208 = vpack.c.b16 %v4199, %v4198
      %v4209 = vpack.c.b16 %v4201, %v4200
      %4218 = vmatprep.subr.bf16.mxu0 0
      %4219 = vmatpush1.bf16.msra.mxu0 %v4202
      %4220 = vmatprep.subr.bf16.mxu0 0
      %4221 = vmatpush1.bf16.msra.mxu0 %v4203
      %4222 = vmatprep.subr.bf16.mxu0 0
      %4223 = vmatpush1.bf16.msra.mxu0 %v4204
      %4224 = vmatprep.subr.bf16.mxu0 0
      %4225 = vmatpush1.bf16.msra.mxu0 %v4205
      %4226 = vmatprep.subr.bf16.mxu0 0
      %4227 = vmatpush1.bf16.msra.mxu0 %v4206
      %4228 = vmatprep.subr.bf16.mxu0 0
      %4229 = vmatpush1.bf16.msra.mxu0 %v4207
      %4230 = vmatprep.subr.bf16.mxu0 0
      %4231 = vmatpush1.bf16.msra.mxu0 %v4208
      %4232 = vmatprep.subr.bf16.mxu0 0
      %4233 = vmatpush1.bf16.msra.mxu0 %v4209
      %4234 = vmatprep.subr.bf16.mxu0 0
      %4235 = vmatpush1.bf16.msra.mxu0 0
      %4236 = vmatprep.subr.bf16.mxu0 0
      %4237 = vmatpush1.bf16.msra.mxu0 0
      %4238 = vmatprep.subr.bf16.mxu0 0
      %4239 = vmatpush1.bf16.msra.mxu0 0
      %4240 = vmatprep.subr.bf16.mxu0 0
      %4241 = vmatpush1.bf16.msra.mxu0 0
      %4242 = vmatprep.subr.bf16.mxu0 0
      %4243 = vmatpush1.bf16.msra.mxu0 0
      %4244 = vmatprep.subr.bf16.mxu0 0
      %4245 = vmatpush1.bf16.msra.mxu0 0
      %4246 = vmatprep.subr.bf16.mxu0 0
      %4247 = vmatpush1.bf16.msra.mxu0 0
      %4248 = vmatprep.subr.bf16.mxu0 0
      %4249 = vmatpush1.bf16.msra.mxu0 0
      %4250 = vmatprep.mubr.bf16.mxu0 0
      %4251 = vmatmul.mubr.bf16.gmra.mrb[0].mxu0 %v4033
      %v4252 = vpop.f32.mrb[0].mxu0
      %v4253 = vadd.f32 0.0, %v4252
      %v4254 = vpop.f32.mrb[0].mxu0
      %v4255 = vpop.f32.mrb[0].mxu0
      %v4256 = vadd.f32 0.0, %v4255
      %v4257 = vpop.f32.mrb[0].mxu0
      %4258 = vmatprep.mubr.bf16.mxu0 0
      %4259 = vmatmul.mubr.bf16.gmra.mrb[0].mxu0 %v4041
      %v4260 = vpop.f32.mrb[0].mxu0
      %v4261 = vadd.f32 0.0, %v4260
      %v4262 = vpop.f32.mrb[0].mxu0
      %v4263 = vpop.f32.mrb[0].mxu0
      %v4264 = vadd.f32 0.0, %v4263
      %v4265 = vpop.f32.mrb[0].mxu0
      %4266 = vmatprep.mubr.bf16.mxu0 0
      %4267 = vmatmul.mubr.bf16.gmra.mrb[0].mxu0 %v4049
      %v4268 = vpop.f32.mrb[0].mxu0
      %v4269 = vadd.f32 0.0, %v4268
      %v4270 = vpop.f32.mrb[0].mxu0
      %v4271 = vpop.f32.mrb[0].mxu0
      %v4272 = vadd.f32 0.0, %v4271
      %v4273 = vpop.f32.mrb[0].mxu0
      %4274 = vmatprep.mubr.bf16.mxu0 0
      %4275 = vmatmul.mubr.bf16.gmra.mrb[0].mxu0 %v4057
      %v4276 = vpop.f32.mrb[0].mxu0
      %v4277 = vadd.f32 0.0, %v4276
      %v4278 = vpop.f32.mrb[0].mxu0
      %v4279 = vpop.f32.mrb[0].mxu0
      %v4280 = vadd.f32 0.0, %v4279
      %v4281 = vpop.f32.mrb[0].mxu0
      %4282 = vmatprep.mubr.bf16.mxu0 0
      %4283 = vmatmul.mubr.bf16.gmra.mrb[0].mxu0 %v4065
      %v4284 = vpop.f32.mrb[0].mxu0
      %v4285 = vadd.f32 0.0, %v4284
      %v4286 = vpop.f32.mrb[0].mxu0
      %v4287 = vpop.f32.mrb[0].mxu0
      %v4288 = vadd.f32 0.0, %v4287
      %v4289 = vpop.f32.mrb[0].mxu0
      %4290 = vmatprep.mubr.bf16.mxu0 0
      %4291 = vmatmul.mubr.bf16.gmra.mrb[0].mxu0 %v4073
      %v4292 = vpop.f32.mrb[0].mxu0
      %v4293 = vadd.f32 0.0, %v4292
      %v4294 = vpop.f32.mrb[0].mxu0
      %v4295 = vpop.f32.mrb[0].mxu0
      %v4296 = vadd.f32 0.0, %v4295
      %v4297 = vpop.f32.mrb[0].mxu0
      %4298 = vmatprep.mubr.bf16.mxu0 0
      %4299 = vmatmul.mubr.bf16.gmra.mrb[0].mxu0 %v4081
      %v4300 = vpop.f32.mrb[0].mxu0
      %v4301 = vadd.f32 0.0, %v4300
      %v4302 = vpop.f32.mrb[0].mxu0
      %v4303 = vpop.f32.mrb[0].mxu0
      %v4304 = vadd.f32 0.0, %v4303
      %v4305 = vpop.f32.mrb[0].mxu0
      %4306 = vmatprep.mubr.bf16.mxu0 0
      %4307 = vmatmul.mubr.bf16.gmra.mrb[0].mxu0 %v4089
      %v4308 = vpop.f32.mrb[0].mxu0
      %v4309 = vadd.f32 0.0, %v4308
      %v4310 = vpop.f32.mrb[0].mxu0
      %v4311 = vpop.f32.mrb[0].mxu0
      %v4312 = vadd.f32 0.0, %v4311
      %v4313 = vpop.f32.mrb[0].mxu0
      %4314 = vmatprep.mubr.bf16.mxu0 0
      %4315 = vmatmul.mubr.bf16.gmra.mrb[0].mxu0 %v4097
      %v4316 = vpop.f32.mrb[0].mxu0
      %v4317 = vadd.f32 0.0, %v4316
      %v4318 = vpop.f32.mrb[0].mxu0
      %v4319 = vpop.f32.mrb[0].mxu0
      %v4320 = vadd.f32 0.0, %v4319
      %v4321 = vpop.f32.mrb[0].mxu0
      %4322 = vmatprep.mubr.bf16.mxu0 0
      %4323 = vmatmul.mubr.bf16.gmra.mrb[0].mxu0 %v4105
      %v4324 = vpop.f32.mrb[0].mxu0
      %v4325 = vadd.f32 0.0, %v4324
      %v4326 = vpop.f32.mrb[0].mxu0
      %v4327 = vpop.f32.mrb[0].mxu0
      %v4328 = vadd.f32 0.0, %v4327
      %v4329 = vpop.f32.mrb[0].mxu0
      %4330 = vmatprep.mubr.bf16.mxu0 0
      %4331 = vmatmul.mubr.bf16.gmra.mrb[0].mxu0 %v4113
      %v4332 = vpop.f32.mrb[0].mxu0
      %v4333 = vadd.f32 0.0, %v4332
      %v4334 = vpop.f32.mrb[0].mxu0
      %v4335 = vpop.f32.mrb[0].mxu0
      %v4336 = vadd.f32 0.0, %v4335
      %v4337 = vpop.f32.mrb[0].mxu0
      %4338 = vmatprep.mubr.bf16.mxu0 0
      %4339 = vmatmul.mubr.bf16.gmra.mrb[0].mxu0 %v4121
      %v4340 = vpop.f32.mrb[0].mxu0
      %v4341 = vadd.f32 0.0, %v4340
      %v4342 = vpop.f32.mrb[0].mxu0
      %v4343 = vpop.f32.mrb[0].mxu0
      %v4344 = vadd.f32 0.0, %v4343
      %v4345 = vpop.f32.mrb[0].mxu0
      %4346 = vmatprep.mubr.bf16.mxu0 0
      %4347 = vmatmul.mubr.bf16.gmra.mrb[0].mxu0 %v4129
      %v4348 = vpop.f32.mrb[0].mxu0
      %v4349 = vadd.f32 0.0, %v4348
      %v4350 = vpop.f32.mrb[0].mxu0
      %v4351 = vpop.f32.mrb[0].mxu0
      %v4352 = vadd.f32 0.0, %v4351
      %v4353 = vpop.f32.mrb[0].mxu0
      %4354 = vmatprep.mubr.bf16.mxu0 0
      %4355 = vmatmul.mubr.bf16.gmra.mrb[0].mxu0 %v4137
      %v4356 = vpop.f32.mrb[0].mxu0
      %v4357 = vadd.f32 0.0, %v4356
      %v4358 = vpop.f32.mrb[0].mxu0
      %v4359 = vpop.f32.mrb[0].mxu0
      %v4360 = vadd.f32 0.0, %v4359
      %v4361 = vpop.f32.mrb[0].mxu0
      %4362 = vmatprep.mubr.bf16.mxu0 0
      %4363 = vmatmul.mubr.bf16.gmra.mrb[0].mxu0 %v4145
      %v4364 = vpop.f32.mrb[0].mxu0
      %v4365 = vadd.f32 0.0, %v4364
      %v4366 = vpop.f32.mrb[0].mxu0
      %v4367 = vpop.f32.mrb[0].mxu0
      %v4368 = vadd.f32 0.0, %v4367
      %v4369 = vpop.f32.mrb[0].mxu0
      %4370 = vmatprep.mubr.bf16.mxu0 0
      %4371 = vmatmul.mubr.bf16.gmra.mrb[0].mxu0 %v4153
      %v4372 = vpop.f32.mrb[0].mxu0
      %v4373 = vadd.f32 0.0, %v4372
      %v4374 = vpop.f32.mrb[0].mxu0
      %v4375 = vpop.f32.mrb[0].mxu0
      %v4376 = vadd.f32 0.0, %v4375
      %v4377 = vpop.f32.mrb[0].mxu0
      %4378 = vdwg.mxu0
      %v4379 = vld [vmem:[#allocation3] sm:$0xff]
      %v4380 = vld [vmem:[#allocation3 + $0x8] sm:$0xff]
      %v4381 = vld [vmem:[#allocation3 + $0x10] sm:$0xff]
      %v4382 = vld [vmem:[#allocation3 + $0x18] sm:$0xff]
      %v4383 = vld [vmem:[#allocation3 + $0x20] sm:$0xff]
      %v4384 = vld [vmem:[#allocation3 + $0x28] sm:$0xff]
      %v4385 = vld [vmem:[#allocation3 + $0x30] sm:$0xff]
      %v4386 = vld [vmem:[#allocation3 + $0x38] sm:$0xff]
      %v4387 = vld [vmem:[#allocation3 + $0x40] sm:$0xff]
      %v4388 = vld [vmem:[#allocation3 + $0x48] sm:$0xff]
      %v4389 = vld [vmem:[#allocation3 + $0x50] sm:$0xff]
      %v4390 = vld [vmem:[#allocation3 + $0x58] sm:$0xff]
      %v4391 = vld [vmem:[#allocation3 + $0x60] sm:$0xff]
      %v4392 = vld [vmem:[#allocation3 + $0x68] sm:$0xff]
      %v4393 = vld [vmem:[#allocation3 + $0x70] sm:$0xff]
      %v4394 = vld [vmem:[#allocation3 + $0x78] sm:$0xff]
      %v4395 = vld [vmem:[#allocation3 + $0x80] sm:$0xff]
      %v4396 = vld [vmem:[#allocation3 + $0x88] sm:$0xff]
      %v4397 = vld [vmem:[#allocation3 + $0x90] sm:$0xff]
      %v4398 = vld [vmem:[#allocation3 + $0x98] sm:$0xff]
      %v4399 = vld [vmem:[#allocation3 + $0xa0] sm:$0xff]
      %v4400 = vld [vmem:[#allocation3 + $0xa8] sm:$0xff]
      %v4401 = vld [vmem:[#allocation3 + $0xb0] sm:$0xff]
      %v4402 = vld [vmem:[#allocation3 + $0xb8] sm:$0xff]
      %v4403 = vld [vmem:[#allocation3 + $0xc0] sm:$0xff]
      %v4404 = vld [vmem:[#allocation3 + $0xc8] sm:$0xff]
      %v4405 = vld [vmem:[#allocation3 + $0xd0] sm:$0xff]
      %v4406 = vld [vmem:[#allocation3 + $0xd8] sm:$0xff]
      %v4407 = vld [vmem:[#allocation3 + $0xe0] sm:$0xff]
      %v4408 = vld [vmem:[#allocation3 + $0xe8] sm:$0xff]
      %v4409 = vld [vmem:[#allocation3 + $0xf0] sm:$0xff]
      %v4410 = vld [vmem:[#allocation3 + $0xf8] sm:$0xff]
      %v4411 = vadd.f32 %v4379, %v4253
      %v4412 = vadd.f32 %v4380, %v4256
      %v4413 = vadd.f32 %v4381, %v4261
      %v4414 = vadd.f32 %v4382, %v4264
      %v4415 = vadd.f32 %v4383, %v4269
      %v4416 = vadd.f32 %v4384, %v4272
      %v4417 = vadd.f32 %v4385, %v4277
      %v4418 = vadd.f32 %v4386, %v4280
      %v4419 = vadd.f32 %v4387, %v4285
      %v4420 = vadd.f32 %v4388, %v4288
      %v4421 = vadd.f32 %v4389, %v4293
      %v4422 = vadd.f32 %v4390, %v4296
      %v4423 = vadd.f32 %v4391, %v4301
      %v4424 = vadd.f32 %v4392, %v4304
      %v4425 = vadd.f32 %v4393, %v4309
      %v4426 = vadd.f32 %v4394, %v4312
      %v4427 = vadd.f32 %v4395, %v4317
      %v4428 = vadd.f32 %v4396, %v4320
      %v4429 = vadd.f32 %v4397, %v4325
      %v4430 = vadd.f32 %v4398, %v4328
      %v4431 = vadd.f32 %v4399, %v4333
      %v4432 = vadd.f32 %v4400, %v4336
      %v4433 = vadd.f32 %v4401, %v4341
      %v4434 = vadd.f32 %v4402, %v4344
      %v4435 = vadd.f32 %v4403, %v4349
      %v4436 = vadd.f32 %v4404, %v4352
      %v4437 = vadd.f32 %v4405, %v4357
      %v4438 = vadd.f32 %v4406, %v4360
      %v4439 = vadd.f32 %v4407, %v4365
      %v4440 = vadd.f32 %v4408, %v4368
      %v4441 = vadd.f32 %v4409, %v4373
      %v4442 = vadd.f32 %v4410, %v4376
      %4443 = vst [vmem:[#allocation3] sm:$0xff] %v4411
      %4444 = vst [vmem:[#allocation3 + $0x8] sm:$0xff] %v4412
      %4445 = vst [vmem:[#allocation3 + $0x10] sm:$0xff] %v4413
      %4446 = vst [vmem:[#allocation3 + $0x18] sm:$0xff] %v4414
      %4447 = vst [vmem:[#allocation3 + $0x20] sm:$0xff] %v4415
      %4448 = vst [vmem:[#allocation3 + $0x28] sm:$0xff] %v4416
      %4449 = vst [vmem:[#allocation3 + $0x30] sm:$0xff] %v4417
      %4450 = vst [vmem:[#allocation3 + $0x38] sm:$0xff] %v4418
      %4451 = vst [vmem:[#allocation3 + $0x40] sm:$0xff] %v4419
      %4452 = vst [vmem:[#allocation3 + $0x48] sm:$0xff] %v4420
      %4453 = vst [vmem:[#allocation3 + $0x50] sm:$0xff] %v4421
      %4454 = vst [vmem:[#allocation3 + $0x58] sm:$0xff] %v4422
      %4455 = vst [vmem:[#allocation3 + $0x60] sm:$0xff] %v4423
      %4456 = vst [vmem:[#allocation3 + $0x68] sm:$0xff] %v4424
      %4457 = vst [vmem:[#allocation3 + $0x70] sm:$0xff] %v4425
      %4458 = vst [vmem:[#allocation3 + $0x78] sm:$0xff] %v4426
      %4459 = vst [vmem:[#allocation3 + $0x80] sm:$0xff] %v4427
      %4460 = vst [vmem:[#allocation3 + $0x88] sm:$0xff] %v4428
      %4461 = vst [vmem:[#allocation3 + $0x90] sm:$0xff] %v4429
      %4462 = vst [vmem:[#allocation3 + $0x98] sm:$0xff] %v4430
      %4463 = vst [vmem:[#allocation3 + $0xa0] sm:$0xff] %v4431
      %4464 = vst [vmem:[#allocation3 + $0xa8] sm:$0xff] %v4432
      %4465 = vst [vmem:[#allocation3 + $0xb0] sm:$0xff] %v4433
      %4466 = vst [vmem:[#allocation3 + $0xb8] sm:$0xff] %v4434
      %4467 = vst [vmem:[#allocation3 + $0xc0] sm:$0xff] %v4435
      %4468 = vst [vmem:[#allocation3 + $0xc8] sm:$0xff] %v4436
      %4469 = vst [vmem:[#allocation3 + $0xd0] sm:$0xff] %v4437
      %4470 = vst [vmem:[#allocation3 + $0xd8] sm:$0xff] %v4438
      %4471 = vst [vmem:[#allocation3 + $0xe0] sm:$0xff] %v4439
      %4472 = vst [vmem:[#allocation3 + $0xe8] sm:$0xff] %v4440
      %4473 = vst [vmem:[#allocation3 + $0xf0] sm:$0xff] %v4441
      %4474 = vst [vmem:[#allocation3 + $0xf8] sm:$0xff] %v4442
      %v4475 = vld [vmem:[#allocation2 + $0x18] sm:$0xff]
      %v4476 = vld [vmem:[#allocation2 + $0x20] sm:$0xff]
      %v4477 = vld [vmem:[#allocation2 + $0x28] sm:$0xff]
      %v4478 = vld [vmem:[#allocation2 + $0x30] sm:$0xff]
      %v4479 = vld [vmem:[#allocation2 + $0x38] sm:$0xff]
      %v4480 = vld [vmem:[#allocation2 + $0x40] sm:$0xff]
      %v4481 = vld [vmem:[#allocation2 + $0x48] sm:$0xff]
      %v4482 = vld [vmem:[#allocation2 + $0x50] sm:$0xff]
      %v4483 = vld [vmem:[#allocation2 + $0x58] sm:$0xff]
      %v4484 = vld [vmem:[#allocation2 + $0x60] sm:$0xff]
      %v4485 = vld [vmem:[#allocation2 + $0x68] sm:$0xff]
      %v4486 = vld [vmem:[#allocation2 + $0x70] sm:$0xff]
      %v4487 = vld [vmem:[#allocation2 + $0x78] sm:$0xff]
      %v4488 = vld [vmem:[#allocation2 + $0x80] sm:$0xff]
      %v4489 = vld [vmem:[#allocation2 + $0x88] sm:$0xff]
      %v4490 = vld [vmem:[#allocation2 + $0x90] sm:$0xff]
      %v4491 = vld [vmem:[%s2 + $0x1c0] sm:$0xf]
      %v4492 = vld [vmem:[%s2 + $0x1c4] sm:$0xf]
      %v4493 = vld [vmem:[%s2 + $0x1c8] sm:$0xf]
      %v4494 = vld [vmem:[%s2 + $0x1cc] sm:$0xf]
      %v4495 = vld [vmem:[%s2 + $0x1d0] sm:$0xf]
      %v4496 = vld [vmem:[%s2 + $0x1d4] sm:$0xf]
      %v4497 = vld [vmem:[%s2 + $0x1d8] sm:$0xf]
      %v4498 = vld [vmem:[%s2 + $0x1dc] sm:$0xf]
      %v4499 = vld [vmem:[%s2 + $0x1e0] sm:$0xf]
      %v4500 = vld [vmem:[%s2 + $0x1e4] sm:$0xf]
      %v4501 = vld [vmem:[%s2 + $0x1e8] sm:$0xf]
      %v4502 = vld [vmem:[%s2 + $0x1ec] sm:$0xf]
      %v4503 = vld [vmem:[%s2 + $0x1f0] sm:$0xf]
      %v4504 = vld [vmem:[%s2 + $0x1f4] sm:$0xf]
      %v4505 = vld [vmem:[%s2 + $0x1f8] sm:$0xf]
      %v4506 = vld [vmem:[%s2 + $0x1fc] sm:$0xf]
      %v4523 = vunpack.c.l.b16 %v4491
      %v4524 = vunpack.c.l.b16 %v4492
      %v4525 = vunpack.c.l.b16 %v4493
      %v4526 = vunpack.c.l.b16 %v4494
      %v4527 = vunpack.c.l.b16 %v4495
      %v4528 = vunpack.c.l.b16 %v4496
      %v4529 = vunpack.c.l.b16 %v4497
      %v4530 = vunpack.c.l.b16 %v4498
      %v4531 = vunpack.c.l.b16 %v4499
      %v4532 = vunpack.c.l.b16 %v4500
      %v4533 = vunpack.c.l.b16 %v4501
      %v4534 = vunpack.c.l.b16 %v4502
      %v4535 = vunpack.c.l.b16 %v4503
      %v4536 = vunpack.c.l.b16 %v4504
      %v4537 = vunpack.c.l.b16 %v4505
      %v4538 = vunpack.c.l.b16 %v4506
      %v4539 = vpack.c.b16 %v4524, %v4523
      %v4540 = vpack.c.b16 %v4526, %v4525
      %v4541 = vpack.c.b16 %v4528, %v4527
      %v4542 = vpack.c.b16 %v4530, %v4529
      %v4543 = vpack.c.b16 %v4532, %v4531
      %v4544 = vpack.c.b16 %v4534, %v4533
      %v4545 = vpack.c.b16 %v4536, %v4535
      %v4546 = vpack.c.b16 %v4538, %v4537
      %4555 = vmatprep.subr.bf16.mxu0 0
      %4556 = vmatpush1.bf16.msra.mxu0 %v4539
      %4557 = vmatprep.subr.bf16.mxu0 0
      %4558 = vmatpush1.bf16.msra.mxu0 %v4540
      %4559 = vmatprep.subr.bf16.mxu0 0
      %4560 = vmatpush1.bf16.msra.mxu0 %v4541
      %4561 = vmatprep.subr.bf16.mxu0 0
      %4562 = vmatpush1.bf16.msra.mxu0 %v4542
      %4563 = vmatprep.subr.bf16.mxu0 0
      %4564 = vmatpush1.bf16.msra.mxu0 %v4543
      %4565 = vmatprep.subr.bf16.mxu0 0
      %4566 = vmatpush1.bf16.msra.mxu0 %v4544
      %4567 = vmatprep.subr.bf16.mxu0 0
      %4568 = vmatpush1.bf16.msra.mxu0 %v4545
      %4569 = vmatprep.subr.bf16.mxu0 0
      %4570 = vmatpush1.bf16.msra.mxu0 %v4546
      %4571 = vmatprep.subr.bf16.mxu0 0
      %4572 = vmatpush1.bf16.msra.mxu0 0
      %4573 = vmatprep.subr.bf16.mxu0 0
      %4574 = vmatpush1.bf16.msra.mxu0 0
      %4575 = vmatprep.subr.bf16.mxu0 0
      %4576 = vmatpush1.bf16.msra.mxu0 0
      %4577 = vmatprep.subr.bf16.mxu0 0
      %4578 = vmatpush1.bf16.msra.mxu0 0
      %4579 = vmatprep.subr.bf16.mxu0 0
      %4580 = vmatpush1.bf16.msra.mxu0 0
      %4581 = vmatprep.subr.bf16.mxu0 0
      %4582 = vmatpush1.bf16.msra.mxu0 0
      %4583 = vmatprep.subr.bf16.mxu0 0
      %4584 = vmatpush1.bf16.msra.mxu0 0
      %4585 = vmatprep.subr.bf16.mxu0 0
      %4586 = vmatpush1.bf16.msra.mxu0 0
      %4587 = vmatprep.mubr.bf16.mxu0 0
      %4588 = vmatmul.mubr.bf16.gmra.mrb[0].mxu0 %v4475
      %v4589 = vpop.f32.mrb[0].mxu0
      %v4590 = vadd.f32 0.0, %v4589
      %v4591 = vpop.f32.mrb[0].mxu0
      %v4592 = vpop.f32.mrb[0].mxu0
      %v4593 = vadd.f32 0.0, %v4592
      %v4594 = vpop.f32.mrb[0].mxu0
      %4595 = vmatprep.mubr.bf16.mxu0 0
      %4596 = vmatmul.mubr.bf16.gmra.mrb[0].mxu0 %v4476
      %v4597 = vpop.f32.mrb[0].mxu0
      %v4598 = vadd.f32 0.0, %v4597
      %v4599 = vpop.f32.mrb[0].mxu0
      %v4600 = vpop.f32.mrb[0].mxu0
      %v4601 = vadd.f32 0.0, %v4600
      %v4602 = vpop.f32.mrb[0].mxu0
      %4603 = vmatprep.mubr.bf16.mxu0 0
      %4604 = vmatmul.mubr.bf16.gmra.mrb[0].mxu0 %v4477
      %v4605 = vpop.f32.mrb[0].mxu0
      %v4606 = vadd.f32 0.0, %v4605
      %v4607 = vpop.f32.mrb[0].mxu0
      %v4608 = vpop.f32.mrb[0].mxu0
      %v4609 = vadd.f32 0.0, %v4608
      %v4610 = vpop.f32.mrb[0].mxu0
      %4611 = vmatprep.mubr.bf16.mxu0 0
      %4612 = vmatmul.mubr.bf16.gmra.mrb[0].mxu0 %v4478
      %v4613 = vpop.f32.mrb[0].mxu0
      %v4614 = vadd.f32 0.0, %v4613
      %v4615 = vpop.f32.mrb[0].mxu0
      %v4616 = vpop.f32.mrb[0].mxu0
      %v4617 = vadd.f32 0.0, %v4616
      %v4618 = vpop.f32.mrb[0].mxu0
      %4619 = vmatprep.mubr.bf16.mxu0 0
      %4620 = vmatmul.mubr.bf16.gmra.mrb[0].mxu0 %v4479
      %v4621 = vpop.f32.mrb[0].mxu0
      %v4622 = vadd.f32 0.0, %v4621
      %v4623 = vpop.f32.mrb[0].mxu0
      %v4624 = vpop.f32.mrb[0].mxu0
      %v4625 = vadd.f32 0.0, %v4624
      %v4626 = vpop.f32.mrb[0].mxu0
      %4627 = vmatprep.mubr.bf16.mxu0 0
      %4628 = vmatmul.mubr.bf16.gmra.mrb[0].mxu0 %v4480
      %v4629 = vpop.f32.mrb[0].mxu0
      %v4630 = vadd.f32 0.0, %v4629
      %v4631 = vpop.f32.mrb[0].mxu0
      %v4632 = vpop.f32.mrb[0].mxu0
      %v4633 = vadd.f32 0.0, %v4632
      %v4634 = vpop.f32.mrb[0].mxu0
      %4635 = vmatprep.mubr.bf16.mxu0 0
      %4636 = vmatmul.mubr.bf16.gmra.mrb[0].mxu0 %v4481
      %v4637 = vpop.f32.mrb[0].mxu0
      %v4638 = vadd.f32 0.0, %v4637
      %v4639 = vpop.f32.mrb[0].mxu0
      %v4640 = vpop.f32.mrb[0].mxu0
      %v4641 = vadd.f32 0.0, %v4640
      %v4642 = vpop.f32.mrb[0].mxu0
      %4643 = vmatprep.mubr.bf16.mxu0 0
      %4644 = vmatmul.mubr.bf16.gmra.mrb[0].mxu0 %v4482
      %v4645 = vpop.f32.mrb[0].mxu0
      %v4646 = vadd.f32 0.0, %v4645
      %v4647 = vpop.f32.mrb[0].mxu0
      %v4648 = vpop.f32.mrb[0].mxu0
      %v4649 = vadd.f32 0.0, %v4648
      %v4650 = vpop.f32.mrb[0].mxu0
      %4651 = vmatprep.mubr.bf16.mxu0 0
      %4652 = vmatmul.mubr.bf16.gmra.mrb[0].mxu0 %v4483
      %v4653 = vpop.f32.mrb[0].mxu0
      %v4654 = vadd.f32 0.0, %v4653
      %v4655 = vpop.f32.mrb[0].mxu0
      %v4656 = vpop.f32.mrb[0].mxu0
      %v4657 = vadd.f32 0.0, %v4656
      %v4658 = vpop.f32.mrb[0].mxu0
      %4659 = vmatprep.mubr.bf16.mxu0 0
      %4660 = vmatmul.mubr.bf16.gmra.mrb[0].mxu0 %v4484
      %v4661 = vpop.f32.mrb[0].mxu0
      %v4662 = vadd.f32 0.0, %v4661
      %v4663 = vpop.f32.mrb[0].mxu0
      %v4664 = vpop.f32.mrb[0].mxu0
      %v4665 = vadd.f32 0.0, %v4664
      %v4666 = vpop.f32.mrb[0].mxu0
      %4667 = vmatprep.mubr.bf16.mxu0 0
      %4668 = vmatmul.mubr.bf16.gmra.mrb[0].mxu0 %v4485
      %v4669 = vpop.f32.mrb[0].mxu0
      %v4670 = vadd.f32 0.0, %v4669
      %v4671 = vpop.f32.mrb[0].mxu0
      %v4672 = vpop.f32.mrb[0].mxu0
      %v4673 = vadd.f32 0.0, %v4672
      %v4674 = vpop.f32.mrb[0].mxu0
      %4675 = vmatprep.mubr.bf16.mxu0 0
      %4676 = vmatmul.mubr.bf16.gmra.mrb[0].mxu0 %v4486
      %v4677 = vpop.f32.mrb[0].mxu0
      %v4678 = vadd.f32 0.0, %v4677
      %v4679 = vpop.f32.mrb[0].mxu0
      %v4680 = vpop.f32.mrb[0].mxu0
      %v4681 = vadd.f32 0.0, %v4680
      %v4682 = vpop.f32.mrb[0].mxu0
      %4683 = vmatprep.mubr.bf16.mxu0 0
      %4684 = vmatmul.mubr.bf16.gmra.mrb[0].mxu0 %v4487
      %v4685 = vpop.f32.mrb[0].mxu0
      %v4686 = vadd.f32 0.0, %v4685
      %v4687 = vpop.f32.mrb[0].mxu0
      %v4688 = vpop.f32.mrb[0].mxu0
      %v4689 = vadd.f32 0.0, %v4688
      %v4690 = vpop.f32.mrb[0].mxu0
      %4691 = vmatprep.mubr.bf16.mxu0 0
      %4692 = vmatmul.mubr.bf16.gmra.mrb[0].mxu0 %v4488
      %v4693 = vpop.f32.mrb[0].mxu0
      %v4694 = vadd.f32 0.0, %v4693
      %v4695 = vpop.f32.mrb[0].mxu0
      %v4696 = vpop.f32.mrb[0].mxu0
      %v4697 = vadd.f32 0.0, %v4696
      %v4698 = vpop.f32.mrb[0].mxu0
      %4699 = vmatprep.mubr.bf16.mxu0 0
      %4700 = vmatmul.mubr.bf16.gmra.mrb[0].mxu0 %v4489
      %v4701 = vpop.f32.mrb[0].mxu0
      %v4702 = vadd.f32 0.0, %v4701
      %v4703 = vpop.f32.mrb[0].mxu0
      %v4704 = vpop.f32.mrb[0].mxu0
      %v4705 = vadd.f32 0.0, %v4704
      %v4706 = vpop.f32.mrb[0].mxu0
      %4707 = vmatprep.mubr.bf16.mxu0 0
      %4708 = vmatmul.mubr.bf16.gmra.mrb[0].mxu0 %v4490
      %v4709 = vpop.f32.mrb[0].mxu0
      %v4710 = vadd.f32 0.0, %v4709
      %v4711 = vpop.f32.mrb[0].mxu0
      %v4712 = vpop.f32.mrb[0].mxu0
      %v4713 = vadd.f32 0.0, %v4712
      %v4714 = vpop.f32.mrb[0].mxu0
      %4715 = vdwg.mxu0
      %v4716 = vld [vmem:[#allocation3] sm:$0xff]
      %v4717 = vld [vmem:[#allocation3 + $0x8] sm:$0xff]
      %v4718 = vld [vmem:[#allocation3 + $0x10] sm:$0xff]
      %v4719 = vld [vmem:[#allocation3 + $0x18] sm:$0xff]
      %v4720 = vld [vmem:[#allocation3 + $0x20] sm:$0xff]
      %v4721 = vld [vmem:[#allocation3 + $0x28] sm:$0xff]
      %v4722 = vld [vmem:[#allocation3 + $0x30] sm:$0xff]
      %v4723 = vld [vmem:[#allocation3 + $0x38] sm:$0xff]
      %v4724 = vld [vmem:[#allocation3 + $0x40] sm:$0xff]
      %v4725 = vld [vmem:[#allocation3 + $0x48] sm:$0xff]
      %v4726 = vld [vmem:[#allocation3 + $0x50] sm:$0xff]
      %v4727 = vld [vmem:[#allocation3 + $0x58] sm:$0xff]
      %v4728 = vld [vmem:[#allocation3 + $0x60] sm:$0xff]
      %v4729 = vld [vmem:[#allocation3 + $0x68] sm:$0xff]
      %v4730 = vld [vmem:[#allocation3 + $0x70] sm:$0xff]
      %v4731 = vld [vmem:[#allocation3 + $0x78] sm:$0xff]
      %v4732 = vld [vmem:[#allocation3 + $0x80] sm:$0xff]
      %v4733 = vld [vmem:[#allocation3 + $0x88] sm:$0xff]
      %v4734 = vld [vmem:[#allocation3 + $0x90] sm:$0xff]
      %v4735 = vld [vmem:[#allocation3 + $0x98] sm:$0xff]
      %v4736 = vld [vmem:[#allocation3 + $0xa0] sm:$0xff]
      %v4737 = vld [vmem:[#allocation3 + $0xa8] sm:$0xff]
      %v4738 = vld [vmem:[#allocation3 + $0xb0] sm:$0xff]
      %v4739 = vld [vmem:[#allocation3 + $0xb8] sm:$0xff]
      %v4740 = vld [vmem:[#allocation3 + $0xc0] sm:$0xff]
      %v4741 = vld [vmem:[#allocation3 + $0xc8] sm:$0xff]
      %v4742 = vld [vmem:[#allocation3 + $0xd0] sm:$0xff]
      %v4743 = vld [vmem:[#allocation3 + $0xd8] sm:$0xff]
      %v4744 = vld [vmem:[#allocation3 + $0xe0] sm:$0xff]
      %v4745 = vld [vmem:[#allocation3 + $0xe8] sm:$0xff]
      %v4746 = vld [vmem:[#allocation3 + $0xf0] sm:$0xff]
      %v4747 = vld [vmem:[#allocation3 + $0xf8] sm:$0xff]
      %v4748 = vadd.f32 %v4716, %v4590
      %v4749 = vadd.f32 %v4717, %v4593
      %v4750 = vadd.f32 %v4718, %v4598
      %v4751 = vadd.f32 %v4719, %v4601
      %v4752 = vadd.f32 %v4720, %v4606
      %v4753 = vadd.f32 %v4721, %v4609
      %v4754 = vadd.f32 %v4722, %v4614
      %v4755 = vadd.f32 %v4723, %v4617
      %v4756 = vadd.f32 %v4724, %v4622
      %v4757 = vadd.f32 %v4725, %v4625
      %v4758 = vadd.f32 %v4726, %v4630
      %v4759 = vadd.f32 %v4727, %v4633
      %v4760 = vadd.f32 %v4728, %v4638
      %v4761 = vadd.f32 %v4729, %v4641
      %v4762 = vadd.f32 %v4730, %v4646
      %v4763 = vadd.f32 %v4731, %v4649
      %v4764 = vadd.f32 %v4732, %v4654
      %v4765 = vadd.f32 %v4733, %v4657
      %v4766 = vadd.f32 %v4734, %v4662
      %v4767 = vadd.f32 %v4735, %v4665
      %v4768 = vadd.f32 %v4736, %v4670
      %v4769 = vadd.f32 %v4737, %v4673
      %v4770 = vadd.f32 %v4738, %v4678
      %v4771 = vadd.f32 %v4739, %v4681
      %v4772 = vadd.f32 %v4740, %v4686
      %v4773 = vadd.f32 %v4741, %v4689
      %v4774 = vadd.f32 %v4742, %v4694
      %v4775 = vadd.f32 %v4743, %v4697
      %v4776 = vadd.f32 %v4744, %v4702
      %v4777 = vadd.f32 %v4745, %v4705
      %v4778 = vadd.f32 %v4746, %v4710
      %v4779 = vadd.f32 %v4747, %v4713
      %4780 = vst [vmem:[#allocation3] sm:$0xff] %v4748
      %4781 = vst [vmem:[#allocation3 + $0x8] sm:$0xff] %v4749
      %4782 = vst [vmem:[#allocation3 + $0x10] sm:$0xff] %v4750
      %4783 = vst [vmem:[#allocation3 + $0x18] sm:$0xff] %v4751
      %4784 = vst [vmem:[#allocation3 + $0x20] sm:$0xff] %v4752
      %4785 = vst [vmem:[#allocation3 + $0x28] sm:$0xff] %v4753
      %4786 = vst [vmem:[#allocation3 + $0x30] sm:$0xff] %v4754
      %4787 = vst [vmem:[#allocation3 + $0x38] sm:$0xff] %v4755
      %4788 = vst [vmem:[#allocation3 + $0x40] sm:$0xff] %v4756
      %4789 = vst [vmem:[#allocation3 + $0x48] sm:$0xff] %v4757
      %4790 = vst [vmem:[#allocation3 + $0x50] sm:$0xff] %v4758
      %4791 = vst [vmem:[#allocation3 + $0x58] sm:$0xff] %v4759
      %4792 = vst [vmem:[#allocation3 + $0x60] sm:$0xff] %v4760
      %4793 = vst [vmem:[#allocation3 + $0x68] sm:$0xff] %v4761
      %4794 = vst [vmem:[#allocation3 + $0x70] sm:$0xff] %v4762
      %4795 = vst [vmem:[#allocation3 + $0x78] sm:$0xff] %v4763
      %4796 = vst [vmem:[#allocation3 + $0x80] sm:$0xff] %v4764
      %4797 = vst [vmem:[#allocation3 + $0x88] sm:$0xff] %v4765
      %4798 = vst [vmem:[#allocation3 + $0x90] sm:$0xff] %v4766
      %4799 = vst [vmem:[#allocation3 + $0x98] sm:$0xff] %v4767
      %4800 = vst [vmem:[#allocation3 + $0xa0] sm:$0xff] %v4768
      %4801 = vst [vmem:[#allocation3 + $0xa8] sm:$0xff] %v4769
      %4802 = vst [vmem:[#allocation3 + $0xb0] sm:$0xff] %v4770
      %4803 = vst [vmem:[#allocation3 + $0xb8] sm:$0xff] %v4771
      %4804 = vst [vmem:[#allocation3 + $0xc0] sm:$0xff] %v4772
      %4805 = vst [vmem:[#allocation3 + $0xc8] sm:$0xff] %v4773
      %4806 = vst [vmem:[#allocation3 + $0xd0] sm:$0xff] %v4774
      %4807 = vst [vmem:[#allocation3 + $0xd8] sm:$0xff] %v4775
      %4808 = vst [vmem:[#allocation3 + $0xe0] sm:$0xff] %v4776
      %4809 = vst [vmem:[#allocation3 + $0xe8] sm:$0xff] %v4777
      %4810 = vst [vmem:[#allocation3 + $0xf0] sm:$0xff] %v4778
      %4811 = vst [vmem:[#allocation3 + $0xf8] sm:$0xff] %v4779
      %v4812 = vld [vmem:[#allocation2 + $0x18] sm:$0xff]
      %v4813 = vld [vmem:[#allocation2 + $0x20] sm:$0xff]
      %v4814 = vld [vmem:[#allocation2 + $0x28] sm:$0xff]
      %v4815 = vld [vmem:[#allocation2 + $0x30] sm:$0xff]
      %v4816 = vld [vmem:[#allocation2 + $0x38] sm:$0xff]
      %v4817 = vld [vmem:[#allocation2 + $0x40] sm:$0xff]
      %v4818 = vld [vmem:[#allocation2 + $0x48] sm:$0xff]
      %v4819 = vld [vmem:[#allocation2 + $0x50] sm:$0xff]
      %v4820 = vld [vmem:[#allocation2 + $0x58] sm:$0xff]
      %v4821 = vld [vmem:[#allocation2 + $0x60] sm:$0xff]
      %v4822 = vld [vmem:[#allocation2 + $0x68] sm:$0xff]
      %v4823 = vld [vmem:[#allocation2 + $0x70] sm:$0xff]
      %v4824 = vld [vmem:[#allocation2 + $0x78] sm:$0xff]
      %v4825 = vld [vmem:[#allocation2 + $0x80] sm:$0xff]
      %v4826 = vld [vmem:[#allocation2 + $0x88] sm:$0xff]
      %v4827 = vld [vmem:[#allocation2 + $0x90] sm:$0xff]
      %v4828 = vld [vmem:[#allocation2 + $0x98] sm:$0x1]
      %v4829 = vmul.bf16 %v4812, %v2005
      %v4830 = vmul.bf16 %v4813, %v2013
      %v4831 = vmul.bf16 %v4814, %v2021
      %v4832 = vmul.bf16 %v4815, %v2029
      %v4833 = vmul.bf16 %v4816, %v2037
      %v4834 = vmul.bf16 %v4817, %v2045
      %v4835 = vmul.bf16 %v4818, %v2053
      %v4836 = vmul.bf16 %v4819, %v2061
      %v4837 = vmul.bf16 %v4820, %v2069
      %v4838 = vmul.bf16 %v4821, %v2077
      %v4839 = vmul.bf16 %v4822, %v2085
      %v4840 = vmul.bf16 %v4823, %v2093
      %v4841 = vmul.bf16 %v4824, %v2101
      %v4842 = vmul.bf16 %v4825, %v2109
      %v4843 = vmul.bf16 %v4826, %v2117
      %v4844 = vmul.bf16 %v4827, %v2125
      %v4845 = vmul.bf16 %v4828, %v2121
      %v4846 = vld [vmem:[%s2 + $0x200] sm:$0xf]
      %v4847 = vld [vmem:[%s2 + $0x204] sm:$0xf]
      %v4848 = vld [vmem:[%s2 + $0x208] sm:$0xf]
      %v4849 = vld [vmem:[%s2 + $0x20c] sm:$0xf]
      %v4850 = vld [vmem:[%s2 + $0x210] sm:$0xf]
      %v4851 = vld [vmem:[%s2 + $0x214] sm:$0xf]
      %v4852 = vld [vmem:[%s2 + $0x218] sm:$0xf]
      %v4853 = vld [vmem:[%s2 + $0x21c] sm:$0xf]
      %v4854 = vld [vmem:[%s2 + $0x220] sm:$0xf]
      %v4855 = vld [vmem:[%s2 + $0x224] sm:$0xf]
      %v4856 = vld [vmem:[%s2 + $0x228] sm:$0xf]
      %v4857 = vld [vmem:[%s2 + $0x22c] sm:$0xf]
      %v4858 = vld [vmem:[%s2 + $0x230] sm:$0xf]
      %v4859 = vld [vmem:[%s2 + $0x234] sm:$0xf]
      %v4860 = vld [vmem:[%s2 + $0x238] sm:$0xf]
      %v4861 = vld [vmem:[%s2 + $0x23c] sm:$0xf]
      %v4863 = vshrl.u32 %v4829, 16
      %v4865 = vshll.u32 %v4829, 16
      %v4867 = vrot.slane %v4865, 1
      %v4868 = vor.u32 %v4863, %v4867
      %v4870 = vshll.u32 %v4830, 16
      %v4872 = vrot.slane %v4870, 1
      %v4873 = vsel %vm1077, %v4868, %v4872
      %v4874 = vshrl.u32 %v4830, 16
      %v4876 = vor.u32 %v4874, %v4872
      %v4878 = vshll.u32 %v4831, 16
      %v4880 = vrot.slane %v4878, 1
      %v4881 = vsel %vm1077, %v4876, %v4880
      %v4882 = vshrl.u32 %v4831, 16
      %v4884 = vor.u32 %v4882, %v4880
      %v4886 = vshll.u32 %v4832, 16
      %v4888 = vrot.slane %v4886, 1
      %v4889 = vsel %vm1077, %v4884, %v4888
      %v4890 = vshrl.u32 %v4832, 16
      %v4892 = vor.u32 %v4890, %v4888
      %v4894 = vshll.u32 %v4833, 16
      %v4896 = vrot.slane %v4894, 1
      %v4897 = vsel %vm1077, %v4892, %v4896
      %v4898 = vshrl.u32 %v4833, 16
      %v4900 = vor.u32 %v4898, %v4896
      %v4902 = vshll.u32 %v4834, 16
      %v4904 = vrot.slane %v4902, 1
      %v4905 = vsel %vm1077, %v4900, %v4904
      %v4906 = vshrl.u32 %v4834, 16
      %v4908 = vor.u32 %v4906, %v4904
      %v4910 = vshll.u32 %v4835, 16
      %v4912 = vrot.slane %v4910, 1
      %v4913 = vsel %vm1077, %v4908, %v4912
      %v4914 = vshrl.u32 %v4835, 16
      %v4916 = vor.u32 %v4914, %v4912
      %v4918 = vshll.u32 %v4836, 16
      %v4920 = vrot.slane %v4918, 1
      %v4921 = vsel %vm1077, %v4916, %v4920
      %v4922 = vshrl.u32 %v4836, 16
      %v4924 = vor.u32 %v4922, %v4920
      %v4926 = vshll.u32 %v4837, 16
      %v4928 = vrot.slane %v4926, 1
      %v4929 = vsel %vm1077, %v4924, %v4928
      %v4930 = vshrl.u32 %v4837, 16
      %v4932 = vor.u32 %v4930, %v4928
      %v4934 = vshll.u32 %v4838, 16
      %v4936 = vrot.slane %v4934, 1
      %v4937 = vsel %vm1077, %v4932, %v4936
      %v4938 = vshrl.u32 %v4838, 16
      %v4940 = vor.u32 %v4938, %v4936
      %v4942 = vshll.u32 %v4839, 16
      %v4944 = vrot.slane %v4942, 1
      %v4945 = vsel %vm1077, %v4940, %v4944
      %v4946 = vshrl.u32 %v4839, 16
      %v4948 = vor.u32 %v4946, %v4944
      %v4950 = vshll.u32 %v4840, 16
      %v4952 = vrot.slane %v4950, 1
      %v4953 = vsel %vm1077, %v4948, %v4952
      %v4954 = vshrl.u32 %v4840, 16
      %v4956 = vor.u32 %v4954, %v4952
      %v4958 = vshll.u32 %v4841, 16
      %v4960 = vrot.slane %v4958, 1
      %v4961 = vsel %vm1077, %v4956, %v4960
      %v4962 = vshrl.u32 %v4841, 16
      %v4964 = vor.u32 %v4962, %v4960
      %v4966 = vshll.u32 %v4842, 16
      %v4968 = vrot.slane %v4966, 1
      %v4969 = vsel %vm1077, %v4964, %v4968
      %v4970 = vshrl.u32 %v4842, 16
      %v4972 = vor.u32 %v4970, %v4968
      %v4974 = vshll.u32 %v4843, 16
      %v4976 = vrot.slane %v4974, 1
      %v4977 = vsel %vm1077, %v4972, %v4976
      %v4978 = vshrl.u32 %v4843, 16
      %v4980 = vor.u32 %v4978, %v4976
      %v4982 = vshll.u32 %v4844, 16
      %v4984 = vrot.slane %v4982, 1
      %v4985 = vsel %vm1077, %v4980, %v4984
      %v4986 = vshrl.u32 %v4844, 16
      %v4988 = vor.u32 %v4986, %v4984
      %v4990 = vshll.u32 %v4845, 16
      %v4992 = vrot.slane %v4990, 1
      %v4993 = vsel %vm1077, %v4988, %v4992
      %v5026 = vunpack.c.l.b16 %v4846
      %v5027 = vunpack.c.l.b16 %v4847
      %v5028 = vunpack.c.l.b16 %v4848
      %v5029 = vunpack.c.l.b16 %v4849
      %v5030 = vunpack.c.l.b16 %v4850
      %v5031 = vunpack.c.l.b16 %v4851
      %v5032 = vunpack.c.l.b16 %v4852
      %v5033 = vunpack.c.l.b16 %v4853
      %v5034 = vunpack.c.l.b16 %v4854
      %v5035 = vunpack.c.l.b16 %v4855
      %v5036 = vunpack.c.l.b16 %v4856
      %v5037 = vunpack.c.l.b16 %v4857
      %v5038 = vunpack.c.l.b16 %v4858
      %v5039 = vunpack.c.l.b16 %v4859
      %v5040 = vunpack.c.l.b16 %v4860
      %v5041 = vunpack.c.l.b16 %v4861
      %v5042 = vpack.c.b16 %v5027, %v5026
      %v5043 = vpack.c.b16 %v5029, %v5028
      %v5044 = vpack.c.b16 %v5031, %v5030
      %v5045 = vpack.c.b16 %v5033, %v5032
      %v5046 = vpack.c.b16 %v5035, %v5034
      %v5047 = vpack.c.b16 %v5037, %v5036
      %v5048 = vpack.c.b16 %v5039, %v5038
      %v5049 = vpack.c.b16 %v5041, %v5040
      %5058 = vmatprep.subr.bf16.mxu0 0
      %5059 = vmatpush1.bf16.msra.mxu0 %v5042
      %5060 = vmatprep.subr.bf16.mxu0 0
      %5061 = vmatpush1.bf16.msra.mxu0 %v5043
      %5062 = vmatprep.subr.bf16.mxu0 0
      %5063 = vmatpush1.bf16.msra.mxu0 %v5044
      %5064 = vmatprep.subr.bf16.mxu0 0
      %5065 = vmatpush1.bf16.msra.mxu0 %v5045
      %5066 = vmatprep.subr.bf16.mxu0 0
      %5067 = vmatpush1.bf16.msra.mxu0 %v5046
      %5068 = vmatprep.subr.bf16.mxu0 0
      %5069 = vmatpush1.bf16.msra.mxu0 %v5047
      %5070 = vmatprep.subr.bf16.mxu0 0
      %5071 = vmatpush1.bf16.msra.mxu0 %v5048
      %5072 = vmatprep.subr.bf16.mxu0 0
      %5073 = vmatpush1.bf16.msra.mxu0 %v5049
      %5074 = vmatprep.subr.bf16.mxu0 0
      %5075 = vmatpush1.bf16.msra.mxu0 0
      %5076 = vmatprep.subr.bf16.mxu0 0
      %5077 = vmatpush1.bf16.msra.mxu0 0
      %5078 = vmatprep.subr.bf16.mxu0 0
      %5079 = vmatpush1.bf16.msra.mxu0 0
      %5080 = vmatprep.subr.bf16.mxu0 0
      %5081 = vmatpush1.bf16.msra.mxu0 0
      %5082 = vmatprep.subr.bf16.mxu0 0
      %5083 = vmatpush1.bf16.msra.mxu0 0
      %5084 = vmatprep.subr.bf16.mxu0 0
      %5085 = vmatpush1.bf16.msra.mxu0 0
      %5086 = vmatprep.subr.bf16.mxu0 0
      %5087 = vmatpush1.bf16.msra.mxu0 0
      %5088 = vmatprep.subr.bf16.mxu0 0
      %5089 = vmatpush1.bf16.msra.mxu0 0
      %5090 = vmatprep.mubr.bf16.mxu0 0
      %5091 = vmatmul.mubr.bf16.gmra.mrb[0].mxu0 %v4873
      %v5092 = vpop.f32.mrb[0].mxu0
      %v5093 = vadd.f32 0.0, %v5092
      %v5094 = vpop.f32.mrb[0].mxu0
      %v5095 = vpop.f32.mrb[0].mxu0
      %v5096 = vadd.f32 0.0, %v5095
      %v5097 = vpop.f32.mrb[0].mxu0
      %5098 = vmatprep.mubr.bf16.mxu0 0
      %5099 = vmatmul.mubr.bf16.gmra.mrb[0].mxu0 %v4881
      %v5100 = vpop.f32.mrb[0].mxu0
      %v5101 = vadd.f32 0.0, %v5100
      %v5102 = vpop.f32.mrb[0].mxu0
      %v5103 = vpop.f32.mrb[0].mxu0
      %v5104 = vadd.f32 0.0, %v5103
      %v5105 = vpop.f32.mrb[0].mxu0
      %5106 = vmatprep.mubr.bf16.mxu0 0
      %5107 = vmatmul.mubr.bf16.gmra.mrb[0].mxu0 %v4889
      %v5108 = vpop.f32.mrb[0].mxu0
      %v5109 = vadd.f32 0.0, %v5108
      %v5110 = vpop.f32.mrb[0].mxu0
      %v5111 = vpop.f32.mrb[0].mxu0
      %v5112 = vadd.f32 0.0, %v5111
      %v5113 = vpop.f32.mrb[0].mxu0
      %5114 = vmatprep.mubr.bf16.mxu0 0
      %5115 = vmatmul.mubr.bf16.gmra.mrb[0].mxu0 %v4897
      %v5116 = vpop.f32.mrb[0].mxu0
      %v5117 = vadd.f32 0.0, %v5116
      %v5118 = vpop.f32.mrb[0].mxu0
      %v5119 = vpop.f32.mrb[0].mxu0
      %v5120 = vadd.f32 0.0, %v5119
      %v5121 = vpop.f32.mrb[0].mxu0
      %5122 = vmatprep.mubr.bf16.mxu0 0
      %5123 = vmatmul.mubr.bf16.gmra.mrb[0].mxu0 %v4905
      %v5124 = vpop.f32.mrb[0].mxu0
      %v5125 = vadd.f32 0.0, %v5124
      %v5126 = vpop.f32.mrb[0].mxu0
      %v5127 = vpop.f32.mrb[0].mxu0
      %v5128 = vadd.f32 0.0, %v5127
      %v5129 = vpop.f32.mrb[0].mxu0
      %5130 = vmatprep.mubr.bf16.mxu0 0
      %5131 = vmatmul.mubr.bf16.gmra.mrb[0].mxu0 %v4913
      %v5132 = vpop.f32.mrb[0].mxu0
      %v5133 = vadd.f32 0.0, %v5132
      %v5134 = vpop.f32.mrb[0].mxu0
      %v5135 = vpop.f32.mrb[0].mxu0
      %v5136 = vadd.f32 0.0, %v5135
      %v5137 = vpop.f32.mrb[0].mxu0
      %5138 = vmatprep.mubr.bf16.mxu0 0
      %5139 = vmatmul.mubr.bf16.gmra.mrb[0].mxu0 %v4921
      %v5140 = vpop.f32.mrb[0].mxu0
      %v5141 = vadd.f32 0.0, %v5140
      %v5142 = vpop.f32.mrb[0].mxu0
      %v5143 = vpop.f32.mrb[0].mxu0
      %v5144 = vadd.f32 0.0, %v5143
      %v5145 = vpop.f32.mrb[0].mxu0
      %5146 = vmatprep.mubr.bf16.mxu0 0
      %5147 = vmatmul.mubr.bf16.gmra.mrb[0].mxu0 %v4929
      %v5148 = vpop.f32.mrb[0].mxu0
      %v5149 = vadd.f32 0.0, %v5148
      %v5150 = vpop.f32.mrb[0].mxu0
      %v5151 = vpop.f32.mrb[0].mxu0
      %v5152 = vadd.f32 0.0, %v5151
      %v5153 = vpop.f32.mrb[0].mxu0
      %5154 = vmatprep.mubr.bf16.mxu0 0
      %5155 = vmatmul.mubr.bf16.gmra.mrb[0].mxu0 %v4937
      %v5156 = vpop.f32.mrb[0].mxu0
      %v5157 = vadd.f32 0.0, %v5156
      %v5158 = vpop.f32.mrb[0].mxu0
      %v5159 = vpop.f32.mrb[0].mxu0
      %v5160 = vadd.f32 0.0, %v5159
      %v5161 = vpop.f32.mrb[0].mxu0
      %5162 = vmatprep.mubr.bf16.mxu0 0
      %5163 = vmatmul.mubr.bf16.gmra.mrb[0].mxu0 %v4945
      %v5164 = vpop.f32.mrb[0].mxu0
      %v5165 = vadd.f32 0.0, %v5164
      %v5166 = vpop.f32.mrb[0].mxu0
      %v5167 = vpop.f32.mrb[0].mxu0
      %v5168 = vadd.f32 0.0, %v5167
      %v5169 = vpop.f32.mrb[0].mxu0
      %5170 = vmatprep.mubr.bf16.mxu0 0
      %5171 = vmatmul.mubr.bf16.gmra.mrb[0].mxu0 %v4953
      %v5172 = vpop.f32.mrb[0].mxu0
      %v5173 = vadd.f32 0.0, %v5172
      %v5174 = vpop.f32.mrb[0].mxu0
      %v5175 = vpop.f32.mrb[0].mxu0
      %v5176 = vadd.f32 0.0, %v5175
      %v5177 = vpop.f32.mrb[0].mxu0
      %5178 = vmatprep.mubr.bf16.mxu0 0
      %5179 = vmatmul.mubr.bf16.gmra.mrb[0].mxu0 %v4961
      %v5180 = vpop.f32.mrb[0].mxu0
      %v5181 = vadd.f32 0.0, %v5180
      %v5182 = vpop.f32.mrb[0].mxu0
      %v5183 = vpop.f32.mrb[0].mxu0
      %v5184 = vadd.f32 0.0, %v5183
      %v5185 = vpop.f32.mrb[0].mxu0
      %5186 = vmatprep.mubr.bf16.mxu0 0
      %5187 = vmatmul.mubr.bf16.gmra.mrb[0].mxu0 %v4969
      %v5188 = vpop.f32.mrb[0].mxu0
      %v5189 = vadd.f32 0.0, %v5188
      %v5190 = vpop.f32.mrb[0].mxu0
      %v5191 = vpop.f32.mrb[0].mxu0
      %v5192 = vadd.f32 0.0, %v5191
      %v5193 = vpop.f32.mrb[0].mxu0
      %5194 = vmatprep.mubr.bf16.mxu0 0
      %5195 = vmatmul.mubr.bf16.gmra.mrb[0].mxu0 %v4977
      %v5196 = vpop.f32.mrb[0].mxu0
      %v5197 = vadd.f32 0.0, %v5196
      %v5198 = vpop.f32.mrb[0].mxu0
      %v5199 = vpop.f32.mrb[0].mxu0
      %v5200 = vadd.f32 0.0, %v5199
      %v5201 = vpop.f32.mrb[0].mxu0
      %5202 = vmatprep.mubr.bf16.mxu0 0
      %5203 = vmatmul.mubr.bf16.gmra.mrb[0].mxu0 %v4985
      %v5204 = vpop.f32.mrb[0].mxu0
      %v5205 = vadd.f32 0.0, %v5204
      %v5206 = vpop.f32.mrb[0].mxu0
      %v5207 = vpop.f32.mrb[0].mxu0
      %v5208 = vadd.f32 0.0, %v5207
      %v5209 = vpop.f32.mrb[0].mxu0
      %5210 = vmatprep.mubr.bf16.mxu0 0
      %5211 = vmatmul.mubr.bf16.gmra.mrb[0].mxu0 %v4993
      %v5212 = vpop.f32.mrb[0].mxu0
      %v5213 = vadd.f32 0.0, %v5212
      %v5214 = vpop.f32.mrb[0].mxu0
      %v5215 = vpop.f32.mrb[0].mxu0
      %v5216 = vadd.f32 0.0, %v5215
      %v5217 = vpop.f32.mrb[0].mxu0
      %5218 = vdwg.mxu0
      %v5219 = vld [vmem:[#allocation3] sm:$0xff]
      %v5220 = vld [vmem:[#allocation3 + $0x8] sm:$0xff]
      %v5221 = vld [vmem:[#allocation3 + $0x10] sm:$0xff]
      %v5222 = vld [vmem:[#allocation3 + $0x18] sm:$0xff]
      %v5223 = vld [vmem:[#allocation3 + $0x20] sm:$0xff]
      %v5224 = vld [vmem:[#allocation3 + $0x28] sm:$0xff]
      %v5225 = vld [vmem:[#allocation3 + $0x30] sm:$0xff]
      %v5226 = vld [vmem:[#allocation3 + $0x38] sm:$0xff]
      %v5227 = vld [vmem:[#allocation3 + $0x40] sm:$0xff]
      %v5228 = vld [vmem:[#allocation3 + $0x48] sm:$0xff]
      %v5229 = vld [vmem:[#allocation3 + $0x50] sm:$0xff]
      %v5230 = vld [vmem:[#allocation3 + $0x58] sm:$0xff]
      %v5231 = vld [vmem:[#allocation3 + $0x60] sm:$0xff]
      %v5232 = vld [vmem:[#allocation3 + $0x68] sm:$0xff]
      %v5233 = vld [vmem:[#allocation3 + $0x70] sm:$0xff]
      %v5234 = vld [vmem:[#allocation3 + $0x78] sm:$0xff]
      %v5235 = vld [vmem:[#allocation3 + $0x80] sm:$0xff]
      %v5236 = vld [vmem:[#allocation3 + $0x88] sm:$0xff]
      %v5237 = vld [vmem:[#allocation3 + $0x90] sm:$0xff]
      %v5238 = vld [vmem:[#allocation3 + $0x98] sm:$0xff]
      %v5239 = vld [vmem:[#allocation3 + $0xa0] sm:$0xff]
      %v5240 = vld [vmem:[#allocation3 + $0xa8] sm:$0xff]
      %v5241 = vld [vmem:[#allocation3 + $0xb0] sm:$0xff]
      %v5242 = vld [vmem:[#allocation3 + $0xb8] sm:$0xff]
      %v5243 = vld [vmem:[#allocation3 + $0xc0] sm:$0xff]
      %v5244 = vld [vmem:[#allocation3 + $0xc8] sm:$0xff]
      %v5245 = vld [vmem:[#allocation3 + $0xd0] sm:$0xff]
      %v5246 = vld [vmem:[#allocation3 + $0xd8] sm:$0xff]
      %v5247 = vld [vmem:[#allocation3 + $0xe0] sm:$0xff]
      %v5248 = vld [vmem:[#allocation3 + $0xe8] sm:$0xff]
      %v5249 = vld [vmem:[#allocation3 + $0xf0] sm:$0xff]
      %v5250 = vld [vmem:[#allocation3 + $0xf8] sm:$0xff]
      %v5251 = vadd.f32 %v5219, %v5093
      %v5252 = vadd.f32 %v5220, %v5096
      %v5253 = vadd.f32 %v5221, %v5101
      %v5254 = vadd.f32 %v5222, %v5104
      %v5255 = vadd.f32 %v5223, %v5109
      %v5256 = vadd.f32 %v5224, %v5112
      %v5257 = vadd.f32 %v5225, %v5117
      %v5258 = vadd.f32 %v5226, %v5120
      %v5259 = vadd.f32 %v5227, %v5125
      %v5260 = vadd.f32 %v5228, %v5128
      %v5261 = vadd.f32 %v5229, %v5133
      %v5262 = vadd.f32 %v5230, %v5136
      %v5263 = vadd.f32 %v5231, %v5141
      %v5264 = vadd.f32 %v5232, %v5144
      %v5265 = vadd.f32 %v5233, %v5149
      %v5266 = vadd.f32 %v5234, %v5152
      %v5267 = vadd.f32 %v5235, %v5157
      %v5268 = vadd.f32 %v5236, %v5160
      %v5269 = vadd.f32 %v5237, %v5165
      %v5270 = vadd.f32 %v5238, %v5168
      %v5271 = vadd.f32 %v5239, %v5173
      %v5272 = vadd.f32 %v5240, %v5176
      %v5273 = vadd.f32 %v5241, %v5181
      %v5274 = vadd.f32 %v5242, %v5184
      %v5275 = vadd.f32 %v5243, %v5189
      %v5276 = vadd.f32 %v5244, %v5192
      %v5277 = vadd.f32 %v5245, %v5197
      %v5278 = vadd.f32 %v5246, %v5200
      %v5279 = vadd.f32 %v5247, %v5205
      %v5280 = vadd.f32 %v5248, %v5208
      %v5281 = vadd.f32 %v5249, %v5213
      %v5282 = vadd.f32 %v5250, %v5216
      %5283 = vst [vmem:[#allocation3] sm:$0xff] %v5251
      %5284 = vst [vmem:[#allocation3 + $0x8] sm:$0xff] %v5252
      %5285 = vst [vmem:[#allocation3 + $0x10] sm:$0xff] %v5253
      %5286 = vst [vmem:[#allocation3 + $0x18] sm:$0xff] %v5254
      %5287 = vst [vmem:[#allocation3 + $0x20] sm:$0xff] %v5255
      %5288 = vst [vmem:[#allocation3 + $0x28] sm:$0xff] %v5256
      %5289 = vst [vmem:[#allocation3 + $0x30] sm:$0xff] %v5257
      %5290 = vst [vmem:[#allocation3 + $0x38] sm:$0xff] %v5258
      %5291 = vst [vmem:[#allocation3 + $0x40] sm:$0xff] %v5259
      %5292 = vst [vmem:[#allocation3 + $0x48] sm:$0xff] %v5260
      %5293 = vst [vmem:[#allocation3 + $0x50] sm:$0xff] %v5261
      %5294 = vst [vmem:[#allocation3 + $0x58] sm:$0xff] %v5262
      %5295 = vst [vmem:[#allocation3 + $0x60] sm:$0xff] %v5263
      %5296 = vst [vmem:[#allocation3 + $0x68] sm:$0xff] %v5264
      %5297 = vst [vmem:[#allocation3 + $0x70] sm:$0xff] %v5265
      %5298 = vst [vmem:[#allocation3 + $0x78] sm:$0xff] %v5266
      %5299 = vst [vmem:[#allocation3 + $0x80] sm:$0xff] %v5267
      %5300 = vst [vmem:[#allocation3 + $0x88] sm:$0xff] %v5268
      %5301 = vst [vmem:[#allocation3 + $0x90] sm:$0xff] %v5269
      %5302 = vst [vmem:[#allocation3 + $0x98] sm:$0xff] %v5270
      %5303 = vst [vmem:[#allocation3 + $0xa0] sm:$0xff] %v5271
      %5304 = vst [vmem:[#allocation3 + $0xa8] sm:$0xff] %v5272
      %5305 = vst [vmem:[#allocation3 + $0xb0] sm:$0xff] %v5273
      %5306 = vst [vmem:[#allocation3 + $0xb8] sm:$0xff] %v5274
      %5307 = vst [vmem:[#allocation3 + $0xc0] sm:$0xff] %v5275
      %5308 = vst [vmem:[#allocation3 + $0xc8] sm:$0xff] %v5276
      %5309 = vst [vmem:[#allocation3 + $0xd0] sm:$0xff] %v5277
      %5310 = vst [vmem:[#allocation3 + $0xd8] sm:$0xff] %v5278
      %5311 = vst [vmem:[#allocation3 + $0xe0] sm:$0xff] %v5279
      %5312 = vst [vmem:[#allocation3 + $0xe8] sm:$0xff] %v5280
      %5313 = vst [vmem:[#allocation3 + $0xf0] sm:$0xff] %v5281
      %5314 = vst [vmem:[#allocation3 + $0xf8] sm:$0xff] %v5282
      %v5315 = vld [vmem:[#allocation3] sm:$0xff]
      %v5316 = vld [vmem:[#allocation3 + $0x8] sm:$0xff]
      %v5317 = vld [vmem:[#allocation3 + $0x10] sm:$0xff]
      %v5318 = vld [vmem:[#allocation3 + $0x18] sm:$0xff]
      %v5319 = vld [vmem:[#allocation3 + $0x20] sm:$0xff]
      %v5320 = vld [vmem:[#allocation3 + $0x28] sm:$0xff]
      %v5321 = vld [vmem:[#allocation3 + $0x30] sm:$0xff]
      %v5322 = vld [vmem:[#allocation3 + $0x38] sm:$0xff]
      %v5323 = vld [vmem:[#allocation3 + $0x40] sm:$0xff]
      %v5324 = vld [vmem:[#allocation3 + $0x48] sm:$0xff]
      %v5325 = vld [vmem:[#allocation3 + $0x50] sm:$0xff]
      %v5326 = vld [vmem:[#allocation3 + $0x58] sm:$0xff]
      %v5327 = vld [vmem:[#allocation3 + $0x60] sm:$0xff]
      %v5328 = vld [vmem:[#allocation3 + $0x68] sm:$0xff]
      %v5329 = vld [vmem:[#allocation3 + $0x70] sm:$0xff]
      %v5330 = vld [vmem:[#allocation3 + $0x78] sm:$0xff]
      %v5331 = vld [vmem:[#allocation3 + $0x80] sm:$0xff]
      %v5332 = vld [vmem:[#allocation3 + $0x88] sm:$0xff]
      %v5333 = vld [vmem:[#allocation3 + $0x90] sm:$0xff]
      %v5334 = vld [vmem:[#allocation3 + $0x98] sm:$0xff]
      %v5335 = vld [vmem:[#allocation3 + $0xa0] sm:$0xff]
      %v5336 = vld [vmem:[#allocation3 + $0xa8] sm:$0xff]
      %v5337 = vld [vmem:[#allocation3 + $0xb0] sm:$0xff]
      %v5338 = vld [vmem:[#allocation3 + $0xb8] sm:$0xff]
      %v5339 = vld [vmem:[#allocation3 + $0xc0] sm:$0xff]
      %v5340 = vld [vmem:[#allocation3 + $0xc8] sm:$0xff]
      %v5341 = vld [vmem:[#allocation3 + $0xd0] sm:$0xff]
      %v5342 = vld [vmem:[#allocation3 + $0xd8] sm:$0xff]
      %v5343 = vld [vmem:[#allocation3 + $0xe0] sm:$0xff]
      %v5344 = vld [vmem:[#allocation3 + $0xe8] sm:$0xff]
      %v5345 = vld [vmem:[#allocation3 + $0xf0] sm:$0xff]
      %v5346 = vld [vmem:[#allocation3 + $0xf8] sm:$0xff]
      %v5347 = vpack.c.bf16 %v5316, %v5315
      %v5348 = vpack.c.bf16 %v5318, %v5317
      %v5349 = vpack.c.bf16 %v5320, %v5319
      %v5350 = vpack.c.bf16 %v5322, %v5321
      %v5351 = vpack.c.bf16 %v5324, %v5323
      %v5352 = vpack.c.bf16 %v5326, %v5325
      %v5353 = vpack.c.bf16 %v5328, %v5327
      %v5354 = vpack.c.bf16 %v5330, %v5329
      %v5355 = vpack.c.bf16 %v5332, %v5331
      %v5356 = vpack.c.bf16 %v5334, %v5333
      %v5357 = vpack.c.bf16 %v5336, %v5335
      %v5358 = vpack.c.bf16 %v5338, %v5337
      %v5359 = vpack.c.bf16 %v5340, %v5339
      %v5360 = vpack.c.bf16 %v5342, %v5341
      %v5361 = vpack.c.bf16 %v5344, %v5343
      %v5362 = vpack.c.bf16 %v5346, %v5345
      %v5379 = vunpack.c.l.b16 %v5347
      %v5380 = vunpack.c.h.b16 %v5347
      %v5381 = vunpack.c.l.b16 %v5348
      %v5382 = vunpack.c.h.b16 %v5348
      %v5383 = vunpack.c.l.b16 %v5349
      %v5384 = vunpack.c.h.b16 %v5349
      %v5385 = vunpack.c.l.b16 %v5350
      %v5386 = vunpack.c.h.b16 %v5350
      %v5387 = vunpack.c.l.b16 %v5351
      %v5388 = vunpack.c.h.b16 %v5351
      %v5389 = vunpack.c.l.b16 %v5352
      %v5390 = vunpack.c.h.b16 %v5352
      %v5391 = vunpack.c.l.b16 %v5353
      %v5392 = vunpack.c.h.b16 %v5353
      %v5393 = vunpack.c.l.b16 %v5354
      %v5394 = vunpack.c.h.b16 %v5354
      %v5395 = vunpack.c.l.b16 %v5355
      %v5396 = vunpack.c.h.b16 %v5355
      %v5397 = vunpack.c.l.b16 %v5356
      %v5398 = vunpack.c.h.b16 %v5356
      %v5399 = vunpack.c.l.b16 %v5357
      %v5400 = vunpack.c.h.b16 %v5357
      %v5401 = vunpack.c.l.b16 %v5358
      %v5402 = vunpack.c.h.b16 %v5358
      %v5403 = vunpack.c.l.b16 %v5359
      %v5404 = vunpack.c.h.b16 %v5359
      %v5405 = vunpack.c.l.b16 %v5360
      %v5406 = vunpack.c.h.b16 %v5360
      %v5407 = vunpack.c.l.b16 %v5361
      %v5408 = vunpack.c.h.b16 %v5361
      %v5409 = vunpack.c.l.b16 %v5362
      %v5410 = vunpack.c.h.b16 %v5362
      %v5411 = vpack.c.b16 %v5379, %v5379
      %v5412 = vpack.c.b16 %v5380, %v5380
      %v5413 = vpack.c.b16 %v5381, %v5381
      %v5414 = vpack.c.b16 %v5382, %v5382
      %v5415 = vpack.c.b16 %v5383, %v5383
      %v5416 = vpack.c.b16 %v5384, %v5384
      %v5417 = vpack.c.b16 %v5385, %v5385
      %v5418 = vpack.c.b16 %v5386, %v5386
      %v5419 = vpack.c.b16 %v5387, %v5387
      %v5420 = vpack.c.b16 %v5388, %v5388
      %v5421 = vpack.c.b16 %v5389, %v5389
      %v5422 = vpack.c.b16 %v5390, %v5390
      %v5423 = vpack.c.b16 %v5391, %v5391
      %v5424 = vpack.c.b16 %v5392, %v5392
      %v5425 = vpack.c.b16 %v5393, %v5393
      %v5426 = vpack.c.b16 %v5394, %v5394
      %v5427 = vpack.c.b16 %v5395, %v5395
      %v5428 = vpack.c.b16 %v5396, %v5396
      %v5429 = vpack.c.b16 %v5397, %v5397
      %v5430 = vpack.c.b16 %v5398, %v5398
      %v5431 = vpack.c.b16 %v5399, %v5399
      %v5432 = vpack.c.b16 %v5400, %v5400
      %v5433 = vpack.c.b16 %v5401, %v5401
      %v5434 = vpack.c.b16 %v5402, %v5402
      %v5435 = vpack.c.b16 %v5403, %v5403
      %v5436 = vpack.c.b16 %v5404, %v5404
      %v5437 = vpack.c.b16 %v5405, %v5405
      %v5438 = vpack.c.b16 %v5406, %v5406
      %v5439 = vpack.c.b16 %v5407, %v5407
      %v5440 = vpack.c.b16 %v5408, %v5408
      %v5441 = vpack.c.b16 %v5409, %v5409
      %v5442 = vpack.c.b16 %v5410, %v5410
      %5475 = vst [vmem:[%s206] sm:$0xf] %v5411
      %5476 = vst [vmem:[%s206 + $0x4] sm:$0xf] %v5412
      %5477 = vst [vmem:[%s206 + $0x8] sm:$0xf] %v5413
      %5478 = vst [vmem:[%s206 + $0xc] sm:$0xf] %v5414
      %5479 = vst [vmem:[%s206 + $0x10] sm:$0xf] %v5415
      %5480 = vst [vmem:[%s206 + $0x14] sm:$0xf] %v5416
      %5481 = vst [vmem:[%s206 + $0x18] sm:$0xf] %v5417
      %5482 = vst [vmem:[%s206 + $0x1c] sm:$0xf] %v5418
      %5483 = vst [vmem:[%s206 + $0x20] sm:$0xf] %v5419
      %5484 = vst [vmem:[%s206 + $0x24] sm:$0xf] %v5420
      %5485 = vst [vmem:[%s206 + $0x28] sm:$0xf] %v5421
      %5486 = vst [vmem:[%s206 + $0x2c] sm:$0xf] %v5422
      %5487 = vst [vmem:[%s206 + $0x30] sm:$0xf] %v5423
      %5488 = vst [vmem:[%s206 + $0x34] sm:$0xf] %v5424
      %5489 = vst [vmem:[%s206 + $0x38] sm:$0xf] %v5425
      %5490 = vst [vmem:[%s206 + $0x3c] sm:$0xf] %v5426
      %5491 = vst [vmem:[%s206 + $0x40] sm:$0xf] %v5427
      %5492 = vst [vmem:[%s206 + $0x44] sm:$0xf] %v5428
      %5493 = vst [vmem:[%s206 + $0x48] sm:$0xf] %v5429
      %5494 = vst [vmem:[%s206 + $0x4c] sm:$0xf] %v5430
      %5495 = vst [vmem:[%s206 + $0x50] sm:$0xf] %v5431
      %5496 = vst [vmem:[%s206 + $0x54] sm:$0xf] %v5432
      %5497 = vst [vmem:[%s206 + $0x58] sm:$0xf] %v5433
      %5498 = vst [vmem:[%s206 + $0x5c] sm:$0xf] %v5434
      %5499 = vst [vmem:[%s206 + $0x60] sm:$0xf] %v5435
      %5500 = vst [vmem:[%s206 + $0x64] sm:$0xf] %v5436
      %5501 = vst [vmem:[%s206 + $0x68] sm:$0xf] %v5437
      %5502 = vst [vmem:[%s206 + $0x6c] sm:$0xf] %v5438
      %5503 = vst [vmem:[%s206 + $0x70] sm:$0xf] %v5439
      %5504 = vst [vmem:[%s206 + $0x74] sm:$0xf] %v5440
      %5505 = vst [vmem:[%s206 + $0x78] sm:$0xf] %v5441
      %5506 = vst [vmem:[%s206 + $0x7c] sm:$0xf] %v5442
      %v5507 = vadd.f32 %v5315, %v5316
      %v5508 = vadd.f32 %v5507, %v5317
      %v5509 = vadd.f32 %v5508, %v5318
      %v5510 = vadd.f32 %v5509, %v5319
      %v5511 = vadd.f32 %v5510, %v5320
      %v5512 = vadd.f32 %v5511, %v5321
      %v5513 = vadd.f32 %v5512, %v5322
      %v5514 = vadd.f32 %v5513, %v5323
      %v5515 = vadd.f32 %v5514, %v5324
      %v5516 = vadd.f32 %v5515, %v5325
      %v5517 = vadd.f32 %v5516, %v5326
      %v5518 = vadd.f32 %v5517, %v5327
      %v5519 = vadd.f32 %v5518, %v5328
      %v5520 = vadd.f32 %v5519, %v5329
      %v5521 = vadd.f32 %v5520, %v5330
      %v5522 = vadd.f32 %v5521, %v5331
      %v5523 = vadd.f32 %v5522, %v5332
      %v5524 = vadd.f32 %v5523, %v5333
      %v5525 = vadd.f32 %v5524, %v5334
      %v5526 = vadd.f32 %v5525, %v5335
      %v5527 = vadd.f32 %v5526, %v5336
      %v5528 = vadd.f32 %v5527, %v5337
      %v5529 = vadd.f32 %v5528, %v5338
      %v5530 = vadd.f32 %v5529, %v5339
      %v5531 = vadd.f32 %v5530, %v5340
      %v5532 = vadd.f32 %v5531, %v5341
      %v5533 = vadd.f32 %v5532, %v5342
      %v5534 = vadd.f32 %v5533, %v5343
      %v5535 = vadd.f32 %v5534, %v5344
      %v5536 = vadd.f32 %v5535, %v5345
      %v5537 = vadd.f32 %v5536, %v5346
      %v5538 = vrot.slane %v5537, 4
      %v5539 = vadd.f32 %v5537, %v5538
      %v5540 = vrot.slane %v5539, 2
      %v5541 = vadd.f32 %v5539, %v5540
      %v5542 = vrot.slane %v5541, 1
      %v5543 = vadd.f32 %v5541, %v5542
      %v5544 = vrcp.pop 256.0
      %v5545 = vmul.f32 %v5543, %v5544
      %v5546 = vsub.f32 %v5315, %v5545
      %v5547 = vsub.f32 %v5316, %v5545
      %v5548 = vsub.f32 %v5317, %v5545
      %v5549 = vsub.f32 %v5318, %v5545
      %v5550 = vsub.f32 %v5319, %v5545
      %v5551 = vsub.f32 %v5320, %v5545
      %v5552 = vsub.f32 %v5321, %v5545
      %v5553 = vsub.f32 %v5322, %v5545
      %v5554 = vsub.f32 %v5323, %v5545
      %v5555 = vsub.f32 %v5324, %v5545
      %v5556 = vsub.f32 %v5325, %v5545
      %v5557 = vsub.f32 %v5326, %v5545
      %v5558 = vsub.f32 %v5327, %v5545
      %v5559 = vsub.f32 %v5328, %v5545
      %v5560 = vsub.f32 %v5329, %v5545
      %v5561 = vsub.f32 %v5330, %v5545
      %v5562 = vsub.f32 %v5331, %v5545
      %v5563 = vsub.f32 %v5332, %v5545
      %v5564 = vsub.f32 %v5333, %v5545
      %v5565 = vsub.f32 %v5334, %v5545
      %v5566 = vsub.f32 %v5335, %v5545
      %v5567 = vsub.f32 %v5336, %v5545
      %v5568 = vsub.f32 %v5337, %v5545
      %v5569 = vsub.f32 %v5338, %v5545
      %v5570 = vsub.f32 %v5339, %v5545
      %v5571 = vsub.f32 %v5340, %v5545
      %v5572 = vsub.f32 %v5341, %v5545
      %v5573 = vsub.f32 %v5342, %v5545
      %v5574 = vsub.f32 %v5343, %v5545
      %v5575 = vsub.f32 %v5344, %v5545
      %v5576 = vsub.f32 %v5345, %v5545
      %v5577 = vsub.f32 %v5346, %v5545
      %v5578 = vmul.f32 %v5546, %v5546
      %v5579 = vmul.f32 %v5547, %v5547
      %v5580 = vmul.f32 %v5548, %v5548
      %v5581 = vmul.f32 %v5549, %v5549
      %v5582 = vmul.f32 %v5550, %v5550
      %v5583 = vmul.f32 %v5551, %v5551
      %v5584 = vmul.f32 %v5552, %v5552
      %v5585 = vmul.f32 %v5553, %v5553
      %v5586 = vmul.f32 %v5554, %v5554
      %v5587 = vmul.f32 %v5555, %v5555
      %v5588 = vmul.f32 %v5556, %v5556
      %v5589 = vmul.f32 %v5557, %v5557
      %v5590 = vmul.f32 %v5558, %v5558
      %v5591 = vmul.f32 %v5559, %v5559
      %v5592 = vmul.f32 %v5560, %v5560
      %v5593 = vmul.f32 %v5561, %v5561
      %v5594 = vmul.f32 %v5562, %v5562
      %v5595 = vmul.f32 %v5563, %v5563
      %v5596 = vmul.f32 %v5564, %v5564
      %v5597 = vmul.f32 %v5565, %v5565
      %v5598 = vmul.f32 %v5566, %v5566
      %v5599 = vmul.f32 %v5567, %v5567
      %v5600 = vmul.f32 %v5568, %v5568
      %v5601 = vmul.f32 %v5569, %v5569
      %v5602 = vmul.f32 %v5570, %v5570
      %v5603 = vmul.f32 %v5571, %v5571
      %v5604 = vmul.f32 %v5572, %v5572
      %v5605 = vmul.f32 %v5573, %v5573
      %v5606 = vmul.f32 %v5574, %v5574
      %v5607 = vmul.f32 %v5575, %v5575
      %v5608 = vmul.f32 %v5576, %v5576
      %v5609 = vmul.f32 %v5577, %v5577
      %v5610 = vadd.f32 %v5578, %v5579
      %v5611 = vadd.f32 %v5610, %v5580
      %v5612 = vadd.f32 %v5611, %v5581
      %v5613 = vadd.f32 %v5612, %v5582
      %v5614 = vadd.f32 %v5613, %v5583
      %v5615 = vadd.f32 %v5614, %v5584
      %v5616 = vadd.f32 %v5615, %v5585
      %v5617 = vadd.f32 %v5616, %v5586
      %v5618 = vadd.f32 %v5617, %v5587
      %v5619 = vadd.f32 %v5618, %v5588
      %v5620 = vadd.f32 %v5619, %v5589
      %v5621 = vadd.f32 %v5620, %v5590
      %v5622 = vadd.f32 %v5621, %v5591
      %v5623 = vadd.f32 %v5622, %v5592
      %v5624 = vadd.f32 %v5623, %v5593
      %v5625 = vadd.f32 %v5624, %v5594
      %v5626 = vadd.f32 %v5625, %v5595
      %v5627 = vadd.f32 %v5626, %v5596
      %v5628 = vadd.f32 %v5627, %v5597
      %v5629 = vadd.f32 %v5628, %v5598
      %v5630 = vadd.f32 %v5629, %v5599
      %v5631 = vadd.f32 %v5630, %v5600
      %v5632 = vadd.f32 %v5631, %v5601
      %v5633 = vadd.f32 %v5632, %v5602
      %v5634 = vadd.f32 %v5633, %v5603
      %v5635 = vadd.f32 %v5634, %v5604
      %v5636 = vadd.f32 %v5635, %v5605
      %v5637 = vadd.f32 %v5636, %v5606
      %v5638 = vadd.f32 %v5637, %v5607
      %v5639 = vadd.f32 %v5638, %v5608
      %v5640 = vadd.f32 %v5639, %v5609
      %v5641 = vrot.slane %v5640, 4
      %v5642 = vadd.f32 %v5640, %v5641
      %v5643 = vrot.slane %v5642, 2
      %v5644 = vadd.f32 %v5642, %v5643
      %v5645 = vrot.slane %v5644, 1
      %v5646 = vadd.f32 %v5644, %v5645
      %vm5647 = vcmask 1040384
      %v5648 = vsel %vm5647, %v5545, %v5646
      %5649 = vst [vmem:[%s211] sm:$0x3] %v5648
      %s5650 = smul.u32 32, %s16
      %p5651 = scmp.lt.s32.totalorder %s5650, 63
      %s5652 = scalar_select %p5651, %s5650, 63
      %s5653 = smul.addr %s5652, 4
      %s5654 = scalar_lea.vmem %s3, %s5653
      %p5655 = scmp.lt.s32.totalorder %s16, 1
      %s5656 = scalar_select %p5655, %s16, 1
      %s5657 = smul.addr %s5656, 2
      %s5658 = scalar_lea.vmem %s4, %s5657
      // Predicated region
      $region33: #{basicblock_forward.4} parent=31 // pred_check
        %p5659 = pneg %p102
      $region34: #{basicblock_forward.4} parent=31 // pred_check_branch
        %5661 = sbr.rel (%p5659) target = $region36
      $region35: #{basicblock_forward.4} parent=31 // pred_region
        %s5662 = smul.u32 32, %s16
      $region36: #{basicblock_forward.4} parent=31 // pred_fallthru
        _
      // Predicated region
      $region37: #{basicblock_forward.4} parent=31 // pred_check
        %p5663 = pneg %p128
      $region38: #{basicblock_forward.4} parent=31 // pred_check_branch
        %5665 = sbr.rel (%p5663) target = $region40
      $region39: #{basicblock_forward.4} parent=31 // pred_region
        _
      $region40: #{basicblock_forward.4} parent=31 // pred_fallthru
        _
    $region32: #{basicblock_forward.4} parent=5 // pred_fallthru
      _
    %p5666 = scmp.le.s32.totalorder 2, %s11
    // Predicated region
    $region41: #{basicblock_forward.4} parent=5 // pred_check
      %p5667 = pneg %p5666
    $region42: #{basicblock_forward.4} parent=5 // pred_check_branch
      %5669 = sbr.rel (%p5667) target = $region44
    $region43: #{basicblock_forward.4} parent=5 // pred_region
      %s5670 = ssub.s32 %s11, 2
      // Predicated region
      $region45: #{basicblock_forward.4} parent=43 // pred_check
        %p5671 = pneg %p108
      $region46: #{basicblock_forward.4} parent=43 // pred_check_branch
        %5673 = sbr.rel (%p5671) target = $region48
      $region47: #{basicblock_forward.4} parent=43 // pred_region
        %s5674 = smul.u32 32, %s17
        %p5675 = scmp.lt.s32.totalorder %s5674, 63
        %s5676 = scalar_select %p5675, %s5674, 63
        %s5677 = smul.addr %s5676, 4
        %s5678 = scalar_lea.vmem %s3, %s5677
      $region48: #{basicblock_forward.4} parent=43 // pred_fallthru
        _
      // Predicated region
      $region49: #{basicblock_forward.4} parent=43 // pred_check
        %p5679 = pneg %p134
      $region50: #{basicblock_forward.4} parent=43 // pred_check_branch
        %5681 = sbr.rel (%p5679) target = $region52
      $region51: #{basicblock_forward.4} parent=43 // pred_region
        %p5682 = scmp.lt.s32.totalorder %s17, 1
        %s5683 = scalar_select %p5682, %s17, 1
        %s5684 = smul.addr %s5683, 2
        %s5685 = scalar_lea.vmem %s4, %s5684
      $region52: #{basicblock_forward.4} parent=43 // pred_fallthru
        _
    $region44: #{basicblock_forward.4} parent=5 // pred_fallthru
      _
  $region6: #{basicblock_forward.4} parent=0 // loop_footer
    %s15 = sadd.s32 1, %s11
  $region7: #{basicblock_forward.4} parent=0 // loop_footer_branch
    %10 = sbr.rel target = $region3
  $region8: #{basicblock_forward.4} parent=0 // loop_exit
    _

</llo_original>
